<compile_context>
chip_gen: v7x
topology: tpu7x:2x2x1
jax: 0.10.0
libtpu: 0.0.40
codegen_flags: <defaults>
</compile_context>

<pallas_src>
import functools

import numpy as np
import jax
import jax.numpy as jnp
from jax.experimental import pallas as pl
from jax.experimental.pallas import tpu as pltpu

FILTERS = 32          # Wave_LSTM_Layer(32, 3, 16, ...)
KERNEL_SIZE = 3
DILATION_DEPTH = 16
BN_EPS = 1e-5


# ----------------------------------------------------------------------------
# Fused kernel: WaveNet stack + BN fold + multi-layer LSTM + final Linear
# ----------------------------------------------------------------------------
def andi_fused_kernel(T, B, L,
                      seq_ref, shift_ref, w0_ref, b0_ref,
                      wgc_ref, wgs_ref, bg_ref, w11_ref, b11_ref,
                      bns_ref, bnh_ref, *rest):
    # seq_ref:   (T*B, Cin)            time-major rows (r = t*B + b)
    # shift_ref: (n_live, 2, T*B, T*B) 0/1 shift matrices [minus, plus] per dilation
    # w0_ref:    (Cin, 3F)             conv1d_0, column blocks [center|minus|plus]
    # b0_ref:    (1, F)
    # wgc_ref:   (D, F, 2F)            centre tap, gate-fused [tanh|sigm]
    # wgs_ref:   (n_live, F, 4F)       side taps [minus(tanh|sigm) | plus(tanh|sigm)]
    # bg_ref:    (D, 1, 2F)
    # w11_ref:   (F, F), b11_ref: (1, F)   shared 1x1 conv
    # bns_ref / bnh_ref: (1, F)        folded BatchNorm1d (eval, running stats)
    # rest: wih_0, whh_0, b_0, ..., fc_w, fc_b, out_ref, gx_scratch(T*B, 4H)
    #       LSTM weights pre-transposed to (In,4H)/(H,4H), gate cols [i|f|o|g],
    #       bias = b_ih + b_hh.
    f32 = jnp.float32
    lstm_refs = rest[:3 * L]
    fc_w_ref = rest[3 * L]
    fc_b_ref = rest[3 * L + 1]
    out_ref = rest[3 * L + 2]
    gx_ref = rest[3 * L + 3]

    F = w11_ref.shape[0]
    depth = wgc_ref.shape[0]
    H = lstm_refs[1].shape[0]

    def mm(a, b):
        return jnp.dot(a, b, preferred_element_type=f32)

    # ---------------- WaveNet stack ----------------
    # conv1d_0 (k=3, pad=1): one GEMM; +/-1 taps via exact masked shift matmuls.
    y0 = mm(seq_ref[...], w0_ref[...])                       # (BT, 3F)
    x = y0[:, :F]
    if T > 1:
        x = x + mm(shift_ref[0, 0], y0[:, F:2 * F])           # x[t-1] tap
        x = x + mm(shift_ref[0, 1], y0[:, 2 * F:])            # x[t+1] tap
    x = x + b0_ref[...]
    res = x

    w11 = w11_ref[...]
    b11 = b11_ref[...]

    for i in range(depth):
        d = 2 ** i
        gates = mm(x, wgc_ref[i]) + bg_ref[i]                 # centre tap -> (BT, 2F)
        if d < T:                                             # live side taps
            side = mm(x, wgs_ref[i])                          # (BT, 4F)
            gates = gates + mm(shift_ref[i, 0], side[:, :2 * F])
            gates = gates + mm(shift_ref[i, 1], side[:, 2 * F:])
        gated = jnp.tanh(gates[:, :F]) * jax.nn.sigmoid(gates[:, F:])
        x = mm(gated, w11) + b11                              # shared 1x1 conv
        res = res + x

    # BatchNorm1d (eval, folded to scale/shift); Dropout(0.1) identity in eval.
    seq_feat = res * bns_ref[...] + bnh_ref[...]              # (BT, F)

    # ---------------- multi-layer LSTM (fully unrolled, wavefront) ----------------
    wih = [lstm_refs[3 * l][...] for l in range(L)]
    whh = [lstm_refs[3 * l + 1][...] for l in range(L)]
    bias = [lstm_refs[3 * l + 2][...] for l in range(L)]

    # Layer-0 input projection hoisted out of the recurrence: one dense GEMM into a
    # flat (T*B, 4H) VMEM scratch (dense sublanes + lanes).
    gx_ref[...] = mm(seq_feat, wih[0]) + bias[0]

    def cell(gates, c_prev):
        sig = jax.nn.sigmoid(gates[:, :3 * H])                # [i|f|o] in one EUP slab
        i_g = sig[:, :H]
        f_g = sig[:, H:2 * H]
        o_g = sig[:, 2 * H:]
        g_g = jnp.tanh(gates[:, 3 * H:])
        c_new = f_g * c_prev + i_g * g_g
        h_new = o_g * jnp.tanh(c_new)
        return h_new, c_new

    h = [jnp.zeros((B, H), f32) for _ in range(L)]
    c = [jnp.zeros((B, H), f32) for _ in range(L)]

    # Wavefront emission: at global step s, layer l handles t = s - l.  Iterating
    # layers high -> low keeps h[l-1] holding layer l-1's output at time t when
    # layer l consumes it.  Everything is unrolled into one basic block, so the
    # scheduler overlaps independent layers' MXU / EUP / VPU work.
    for s in range(T + L - 1):
        for l in range(min(L - 1, s), -1, -1):
            t = s - l
            if t < 0 or t >= T:
                continue
            if l == 0:
                gates = gx_ref[t * B:(t + 1) * B, :] + mm(h[0], whh[0])
            else:
                gates = mm(h[l - 1], wih[l]) + mm(h[l], whh[l]) + bias[l]
            h[l], c[l] = cell(gates, c[l])

    # ---------------- final Linear on the last timestep (Dropout identity) -------
    out_ref[...] = (mm(h[L - 1], fc_w_ref[...]) + fc_b_ref[...]).astype(out_ref.dtype)


# ----------------------------------------------------------------------------
# Wrapper (trace-time weight reparameterization + single pallas_call)
# ----------------------------------------------------------------------------
def _shift_matrices(T, B, dilations):
    """0/1 matrices implementing the +/-d time shift on time-major (T*B) rows,
    zeroing taps that would cross the sequence (== batch-block) boundary."""
    BT = T * B
    r = np.arange(BT)[:, None]
    col = np.arange(BT)[None, :]
    t = r // B
    mats = []
    for d in dilations:
        s_minus = ((col == r - d * B) & (t >= d)).astype(np.float32)     # row r <- z[t-d]
        s_plus = ((col == r + d * B) & (t < T - d)).astype(np.float32)   # row r <- z[t+d]
        mats.append(np.stack([s_minus, s_plus]))
    return jnp.asarray(np.stack(mats))                                   # (n, 2, BT, BT)


def andi_model_forward(x_nct, params):
    """x_nct: (B, input_dim, T) float32 (PyTorch NCW). Returns (B, output_dim)."""
    x = jnp.transpose(x_nct, (2, 0, 1)).astype(jnp.float32)   # (T, B, Cin), time-major
    T, B, Cin = x.shape
    seq = x.reshape(T * B, Cin)                                # row r = t*B + b

    F = params['w11'].shape[0]
    D = params['wt'].shape[0]
    n_live = sum(1 for i in range(D) if 2 ** i < T)            # levels with live side taps
    nl = max(n_live, 1)

    # --- trace-time reparameterization (tap stacking, gate fusion, BN fold) ---
    w0 = params['w0']                                          # (3, Cin, F): taps [t-1, t, t+1]
    w0s = jnp.concatenate([w0[1], w0[0], w0[2]], axis=-1)      # (Cin, 3F): [center|minus|plus]
    wt, ws = params['wt'], params['ws']                        # (D, 3, F, F)
    wgc = jnp.concatenate([wt[:, 1], ws[:, 1]], axis=-1)       # (D, F, 2F)
    wgs = jnp.concatenate([wt[:nl, 0], ws[:nl, 0],
                           wt[:nl, 2], ws[:nl, 2]], axis=-1)   # (nl, F, 4F)
    bg = jnp.concatenate([params['bt'], params['bs']], axis=-1)[:, None, :]   # (D, 1, 2F)
    inv_std = jax.lax.rsqrt(params['var'] + BN_EPS)
    bn_scale = params['gamma'] * inv_std                       # (1, F)
    bn_shift = params['beta'] - params['mean'] * bn_scale      # (1, F)
    shift_mats = _shift_matrices(T, B, [2 ** i for i in range(nl)])

    # LSTM gate columns [i|f|g|o] (PyTorch) -> [i|f|o|g] so sigmoid hits one 3H slab.
    def reorder(w):
        Hh = w.shape[-1] // 4
        return jnp.concatenate([w[..., :2 * Hh], w[..., 3 * Hh:], w[..., 2 * Hh:3 * Hh]],
                               axis=-1)

    lstm = params['lstm']
    L = len(lstm)
    H = lstm[0][1].shape[0]
    O = params['fc_w'].shape[1]
    flat = []
    for (wih_l, whh_l, b_l) in lstm:
        flat.extend([reorder(wih_l), reorder(whh_l), reorder(b_l)])

    operands = [seq, shift_mats, w0s, params['b0'], wgc, wgs, bg,
                params['w11'], params['b11'], bn_scale, bn_shift,
                *flat, params['fc_w'], params['fc_b']]

    # Rough cost hints for the XLA scheduler (advisory).
    BT = T * B
    flops = 2 * BT * Cin * 3 * F + 2 * 2 * BT * BT * F
    flops += D * (2 * BT * F * 2 * F + 2 * BT * F * F)
    flops += n_live * (2 * BT * F * 4 * F + 2 * 2 * BT * BT * 2 * F)
    flops += 2 * BT * F * 4 * H + (2 * L - 1) * T * 2 * B * H * 4 * H + 2 * B * H * O
    transcendentals = D * BT * 2 * F + T * L * B * 5 * H
    bytes_accessed = 4 * (sum(int(np.prod(a.shape)) for a in operands) + B * O)

    vmem = pl.BlockSpec(memory_space=pltpu.MemorySpace.VMEM)
    out = pl.pallas_call(
        functools.partial(andi_fused_kernel, T, B, L),
        out_shape=jax.ShapeDtypeStruct((B, O), jnp.float32),
        in_specs=[vmem] * len(operands),
        out_specs=vmem,
        scratch_shapes=[pltpu.VMEM((T * B, 4 * H), jnp.float32)],
        compiler_params=pltpu.CompilerParams(vmem_limit_bytes=16 * 1024 * 1024),
        cost_estimate=pl.CostEstimate(flops=flops, transcendentals=transcendentals,
                                      bytes_accessed=bytes_accessed),
    )(*operands)
    return out


# ----------------------------------------------------------------------------
# Deterministic synthetic parameters (shapes implied by the module __init__)
# ----------------------------------------------------------------------------
def init_params(key, input_dim, hidden_dim, layer_dim, output_dim,
                filters=FILTERS, depth=DILATION_DEPTH):
    keys = jax.random.split(key, 32)
    k = iter(keys)
    s = 0.1

    def nrm(shape):
        return jax.random.normal(next(k), shape, jnp.float32) * s

    p = {}
    # conv1d_0: Conv1d(input_dim, filters, 3, padding=1); per-tap, transposed (Cin, F)
    p['w0'] = nrm((3, input_dim, filters))
    p['b0'] = nrm((1, filters))
    # dilated gated convs: per dilation, per tap (t-d, t, t+d), (F_in, F_out)
    p['wt'] = nrm((depth, 3, filters, filters))
    p['bt'] = nrm((depth, filters))
    p['ws'] = nrm((depth, 3, filters, filters))
    p['bs'] = nrm((depth, filters))
    # conv1d_1: 1x1 conv shared across iterations
    p['w11'] = nrm((filters, filters))
    p['b11'] = nrm((1, filters))
    # BatchNorm1d(filters) eval-mode parameters / running stats
    p['gamma'] = 1.0 + nrm((1, filters))
    p['beta'] = nrm((1, filters))
    p['mean'] = nrm((1, filters))
    p['var'] = 1.0 + jnp.abs(nrm((1, filters)))
    # LSTM(filters, hidden_dim, layer_dim, batch_first=True); PyTorch gate order ifgo
    p['lstm'] = []
    in_dim = filters
    for _ in range(layer_dim):
        wih = nrm((in_dim, 4 * hidden_dim))        # W_ih^T
        whh = nrm((hidden_dim, 4 * hidden_dim))    # W_hh^T
        b = nrm((1, 4 * hidden_dim))               # b_ih + b_hh combined
        p['lstm'].append((wih, whh, b))
        in_dim = hidden_dim
    # fc: Dropout(0.1) [identity in eval] + Linear(hidden_dim, output_dim)
    p['fc_w'] = nrm((hidden_dim, output_dim))      # W^T
    p['fc_b'] = nrm((1, output_dim))
    # TODO(synk): training-mode Dropout / batch-statistics BatchNorm not implemented
    #             (eval-mode forward semantics only).
    return p


if __name__ == "__main__":
    B, input_dim, T = 2, 4, 16
    hidden_dim, layer_dim, output_dim = 32, 2, 5

    key = jax.random.PRNGKey(0)
    kx, kp = jax.random.split(key)
    x = jax.random.normal(kx, (B, input_dim, T), jnp.float32)  # PyTorch NCW layout
    params = init_params(kp, input_dim, hidden_dim, layer_dim, output_dim)

    out = jax.jit(andi_model_forward)(x, params)
    out = jax.block_until_ready(out)
    assert out.shape == (B, output_dim), out.shape
    assert bool(jnp.all(jnp.isfinite(out)))
    print("KERNEL_OK")
</pallas_src>

<mosaic_0001>
module attributes {stable_mosaic.version = 11 : i64} {
  func.func @andi_fused_kernel(%arg0: memref<32x4xf32, #tpu.memory_space<vmem>>, %arg1: memref<4x2x32x32xf32, #tpu.memory_space<vmem>>, %arg2: memref<4x96xf32, #tpu.memory_space<vmem>>, %arg3: memref<1x32xf32, #tpu.memory_space<vmem>>, %arg4: memref<16x32x64xf32, #tpu.memory_space<vmem>>, %arg5: memref<4x32x128xf32, #tpu.memory_space<vmem>>, %arg6: memref<16x1x64xf32, #tpu.memory_space<vmem>>, %arg7: memref<32x32xf32, #tpu.memory_space<vmem>>, %arg8: memref<1x32xf32, #tpu.memory_space<vmem>>, %arg9: memref<1x32xf32, #tpu.memory_space<vmem>>, %arg10: memref<1x32xf32, #tpu.memory_space<vmem>>, %arg11: memref<32x128xf32, #tpu.memory_space<vmem>>, %arg12: memref<32x128xf32, #tpu.memory_space<vmem>>, %arg13: memref<1x128xf32, #tpu.memory_space<vmem>>, %arg14: memref<32x128xf32, #tpu.memory_space<vmem>>, %arg15: memref<32x128xf32, #tpu.memory_space<vmem>>, %arg16: memref<1x128xf32, #tpu.memory_space<vmem>>, %arg17: memref<32x5xf32, #tpu.memory_space<vmem>>, %arg18: memref<1x5xf32, #tpu.memory_space<vmem>>, %arg19: memref<2x5xf32, #tpu.memory_space<vmem>>, %arg20: memref<32x128xf32, #tpu.memory_space<vmem>>) attributes {dimension_semantics = [], scalar_prefetch = 0 : i64, scratch_operands = 1 : i64, tpu.core_type = #tpu.core_type<tc>} {
    %c0 = arith.constant 0 : index
    %c0_0 = arith.constant 0 : index
    %0 = vector.load %arg0[%c0, %c0_0] : memref<32x4xf32, #tpu.memory_space<vmem>>, vector<32x4xf32>
    %c0_1 = arith.constant 0 : index
    %c0_2 = arith.constant 0 : index
    %1 = vector.load %arg2[%c0_1, %c0_2] : memref<4x96xf32, #tpu.memory_space<vmem>>, vector<4x96xf32>
    %cst = arith.constant dense<0.000000e+00> : vector<32x96xf32>
    %2 = tpu.matmul %0, %1, %cst {dimension_numbers = #tpu.dot_dimension_numbers<[1], [0], [0], [1], [0, 0, 1, 1], [], []>} : vector<32x4xf32>, vector<4x96xf32>, vector<32x96xf32> -> vector<32x96xf32>
    %3 = vector.extract_strided_slice %2 {offsets = [0, 0], sizes = [32, 32], strides = [1, 1]} : vector<32x96xf32> to vector<32x32xf32>
    %c0_3 = arith.constant 0 : index
    %c0_4 = arith.constant 0 : index
    %c0_5 = arith.constant 0 : index
    %c0_6 = arith.constant 0 : index
    %4 = vector.load %arg1[%c0_3, %c0_4, %c0_5, %c0_6] : memref<4x2x32x32xf32, #tpu.memory_space<vmem>>, vector<1x1x32x32xf32>
    %5 = vector.shape_cast %4 : vector<1x1x32x32xf32> to vector<32x32xf32>
    %6 = vector.extract_strided_slice %2 {offsets = [0, 32], sizes = [32, 32], strides = [1, 1]} : vector<32x96xf32> to vector<32x32xf32>
    %cst_7 = arith.constant dense<0.000000e+00> : vector<32x32xf32>
    %7 = tpu.matmul %5, %6, %cst_7 {dimension_numbers = #tpu.dot_dimension_numbers<[1], [0], [0], [1], [0, 0, 1, 1], [], []>} : vector<32x32xf32>, vector<32x32xf32>, vector<32x32xf32> -> vector<32x32xf32>
    %8 = arith.addf %3, %7 : vector<32x32xf32>
    %c0_8 = arith.constant 0 : index
    %c1 = arith.constant 1 : index
    %c0_9 = arith.constant 0 : index
    %c0_10 = arith.constant 0 : index
    %9 = vector.load %arg1[%c0_8, %c1, %c0_9, %c0_10] : memref<4x2x32x32xf32, #tpu.memory_space<vmem>>, vector<1x1x32x32xf32>
    %10 = vector.shape_cast %9 : vector<1x1x32x32xf32> to vector<32x32xf32>
    %11 = vector.extract_strided_slice %2 {offsets = [0, 64], sizes = [32, 32], strides = [1, 1]} : vector<32x96xf32> to vector<32x32xf32>
    %cst_11 = arith.constant dense<0.000000e+00> : vector<32x32xf32>
    %12 = tpu.matmul %10, %11, %cst_11 {dimension_numbers = #tpu.dot_dimension_numbers<[1], [0], [0], [1], [0, 0, 1, 1], [], []>} : vector<32x32xf32>, vector<32x32xf32>, vector<32x32xf32> -> vector<32x32xf32>
    %13 = arith.addf %8, %12 : vector<32x32xf32>
    %c0_12 = arith.constant 0 : index
    %c0_13 = arith.constant 0 : index
    %14 = vector.load %arg3[%c0_12, %c0_13] : memref<1x32xf32, #tpu.memory_space<vmem>>, vector<1x32xf32>
    %15 = vector.broadcast %14 : vector<1x32xf32> to vector<32x32xf32>
    %16 = arith.addf %13, %15 : vector<32x32xf32>
    %c0_14 = arith.constant 0 : index
    %c0_15 = arith.constant 0 : index
    %17 = vector.load %arg7[%c0_14, %c0_15] : memref<32x32xf32, #tpu.memory_space<vmem>>, vector<32x32xf32>
    %c0_16 = arith.constant 0 : index
    %c0_17 = arith.constant 0 : index
    %18 = vector.load %arg8[%c0_16, %c0_17] : memref<1x32xf32, #tpu.memory_space<vmem>>, vector<1x32xf32>
    %c0_18 = arith.constant 0 : index
    %c0_19 = arith.constant 0 : index
    %c0_20 = arith.constant 0 : index
    %19 = vector.load %arg4[%c0_18, %c0_19, %c0_20] : memref<16x32x64xf32, #tpu.memory_space<vmem>>, vector<1x32x64xf32>
    %20 = vector.shape_cast %19 : vector<1x32x64xf32> to vector<32x64xf32>
    %cst_21 = arith.constant dense<0.000000e+00> : vector<32x64xf32>
    %21 = tpu.matmul %16, %20, %cst_21 {dimension_numbers = #tpu.dot_dimension_numbers<[1], [0], [0], [1], [0, 0, 1, 1], [], []>} : vector<32x32xf32>, vector<32x64xf32>, vector<32x64xf32> -> vector<32x64xf32>
    %c0_22 = arith.constant 0 : index
    %c0_23 = arith.constant 0 : index
    %c0_24 = arith.constant 0 : index
    %22 = vector.load %arg6[%c0_22, %c0_23, %c0_24] : memref<16x1x64xf32, #tpu.memory_space<vmem>>, vector<1x1x64xf32>
    %23 = vector.shape_cast %22 : vector<1x1x64xf32> to vector<1x64xf32>
    %24 = vector.broadcast %23 : vector<1x64xf32> to vector<32x64xf32>
    %25 = arith.addf %21, %24 : vector<32x64xf32>
    %c0_25 = arith.constant 0 : index
    %c0_26 = arith.constant 0 : index
    %c0_27 = arith.constant 0 : index
    %26 = vector.load %arg5[%c0_25, %c0_26, %c0_27] : memref<4x32x128xf32, #tpu.memory_space<vmem>>, vector<1x32x128xf32>
    %27 = vector.shape_cast %26 : vector<1x32x128xf32> to vector<32x128xf32>
    %cst_28 = arith.constant dense<0.000000e+00> : vector<32x128xf32>
    %28 = tpu.matmul %16, %27, %cst_28 {dimension_numbers = #tpu.dot_dimension_numbers<[1], [0], [0], [1], [0, 0, 1, 1], [], []>} : vector<32x32xf32>, vector<32x128xf32>, vector<32x128xf32> -> vector<32x128xf32>
    %c0_29 = arith.constant 0 : index
    %c0_30 = arith.constant 0 : index
    %c0_31 = arith.constant 0 : index
    %c0_32 = arith.constant 0 : index
    %29 = vector.load %arg1[%c0_29, %c0_30, %c0_31, %c0_32] : memref<4x2x32x32xf32, #tpu.memory_space<vmem>>, vector<1x1x32x32xf32>
    %30 = vector.shape_cast %29 : vector<1x1x32x32xf32> to vector<32x32xf32>
    %31 = vector.extract_strided_slice %28 {offsets = [0, 0], sizes = [32, 64], strides = [1, 1]} : vector<32x128xf32> to vector<32x64xf32>
    %cst_33 = arith.constant dense<0.000000e+00> : vector<32x64xf32>
    %32 = tpu.matmul %30, %31, %cst_33 {dimension_numbers = #tpu.dot_dimension_numbers<[1], [0], [0], [1], [0, 0, 1, 1], [], []>} : vector<32x32xf32>, vector<32x64xf32>, vector<32x64xf32> -> vector<32x64xf32>
    %33 = arith.addf %25, %32 : vector<32x64xf32>
    %c0_34 = arith.constant 0 : index
    %c1_35 = arith.constant 1 : index
    %c0_36 = arith.constant 0 : index
    %c0_37 = arith.constant 0 : index
    %34 = vector.load %arg1[%c0_34, %c1_35, %c0_36, %c0_37] : memref<4x2x32x32xf32, #tpu.memory_space<vmem>>, vector<1x1x32x32xf32>
    %35 = vector.shape_cast %34 : vector<1x1x32x32xf32> to vector<32x32xf32>
    %36 = vector.extract_strided_slice %28 {offsets = [0, 64], sizes = [32, 64], strides = [1, 1]} : vector<32x128xf32> to vector<32x64xf32>
    %cst_38 = arith.constant dense<0.000000e+00> : vector<32x64xf32>
    %37 = tpu.matmul %35, %36, %cst_38 {dimension_numbers = #tpu.dot_dimension_numbers<[1], [0], [0], [1], [0, 0, 1, 1], [], []>} : vector<32x32xf32>, vector<32x64xf32>, vector<32x64xf32> -> vector<32x64xf32>
    %38 = arith.addf %33, %37 : vector<32x64xf32>
    %39 = vector.extract_strided_slice %38 {offsets = [0, 0], sizes = [32, 32], strides = [1, 1]} : vector<32x64xf32> to vector<32x32xf32>
    %40 = math.tanh %39 : vector<32x32xf32>
    %41 = vector.extract_strided_slice %38 {offsets = [0, 32], sizes = [32, 32], strides = [1, 1]} : vector<32x64xf32> to vector<32x32xf32>
    %42 = arith.negf %41 : vector<32x32xf32>
    %43 = math.exp %42 : vector<32x32xf32>
    %cst_39 = arith.constant 1.000000e+00 : f32
    %44 = vector.broadcast %cst_39 : f32 to vector<32x32xf32>
    %45 = arith.addf %44, %43 : vector<32x32xf32>
    %46 = arith.divf %44, %45 : vector<32x32xf32>
    %47 = arith.mulf %40, %46 : vector<32x32xf32>
    %cst_40 = arith.constant dense<0.000000e+00> : vector<32x32xf32>
    %48 = tpu.matmul %47, %17, %cst_40 {dimension_numbers = #tpu.dot_dimension_numbers<[1], [0], [0], [1], [0, 0, 1, 1], [], []>} : vector<32x32xf32>, vector<32x32xf32>, vector<32x32xf32> -> vector<32x32xf32>
    %49 = vector.broadcast %18 : vector<1x32xf32> to vector<32x32xf32>
    %50 = arith.addf %48, %49 : vector<32x32xf32>
    %51 = arith.addf %16, %50 : vector<32x32xf32>
    %c1_41 = arith.constant 1 : index
    %c0_42 = arith.constant 0 : index
    %c0_43 = arith.constant 0 : index
    %52 = vector.load %arg4[%c1_41, %c0_42, %c0_43] : memref<16x32x64xf32, #tpu.memory_space<vmem>>, vector<1x32x64xf32>
    %53 = vector.shape_cast %52 : vector<1x32x64xf32> to vector<32x64xf32>
    %cst_44 = arith.constant dense<0.000000e+00> : vector<32x64xf32>
    %54 = tpu.matmul %50, %53, %cst_44 {dimension_numbers = #tpu.dot_dimension_numbers<[1], [0], [0], [1], [0, 0, 1, 1], [], []>} : vector<32x32xf32>, vector<32x64xf32>, vector<32x64xf32> -> vector<32x64xf32>
    %c1_45 = arith.constant 1 : index
    %c0_46 = arith.constant 0 : index
    %c0_47 = arith.constant 0 : index
    %55 = vector.load %arg6[%c1_45, %c0_46, %c0_47] : memref<16x1x64xf32, #tpu.memory_space<vmem>>, vector<1x1x64xf32>
    %56 = vector.shape_cast %55 : vector<1x1x64xf32> to vector<1x64xf32>
    %57 = vector.broadcast %56 : vector<1x64xf32> to vector<32x64xf32>
    %58 = arith.addf %54, %57 : vector<32x64xf32>
    %c1_48 = arith.constant 1 : index
    %c0_49 = arith.constant 0 : index
    %c0_50 = arith.constant 0 : index
    %59 = vector.load %arg5[%c1_48, %c0_49, %c0_50] : memref<4x32x128xf32, #tpu.memory_space<vmem>>, vector<1x32x128xf32>
    %60 = vector.shape_cast %59 : vector<1x32x128xf32> to vector<32x128xf32>
    %cst_51 = arith.constant dense<0.000000e+00> : vector<32x128xf32>
    %61 = tpu.matmul %50, %60, %cst_51 {dimension_numbers = #tpu.dot_dimension_numbers<[1], [0], [0], [1], [0, 0, 1, 1], [], []>} : vector<32x32xf32>, vector<32x128xf32>, vector<32x128xf32> -> vector<32x128xf32>
    %c1_52 = arith.constant 1 : index
    %c0_53 = arith.constant 0 : index
    %c0_54 = arith.constant 0 : index
    %c0_55 = arith.constant 0 : index
    %62 = vector.load %arg1[%c1_52, %c0_53, %c0_54, %c0_55] : memref<4x2x32x32xf32, #tpu.memory_space<vmem>>, vector<1x1x32x32xf32>
    %63 = vector.shape_cast %62 : vector<1x1x32x32xf32> to vector<32x32xf32>
    %64 = vector.extract_strided_slice %61 {offsets = [0, 0], sizes = [32, 64], strides = [1, 1]} : vector<32x128xf32> to vector<32x64xf32>
    %cst_56 = arith.constant dense<0.000000e+00> : vector<32x64xf32>
    %65 = tpu.matmul %63, %64, %cst_56 {dimension_numbers = #tpu.dot_dimension_numbers<[1], [0], [0], [1], [0, 0, 1, 1], [], []>} : vector<32x32xf32>, vector<32x64xf32>, vector<32x64xf32> -> vector<32x64xf32>
    %66 = arith.addf %58, %65 : vector<32x64xf32>
    %c1_57 = arith.constant 1 : index
    %c1_58 = arith.constant 1 : index
    %c0_59 = arith.constant 0 : index
    %c0_60 = arith.constant 0 : index
    %67 = vector.load %arg1[%c1_57, %c1_58, %c0_59, %c0_60] : memref<4x2x32x32xf32, #tpu.memory_space<vmem>>, vector<1x1x32x32xf32>
    %68 = vector.shape_cast %67 : vector<1x1x32x32xf32> to vector<32x32xf32>
    %69 = vector.extract_strided_slice %61 {offsets = [0, 64], sizes = [32, 64], strides = [1, 1]} : vector<32x128xf32> to vector<32x64xf32>
    %cst_61 = arith.constant dense<0.000000e+00> : vector<32x64xf32>
    %70 = tpu.matmul %68, %69, %cst_61 {dimension_numbers = #tpu.dot_dimension_numbers<[1], [0], [0], [1], [0, 0, 1, 1], [], []>} : vector<32x32xf32>, vector<32x64xf32>, vector<32x64xf32> -> vector<32x64xf32>
    %71 = arith.addf %66, %70 : vector<32x64xf32>
    %72 = vector.extract_strided_slice %71 {offsets = [0, 0], sizes = [32, 32], strides = [1, 1]} : vector<32x64xf32> to vector<32x32xf32>
    %73 = math.tanh %72 : vector<32x32xf32>
    %74 = vector.extract_strided_slice %71 {offsets = [0, 32], sizes = [32, 32], strides = [1, 1]} : vector<32x64xf32> to vector<32x32xf32>
    %75 = arith.negf %74 : vector<32x32xf32>
    %76 = math.exp %75 : vector<32x32xf32>
    %cst_62 = arith.constant 1.000000e+00 : f32
    %77 = vector.broadcast %cst_62 : f32 to vector<32x32xf32>
    %78 = arith.addf %77, %76 : vector<32x32xf32>
    %79 = arith.divf %77, %78 : vector<32x32xf32>
    %80 = arith.mulf %73, %79 : vector<32x32xf32>
    %cst_63 = arith.constant dense<0.000000e+00> : vector<32x32xf32>
    %81 = tpu.matmul %80, %17, %cst_63 {dimension_numbers = #tpu.dot_dimension_numbers<[1], [0], [0], [1], [0, 0, 1, 1], [], []>} : vector<32x32xf32>, vector<32x32xf32>, vector<32x32xf32> -> vector<32x32xf32>
    %82 = vector.broadcast %18 : vector<1x32xf32> to vector<32x32xf32>
    %83 = arith.addf %81, %82 : vector<32x32xf32>
    %84 = arith.addf %51, %83 : vector<32x32xf32>
    %c2 = arith.constant 2 : index
    %c0_64 = arith.constant 0 : index
    %c0_65 = arith.constant 0 : index
    %85 = vector.load %arg4[%c2, %c0_64, %c0_65] : memref<16x32x64xf32, #tpu.memory_space<vmem>>, vector<1x32x64xf32>
    %86 = vector.shape_cast %85 : vector<1x32x64xf32> to vector<32x64xf32>
    %cst_66 = arith.constant dense<0.000000e+00> : vector<32x64xf32>
    %87 = tpu.matmul %83, %86, %cst_66 {dimension_numbers = #tpu.dot_dimension_numbers<[1], [0], [0], [1], [0, 0, 1, 1], [], []>} : vector<32x32xf32>, vector<32x64xf32>, vector<32x64xf32> -> vector<32x64xf32>
    %c2_67 = arith.constant 2 : index
    %c0_68 = arith.constant 0 : index
    %c0_69 = arith.constant 0 : index
    %88 = vector.load %arg6[%c2_67, %c0_68, %c0_69] : memref<16x1x64xf32, #tpu.memory_space<vmem>>, vector<1x1x64xf32>
    %89 = vector.shape_cast %88 : vector<1x1x64xf32> to vector<1x64xf32>
    %90 = vector.broadcast %89 : vector<1x64xf32> to vector<32x64xf32>
    %91 = arith.addf %87, %90 : vector<32x64xf32>
    %c2_70 = arith.constant 2 : index
    %c0_71 = arith.constant 0 : index
    %c0_72 = arith.constant 0 : index
    %92 = vector.load %arg5[%c2_70, %c0_71, %c0_72] : memref<4x32x128xf32, #tpu.memory_space<vmem>>, vector<1x32x128xf32>
    %93 = vector.shape_cast %92 : vector<1x32x128xf32> to vector<32x128xf32>
    %cst_73 = arith.constant dense<0.000000e+00> : vector<32x128xf32>
    %94 = tpu.matmul %83, %93, %cst_73 {dimension_numbers = #tpu.dot_dimension_numbers<[1], [0], [0], [1], [0, 0, 1, 1], [], []>} : vector<32x32xf32>, vector<32x128xf32>, vector<32x128xf32> -> vector<32x128xf32>
    %c2_74 = arith.constant 2 : index
    %c0_75 = arith.constant 0 : index
    %c0_76 = arith.constant 0 : index
    %c0_77 = arith.constant 0 : index
    %95 = vector.load %arg1[%c2_74, %c0_75, %c0_76, %c0_77] : memref<4x2x32x32xf32, #tpu.memory_space<vmem>>, vector<1x1x32x32xf32>
    %96 = vector.shape_cast %95 : vector<1x1x32x32xf32> to vector<32x32xf32>
    %97 = vector.extract_strided_slice %94 {offsets = [0, 0], sizes = [32, 64], strides = [1, 1]} : vector<32x128xf32> to vector<32x64xf32>
    %cst_78 = arith.constant dense<0.000000e+00> : vector<32x64xf32>
    %98 = tpu.matmul %96, %97, %cst_78 {dimension_numbers = #tpu.dot_dimension_numbers<[1], [0], [0], [1], [0, 0, 1, 1], [], []>} : vector<32x32xf32>, vector<32x64xf32>, vector<32x64xf32> -> vector<32x64xf32>
    %99 = arith.addf %91, %98 : vector<32x64xf32>
    %c2_79 = arith.constant 2 : index
    %c1_80 = arith.constant 1 : index
    %c0_81 = arith.constant 0 : index
    %c0_82 = arith.constant 0 : index
    %100 = vector.load %arg1[%c2_79, %c1_80, %c0_81, %c0_82] : memref<4x2x32x32xf32, #tpu.memory_space<vmem>>, vector<1x1x32x32xf32>
    %101 = vector.shape_cast %100 : vector<1x1x32x32xf32> to vector<32x32xf32>
    %102 = vector.extract_strided_slice %94 {offsets = [0, 64], sizes = [32, 64], strides = [1, 1]} : vector<32x128xf32> to vector<32x64xf32>
    %cst_83 = arith.constant dense<0.000000e+00> : vector<32x64xf32>
    %103 = tpu.matmul %101, %102, %cst_83 {dimension_numbers = #tpu.dot_dimension_numbers<[1], [0], [0], [1], [0, 0, 1, 1], [], []>} : vector<32x32xf32>, vector<32x64xf32>, vector<32x64xf32> -> vector<32x64xf32>
    %104 = arith.addf %99, %103 : vector<32x64xf32>
    %105 = vector.extract_strided_slice %104 {offsets = [0, 0], sizes = [32, 32], strides = [1, 1]} : vector<32x64xf32> to vector<32x32xf32>
    %106 = math.tanh %105 : vector<32x32xf32>
    %107 = vector.extract_strided_slice %104 {offsets = [0, 32], sizes = [32, 32], strides = [1, 1]} : vector<32x64xf32> to vector<32x32xf32>
    %108 = arith.negf %107 : vector<32x32xf32>
    %109 = math.exp %108 : vector<32x32xf32>
    %cst_84 = arith.constant 1.000000e+00 : f32
    %110 = vector.broadcast %cst_84 : f32 to vector<32x32xf32>
    %111 = arith.addf %110, %109 : vector<32x32xf32>
    %112 = arith.divf %110, %111 : vector<32x32xf32>
    %113 = arith.mulf %106, %112 : vector<32x32xf32>
    %cst_85 = arith.constant dense<0.000000e+00> : vector<32x32xf32>
    %114 = tpu.matmul %113, %17, %cst_85 {dimension_numbers = #tpu.dot_dimension_numbers<[1], [0], [0], [1], [0, 0, 1, 1], [], []>} : vector<32x32xf32>, vector<32x32xf32>, vector<32x32xf32> -> vector<32x32xf32>
    %115 = vector.broadcast %18 : vector<1x32xf32> to vector<32x32xf32>
    %116 = arith.addf %114, %115 : vector<32x32xf32>
    %117 = arith.addf %84, %116 : vector<32x32xf32>
    %c3 = arith.constant 3 : index
    %c0_86 = arith.constant 0 : index
    %c0_87 = arith.constant 0 : index
    %118 = vector.load %arg4[%c3, %c0_86, %c0_87] : memref<16x32x64xf32, #tpu.memory_space<vmem>>, vector<1x32x64xf32>
    %119 = vector.shape_cast %118 : vector<1x32x64xf32> to vector<32x64xf32>
    %cst_88 = arith.constant dense<0.000000e+00> : vector<32x64xf32>
    %120 = tpu.matmul %116, %119, %cst_88 {dimension_numbers = #tpu.dot_dimension_numbers<[1], [0], [0], [1], [0, 0, 1, 1], [], []>} : vector<32x32xf32>, vector<32x64xf32>, vector<32x64xf32> -> vector<32x64xf32>
    %c3_89 = arith.constant 3 : index
    %c0_90 = arith.constant 0 : index
    %c0_91 = arith.constant 0 : index
    %121 = vector.load %arg6[%c3_89, %c0_90, %c0_91] : memref<16x1x64xf32, #tpu.memory_space<vmem>>, vector<1x1x64xf32>
    %122 = vector.shape_cast %121 : vector<1x1x64xf32> to vector<1x64xf32>
    %123 = vector.broadcast %122 : vector<1x64xf32> to vector<32x64xf32>
    %124 = arith.addf %120, %123 : vector<32x64xf32>
    %c3_92 = arith.constant 3 : index
    %c0_93 = arith.constant 0 : index
    %c0_94 = arith.constant 0 : index
    %125 = vector.load %arg5[%c3_92, %c0_93, %c0_94] : memref<4x32x128xf32, #tpu.memory_space<vmem>>, vector<1x32x128xf32>
    %126 = vector.shape_cast %125 : vector<1x32x128xf32> to vector<32x128xf32>
    %cst_95 = arith.constant dense<0.000000e+00> : vector<32x128xf32>
    %127 = tpu.matmul %116, %126, %cst_95 {dimension_numbers = #tpu.dot_dimension_numbers<[1], [0], [0], [1], [0, 0, 1, 1], [], []>} : vector<32x32xf32>, vector<32x128xf32>, vector<32x128xf32> -> vector<32x128xf32>
    %c3_96 = arith.constant 3 : index
    %c0_97 = arith.constant 0 : index
    %c0_98 = arith.constant 0 : index
    %c0_99 = arith.constant 0 : index
    %128 = vector.load %arg1[%c3_96, %c0_97, %c0_98, %c0_99] : memref<4x2x32x32xf32, #tpu.memory_space<vmem>>, vector<1x1x32x32xf32>
    %129 = vector.shape_cast %128 : vector<1x1x32x32xf32> to vector<32x32xf32>
    %130 = vector.extract_strided_slice %127 {offsets = [0, 0], sizes = [32, 64], strides = [1, 1]} : vector<32x128xf32> to vector<32x64xf32>
    %cst_100 = arith.constant dense<0.000000e+00> : vector<32x64xf32>
    %131 = tpu.matmul %129, %130, %cst_100 {dimension_numbers = #tpu.dot_dimension_numbers<[1], [0], [0], [1], [0, 0, 1, 1], [], []>} : vector<32x32xf32>, vector<32x64xf32>, vector<32x64xf32> -> vector<32x64xf32>
    %132 = arith.addf %124, %131 : vector<32x64xf32>
    %c3_101 = arith.constant 3 : index
    %c1_102 = arith.constant 1 : index
    %c0_103 = arith.constant 0 : index
    %c0_104 = arith.constant 0 : index
    %133 = vector.load %arg1[%c3_101, %c1_102, %c0_103, %c0_104] : memref<4x2x32x32xf32, #tpu.memory_space<vmem>>, vector<1x1x32x32xf32>
    %134 = vector.shape_cast %133 : vector<1x1x32x32xf32> to vector<32x32xf32>
    %135 = vector.extract_strided_slice %127 {offsets = [0, 64], sizes = [32, 64], strides = [1, 1]} : vector<32x128xf32> to vector<32x64xf32>
    %cst_105 = arith.constant dense<0.000000e+00> : vector<32x64xf32>
    %136 = tpu.matmul %134, %135, %cst_105 {dimension_numbers = #tpu.dot_dimension_numbers<[1], [0], [0], [1], [0, 0, 1, 1], [], []>} : vector<32x32xf32>, vector<32x64xf32>, vector<32x64xf32> -> vector<32x64xf32>
    %137 = arith.addf %132, %136 : vector<32x64xf32>
    %138 = vector.extract_strided_slice %137 {offsets = [0, 0], sizes = [32, 32], strides = [1, 1]} : vector<32x64xf32> to vector<32x32xf32>
    %139 = math.tanh %138 : vector<32x32xf32>
    %140 = vector.extract_strided_slice %137 {offsets = [0, 32], sizes = [32, 32], strides = [1, 1]} : vector<32x64xf32> to vector<32x32xf32>
    %141 = arith.negf %140 : vector<32x32xf32>
    %142 = math.exp %141 : vector<32x32xf32>
    %cst_106 = arith.constant 1.000000e+00 : f32
    %143 = vector.broadcast %cst_106 : f32 to vector<32x32xf32>
    %144 = arith.addf %143, %142 : vector<32x32xf32>
    %145 = arith.divf %143, %144 : vector<32x32xf32>
    %146 = arith.mulf %139, %145 : vector<32x32xf32>
    %cst_107 = arith.constant dense<0.000000e+00> : vector<32x32xf32>
    %147 = tpu.matmul %146, %17, %cst_107 {dimension_numbers = #tpu.dot_dimension_numbers<[1], [0], [0], [1], [0, 0, 1, 1], [], []>} : vector<32x32xf32>, vector<32x32xf32>, vector<32x32xf32> -> vector<32x32xf32>
    %148 = vector.broadcast %18 : vector<1x32xf32> to vector<32x32xf32>
    %149 = arith.addf %147, %148 : vector<32x32xf32>
    %150 = arith.addf %117, %149 : vector<32x32xf32>
    %c4 = arith.constant 4 : index
    %c0_108 = arith.constant 0 : index
    %c0_109 = arith.constant 0 : index
    %151 = vector.load %arg4[%c4, %c0_108, %c0_109] : memref<16x32x64xf32, #tpu.memory_space<vmem>>, vector<1x32x64xf32>
    %152 = vector.shape_cast %151 : vector<1x32x64xf32> to vector<32x64xf32>
    %cst_110 = arith.constant dense<0.000000e+00> : vector<32x64xf32>
    %153 = tpu.matmul %149, %152, %cst_110 {dimension_numbers = #tpu.dot_dimension_numbers<[1], [0], [0], [1], [0, 0, 1, 1], [], []>} : vector<32x32xf32>, vector<32x64xf32>, vector<32x64xf32> -> vector<32x64xf32>
    %c4_111 = arith.constant 4 : index
    %c0_112 = arith.constant 0 : index
    %c0_113 = arith.constant 0 : index
    %154 = vector.load %arg6[%c4_111, %c0_112, %c0_113] : memref<16x1x64xf32, #tpu.memory_space<vmem>>, vector<1x1x64xf32>
    %155 = vector.shape_cast %154 : vector<1x1x64xf32> to vector<1x64xf32>
    %156 = vector.broadcast %155 : vector<1x64xf32> to vector<32x64xf32>
    %157 = arith.addf %153, %156 : vector<32x64xf32>
    %158 = vector.extract_strided_slice %157 {offsets = [0, 0], sizes = [32, 32], strides = [1, 1]} : vector<32x64xf32> to vector<32x32xf32>
    %159 = math.tanh %158 : vector<32x32xf32>
    %160 = vector.extract_strided_slice %157 {offsets = [0, 32], sizes = [32, 32], strides = [1, 1]} : vector<32x64xf32> to vector<32x32xf32>
    %161 = arith.negf %160 : vector<32x32xf32>
    %162 = math.exp %161 : vector<32x32xf32>
    %cst_114 = arith.constant 1.000000e+00 : f32
    %163 = vector.broadcast %cst_114 : f32 to vector<32x32xf32>
    %164 = arith.addf %163, %162 : vector<32x32xf32>
    %165 = arith.divf %163, %164 : vector<32x32xf32>
    %166 = arith.mulf %159, %165 : vector<32x32xf32>
    %cst_115 = arith.constant dense<0.000000e+00> : vector<32x32xf32>
    %167 = tpu.matmul %166, %17, %cst_115 {dimension_numbers = #tpu.dot_dimension_numbers<[1], [0], [0], [1], [0, 0, 1, 1], [], []>} : vector<32x32xf32>, vector<32x32xf32>, vector<32x32xf32> -> vector<32x32xf32>
    %168 = vector.broadcast %18 : vector<1x32xf32> to vector<32x32xf32>
    %169 = arith.addf %167, %168 : vector<32x32xf32>
    %170 = arith.addf %150, %169 : vector<32x32xf32>
    %c5 = arith.constant 5 : index
    %c0_116 = arith.constant 0 : index
    %c0_117 = arith.constant 0 : index
    %171 = vector.load %arg4[%c5, %c0_116, %c0_117] : memref<16x32x64xf32, #tpu.memory_space<vmem>>, vector<1x32x64xf32>
    %172 = vector.shape_cast %171 : vector<1x32x64xf32> to vector<32x64xf32>
    %cst_118 = arith.constant dense<0.000000e+00> : vector<32x64xf32>
    %173 = tpu.matmul %169, %172, %cst_118 {dimension_numbers = #tpu.dot_dimension_numbers<[1], [0], [0], [1], [0, 0, 1, 1], [], []>} : vector<32x32xf32>, vector<32x64xf32>, vector<32x64xf32> -> vector<32x64xf32>
    %c5_119 = arith.constant 5 : index
    %c0_120 = arith.constant 0 : index
    %c0_121 = arith.constant 0 : index
    %174 = vector.load %arg6[%c5_119, %c0_120, %c0_121] : memref<16x1x64xf32, #tpu.memory_space<vmem>>, vector<1x1x64xf32>
    %175 = vector.shape_cast %174 : vector<1x1x64xf32> to vector<1x64xf32>
    %176 = vector.broadcast %175 : vector<1x64xf32> to vector<32x64xf32>
    %177 = arith.addf %173, %176 : vector<32x64xf32>
    %178 = vector.extract_strided_slice %177 {offsets = [0, 0], sizes = [32, 32], strides = [1, 1]} : vector<32x64xf32> to vector<32x32xf32>
    %179 = math.tanh %178 : vector<32x32xf32>
    %180 = vector.extract_strided_slice %177 {offsets = [0, 32], sizes = [32, 32], strides = [1, 1]} : vector<32x64xf32> to vector<32x32xf32>
    %181 = arith.negf %180 : vector<32x32xf32>
    %182 = math.exp %181 : vector<32x32xf32>
    %cst_122 = arith.constant 1.000000e+00 : f32
    %183 = vector.broadcast %cst_122 : f32 to vector<32x32xf32>
    %184 = arith.addf %183, %182 : vector<32x32xf32>
    %185 = arith.divf %183, %184 : vector<32x32xf32>
    %186 = arith.mulf %179, %185 : vector<32x32xf32>
    %cst_123 = arith.constant dense<0.000000e+00> : vector<32x32xf32>
    %187 = tpu.matmul %186, %17, %cst_123 {dimension_numbers = #tpu.dot_dimension_numbers<[1], [0], [0], [1], [0, 0, 1, 1], [], []>} : vector<32x32xf32>, vector<32x32xf32>, vector<32x32xf32> -> vector<32x32xf32>
    %188 = vector.broadcast %18 : vector<1x32xf32> to vector<32x32xf32>
    %189 = arith.addf %187, %188 : vector<32x32xf32>
    %190 = arith.addf %170, %189 : vector<32x32xf32>
    %c6 = arith.constant 6 : index
    %c0_124 = arith.constant 0 : index
    %c0_125 = arith.constant 0 : index
    %191 = vector.load %arg4[%c6, %c0_124, %c0_125] : memref<16x32x64xf32, #tpu.memory_space<vmem>>, vector<1x32x64xf32>
    %192 = vector.shape_cast %191 : vector<1x32x64xf32> to vector<32x64xf32>
    %cst_126 = arith.constant dense<0.000000e+00> : vector<32x64xf32>
    %193 = tpu.matmul %189, %192, %cst_126 {dimension_numbers = #tpu.dot_dimension_numbers<[1], [0], [0], [1], [0, 0, 1, 1], [], []>} : vector<32x32xf32>, vector<32x64xf32>, vector<32x64xf32> -> vector<32x64xf32>
    %c6_127 = arith.constant 6 : index
    %c0_128 = arith.constant 0 : index
    %c0_129 = arith.constant 0 : index
    %194 = vector.load %arg6[%c6_127, %c0_128, %c0_129] : memref<16x1x64xf32, #tpu.memory_space<vmem>>, vector<1x1x64xf32>
    %195 = vector.shape_cast %194 : vector<1x1x64xf32> to vector<1x64xf32>
    %196 = vector.broadcast %195 : vector<1x64xf32> to vector<32x64xf32>
    %197 = arith.addf %193, %196 : vector<32x64xf32>
    %198 = vector.extract_strided_slice %197 {offsets = [0, 0], sizes = [32, 32], strides = [1, 1]} : vector<32x64xf32> to vector<32x32xf32>
    %199 = math.tanh %198 : vector<32x32xf32>
    %200 = vector.extract_strided_slice %197 {offsets = [0, 32], sizes = [32, 32], strides = [1, 1]} : vector<32x64xf32> to vector<32x32xf32>
    %201 = arith.negf %200 : vector<32x32xf32>
    %202 = math.exp %201 : vector<32x32xf32>
    %cst_130 = arith.constant 1.000000e+00 : f32
    %203 = vector.broadcast %cst_130 : f32 to vector<32x32xf32>
    %204 = arith.addf %203, %202 : vector<32x32xf32>
    %205 = arith.divf %203, %204 : vector<32x32xf32>
    %206 = arith.mulf %199, %205 : vector<32x32xf32>
    %cst_131 = arith.constant dense<0.000000e+00> : vector<32x32xf32>
    %207 = tpu.matmul %206, %17, %cst_131 {dimension_numbers = #tpu.dot_dimension_numbers<[1], [0], [0], [1], [0, 0, 1, 1], [], []>} : vector<32x32xf32>, vector<32x32xf32>, vector<32x32xf32> -> vector<32x32xf32>
    %208 = vector.broadcast %18 : vector<1x32xf32> to vector<32x32xf32>
    %209 = arith.addf %207, %208 : vector<32x32xf32>
    %210 = arith.addf %190, %209 : vector<32x32xf32>
    %c7 = arith.constant 7 : index
    %c0_132 = arith.constant 0 : index
    %c0_133 = arith.constant 0 : index
    %211 = vector.load %arg4[%c7, %c0_132, %c0_133] : memref<16x32x64xf32, #tpu.memory_space<vmem>>, vector<1x32x64xf32>
    %212 = vector.shape_cast %211 : vector<1x32x64xf32> to vector<32x64xf32>
    %cst_134 = arith.constant dense<0.000000e+00> : vector<32x64xf32>
    %213 = tpu.matmul %209, %212, %cst_134 {dimension_numbers = #tpu.dot_dimension_numbers<[1], [0], [0], [1], [0, 0, 1, 1], [], []>} : vector<32x32xf32>, vector<32x64xf32>, vector<32x64xf32> -> vector<32x64xf32>
    %c7_135 = arith.constant 7 : index
    %c0_136 = arith.constant 0 : index
    %c0_137 = arith.constant 0 : index
    %214 = vector.load %arg6[%c7_135, %c0_136, %c0_137] : memref<16x1x64xf32, #tpu.memory_space<vmem>>, vector<1x1x64xf32>
    %215 = vector.shape_cast %214 : vector<1x1x64xf32> to vector<1x64xf32>
    %216 = vector.broadcast %215 : vector<1x64xf32> to vector<32x64xf32>
    %217 = arith.addf %213, %216 : vector<32x64xf32>
    %218 = vector.extract_strided_slice %217 {offsets = [0, 0], sizes = [32, 32], strides = [1, 1]} : vector<32x64xf32> to vector<32x32xf32>
    %219 = math.tanh %218 : vector<32x32xf32>
    %220 = vector.extract_strided_slice %217 {offsets = [0, 32], sizes = [32, 32], strides = [1, 1]} : vector<32x64xf32> to vector<32x32xf32>
    %221 = arith.negf %220 : vector<32x32xf32>
    %222 = math.exp %221 : vector<32x32xf32>
    %cst_138 = arith.constant 1.000000e+00 : f32
    %223 = vector.broadcast %cst_138 : f32 to vector<32x32xf32>
    %224 = arith.addf %223, %222 : vector<32x32xf32>
    %225 = arith.divf %223, %224 : vector<32x32xf32>
    %226 = arith.mulf %219, %225 : vector<32x32xf32>
    %cst_139 = arith.constant dense<0.000000e+00> : vector<32x32xf32>
    %227 = tpu.matmul %226, %17, %cst_139 {dimension_numbers = #tpu.dot_dimension_numbers<[1], [0], [0], [1], [0, 0, 1, 1], [], []>} : vector<32x32xf32>, vector<32x32xf32>, vector<32x32xf32> -> vector<32x32xf32>
    %228 = vector.broadcast %18 : vector<1x32xf32> to vector<32x32xf32>
    %229 = arith.addf %227, %228 : vector<32x32xf32>
    %230 = arith.addf %210, %229 : vector<32x32xf32>
    %c8 = arith.constant 8 : index
    %c0_140 = arith.constant 0 : index
    %c0_141 = arith.constant 0 : index
    %231 = vector.load %arg4[%c8, %c0_140, %c0_141] : memref<16x32x64xf32, #tpu.memory_space<vmem>>, vector<1x32x64xf32>
    %232 = vector.shape_cast %231 : vector<1x32x64xf32> to vector<32x64xf32>
    %cst_142 = arith.constant dense<0.000000e+00> : vector<32x64xf32>
    %233 = tpu.matmul %229, %232, %cst_142 {dimension_numbers = #tpu.dot_dimension_numbers<[1], [0], [0], [1], [0, 0, 1, 1], [], []>} : vector<32x32xf32>, vector<32x64xf32>, vector<32x64xf32> -> vector<32x64xf32>
    %c8_143 = arith.constant 8 : index
    %c0_144 = arith.constant 0 : index
    %c0_145 = arith.constant 0 : index
    %234 = vector.load %arg6[%c8_143, %c0_144, %c0_145] : memref<16x1x64xf32, #tpu.memory_space<vmem>>, vector<1x1x64xf32>
    %235 = vector.shape_cast %234 : vector<1x1x64xf32> to vector<1x64xf32>
    %236 = vector.broadcast %235 : vector<1x64xf32> to vector<32x64xf32>
    %237 = arith.addf %233, %236 : vector<32x64xf32>
    %238 = vector.extract_strided_slice %237 {offsets = [0, 0], sizes = [32, 32], strides = [1, 1]} : vector<32x64xf32> to vector<32x32xf32>
    %239 = math.tanh %238 : vector<32x32xf32>
    %240 = vector.extract_strided_slice %237 {offsets = [0, 32], sizes = [32, 32], strides = [1, 1]} : vector<32x64xf32> to vector<32x32xf32>
    %241 = arith.negf %240 : vector<32x32xf32>
    %242 = math.exp %241 : vector<32x32xf32>
    %cst_146 = arith.constant 1.000000e+00 : f32
    %243 = vector.broadcast %cst_146 : f32 to vector<32x32xf32>
    %244 = arith.addf %243, %242 : vector<32x32xf32>
    %245 = arith.divf %243, %244 : vector<32x32xf32>
    %246 = arith.mulf %239, %245 : vector<32x32xf32>
    %cst_147 = arith.constant dense<0.000000e+00> : vector<32x32xf32>
    %247 = tpu.matmul %246, %17, %cst_147 {dimension_numbers = #tpu.dot_dimension_numbers<[1], [0], [0], [1], [0, 0, 1, 1], [], []>} : vector<32x32xf32>, vector<32x32xf32>, vector<32x32xf32> -> vector<32x32xf32>
    %248 = vector.broadcast %18 : vector<1x32xf32> to vector<32x32xf32>
    %249 = arith.addf %247, %248 : vector<32x32xf32>
    %250 = arith.addf %230, %249 : vector<32x32xf32>
    %c9 = arith.constant 9 : index
    %c0_148 = arith.constant 0 : index
    %c0_149 = arith.constant 0 : index
    %251 = vector.load %arg4[%c9, %c0_148, %c0_149] : memref<16x32x64xf32, #tpu.memory_space<vmem>>, vector<1x32x64xf32>
    %252 = vector.shape_cast %251 : vector<1x32x64xf32> to vector<32x64xf32>
    %cst_150 = arith.constant dense<0.000000e+00> : vector<32x64xf32>
    %253 = tpu.matmul %249, %252, %cst_150 {dimension_numbers = #tpu.dot_dimension_numbers<[1], [0], [0], [1], [0, 0, 1, 1], [], []>} : vector<32x32xf32>, vector<32x64xf32>, vector<32x64xf32> -> vector<32x64xf32>
    %c9_151 = arith.constant 9 : index
    %c0_152 = arith.constant 0 : index
    %c0_153 = arith.constant 0 : index
    %254 = vector.load %arg6[%c9_151, %c0_152, %c0_153] : memref<16x1x64xf32, #tpu.memory_space<vmem>>, vector<1x1x64xf32>
    %255 = vector.shape_cast %254 : vector<1x1x64xf32> to vector<1x64xf32>
    %256 = vector.broadcast %255 : vector<1x64xf32> to vector<32x64xf32>
    %257 = arith.addf %253, %256 : vector<32x64xf32>
    %258 = vector.extract_strided_slice %257 {offsets = [0, 0], sizes = [32, 32], strides = [1, 1]} : vector<32x64xf32> to vector<32x32xf32>
    %259 = math.tanh %258 : vector<32x32xf32>
    %260 = vector.extract_strided_slice %257 {offsets = [0, 32], sizes = [32, 32], strides = [1, 1]} : vector<32x64xf32> to vector<32x32xf32>
    %261 = arith.negf %260 : vector<32x32xf32>
    %262 = math.exp %261 : vector<32x32xf32>
    %cst_154 = arith.constant 1.000000e+00 : f32
    %263 = vector.broadcast %cst_154 : f32 to vector<32x32xf32>
    %264 = arith.addf %263, %262 : vector<32x32xf32>
    %265 = arith.divf %263, %264 : vector<32x32xf32>
    %266 = arith.mulf %259, %265 : vector<32x32xf32>
    %cst_155 = arith.constant dense<0.000000e+00> : vector<32x32xf32>
    %267 = tpu.matmul %266, %17, %cst_155 {dimension_numbers = #tpu.dot_dimension_numbers<[1], [0], [0], [1], [0, 0, 1, 1], [], []>} : vector<32x32xf32>, vector<32x32xf32>, vector<32x32xf32> -> vector<32x32xf32>
    %268 = vector.broadcast %18 : vector<1x32xf32> to vector<32x32xf32>
    %269 = arith.addf %267, %268 : vector<32x32xf32>
    %270 = arith.addf %250, %269 : vector<32x32xf32>
    %c10 = arith.constant 10 : index
    %c0_156 = arith.constant 0 : index
    %c0_157 = arith.constant 0 : index
    %271 = vector.load %arg4[%c10, %c0_156, %c0_157] : memref<16x32x64xf32, #tpu.memory_space<vmem>>, vector<1x32x64xf32>
    %272 = vector.shape_cast %271 : vector<1x32x64xf32> to vector<32x64xf32>
    %cst_158 = arith.constant dense<0.000000e+00> : vector<32x64xf32>
    %273 = tpu.matmul %269, %272, %cst_158 {dimension_numbers = #tpu.dot_dimension_numbers<[1], [0], [0], [1], [0, 0, 1, 1], [], []>} : vector<32x32xf32>, vector<32x64xf32>, vector<32x64xf32> -> vector<32x64xf32>
    %c10_159 = arith.constant 10 : index
    %c0_160 = arith.constant 0 : index
    %c0_161 = arith.constant 0 : index
    %274 = vector.load %arg6[%c10_159, %c0_160, %c0_161] : memref<16x1x64xf32, #tpu.memory_space<vmem>>, vector<1x1x64xf32>
    %275 = vector.shape_cast %274 : vector<1x1x64xf32> to vector<1x64xf32>
    %276 = vector.broadcast %275 : vector<1x64xf32> to vector<32x64xf32>
    %277 = arith.addf %273, %276 : vector<32x64xf32>
    %278 = vector.extract_strided_slice %277 {offsets = [0, 0], sizes = [32, 32], strides = [1, 1]} : vector<32x64xf32> to vector<32x32xf32>
    %279 = math.tanh %278 : vector<32x32xf32>
    %280 = vector.extract_strided_slice %277 {offsets = [0, 32], sizes = [32, 32], strides = [1, 1]} : vector<32x64xf32> to vector<32x32xf32>
    %281 = arith.negf %280 : vector<32x32xf32>
    %282 = math.exp %281 : vector<32x32xf32>
    %cst_162 = arith.constant 1.000000e+00 : f32
    %283 = vector.broadcast %cst_162 : f32 to vector<32x32xf32>
    %284 = arith.addf %283, %282 : vector<32x32xf32>
    %285 = arith.divf %283, %284 : vector<32x32xf32>
    %286 = arith.mulf %279, %285 : vector<32x32xf32>
    %cst_163 = arith.constant dense<0.000000e+00> : vector<32x32xf32>
    %287 = tpu.matmul %286, %17, %cst_163 {dimension_numbers = #tpu.dot_dimension_numbers<[1], [0], [0], [1], [0, 0, 1, 1], [], []>} : vector<32x32xf32>, vector<32x32xf32>, vector<32x32xf32> -> vector<32x32xf32>
    %288 = vector.broadcast %18 : vector<1x32xf32> to vector<32x32xf32>
    %289 = arith.addf %287, %288 : vector<32x32xf32>
    %290 = arith.addf %270, %289 : vector<32x32xf32>
    %c11 = arith.constant 11 : index
    %c0_164 = arith.constant 0 : index
    %c0_165 = arith.constant 0 : index
    %291 = vector.load %arg4[%c11, %c0_164, %c0_165] : memref<16x32x64xf32, #tpu.memory_space<vmem>>, vector<1x32x64xf32>
    %292 = vector.shape_cast %291 : vector<1x32x64xf32> to vector<32x64xf32>
    %cst_166 = arith.constant dense<0.000000e+00> : vector<32x64xf32>
    %293 = tpu.matmul %289, %292, %cst_166 {dimension_numbers = #tpu.dot_dimension_numbers<[1], [0], [0], [1], [0, 0, 1, 1], [], []>} : vector<32x32xf32>, vector<32x64xf32>, vector<32x64xf32> -> vector<32x64xf32>
    %c11_167 = arith.constant 11 : index
    %c0_168 = arith.constant 0 : index
    %c0_169 = arith.constant 0 : index
    %294 = vector.load %arg6[%c11_167, %c0_168, %c0_169] : memref<16x1x64xf32, #tpu.memory_space<vmem>>, vector<1x1x64xf32>
    %295 = vector.shape_cast %294 : vector<1x1x64xf32> to vector<1x64xf32>
    %296 = vector.broadcast %295 : vector<1x64xf32> to vector<32x64xf32>
    %297 = arith.addf %293, %296 : vector<32x64xf32>
    %298 = vector.extract_strided_slice %297 {offsets = [0, 0], sizes = [32, 32], strides = [1, 1]} : vector<32x64xf32> to vector<32x32xf32>
    %299 = math.tanh %298 : vector<32x32xf32>
    %300 = vector.extract_strided_slice %297 {offsets = [0, 32], sizes = [32, 32], strides = [1, 1]} : vector<32x64xf32> to vector<32x32xf32>
    %301 = arith.negf %300 : vector<32x32xf32>
    %302 = math.exp %301 : vector<32x32xf32>
    %cst_170 = arith.constant 1.000000e+00 : f32
    %303 = vector.broadcast %cst_170 : f32 to vector<32x32xf32>
    %304 = arith.addf %303, %302 : vector<32x32xf32>
    %305 = arith.divf %303, %304 : vector<32x32xf32>
    %306 = arith.mulf %299, %305 : vector<32x32xf32>
    %cst_171 = arith.constant dense<0.000000e+00> : vector<32x32xf32>
    %307 = tpu.matmul %306, %17, %cst_171 {dimension_numbers = #tpu.dot_dimension_numbers<[1], [0], [0], [1], [0, 0, 1, 1], [], []>} : vector<32x32xf32>, vector<32x32xf32>, vector<32x32xf32> -> vector<32x32xf32>
    %308 = vector.broadcast %18 : vector<1x32xf32> to vector<32x32xf32>
    %309 = arith.addf %307, %308 : vector<32x32xf32>
    %310 = arith.addf %290, %309 : vector<32x32xf32>
    %c12 = arith.constant 12 : index
    %c0_172 = arith.constant 0 : index
    %c0_173 = arith.constant 0 : index
    %311 = vector.load %arg4[%c12, %c0_172, %c0_173] : memref<16x32x64xf32, #tpu.memory_space<vmem>>, vector<1x32x64xf32>
    %312 = vector.shape_cast %311 : vector<1x32x64xf32> to vector<32x64xf32>
    %cst_174 = arith.constant dense<0.000000e+00> : vector<32x64xf32>
    %313 = tpu.matmul %309, %312, %cst_174 {dimension_numbers = #tpu.dot_dimension_numbers<[1], [0], [0], [1], [0, 0, 1, 1], [], []>} : vector<32x32xf32>, vector<32x64xf32>, vector<32x64xf32> -> vector<32x64xf32>
    %c12_175 = arith.constant 12 : index
    %c0_176 = arith.constant 0 : index
    %c0_177 = arith.constant 0 : index
    %314 = vector.load %arg6[%c12_175, %c0_176, %c0_177] : memref<16x1x64xf32, #tpu.memory_space<vmem>>, vector<1x1x64xf32>
    %315 = vector.shape_cast %314 : vector<1x1x64xf32> to vector<1x64xf32>
    %316 = vector.broadcast %315 : vector<1x64xf32> to vector<32x64xf32>
    %317 = arith.addf %313, %316 : vector<32x64xf32>
    %318 = vector.extract_strided_slice %317 {offsets = [0, 0], sizes = [32, 32], strides = [1, 1]} : vector<32x64xf32> to vector<32x32xf32>
    %319 = math.tanh %318 : vector<32x32xf32>
    %320 = vector.extract_strided_slice %317 {offsets = [0, 32], sizes = [32, 32], strides = [1, 1]} : vector<32x64xf32> to vector<32x32xf32>
    %321 = arith.negf %320 : vector<32x32xf32>
    %322 = math.exp %321 : vector<32x32xf32>
    %cst_178 = arith.constant 1.000000e+00 : f32
    %323 = vector.broadcast %cst_178 : f32 to vector<32x32xf32>
    %324 = arith.addf %323, %322 : vector<32x32xf32>
    %325 = arith.divf %323, %324 : vector<32x32xf32>
    %326 = arith.mulf %319, %325 : vector<32x32xf32>
    %cst_179 = arith.constant dense<0.000000e+00> : vector<32x32xf32>
    %327 = tpu.matmul %326, %17, %cst_179 {dimension_numbers = #tpu.dot_dimension_numbers<[1], [0], [0], [1], [0, 0, 1, 1], [], []>} : vector<32x32xf32>, vector<32x32xf32>, vector<32x32xf32> -> vector<32x32xf32>
    %328 = vector.broadcast %18 : vector<1x32xf32> to vector<32x32xf32>
    %329 = arith.addf %327, %328 : vector<32x32xf32>
    %330 = arith.addf %310, %329 : vector<32x32xf32>
    %c13 = arith.constant 13 : index
    %c0_180 = arith.constant 0 : index
    %c0_181 = arith.constant 0 : index
    %331 = vector.load %arg4[%c13, %c0_180, %c0_181] : memref<16x32x64xf32, #tpu.memory_space<vmem>>, vector<1x32x64xf32>
    %332 = vector.shape_cast %331 : vector<1x32x64xf32> to vector<32x64xf32>
    %cst_182 = arith.constant dense<0.000000e+00> : vector<32x64xf32>
    %333 = tpu.matmul %329, %332, %cst_182 {dimension_numbers = #tpu.dot_dimension_numbers<[1], [0], [0], [1], [0, 0, 1, 1], [], []>} : vector<32x32xf32>, vector<32x64xf32>, vector<32x64xf32> -> vector<32x64xf32>
    %c13_183 = arith.constant 13 : index
    %c0_184 = arith.constant 0 : index
    %c0_185 = arith.constant 0 : index
    %334 = vector.load %arg6[%c13_183, %c0_184, %c0_185] : memref<16x1x64xf32, #tpu.memory_space<vmem>>, vector<1x1x64xf32>
    %335 = vector.shape_cast %334 : vector<1x1x64xf32> to vector<1x64xf32>
    %336 = vector.broadcast %335 : vector<1x64xf32> to vector<32x64xf32>
    %337 = arith.addf %333, %336 : vector<32x64xf32>
    %338 = vector.extract_strided_slice %337 {offsets = [0, 0], sizes = [32, 32], strides = [1, 1]} : vector<32x64xf32> to vector<32x32xf32>
    %339 = math.tanh %338 : vector<32x32xf32>
    %340 = vector.extract_strided_slice %337 {offsets = [0, 32], sizes = [32, 32], strides = [1, 1]} : vector<32x64xf32> to vector<32x32xf32>
    %341 = arith.negf %340 : vector<32x32xf32>
    %342 = math.exp %341 : vector<32x32xf32>
    %cst_186 = arith.constant 1.000000e+00 : f32
    %343 = vector.broadcast %cst_186 : f32 to vector<32x32xf32>
    %344 = arith.addf %343, %342 : vector<32x32xf32>
    %345 = arith.divf %343, %344 : vector<32x32xf32>
    %346 = arith.mulf %339, %345 : vector<32x32xf32>
    %cst_187 = arith.constant dense<0.000000e+00> : vector<32x32xf32>
    %347 = tpu.matmul %346, %17, %cst_187 {dimension_numbers = #tpu.dot_dimension_numbers<[1], [0], [0], [1], [0, 0, 1, 1], [], []>} : vector<32x32xf32>, vector<32x32xf32>, vector<32x32xf32> -> vector<32x32xf32>
    %348 = vector.broadcast %18 : vector<1x32xf32> to vector<32x32xf32>
    %349 = arith.addf %347, %348 : vector<32x32xf32>
    %350 = arith.addf %330, %349 : vector<32x32xf32>
    %c14 = arith.constant 14 : index
    %c0_188 = arith.constant 0 : index
    %c0_189 = arith.constant 0 : index
    %351 = vector.load %arg4[%c14, %c0_188, %c0_189] : memref<16x32x64xf32, #tpu.memory_space<vmem>>, vector<1x32x64xf32>
    %352 = vector.shape_cast %351 : vector<1x32x64xf32> to vector<32x64xf32>
    %cst_190 = arith.constant dense<0.000000e+00> : vector<32x64xf32>
    %353 = tpu.matmul %349, %352, %cst_190 {dimension_numbers = #tpu.dot_dimension_numbers<[1], [0], [0], [1], [0, 0, 1, 1], [], []>} : vector<32x32xf32>, vector<32x64xf32>, vector<32x64xf32> -> vector<32x64xf32>
    %c14_191 = arith.constant 14 : index
    %c0_192 = arith.constant 0 : index
    %c0_193 = arith.constant 0 : index
    %354 = vector.load %arg6[%c14_191, %c0_192, %c0_193] : memref<16x1x64xf32, #tpu.memory_space<vmem>>, vector<1x1x64xf32>
    %355 = vector.shape_cast %354 : vector<1x1x64xf32> to vector<1x64xf32>
    %356 = vector.broadcast %355 : vector<1x64xf32> to vector<32x64xf32>
    %357 = arith.addf %353, %356 : vector<32x64xf32>
    %358 = vector.extract_strided_slice %357 {offsets = [0, 0], sizes = [32, 32], strides = [1, 1]} : vector<32x64xf32> to vector<32x32xf32>
    %359 = math.tanh %358 : vector<32x32xf32>
    %360 = vector.extract_strided_slice %357 {offsets = [0, 32], sizes = [32, 32], strides = [1, 1]} : vector<32x64xf32> to vector<32x32xf32>
    %361 = arith.negf %360 : vector<32x32xf32>
    %362 = math.exp %361 : vector<32x32xf32>
    %cst_194 = arith.constant 1.000000e+00 : f32
    %363 = vector.broadcast %cst_194 : f32 to vector<32x32xf32>
    %364 = arith.addf %363, %362 : vector<32x32xf32>
    %365 = arith.divf %363, %364 : vector<32x32xf32>
    %366 = arith.mulf %359, %365 : vector<32x32xf32>
    %cst_195 = arith.constant dense<0.000000e+00> : vector<32x32xf32>
    %367 = tpu.matmul %366, %17, %cst_195 {dimension_numbers = #tpu.dot_dimension_numbers<[1], [0], [0], [1], [0, 0, 1, 1], [], []>} : vector<32x32xf32>, vector<32x32xf32>, vector<32x32xf32> -> vector<32x32xf32>
    %368 = vector.broadcast %18 : vector<1x32xf32> to vector<32x32xf32>
    %369 = arith.addf %367, %368 : vector<32x32xf32>
    %370 = arith.addf %350, %369 : vector<32x32xf32>
    %c15 = arith.constant 15 : index
    %c0_196 = arith.constant 0 : index
    %c0_197 = arith.constant 0 : index
    %371 = vector.load %arg4[%c15, %c0_196, %c0_197] : memref<16x32x64xf32, #tpu.memory_space<vmem>>, vector<1x32x64xf32>
    %372 = vector.shape_cast %371 : vector<1x32x64xf32> to vector<32x64xf32>
    %cst_198 = arith.constant dense<0.000000e+00> : vector<32x64xf32>
    %373 = tpu.matmul %369, %372, %cst_198 {dimension_numbers = #tpu.dot_dimension_numbers<[1], [0], [0], [1], [0, 0, 1, 1], [], []>} : vector<32x32xf32>, vector<32x64xf32>, vector<32x64xf32> -> vector<32x64xf32>
    %c15_199 = arith.constant 15 : index
    %c0_200 = arith.constant 0 : index
    %c0_201 = arith.constant 0 : index
    %374 = vector.load %arg6[%c15_199, %c0_200, %c0_201] : memref<16x1x64xf32, #tpu.memory_space<vmem>>, vector<1x1x64xf32>
    %375 = vector.shape_cast %374 : vector<1x1x64xf32> to vector<1x64xf32>
    %376 = vector.broadcast %375 : vector<1x64xf32> to vector<32x64xf32>
    %377 = arith.addf %373, %376 : vector<32x64xf32>
    %378 = vector.extract_strided_slice %377 {offsets = [0, 0], sizes = [32, 32], strides = [1, 1]} : vector<32x64xf32> to vector<32x32xf32>
    %379 = math.tanh %378 : vector<32x32xf32>
    %380 = vector.extract_strided_slice %377 {offsets = [0, 32], sizes = [32, 32], strides = [1, 1]} : vector<32x64xf32> to vector<32x32xf32>
    %381 = arith.negf %380 : vector<32x32xf32>
    %382 = math.exp %381 : vector<32x32xf32>
    %cst_202 = arith.constant 1.000000e+00 : f32
    %383 = vector.broadcast %cst_202 : f32 to vector<32x32xf32>
    %384 = arith.addf %383, %382 : vector<32x32xf32>
    %385 = arith.divf %383, %384 : vector<32x32xf32>
    %386 = arith.mulf %379, %385 : vector<32x32xf32>
    %cst_203 = arith.constant dense<0.000000e+00> : vector<32x32xf32>
    %387 = tpu.matmul %386, %17, %cst_203 {dimension_numbers = #tpu.dot_dimension_numbers<[1], [0], [0], [1], [0, 0, 1, 1], [], []>} : vector<32x32xf32>, vector<32x32xf32>, vector<32x32xf32> -> vector<32x32xf32>
    %388 = vector.broadcast %18 : vector<1x32xf32> to vector<32x32xf32>
    %389 = arith.addf %387, %388 : vector<32x32xf32>
    %390 = arith.addf %370, %389 : vector<32x32xf32>
    %c0_204 = arith.constant 0 : index
    %c0_205 = arith.constant 0 : index
    %391 = vector.load %arg9[%c0_204, %c0_205] : memref<1x32xf32, #tpu.memory_space<vmem>>, vector<1x32xf32>
    %392 = vector.broadcast %391 : vector<1x32xf32> to vector<32x32xf32>
    %393 = arith.mulf %390, %392 : vector<32x32xf32>
    %c0_206 = arith.constant 0 : index
    %c0_207 = arith.constant 0 : index
    %394 = vector.load %arg10[%c0_206, %c0_207] : memref<1x32xf32, #tpu.memory_space<vmem>>, vector<1x32xf32>
    %395 = vector.broadcast %394 : vector<1x32xf32> to vector<32x32xf32>
    %396 = arith.addf %393, %395 : vector<32x32xf32>
    %c0_208 = arith.constant 0 : index
    %c0_209 = arith.constant 0 : index
    %397 = vector.load %arg11[%c0_208, %c0_209] : memref<32x128xf32, #tpu.memory_space<vmem>>, vector<32x128xf32>
    %c0_210 = arith.constant 0 : index
    %c0_211 = arith.constant 0 : index
    %398 = vector.load %arg14[%c0_210, %c0_211] : memref<32x128xf32, #tpu.memory_space<vmem>>, vector<32x128xf32>
    %c0_212 = arith.constant 0 : index
    %c0_213 = arith.constant 0 : index
    %399 = vector.load %arg12[%c0_212, %c0_213] : memref<32x128xf32, #tpu.memory_space<vmem>>, vector<32x128xf32>
    %c0_214 = arith.constant 0 : index
    %c0_215 = arith.constant 0 : index
    %400 = vector.load %arg15[%c0_214, %c0_215] : memref<32x128xf32, #tpu.memory_space<vmem>>, vector<32x128xf32>
    %c0_216 = arith.constant 0 : index
    %c0_217 = arith.constant 0 : index
    %401 = vector.load %arg13[%c0_216, %c0_217] : memref<1x128xf32, #tpu.memory_space<vmem>>, vector<1x128xf32>
    %c0_218 = arith.constant 0 : index
    %c0_219 = arith.constant 0 : index
    %402 = vector.load %arg16[%c0_218, %c0_219] : memref<1x128xf32, #tpu.memory_space<vmem>>, vector<1x128xf32>
    %cst_220 = arith.constant dense<0.000000e+00> : vector<32x128xf32>
    %403 = tpu.matmul %396, %397, %cst_220 {dimension_numbers = #tpu.dot_dimension_numbers<[1], [0], [0], [1], [0, 0, 1, 1], [], []>} : vector<32x32xf32>, vector<32x128xf32>, vector<32x128xf32> -> vector<32x128xf32>
    %404 = vector.broadcast %401 : vector<1x128xf32> to vector<32x128xf32>
    %405 = arith.addf %403, %404 : vector<32x128xf32>
    %c0_221 = arith.constant 0 : index
    %c0_222 = arith.constant 0 : index
    %406 = vector.load %arg20[%c0_221, %c0_222] : memref<32x128xf32, #tpu.memory_space<vmem>>, vector<32x128xf32>
    tpu.vector_store %arg20[%c0_221, %c0_222], %405 {strides = array<i32>} : memref<32x128xf32, #tpu.memory_space<vmem>>, vector<32x128xf32>,
    %cst_223 = arith.constant 0.000000e+00 : f32
    %407 = vector.broadcast %cst_223 : f32 to vector<2x32xf32>
    %cst_224 = arith.constant 0.000000e+00 : f32
    %408 = vector.broadcast %cst_224 : f32 to vector<2x32xf32>
    %cst_225 = arith.constant 0.000000e+00 : f32
    %409 = vector.broadcast %cst_225 : f32 to vector<2x32xf32>
    %cst_226 = arith.constant 0.000000e+00 : f32
    %410 = vector.broadcast %cst_226 : f32 to vector<2x32xf32>
    %c0_227 = arith.constant 0 : index
    %c0_228 = arith.constant 0 : index
    %411 = vector.load %arg20[%c0_227, %c0_228] : memref<32x128xf32, #tpu.memory_space<vmem>>, vector<2x128xf32>
    %cst_229 = arith.constant dense<0.000000e+00> : vector<2x128xf32>
    %412 = tpu.matmul %407, %399, %cst_229 {dimension_numbers = #tpu.dot_dimension_numbers<[1], [0], [0], [1], [0, 0, 1, 1], [], []>} : vector<2x32xf32>, vector<32x128xf32>, vector<2x128xf32> -> vector<2x128xf32>
    %413 = arith.addf %411, %412 : vector<2x128xf32>
    %414 = vector.extract_strided_slice %413 {offsets = [0, 0], sizes = [2, 96], strides = [1, 1]} : vector<2x128xf32> to vector<2x96xf32>
    %415 = arith.negf %414 : vector<2x96xf32>
    %416 = math.exp %415 : vector<2x96xf32>
    %cst_230 = arith.constant 1.000000e+00 : f32
    %417 = vector.broadcast %cst_230 : f32 to vector<2x96xf32>
    %418 = arith.addf %417, %416 : vector<2x96xf32>
    %419 = arith.divf %417, %418 : vector<2x96xf32>
    %420 = vector.extract_strided_slice %419 {offsets = [0, 0], sizes = [2, 32], strides = [1, 1]} : vector<2x96xf32> to vector<2x32xf32>
    %421 = vector.extract_strided_slice %419 {offsets = [0, 32], sizes = [2, 32], strides = [1, 1]} : vector<2x96xf32> to vector<2x32xf32>
    %422 = vector.extract_strided_slice %419 {offsets = [0, 64], sizes = [2, 32], strides = [1, 1]} : vector<2x96xf32> to vector<2x32xf32>
    %423 = vector.extract_strided_slice %413 {offsets = [0, 96], sizes = [2, 32], strides = [1, 1]} : vector<2x128xf32> to vector<2x32xf32>
    %424 = math.tanh %423 : vector<2x32xf32>
    %425 = arith.mulf %421, %409 : vector<2x32xf32>
    %426 = arith.mulf %420, %424 : vector<2x32xf32>
    %427 = arith.addf %425, %426 : vector<2x32xf32>
    %428 = math.tanh %427 : vector<2x32xf32>
    %429 = arith.mulf %422, %428 : vector<2x32xf32>
    %cst_231 = arith.constant dense<0.000000e+00> : vector<2x128xf32>
    %430 = tpu.matmul %429, %398, %cst_231 {dimension_numbers = #tpu.dot_dimension_numbers<[1], [0], [0], [1], [0, 0, 1, 1], [], []>} : vector<2x32xf32>, vector<32x128xf32>, vector<2x128xf32> -> vector<2x128xf32>
    %cst_232 = arith.constant dense<0.000000e+00> : vector<2x128xf32>
    %431 = tpu.matmul %408, %400, %cst_232 {dimension_numbers = #tpu.dot_dimension_numbers<[1], [0], [0], [1], [0, 0, 1, 1], [], []>} : vector<2x32xf32>, vector<32x128xf32>, vector<2x128xf32> -> vector<2x128xf32>
    %432 = arith.addf %430, %431 : vector<2x128xf32>
    %433 = vector.broadcast %402 : vector<1x128xf32> to vector<2x128xf32>
    %434 = arith.addf %432, %433 : vector<2x128xf32>
    %435 = vector.extract_strided_slice %434 {offsets = [0, 0], sizes = [2, 96], strides = [1, 1]} : vector<2x128xf32> to vector<2x96xf32>
    %436 = arith.negf %435 : vector<2x96xf32>
    %437 = math.exp %436 : vector<2x96xf32>
    %cst_233 = arith.constant 1.000000e+00 : f32
    %438 = vector.broadcast %cst_233 : f32 to vector<2x96xf32>
    %439 = arith.addf %438, %437 : vector<2x96xf32>
    %440 = arith.divf %438, %439 : vector<2x96xf32>
    %441 = vector.extract_strided_slice %440 {offsets = [0, 0], sizes = [2, 32], strides = [1, 1]} : vector<2x96xf32> to vector<2x32xf32>
    %442 = vector.extract_strided_slice %440 {offsets = [0, 32], sizes = [2, 32], strides = [1, 1]} : vector<2x96xf32> to vector<2x32xf32>
    %443 = vector.extract_strided_slice %440 {offsets = [0, 64], sizes = [2, 32], strides = [1, 1]} : vector<2x96xf32> to vector<2x32xf32>
    %444 = vector.extract_strided_slice %434 {offsets = [0, 96], sizes = [2, 32], strides = [1, 1]} : vector<2x128xf32> to vector<2x32xf32>
    %445 = math.tanh %444 : vector<2x32xf32>
    %446 = arith.mulf %442, %410 : vector<2x32xf32>
    %447 = arith.mulf %441, %445 : vector<2x32xf32>
    %448 = arith.addf %446, %447 : vector<2x32xf32>
    %449 = math.tanh %448 : vector<2x32xf32>
    %450 = arith.mulf %443, %449 : vector<2x32xf32>
    %c2_234 = arith.constant 2 : index
    %c0_235 = arith.constant 0 : index
    %451 = vector.load %arg20[%c2_234, %c0_235] : memref<32x128xf32, #tpu.memory_space<vmem>>, vector<2x128xf32>
    %cst_236 = arith.constant dense<0.000000e+00> : vector<2x128xf32>
    %452 = tpu.matmul %429, %399, %cst_236 {dimension_numbers = #tpu.dot_dimension_numbers<[1], [0], [0], [1], [0, 0, 1, 1], [], []>} : vector<2x32xf32>, vector<32x128xf32>, vector<2x128xf32> -> vector<2x128xf32>
    %453 = arith.addf %451, %452 : vector<2x128xf32>
    %454 = vector.extract_strided_slice %453 {offsets = [0, 0], sizes = [2, 96], strides = [1, 1]} : vector<2x128xf32> to vector<2x96xf32>
    %455 = arith.negf %454 : vector<2x96xf32>
    %456 = math.exp %455 : vector<2x96xf32>
    %cst_237 = arith.constant 1.000000e+00 : f32
    %457 = vector.broadcast %cst_237 : f32 to vector<2x96xf32>
    %458 = arith.addf %457, %456 : vector<2x96xf32>
    %459 = arith.divf %457, %458 : vector<2x96xf32>
    %460 = vector.extract_strided_slice %459 {offsets = [0, 0], sizes = [2, 32], strides = [1, 1]} : vector<2x96xf32> to vector<2x32xf32>
    %461 = vector.extract_strided_slice %459 {offsets = [0, 32], sizes = [2, 32], strides = [1, 1]} : vector<2x96xf32> to vector<2x32xf32>
    %462 = vector.extract_strided_slice %459 {offsets = [0, 64], sizes = [2, 32], strides = [1, 1]} : vector<2x96xf32> to vector<2x32xf32>
    %463 = vector.extract_strided_slice %453 {offsets = [0, 96], sizes = [2, 32], strides = [1, 1]} : vector<2x128xf32> to vector<2x32xf32>
    %464 = math.tanh %463 : vector<2x32xf32>
    %465 = arith.mulf %461, %427 : vector<2x32xf32>
    %466 = arith.mulf %460, %464 : vector<2x32xf32>
    %467 = arith.addf %465, %466 : vector<2x32xf32>
    %468 = math.tanh %467 : vector<2x32xf32>
    %469 = arith.mulf %462, %468 : vector<2x32xf32>
    %cst_238 = arith.constant dense<0.000000e+00> : vector<2x128xf32>
    %470 = tpu.matmul %469, %398, %cst_238 {dimension_numbers = #tpu.dot_dimension_numbers<[1], [0], [0], [1], [0, 0, 1, 1], [], []>} : vector<2x32xf32>, vector<32x128xf32>, vector<2x128xf32> -> vector<2x128xf32>
    %cst_239 = arith.constant dense<0.000000e+00> : vector<2x128xf32>
    %471 = tpu.matmul %450, %400, %cst_239 {dimension_numbers = #tpu.dot_dimension_numbers<[1], [0], [0], [1], [0, 0, 1, 1], [], []>} : vector<2x32xf32>, vector<32x128xf32>, vector<2x128xf32> -> vector<2x128xf32>
    %472 = arith.addf %470, %471 : vector<2x128xf32>
    %473 = vector.broadcast %402 : vector<1x128xf32> to vector<2x128xf32>
    %474 = arith.addf %472, %473 : vector<2x128xf32>
    %475 = vector.extract_strided_slice %474 {offsets = [0, 0], sizes = [2, 96], strides = [1, 1]} : vector<2x128xf32> to vector<2x96xf32>
    %476 = arith.negf %475 : vector<2x96xf32>
    %477 = math.exp %476 : vector<2x96xf32>
    %cst_240 = arith.constant 1.000000e+00 : f32
    %478 = vector.broadcast %cst_240 : f32 to vector<2x96xf32>
    %479 = arith.addf %478, %477 : vector<2x96xf32>
    %480 = arith.divf %478, %479 : vector<2x96xf32>
    %481 = vector.extract_strided_slice %480 {offsets = [0, 0], sizes = [2, 32], strides = [1, 1]} : vector<2x96xf32> to vector<2x32xf32>
    %482 = vector.extract_strided_slice %480 {offsets = [0, 32], sizes = [2, 32], strides = [1, 1]} : vector<2x96xf32> to vector<2x32xf32>
    %483 = vector.extract_strided_slice %480 {offsets = [0, 64], sizes = [2, 32], strides = [1, 1]} : vector<2x96xf32> to vector<2x32xf32>
    %484 = vector.extract_strided_slice %474 {offsets = [0, 96], sizes = [2, 32], strides = [1, 1]} : vector<2x128xf32> to vector<2x32xf32>
    %485 = math.tanh %484 : vector<2x32xf32>
    %486 = arith.mulf %482, %448 : vector<2x32xf32>
    %487 = arith.mulf %481, %485 : vector<2x32xf32>
    %488 = arith.addf %486, %487 : vector<2x32xf32>
    %489 = math.tanh %488 : vector<2x32xf32>
    %490 = arith.mulf %483, %489 : vector<2x32xf32>
    %c4_241 = arith.constant 4 : index
    %c0_242 = arith.constant 0 : index
    %491 = vector.load %arg20[%c4_241, %c0_242] : memref<32x128xf32, #tpu.memory_space<vmem>>, vector<2x128xf32>
    %cst_243 = arith.constant dense<0.000000e+00> : vector<2x128xf32>
    %492 = tpu.matmul %469, %399, %cst_243 {dimension_numbers = #tpu.dot_dimension_numbers<[1], [0], [0], [1], [0, 0, 1, 1], [], []>} : vector<2x32xf32>, vector<32x128xf32>, vector<2x128xf32> -> vector<2x128xf32>
    %493 = arith.addf %491, %492 : vector<2x128xf32>
    %494 = vector.extract_strided_slice %493 {offsets = [0, 0], sizes = [2, 96], strides = [1, 1]} : vector<2x128xf32> to vector<2x96xf32>
    %495 = arith.negf %494 : vector<2x96xf32>
    %496 = math.exp %495 : vector<2x96xf32>
    %cst_244 = arith.constant 1.000000e+00 : f32
    %497 = vector.broadcast %cst_244 : f32 to vector<2x96xf32>
    %498 = arith.addf %497, %496 : vector<2x96xf32>
    %499 = arith.divf %497, %498 : vector<2x96xf32>
    %500 = vector.extract_strided_slice %499 {offsets = [0, 0], sizes = [2, 32], strides = [1, 1]} : vector<2x96xf32> to vector<2x32xf32>
    %501 = vector.extract_strided_slice %499 {offsets = [0, 32], sizes = [2, 32], strides = [1, 1]} : vector<2x96xf32> to vector<2x32xf32>
    %502 = vector.extract_strided_slice %499 {offsets = [0, 64], sizes = [2, 32], strides = [1, 1]} : vector<2x96xf32> to vector<2x32xf32>
    %503 = vector.extract_strided_slice %493 {offsets = [0, 96], sizes = [2, 32], strides = [1, 1]} : vector<2x128xf32> to vector<2x32xf32>
    %504 = math.tanh %503 : vector<2x32xf32>
    %505 = arith.mulf %501, %467 : vector<2x32xf32>
    %506 = arith.mulf %500, %504 : vector<2x32xf32>
    %507 = arith.addf %505, %506 : vector<2x32xf32>
    %508 = math.tanh %507 : vector<2x32xf32>
    %509 = arith.mulf %502, %508 : vector<2x32xf32>
    %cst_245 = arith.constant dense<0.000000e+00> : vector<2x128xf32>
    %510 = tpu.matmul %509, %398, %cst_245 {dimension_numbers = #tpu.dot_dimension_numbers<[1], [0], [0], [1], [0, 0, 1, 1], [], []>} : vector<2x32xf32>, vector<32x128xf32>, vector<2x128xf32> -> vector<2x128xf32>
    %cst_246 = arith.constant dense<0.000000e+00> : vector<2x128xf32>
    %511 = tpu.matmul %490, %400, %cst_246 {dimension_numbers = #tpu.dot_dimension_numbers<[1], [0], [0], [1], [0, 0, 1, 1], [], []>} : vector<2x32xf32>, vector<32x128xf32>, vector<2x128xf32> -> vector<2x128xf32>
    %512 = arith.addf %510, %511 : vector<2x128xf32>
    %513 = vector.broadcast %402 : vector<1x128xf32> to vector<2x128xf32>
    %514 = arith.addf %512, %513 : vector<2x128xf32>
    %515 = vector.extract_strided_slice %514 {offsets = [0, 0], sizes = [2, 96], strides = [1, 1]} : vector<2x128xf32> to vector<2x96xf32>
    %516 = arith.negf %515 : vector<2x96xf32>
    %517 = math.exp %516 : vector<2x96xf32>
    %cst_247 = arith.constant 1.000000e+00 : f32
    %518 = vector.broadcast %cst_247 : f32 to vector<2x96xf32>
    %519 = arith.addf %518, %517 : vector<2x96xf32>
    %520 = arith.divf %518, %519 : vector<2x96xf32>
    %521 = vector.extract_strided_slice %520 {offsets = [0, 0], sizes = [2, 32], strides = [1, 1]} : vector<2x96xf32> to vector<2x32xf32>
    %522 = vector.extract_strided_slice %520 {offsets = [0, 32], sizes = [2, 32], strides = [1, 1]} : vector<2x96xf32> to vector<2x32xf32>
    %523 = vector.extract_strided_slice %520 {offsets = [0, 64], sizes = [2, 32], strides = [1, 1]} : vector<2x96xf32> to vector<2x32xf32>
    %524 = vector.extract_strided_slice %514 {offsets = [0, 96], sizes = [2, 32], strides = [1, 1]} : vector<2x128xf32> to vector<2x32xf32>
    %525 = math.tanh %524 : vector<2x32xf32>
    %526 = arith.mulf %522, %488 : vector<2x32xf32>
    %527 = arith.mulf %521, %525 : vector<2x32xf32>
    %528 = arith.addf %526, %527 : vector<2x32xf32>
    %529 = math.tanh %528 : vector<2x32xf32>
    %530 = arith.mulf %523, %529 : vector<2x32xf32>
    %c6_248 = arith.constant 6 : index
    %c0_249 = arith.constant 0 : index
    %531 = vector.load %arg20[%c6_248, %c0_249] : memref<32x128xf32, #tpu.memory_space<vmem>>, vector<2x128xf32>
    %cst_250 = arith.constant dense<0.000000e+00> : vector<2x128xf32>
    %532 = tpu.matmul %509, %399, %cst_250 {dimension_numbers = #tpu.dot_dimension_numbers<[1], [0], [0], [1], [0, 0, 1, 1], [], []>} : vector<2x32xf32>, vector<32x128xf32>, vector<2x128xf32> -> vector<2x128xf32>
    %533 = arith.addf %531, %532 : vector<2x128xf32>
    %534 = vector.extract_strided_slice %533 {offsets = [0, 0], sizes = [2, 96], strides = [1, 1]} : vector<2x128xf32> to vector<2x96xf32>
    %535 = arith.negf %534 : vector<2x96xf32>
    %536 = math.exp %535 : vector<2x96xf32>
    %cst_251 = arith.constant 1.000000e+00 : f32
    %537 = vector.broadcast %cst_251 : f32 to vector<2x96xf32>
    %538 = arith.addf %537, %536 : vector<2x96xf32>
    %539 = arith.divf %537, %538 : vector<2x96xf32>
    %540 = vector.extract_strided_slice %539 {offsets = [0, 0], sizes = [2, 32], strides = [1, 1]} : vector<2x96xf32> to vector<2x32xf32>
    %541 = vector.extract_strided_slice %539 {offsets = [0, 32], sizes = [2, 32], strides = [1, 1]} : vector<2x96xf32> to vector<2x32xf32>
    %542 = vector.extract_strided_slice %539 {offsets = [0, 64], sizes = [2, 32], strides = [1, 1]} : vector<2x96xf32> to vector<2x32xf32>
    %543 = vector.extract_strided_slice %533 {offsets = [0, 96], sizes = [2, 32], strides = [1, 1]} : vector<2x128xf32> to vector<2x32xf32>
    %544 = math.tanh %543 : vector<2x32xf32>
    %545 = arith.mulf %541, %507 : vector<2x32xf32>
    %546 = arith.mulf %540, %544 : vector<2x32xf32>
    %547 = arith.addf %545, %546 : vector<2x32xf32>
    %548 = math.tanh %547 : vector<2x32xf32>
    %549 = arith.mulf %542, %548 : vector<2x32xf32>
    %cst_252 = arith.constant dense<0.000000e+00> : vector<2x128xf32>
    %550 = tpu.matmul %549, %398, %cst_252 {dimension_numbers = #tpu.dot_dimension_numbers<[1], [0], [0], [1], [0, 0, 1, 1], [], []>} : vector<2x32xf32>, vector<32x128xf32>, vector<2x128xf32> -> vector<2x128xf32>
    %cst_253 = arith.constant dense<0.000000e+00> : vector<2x128xf32>
    %551 = tpu.matmul %530, %400, %cst_253 {dimension_numbers = #tpu.dot_dimension_numbers<[1], [0], [0], [1], [0, 0, 1, 1], [], []>} : vector<2x32xf32>, vector<32x128xf32>, vector<2x128xf32> -> vector<2x128xf32>
    %552 = arith.addf %550, %551 : vector<2x128xf32>
    %553 = vector.broadcast %402 : vector<1x128xf32> to vector<2x128xf32>
    %554 = arith.addf %552, %553 : vector<2x128xf32>
    %555 = vector.extract_strided_slice %554 {offsets = [0, 0], sizes = [2, 96], strides = [1, 1]} : vector<2x128xf32> to vector<2x96xf32>
    %556 = arith.negf %555 : vector<2x96xf32>
    %557 = math.exp %556 : vector<2x96xf32>
    %cst_254 = arith.constant 1.000000e+00 : f32
    %558 = vector.broadcast %cst_254 : f32 to vector<2x96xf32>
    %559 = arith.addf %558, %557 : vector<2x96xf32>
    %560 = arith.divf %558, %559 : vector<2x96xf32>
    %561 = vector.extract_strided_slice %560 {offsets = [0, 0], sizes = [2, 32], strides = [1, 1]} : vector<2x96xf32> to vector<2x32xf32>
    %562 = vector.extract_strided_slice %560 {offsets = [0, 32], sizes = [2, 32], strides = [1, 1]} : vector<2x96xf32> to vector<2x32xf32>
    %563 = vector.extract_strided_slice %560 {offsets = [0, 64], sizes = [2, 32], strides = [1, 1]} : vector<2x96xf32> to vector<2x32xf32>
    %564 = vector.extract_strided_slice %554 {offsets = [0, 96], sizes = [2, 32], strides = [1, 1]} : vector<2x128xf32> to vector<2x32xf32>
    %565 = math.tanh %564 : vector<2x32xf32>
    %566 = arith.mulf %562, %528 : vector<2x32xf32>
    %567 = arith.mulf %561, %565 : vector<2x32xf32>
    %568 = arith.addf %566, %567 : vector<2x32xf32>
    %569 = math.tanh %568 : vector<2x32xf32>
    %570 = arith.mulf %563, %569 : vector<2x32xf32>
    %c8_255 = arith.constant 8 : index
    %c0_256 = arith.constant 0 : index
    %571 = vector.load %arg20[%c8_255, %c0_256] : memref<32x128xf32, #tpu.memory_space<vmem>>, vector<2x128xf32>
    %cst_257 = arith.constant dense<0.000000e+00> : vector<2x128xf32>
    %572 = tpu.matmul %549, %399, %cst_257 {dimension_numbers = #tpu.dot_dimension_numbers<[1], [0], [0], [1], [0, 0, 1, 1], [], []>} : vector<2x32xf32>, vector<32x128xf32>, vector<2x128xf32> -> vector<2x128xf32>
    %573 = arith.addf %571, %572 : vector<2x128xf32>
    %574 = vector.extract_strided_slice %573 {offsets = [0, 0], sizes = [2, 96], strides = [1, 1]} : vector<2x128xf32> to vector<2x96xf32>
    %575 = arith.negf %574 : vector<2x96xf32>
    %576 = math.exp %575 : vector<2x96xf32>
    %cst_258 = arith.constant 1.000000e+00 : f32
    %577 = vector.broadcast %cst_258 : f32 to vector<2x96xf32>
    %578 = arith.addf %577, %576 : vector<2x96xf32>
    %579 = arith.divf %577, %578 : vector<2x96xf32>
    %580 = vector.extract_strided_slice %579 {offsets = [0, 0], sizes = [2, 32], strides = [1, 1]} : vector<2x96xf32> to vector<2x32xf32>
    %581 = vector.extract_strided_slice %579 {offsets = [0, 32], sizes = [2, 32], strides = [1, 1]} : vector<2x96xf32> to vector<2x32xf32>
    %582 = vector.extract_strided_slice %579 {offsets = [0, 64], sizes = [2, 32], strides = [1, 1]} : vector<2x96xf32> to vector<2x32xf32>
    %583 = vector.extract_strided_slice %573 {offsets = [0, 96], sizes = [2, 32], strides = [1, 1]} : vector<2x128xf32> to vector<2x32xf32>
    %584 = math.tanh %583 : vector<2x32xf32>
    %585 = arith.mulf %581, %547 : vector<2x32xf32>
    %586 = arith.mulf %580, %584 : vector<2x32xf32>
    %587 = arith.addf %585, %586 : vector<2x32xf32>
    %588 = math.tanh %587 : vector<2x32xf32>
    %589 = arith.mulf %582, %588 : vector<2x32xf32>
    %cst_259 = arith.constant dense<0.000000e+00> : vector<2x128xf32>
    %590 = tpu.matmul %589, %398, %cst_259 {dimension_numbers = #tpu.dot_dimension_numbers<[1], [0], [0], [1], [0, 0, 1, 1], [], []>} : vector<2x32xf32>, vector<32x128xf32>, vector<2x128xf32> -> vector<2x128xf32>
    %cst_260 = arith.constant dense<0.000000e+00> : vector<2x128xf32>
    %591 = tpu.matmul %570, %400, %cst_260 {dimension_numbers = #tpu.dot_dimension_numbers<[1], [0], [0], [1], [0, 0, 1, 1], [], []>} : vector<2x32xf32>, vector<32x128xf32>, vector<2x128xf32> -> vector<2x128xf32>
    %592 = arith.addf %590, %591 : vector<2x128xf32>
    %593 = vector.broadcast %402 : vector<1x128xf32> to vector<2x128xf32>
    %594 = arith.addf %592, %593 : vector<2x128xf32>
    %595 = vector.extract_strided_slice %594 {offsets = [0, 0], sizes = [2, 96], strides = [1, 1]} : vector<2x128xf32> to vector<2x96xf32>
    %596 = arith.negf %595 : vector<2x96xf32>
    %597 = math.exp %596 : vector<2x96xf32>
    %cst_261 = arith.constant 1.000000e+00 : f32
    %598 = vector.broadcast %cst_261 : f32 to vector<2x96xf32>
    %599 = arith.addf %598, %597 : vector<2x96xf32>
    %600 = arith.divf %598, %599 : vector<2x96xf32>
    %601 = vector.extract_strided_slice %600 {offsets = [0, 0], sizes = [2, 32], strides = [1, 1]} : vector<2x96xf32> to vector<2x32xf32>
    %602 = vector.extract_strided_slice %600 {offsets = [0, 32], sizes = [2, 32], strides = [1, 1]} : vector<2x96xf32> to vector<2x32xf32>
    %603 = vector.extract_strided_slice %600 {offsets = [0, 64], sizes = [2, 32], strides = [1, 1]} : vector<2x96xf32> to vector<2x32xf32>
    %604 = vector.extract_strided_slice %594 {offsets = [0, 96], sizes = [2, 32], strides = [1, 1]} : vector<2x128xf32> to vector<2x32xf32>
    %605 = math.tanh %604 : vector<2x32xf32>
    %606 = arith.mulf %602, %568 : vector<2x32xf32>
    %607 = arith.mulf %601, %605 : vector<2x32xf32>
    %608 = arith.addf %606, %607 : vector<2x32xf32>
    %609 = math.tanh %608 : vector<2x32xf32>
    %610 = arith.mulf %603, %609 : vector<2x32xf32>
    %c10_262 = arith.constant 10 : index
    %c0_263 = arith.constant 0 : index
    %611 = vector.load %arg20[%c10_262, %c0_263] : memref<32x128xf32, #tpu.memory_space<vmem>>, vector<2x128xf32>
    %cst_264 = arith.constant dense<0.000000e+00> : vector<2x128xf32>
    %612 = tpu.matmul %589, %399, %cst_264 {dimension_numbers = #tpu.dot_dimension_numbers<[1], [0], [0], [1], [0, 0, 1, 1], [], []>} : vector<2x32xf32>, vector<32x128xf32>, vector<2x128xf32> -> vector<2x128xf32>
    %613 = arith.addf %611, %612 : vector<2x128xf32>
    %614 = vector.extract_strided_slice %613 {offsets = [0, 0], sizes = [2, 96], strides = [1, 1]} : vector<2x128xf32> to vector<2x96xf32>
    %615 = arith.negf %614 : vector<2x96xf32>
    %616 = math.exp %615 : vector<2x96xf32>
    %cst_265 = arith.constant 1.000000e+00 : f32
    %617 = vector.broadcast %cst_265 : f32 to vector<2x96xf32>
    %618 = arith.addf %617, %616 : vector<2x96xf32>
    %619 = arith.divf %617, %618 : vector<2x96xf32>
    %620 = vector.extract_strided_slice %619 {offsets = [0, 0], sizes = [2, 32], strides = [1, 1]} : vector<2x96xf32> to vector<2x32xf32>
    %621 = vector.extract_strided_slice %619 {offsets = [0, 32], sizes = [2, 32], strides = [1, 1]} : vector<2x96xf32> to vector<2x32xf32>
    %622 = vector.extract_strided_slice %619 {offsets = [0, 64], sizes = [2, 32], strides = [1, 1]} : vector<2x96xf32> to vector<2x32xf32>
    %623 = vector.extract_strided_slice %613 {offsets = [0, 96], sizes = [2, 32], strides = [1, 1]} : vector<2x128xf32> to vector<2x32xf32>
    %624 = math.tanh %623 : vector<2x32xf32>
    %625 = arith.mulf %621, %587 : vector<2x32xf32>
    %626 = arith.mulf %620, %624 : vector<2x32xf32>
    %627 = arith.addf %625, %626 : vector<2x32xf32>
    %628 = math.tanh %627 : vector<2x32xf32>
    %629 = arith.mulf %622, %628 : vector<2x32xf32>
    %cst_266 = arith.constant dense<0.000000e+00> : vector<2x128xf32>
    %630 = tpu.matmul %629, %398, %cst_266 {dimension_numbers = #tpu.dot_dimension_numbers<[1], [0], [0], [1], [0, 0, 1, 1], [], []>} : vector<2x32xf32>, vector<32x128xf32>, vector<2x128xf32> -> vector<2x128xf32>
    %cst_267 = arith.constant dense<0.000000e+00> : vector<2x128xf32>
    %631 = tpu.matmul %610, %400, %cst_267 {dimension_numbers = #tpu.dot_dimension_numbers<[1], [0], [0], [1], [0, 0, 1, 1], [], []>} : vector<2x32xf32>, vector<32x128xf32>, vector<2x128xf32> -> vector<2x128xf32>
    %632 = arith.addf %630, %631 : vector<2x128xf32>
    %633 = vector.broadcast %402 : vector<1x128xf32> to vector<2x128xf32>
    %634 = arith.addf %632, %633 : vector<2x128xf32>
    %635 = vector.extract_strided_slice %634 {offsets = [0, 0], sizes = [2, 96], strides = [1, 1]} : vector<2x128xf32> to vector<2x96xf32>
    %636 = arith.negf %635 : vector<2x96xf32>
    %637 = math.exp %636 : vector<2x96xf32>
    %cst_268 = arith.constant 1.000000e+00 : f32
    %638 = vector.broadcast %cst_268 : f32 to vector<2x96xf32>
    %639 = arith.addf %638, %637 : vector<2x96xf32>
    %640 = arith.divf %638, %639 : vector<2x96xf32>
    %641 = vector.extract_strided_slice %640 {offsets = [0, 0], sizes = [2, 32], strides = [1, 1]} : vector<2x96xf32> to vector<2x32xf32>
    %642 = vector.extract_strided_slice %640 {offsets = [0, 32], sizes = [2, 32], strides = [1, 1]} : vector<2x96xf32> to vector<2x32xf32>
    %643 = vector.extract_strided_slice %640 {offsets = [0, 64], sizes = [2, 32], strides = [1, 1]} : vector<2x96xf32> to vector<2x32xf32>
    %644 = vector.extract_strided_slice %634 {offsets = [0, 96], sizes = [2, 32], strides = [1, 1]} : vector<2x128xf32> to vector<2x32xf32>
    %645 = math.tanh %644 : vector<2x32xf32>
    %646 = arith.mulf %642, %608 : vector<2x32xf32>
    %647 = arith.mulf %641, %645 : vector<2x32xf32>
    %648 = arith.addf %646, %647 : vector<2x32xf32>
    %649 = math.tanh %648 : vector<2x32xf32>
    %650 = arith.mulf %643, %649 : vector<2x32xf32>
    %c12_269 = arith.constant 12 : index
    %c0_270 = arith.constant 0 : index
    %651 = vector.load %arg20[%c12_269, %c0_270] : memref<32x128xf32, #tpu.memory_space<vmem>>, vector<2x128xf32>
    %cst_271 = arith.constant dense<0.000000e+00> : vector<2x128xf32>
    %652 = tpu.matmul %629, %399, %cst_271 {dimension_numbers = #tpu.dot_dimension_numbers<[1], [0], [0], [1], [0, 0, 1, 1], [], []>} : vector<2x32xf32>, vector<32x128xf32>, vector<2x128xf32> -> vector<2x128xf32>
    %653 = arith.addf %651, %652 : vector<2x128xf32>
    %654 = vector.extract_strided_slice %653 {offsets = [0, 0], sizes = [2, 96], strides = [1, 1]} : vector<2x128xf32> to vector<2x96xf32>
    %655 = arith.negf %654 : vector<2x96xf32>
    %656 = math.exp %655 : vector<2x96xf32>
    %cst_272 = arith.constant 1.000000e+00 : f32
    %657 = vector.broadcast %cst_272 : f32 to vector<2x96xf32>
    %658 = arith.addf %657, %656 : vector<2x96xf32>
    %659 = arith.divf %657, %658 : vector<2x96xf32>
    %660 = vector.extract_strided_slice %659 {offsets = [0, 0], sizes = [2, 32], strides = [1, 1]} : vector<2x96xf32> to vector<2x32xf32>
    %661 = vector.extract_strided_slice %659 {offsets = [0, 32], sizes = [2, 32], strides = [1, 1]} : vector<2x96xf32> to vector<2x32xf32>
    %662 = vector.extract_strided_slice %659 {offsets = [0, 64], sizes = [2, 32], strides = [1, 1]} : vector<2x96xf32> to vector<2x32xf32>
    %663 = vector.extract_strided_slice %653 {offsets = [0, 96], sizes = [2, 32], strides = [1, 1]} : vector<2x128xf32> to vector<2x32xf32>
    %664 = math.tanh %663 : vector<2x32xf32>
    %665 = arith.mulf %661, %627 : vector<2x32xf32>
    %666 = arith.mulf %660, %664 : vector<2x32xf32>
    %667 = arith.addf %665, %666 : vector<2x32xf32>
    %668 = math.tanh %667 : vector<2x32xf32>
    %669 = arith.mulf %662, %668 : vector<2x32xf32>
    %cst_273 = arith.constant dense<0.000000e+00> : vector<2x128xf32>
    %670 = tpu.matmul %669, %398, %cst_273 {dimension_numbers = #tpu.dot_dimension_numbers<[1], [0], [0], [1], [0, 0, 1, 1], [], []>} : vector<2x32xf32>, vector<32x128xf32>, vector<2x128xf32> -> vector<2x128xf32>
    %cst_274 = arith.constant dense<0.000000e+00> : vector<2x128xf32>
    %671 = tpu.matmul %650, %400, %cst_274 {dimension_numbers = #tpu.dot_dimension_numbers<[1], [0], [0], [1], [0, 0, 1, 1], [], []>} : vector<2x32xf32>, vector<32x128xf32>, vector<2x128xf32> -> vector<2x128xf32>
    %672 = arith.addf %670, %671 : vector<2x128xf32>
    %673 = vector.broadcast %402 : vector<1x128xf32> to vector<2x128xf32>
    %674 = arith.addf %672, %673 : vector<2x128xf32>
    %675 = vector.extract_strided_slice %674 {offsets = [0, 0], sizes = [2, 96], strides = [1, 1]} : vector<2x128xf32> to vector<2x96xf32>
    %676 = arith.negf %675 : vector<2x96xf32>
    %677 = math.exp %676 : vector<2x96xf32>
    %cst_275 = arith.constant 1.000000e+00 : f32
    %678 = vector.broadcast %cst_275 : f32 to vector<2x96xf32>
    %679 = arith.addf %678, %677 : vector<2x96xf32>
    %680 = arith.divf %678, %679 : vector<2x96xf32>
    %681 = vector.extract_strided_slice %680 {offsets = [0, 0], sizes = [2, 32], strides = [1, 1]} : vector<2x96xf32> to vector<2x32xf32>
    %682 = vector.extract_strided_slice %680 {offsets = [0, 32], sizes = [2, 32], strides = [1, 1]} : vector<2x96xf32> to vector<2x32xf32>
    %683 = vector.extract_strided_slice %680 {offsets = [0, 64], sizes = [2, 32], strides = [1, 1]} : vector<2x96xf32> to vector<2x32xf32>
    %684 = vector.extract_strided_slice %674 {offsets = [0, 96], sizes = [2, 32], strides = [1, 1]} : vector<2x128xf32> to vector<2x32xf32>
    %685 = math.tanh %684 : vector<2x32xf32>
    %686 = arith.mulf %682, %648 : vector<2x32xf32>
    %687 = arith.mulf %681, %685 : vector<2x32xf32>
    %688 = arith.addf %686, %687 : vector<2x32xf32>
    %689 = math.tanh %688 : vector<2x32xf32>
    %690 = arith.mulf %683, %689 : vector<2x32xf32>
    %c14_276 = arith.constant 14 : index
    %c0_277 = arith.constant 0 : index
    %691 = vector.load %arg20[%c14_276, %c0_277] : memref<32x128xf32, #tpu.memory_space<vmem>>, vector<2x128xf32>
    %cst_278 = arith.constant dense<0.000000e+00> : vector<2x128xf32>
    %692 = tpu.matmul %669, %399, %cst_278 {dimension_numbers = #tpu.dot_dimension_numbers<[1], [0], [0], [1], [0, 0, 1, 1], [], []>} : vector<2x32xf32>, vector<32x128xf32>, vector<2x128xf32> -> vector<2x128xf32>
    %693 = arith.addf %691, %692 : vector<2x128xf32>
    %694 = vector.extract_strided_slice %693 {offsets = [0, 0], sizes = [2, 96], strides = [1, 1]} : vector<2x128xf32> to vector<2x96xf32>
    %695 = arith.negf %694 : vector<2x96xf32>
    %696 = math.exp %695 : vector<2x96xf32>
    %cst_279 = arith.constant 1.000000e+00 : f32
    %697 = vector.broadcast %cst_279 : f32 to vector<2x96xf32>
    %698 = arith.addf %697, %696 : vector<2x96xf32>
    %699 = arith.divf %697, %698 : vector<2x96xf32>
    %700 = vector.extract_strided_slice %699 {offsets = [0, 0], sizes = [2, 32], strides = [1, 1]} : vector<2x96xf32> to vector<2x32xf32>
    %701 = vector.extract_strided_slice %699 {offsets = [0, 32], sizes = [2, 32], strides = [1, 1]} : vector<2x96xf32> to vector<2x32xf32>
    %702 = vector.extract_strided_slice %699 {offsets = [0, 64], sizes = [2, 32], strides = [1, 1]} : vector<2x96xf32> to vector<2x32xf32>
    %703 = vector.extract_strided_slice %693 {offsets = [0, 96], sizes = [2, 32], strides = [1, 1]} : vector<2x128xf32> to vector<2x32xf32>
    %704 = math.tanh %703 : vector<2x32xf32>
    %705 = arith.mulf %701, %667 : vector<2x32xf32>
    %706 = arith.mulf %700, %704 : vector<2x32xf32>
    %707 = arith.addf %705, %706 : vector<2x32xf32>
    %708 = math.tanh %707 : vector<2x32xf32>
    %709 = arith.mulf %702, %708 : vector<2x32xf32>
    %cst_280 = arith.constant dense<0.000000e+00> : vector<2x128xf32>
    %710 = tpu.matmul %709, %398, %cst_280 {dimension_numbers = #tpu.dot_dimension_numbers<[1], [0], [0], [1], [0, 0, 1, 1], [], []>} : vector<2x32xf32>, vector<32x128xf32>, vector<2x128xf32> -> vector<2x128xf32>
    %cst_281 = arith.constant dense<0.000000e+00> : vector<2x128xf32>
    %711 = tpu.matmul %690, %400, %cst_281 {dimension_numbers = #tpu.dot_dimension_numbers<[1], [0], [0], [1], [0, 0, 1, 1], [], []>} : vector<2x32xf32>, vector<32x128xf32>, vector<2x128xf32> -> vector<2x128xf32>
    %712 = arith.addf %710, %711 : vector<2x128xf32>
    %713 = vector.broadcast %402 : vector<1x128xf32> to vector<2x128xf32>
    %714 = arith.addf %712, %713 : vector<2x128xf32>
    %715 = vector.extract_strided_slice %714 {offsets = [0, 0], sizes = [2, 96], strides = [1, 1]} : vector<2x128xf32> to vector<2x96xf32>
    %716 = arith.negf %715 : vector<2x96xf32>
    %717 = math.exp %716 : vector<2x96xf32>
    %cst_282 = arith.constant 1.000000e+00 : f32
    %718 = vector.broadcast %cst_282 : f32 to vector<2x96xf32>
    %719 = arith.addf %718, %717 : vector<2x96xf32>
    %720 = arith.divf %718, %719 : vector<2x96xf32>
    %721 = vector.extract_strided_slice %720 {offsets = [0, 0], sizes = [2, 32], strides = [1, 1]} : vector<2x96xf32> to vector<2x32xf32>
    %722 = vector.extract_strided_slice %720 {offsets = [0, 32], sizes = [2, 32], strides = [1, 1]} : vector<2x96xf32> to vector<2x32xf32>
    %723 = vector.extract_strided_slice %720 {offsets = [0, 64], sizes = [2, 32], strides = [1, 1]} : vector<2x96xf32> to vector<2x32xf32>
    %724 = vector.extract_strided_slice %714 {offsets = [0, 96], sizes = [2, 32], strides = [1, 1]} : vector<2x128xf32> to vector<2x32xf32>
    %725 = math.tanh %724 : vector<2x32xf32>
    %726 = arith.mulf %722, %688 : vector<2x32xf32>
    %727 = arith.mulf %721, %725 : vector<2x32xf32>
    %728 = arith.addf %726, %727 : vector<2x32xf32>
    %729 = math.tanh %728 : vector<2x32xf32>
    %730 = arith.mulf %723, %729 : vector<2x32xf32>
    %c16 = arith.constant 16 : index
    %c0_283 = arith.constant 0 : index
    %731 = vector.load %arg20[%c16, %c0_283] : memref<32x128xf32, #tpu.memory_space<vmem>>, vector<2x128xf32>
    %cst_284 = arith.constant dense<0.000000e+00> : vector<2x128xf32>
    %732 = tpu.matmul %709, %399, %cst_284 {dimension_numbers = #tpu.dot_dimension_numbers<[1], [0], [0], [1], [0, 0, 1, 1], [], []>} : vector<2x32xf32>, vector<32x128xf32>, vector<2x128xf32> -> vector<2x128xf32>
    %733 = arith.addf %731, %732 : vector<2x128xf32>
    %734 = vector.extract_strided_slice %733 {offsets = [0, 0], sizes = [2, 96], strides = [1, 1]} : vector<2x128xf32> to vector<2x96xf32>
    %735 = arith.negf %734 : vector<2x96xf32>
    %736 = math.exp %735 : vector<2x96xf32>
    %cst_285 = arith.constant 1.000000e+00 : f32
    %737 = vector.broadcast %cst_285 : f32 to vector<2x96xf32>
    %738 = arith.addf %737, %736 : vector<2x96xf32>
    %739 = arith.divf %737, %738 : vector<2x96xf32>
    %740 = vector.extract_strided_slice %739 {offsets = [0, 0], sizes = [2, 32], strides = [1, 1]} : vector<2x96xf32> to vector<2x32xf32>
    %741 = vector.extract_strided_slice %739 {offsets = [0, 32], sizes = [2, 32], strides = [1, 1]} : vector<2x96xf32> to vector<2x32xf32>
    %742 = vector.extract_strided_slice %739 {offsets = [0, 64], sizes = [2, 32], strides = [1, 1]} : vector<2x96xf32> to vector<2x32xf32>
    %743 = vector.extract_strided_slice %733 {offsets = [0, 96], sizes = [2, 32], strides = [1, 1]} : vector<2x128xf32> to vector<2x32xf32>
    %744 = math.tanh %743 : vector<2x32xf32>
    %745 = arith.mulf %741, %707 : vector<2x32xf32>
    %746 = arith.mulf %740, %744 : vector<2x32xf32>
    %747 = arith.addf %745, %746 : vector<2x32xf32>
    %748 = math.tanh %747 : vector<2x32xf32>
    %749 = arith.mulf %742, %748 : vector<2x32xf32>
    %cst_286 = arith.constant dense<0.000000e+00> : vector<2x128xf32>
    %750 = tpu.matmul %749, %398, %cst_286 {dimension_numbers = #tpu.dot_dimension_numbers<[1], [0], [0], [1], [0, 0, 1, 1], [], []>} : vector<2x32xf32>, vector<32x128xf32>, vector<2x128xf32> -> vector<2x128xf32>
    %cst_287 = arith.constant dense<0.000000e+00> : vector<2x128xf32>
    %751 = tpu.matmul %730, %400, %cst_287 {dimension_numbers = #tpu.dot_dimension_numbers<[1], [0], [0], [1], [0, 0, 1, 1], [], []>} : vector<2x32xf32>, vector<32x128xf32>, vector<2x128xf32> -> vector<2x128xf32>
    %752 = arith.addf %750, %751 : vector<2x128xf32>
    %753 = vector.broadcast %402 : vector<1x128xf32> to vector<2x128xf32>
    %754 = arith.addf %752, %753 : vector<2x128xf32>
    %755 = vector.extract_strided_slice %754 {offsets = [0, 0], sizes = [2, 96], strides = [1, 1]} : vector<2x128xf32> to vector<2x96xf32>
    %756 = arith.negf %755 : vector<2x96xf32>
    %757 = math.exp %756 : vector<2x96xf32>
    %cst_288 = arith.constant 1.000000e+00 : f32
    %758 = vector.broadcast %cst_288 : f32 to vector<2x96xf32>
    %759 = arith.addf %758, %757 : vector<2x96xf32>
    %760 = arith.divf %758, %759 : vector<2x96xf32>
    %761 = vector.extract_strided_slice %760 {offsets = [0, 0], sizes = [2, 32], strides = [1, 1]} : vector<2x96xf32> to vector<2x32xf32>
    %762 = vector.extract_strided_slice %760 {offsets = [0, 32], sizes = [2, 32], strides = [1, 1]} : vector<2x96xf32> to vector<2x32xf32>
    %763 = vector.extract_strided_slice %760 {offsets = [0, 64], sizes = [2, 32], strides = [1, 1]} : vector<2x96xf32> to vector<2x32xf32>
    %764 = vector.extract_strided_slice %754 {offsets = [0, 96], sizes = [2, 32], strides = [1, 1]} : vector<2x128xf32> to vector<2x32xf32>
    %765 = math.tanh %764 : vector<2x32xf32>
    %766 = arith.mulf %762, %728 : vector<2x32xf32>
    %767 = arith.mulf %761, %765 : vector<2x32xf32>
    %768 = arith.addf %766, %767 : vector<2x32xf32>
    %769 = math.tanh %768 : vector<2x32xf32>
    %770 = arith.mulf %763, %769 : vector<2x32xf32>
    %c18 = arith.constant 18 : index
    %c0_289 = arith.constant 0 : index
    %771 = vector.load %arg20[%c18, %c0_289] : memref<32x128xf32, #tpu.memory_space<vmem>>, vector<2x128xf32>
    %cst_290 = arith.constant dense<0.000000e+00> : vector<2x128xf32>
    %772 = tpu.matmul %749, %399, %cst_290 {dimension_numbers = #tpu.dot_dimension_numbers<[1], [0], [0], [1], [0, 0, 1, 1], [], []>} : vector<2x32xf32>, vector<32x128xf32>, vector<2x128xf32> -> vector<2x128xf32>
    %773 = arith.addf %771, %772 : vector<2x128xf32>
    %774 = vector.extract_strided_slice %773 {offsets = [0, 0], sizes = [2, 96], strides = [1, 1]} : vector<2x128xf32> to vector<2x96xf32>
    %775 = arith.negf %774 : vector<2x96xf32>
    %776 = math.exp %775 : vector<2x96xf32>
    %cst_291 = arith.constant 1.000000e+00 : f32
    %777 = vector.broadcast %cst_291 : f32 to vector<2x96xf32>
    %778 = arith.addf %777, %776 : vector<2x96xf32>
    %779 = arith.divf %777, %778 : vector<2x96xf32>
    %780 = vector.extract_strided_slice %779 {offsets = [0, 0], sizes = [2, 32], strides = [1, 1]} : vector<2x96xf32> to vector<2x32xf32>
    %781 = vector.extract_strided_slice %779 {offsets = [0, 32], sizes = [2, 32], strides = [1, 1]} : vector<2x96xf32> to vector<2x32xf32>
    %782 = vector.extract_strided_slice %779 {offsets = [0, 64], sizes = [2, 32], strides = [1, 1]} : vector<2x96xf32> to vector<2x32xf32>
    %783 = vector.extract_strided_slice %773 {offsets = [0, 96], sizes = [2, 32], strides = [1, 1]} : vector<2x128xf32> to vector<2x32xf32>
    %784 = math.tanh %783 : vector<2x32xf32>
    %785 = arith.mulf %781, %747 : vector<2x32xf32>
    %786 = arith.mulf %780, %784 : vector<2x32xf32>
    %787 = arith.addf %785, %786 : vector<2x32xf32>
    %788 = math.tanh %787 : vector<2x32xf32>
    %789 = arith.mulf %782, %788 : vector<2x32xf32>
    %cst_292 = arith.constant dense<0.000000e+00> : vector<2x128xf32>
    %790 = tpu.matmul %789, %398, %cst_292 {dimension_numbers = #tpu.dot_dimension_numbers<[1], [0], [0], [1], [0, 0, 1, 1], [], []>} : vector<2x32xf32>, vector<32x128xf32>, vector<2x128xf32> -> vector<2x128xf32>
    %cst_293 = arith.constant dense<0.000000e+00> : vector<2x128xf32>
    %791 = tpu.matmul %770, %400, %cst_293 {dimension_numbers = #tpu.dot_dimension_numbers<[1], [0], [0], [1], [0, 0, 1, 1], [], []>} : vector<2x32xf32>, vector<32x128xf32>, vector<2x128xf32> -> vector<2x128xf32>
    %792 = arith.addf %790, %791 : vector<2x128xf32>
    %793 = vector.broadcast %402 : vector<1x128xf32> to vector<2x128xf32>
    %794 = arith.addf %792, %793 : vector<2x128xf32>
    %795 = vector.extract_strided_slice %794 {offsets = [0, 0], sizes = [2, 96], strides = [1, 1]} : vector<2x128xf32> to vector<2x96xf32>
    %796 = arith.negf %795 : vector<2x96xf32>
    %797 = math.exp %796 : vector<2x96xf32>
    %cst_294 = arith.constant 1.000000e+00 : f32
    %798 = vector.broadcast %cst_294 : f32 to vector<2x96xf32>
    %799 = arith.addf %798, %797 : vector<2x96xf32>
    %800 = arith.divf %798, %799 : vector<2x96xf32>
    %801 = vector.extract_strided_slice %800 {offsets = [0, 0], sizes = [2, 32], strides = [1, 1]} : vector<2x96xf32> to vector<2x32xf32>
    %802 = vector.extract_strided_slice %800 {offsets = [0, 32], sizes = [2, 32], strides = [1, 1]} : vector<2x96xf32> to vector<2x32xf32>
    %803 = vector.extract_strided_slice %800 {offsets = [0, 64], sizes = [2, 32], strides = [1, 1]} : vector<2x96xf32> to vector<2x32xf32>
    %804 = vector.extract_strided_slice %794 {offsets = [0, 96], sizes = [2, 32], strides = [1, 1]} : vector<2x128xf32> to vector<2x32xf32>
    %805 = math.tanh %804 : vector<2x32xf32>
    %806 = arith.mulf %802, %768 : vector<2x32xf32>
    %807 = arith.mulf %801, %805 : vector<2x32xf32>
    %808 = arith.addf %806, %807 : vector<2x32xf32>
    %809 = math.tanh %808 : vector<2x32xf32>
    %810 = arith.mulf %803, %809 : vector<2x32xf32>
    %c20 = arith.constant 20 : index
    %c0_295 = arith.constant 0 : index
    %811 = vector.load %arg20[%c20, %c0_295] : memref<32x128xf32, #tpu.memory_space<vmem>>, vector<2x128xf32>
    %cst_296 = arith.constant dense<0.000000e+00> : vector<2x128xf32>
    %812 = tpu.matmul %789, %399, %cst_296 {dimension_numbers = #tpu.dot_dimension_numbers<[1], [0], [0], [1], [0, 0, 1, 1], [], []>} : vector<2x32xf32>, vector<32x128xf32>, vector<2x128xf32> -> vector<2x128xf32>
    %813 = arith.addf %811, %812 : vector<2x128xf32>
    %814 = vector.extract_strided_slice %813 {offsets = [0, 0], sizes = [2, 96], strides = [1, 1]} : vector<2x128xf32> to vector<2x96xf32>
    %815 = arith.negf %814 : vector<2x96xf32>
    %816 = math.exp %815 : vector<2x96xf32>
    %cst_297 = arith.constant 1.000000e+00 : f32
    %817 = vector.broadcast %cst_297 : f32 to vector<2x96xf32>
    %818 = arith.addf %817, %816 : vector<2x96xf32>
    %819 = arith.divf %817, %818 : vector<2x96xf32>
    %820 = vector.extract_strided_slice %819 {offsets = [0, 0], sizes = [2, 32], strides = [1, 1]} : vector<2x96xf32> to vector<2x32xf32>
    %821 = vector.extract_strided_slice %819 {offsets = [0, 32], sizes = [2, 32], strides = [1, 1]} : vector<2x96xf32> to vector<2x32xf32>
    %822 = vector.extract_strided_slice %819 {offsets = [0, 64], sizes = [2, 32], strides = [1, 1]} : vector<2x96xf32> to vector<2x32xf32>
    %823 = vector.extract_strided_slice %813 {offsets = [0, 96], sizes = [2, 32], strides = [1, 1]} : vector<2x128xf32> to vector<2x32xf32>
    %824 = math.tanh %823 : vector<2x32xf32>
    %825 = arith.mulf %821, %787 : vector<2x32xf32>
    %826 = arith.mulf %820, %824 : vector<2x32xf32>
    %827 = arith.addf %825, %826 : vector<2x32xf32>
    %828 = math.tanh %827 : vector<2x32xf32>
    %829 = arith.mulf %822, %828 : vector<2x32xf32>
    %cst_298 = arith.constant dense<0.000000e+00> : vector<2x128xf32>
    %830 = tpu.matmul %829, %398, %cst_298 {dimension_numbers = #tpu.dot_dimension_numbers<[1], [0], [0], [1], [0, 0, 1, 1], [], []>} : vector<2x32xf32>, vector<32x128xf32>, vector<2x128xf32> -> vector<2x128xf32>
    %cst_299 = arith.constant dense<0.000000e+00> : vector<2x128xf32>
    %831 = tpu.matmul %810, %400, %cst_299 {dimension_numbers = #tpu.dot_dimension_numbers<[1], [0], [0], [1], [0, 0, 1, 1], [], []>} : vector<2x32xf32>, vector<32x128xf32>, vector<2x128xf32> -> vector<2x128xf32>
    %832 = arith.addf %830, %831 : vector<2x128xf32>
    %833 = vector.broadcast %402 : vector<1x128xf32> to vector<2x128xf32>
    %834 = arith.addf %832, %833 : vector<2x128xf32>
    %835 = vector.extract_strided_slice %834 {offsets = [0, 0], sizes = [2, 96], strides = [1, 1]} : vector<2x128xf32> to vector<2x96xf32>
    %836 = arith.negf %835 : vector<2x96xf32>
    %837 = math.exp %836 : vector<2x96xf32>
    %cst_300 = arith.constant 1.000000e+00 : f32
    %838 = vector.broadcast %cst_300 : f32 to vector<2x96xf32>
    %839 = arith.addf %838, %837 : vector<2x96xf32>
    %840 = arith.divf %838, %839 : vector<2x96xf32>
    %841 = vector.extract_strided_slice %840 {offsets = [0, 0], sizes = [2, 32], strides = [1, 1]} : vector<2x96xf32> to vector<2x32xf32>
    %842 = vector.extract_strided_slice %840 {offsets = [0, 32], sizes = [2, 32], strides = [1, 1]} : vector<2x96xf32> to vector<2x32xf32>
    %843 = vector.extract_strided_slice %840 {offsets = [0, 64], sizes = [2, 32], strides = [1, 1]} : vector<2x96xf32> to vector<2x32xf32>
    %844 = vector.extract_strided_slice %834 {offsets = [0, 96], sizes = [2, 32], strides = [1, 1]} : vector<2x128xf32> to vector<2x32xf32>
    %845 = math.tanh %844 : vector<2x32xf32>
    %846 = arith.mulf %842, %808 : vector<2x32xf32>
    %847 = arith.mulf %841, %845 : vector<2x32xf32>
    %848 = arith.addf %846, %847 : vector<2x32xf32>
    %849 = math.tanh %848 : vector<2x32xf32>
    %850 = arith.mulf %843, %849 : vector<2x32xf32>
    %c22 = arith.constant 22 : index
    %c0_301 = arith.constant 0 : index
    %851 = vector.load %arg20[%c22, %c0_301] : memref<32x128xf32, #tpu.memory_space<vmem>>, vector<2x128xf32>
    %cst_302 = arith.constant dense<0.000000e+00> : vector<2x128xf32>
    %852 = tpu.matmul %829, %399, %cst_302 {dimension_numbers = #tpu.dot_dimension_numbers<[1], [0], [0], [1], [0, 0, 1, 1], [], []>} : vector<2x32xf32>, vector<32x128xf32>, vector<2x128xf32> -> vector<2x128xf32>
    %853 = arith.addf %851, %852 : vector<2x128xf32>
    %854 = vector.extract_strided_slice %853 {offsets = [0, 0], sizes = [2, 96], strides = [1, 1]} : vector<2x128xf32> to vector<2x96xf32>
    %855 = arith.negf %854 : vector<2x96xf32>
    %856 = math.exp %855 : vector<2x96xf32>
    %cst_303 = arith.constant 1.000000e+00 : f32
    %857 = vector.broadcast %cst_303 : f32 to vector<2x96xf32>
    %858 = arith.addf %857, %856 : vector<2x96xf32>
    %859 = arith.divf %857, %858 : vector<2x96xf32>
    %860 = vector.extract_strided_slice %859 {offsets = [0, 0], sizes = [2, 32], strides = [1, 1]} : vector<2x96xf32> to vector<2x32xf32>
    %861 = vector.extract_strided_slice %859 {offsets = [0, 32], sizes = [2, 32], strides = [1, 1]} : vector<2x96xf32> to vector<2x32xf32>
    %862 = vector.extract_strided_slice %859 {offsets = [0, 64], sizes = [2, 32], strides = [1, 1]} : vector<2x96xf32> to vector<2x32xf32>
    %863 = vector.extract_strided_slice %853 {offsets = [0, 96], sizes = [2, 32], strides = [1, 1]} : vector<2x128xf32> to vector<2x32xf32>
    %864 = math.tanh %863 : vector<2x32xf32>
    %865 = arith.mulf %861, %827 : vector<2x32xf32>
    %866 = arith.mulf %860, %864 : vector<2x32xf32>
    %867 = arith.addf %865, %866 : vector<2x32xf32>
    %868 = math.tanh %867 : vector<2x32xf32>
    %869 = arith.mulf %862, %868 : vector<2x32xf32>
    %cst_304 = arith.constant dense<0.000000e+00> : vector<2x128xf32>
    %870 = tpu.matmul %869, %398, %cst_304 {dimension_numbers = #tpu.dot_dimension_numbers<[1], [0], [0], [1], [0, 0, 1, 1], [], []>} : vector<2x32xf32>, vector<32x128xf32>, vector<2x128xf32> -> vector<2x128xf32>
    %cst_305 = arith.constant dense<0.000000e+00> : vector<2x128xf32>
    %871 = tpu.matmul %850, %400, %cst_305 {dimension_numbers = #tpu.dot_dimension_numbers<[1], [0], [0], [1], [0, 0, 1, 1], [], []>} : vector<2x32xf32>, vector<32x128xf32>, vector<2x128xf32> -> vector<2x128xf32>
    %872 = arith.addf %870, %871 : vector<2x128xf32>
    %873 = vector.broadcast %402 : vector<1x128xf32> to vector<2x128xf32>
    %874 = arith.addf %872, %873 : vector<2x128xf32>
    %875 = vector.extract_strided_slice %874 {offsets = [0, 0], sizes = [2, 96], strides = [1, 1]} : vector<2x128xf32> to vector<2x96xf32>
    %876 = arith.negf %875 : vector<2x96xf32>
    %877 = math.exp %876 : vector<2x96xf32>
    %cst_306 = arith.constant 1.000000e+00 : f32
    %878 = vector.broadcast %cst_306 : f32 to vector<2x96xf32>
    %879 = arith.addf %878, %877 : vector<2x96xf32>
    %880 = arith.divf %878, %879 : vector<2x96xf32>
    %881 = vector.extract_strided_slice %880 {offsets = [0, 0], sizes = [2, 32], strides = [1, 1]} : vector<2x96xf32> to vector<2x32xf32>
    %882 = vector.extract_strided_slice %880 {offsets = [0, 32], sizes = [2, 32], strides = [1, 1]} : vector<2x96xf32> to vector<2x32xf32>
    %883 = vector.extract_strided_slice %880 {offsets = [0, 64], sizes = [2, 32], strides = [1, 1]} : vector<2x96xf32> to vector<2x32xf32>
    %884 = vector.extract_strided_slice %874 {offsets = [0, 96], sizes = [2, 32], strides = [1, 1]} : vector<2x128xf32> to vector<2x32xf32>
    %885 = math.tanh %884 : vector<2x32xf32>
    %886 = arith.mulf %882, %848 : vector<2x32xf32>
    %887 = arith.mulf %881, %885 : vector<2x32xf32>
    %888 = arith.addf %886, %887 : vector<2x32xf32>
    %889 = math.tanh %888 : vector<2x32xf32>
    %890 = arith.mulf %883, %889 : vector<2x32xf32>
    %c24 = arith.constant 24 : index
    %c0_307 = arith.constant 0 : index
    %891 = vector.load %arg20[%c24, %c0_307] : memref<32x128xf32, #tpu.memory_space<vmem>>, vector<2x128xf32>
    %cst_308 = arith.constant dense<0.000000e+00> : vector<2x128xf32>
    %892 = tpu.matmul %869, %399, %cst_308 {dimension_numbers = #tpu.dot_dimension_numbers<[1], [0], [0], [1], [0, 0, 1, 1], [], []>} : vector<2x32xf32>, vector<32x128xf32>, vector<2x128xf32> -> vector<2x128xf32>
    %893 = arith.addf %891, %892 : vector<2x128xf32>
    %894 = vector.extract_strided_slice %893 {offsets = [0, 0], sizes = [2, 96], strides = [1, 1]} : vector<2x128xf32> to vector<2x96xf32>
    %895 = arith.negf %894 : vector<2x96xf32>
    %896 = math.exp %895 : vector<2x96xf32>
    %cst_309 = arith.constant 1.000000e+00 : f32
    %897 = vector.broadcast %cst_309 : f32 to vector<2x96xf32>
    %898 = arith.addf %897, %896 : vector<2x96xf32>
    %899 = arith.divf %897, %898 : vector<2x96xf32>
    %900 = vector.extract_strided_slice %899 {offsets = [0, 0], sizes = [2, 32], strides = [1, 1]} : vector<2x96xf32> to vector<2x32xf32>
    %901 = vector.extract_strided_slice %899 {offsets = [0, 32], sizes = [2, 32], strides = [1, 1]} : vector<2x96xf32> to vector<2x32xf32>
    %902 = vector.extract_strided_slice %899 {offsets = [0, 64], sizes = [2, 32], strides = [1, 1]} : vector<2x96xf32> to vector<2x32xf32>
    %903 = vector.extract_strided_slice %893 {offsets = [0, 96], sizes = [2, 32], strides = [1, 1]} : vector<2x128xf32> to vector<2x32xf32>
    %904 = math.tanh %903 : vector<2x32xf32>
    %905 = arith.mulf %901, %867 : vector<2x32xf32>
    %906 = arith.mulf %900, %904 : vector<2x32xf32>
    %907 = arith.addf %905, %906 : vector<2x32xf32>
    %908 = math.tanh %907 : vector<2x32xf32>
    %909 = arith.mulf %902, %908 : vector<2x32xf32>
    %cst_310 = arith.constant dense<0.000000e+00> : vector<2x128xf32>
    %910 = tpu.matmul %909, %398, %cst_310 {dimension_numbers = #tpu.dot_dimension_numbers<[1], [0], [0], [1], [0, 0, 1, 1], [], []>} : vector<2x32xf32>, vector<32x128xf32>, vector<2x128xf32> -> vector<2x128xf32>
    %cst_311 = arith.constant dense<0.000000e+00> : vector<2x128xf32>
    %911 = tpu.matmul %890, %400, %cst_311 {dimension_numbers = #tpu.dot_dimension_numbers<[1], [0], [0], [1], [0, 0, 1, 1], [], []>} : vector<2x32xf32>, vector<32x128xf32>, vector<2x128xf32> -> vector<2x128xf32>
    %912 = arith.addf %910, %911 : vector<2x128xf32>
    %913 = vector.broadcast %402 : vector<1x128xf32> to vector<2x128xf32>
    %914 = arith.addf %912, %913 : vector<2x128xf32>
    %915 = vector.extract_strided_slice %914 {offsets = [0, 0], sizes = [2, 96], strides = [1, 1]} : vector<2x128xf32> to vector<2x96xf32>
    %916 = arith.negf %915 : vector<2x96xf32>
    %917 = math.exp %916 : vector<2x96xf32>
    %cst_312 = arith.constant 1.000000e+00 : f32
    %918 = vector.broadcast %cst_312 : f32 to vector<2x96xf32>
    %919 = arith.addf %918, %917 : vector<2x96xf32>
    %920 = arith.divf %918, %919 : vector<2x96xf32>
    %921 = vector.extract_strided_slice %920 {offsets = [0, 0], sizes = [2, 32], strides = [1, 1]} : vector<2x96xf32> to vector<2x32xf32>
    %922 = vector.extract_strided_slice %920 {offsets = [0, 32], sizes = [2, 32], strides = [1, 1]} : vector<2x96xf32> to vector<2x32xf32>
    %923 = vector.extract_strided_slice %920 {offsets = [0, 64], sizes = [2, 32], strides = [1, 1]} : vector<2x96xf32> to vector<2x32xf32>
    %924 = vector.extract_strided_slice %914 {offsets = [0, 96], sizes = [2, 32], strides = [1, 1]} : vector<2x128xf32> to vector<2x32xf32>
    %925 = math.tanh %924 : vector<2x32xf32>
    %926 = arith.mulf %922, %888 : vector<2x32xf32>
    %927 = arith.mulf %921, %925 : vector<2x32xf32>
    %928 = arith.addf %926, %927 : vector<2x32xf32>
    %929 = math.tanh %928 : vector<2x32xf32>
    %930 = arith.mulf %923, %929 : vector<2x32xf32>
    %c26 = arith.constant 26 : index
    %c0_313 = arith.constant 0 : index
    %931 = vector.load %arg20[%c26, %c0_313] : memref<32x128xf32, #tpu.memory_space<vmem>>, vector<2x128xf32>
    %cst_314 = arith.constant dense<0.000000e+00> : vector<2x128xf32>
    %932 = tpu.matmul %909, %399, %cst_314 {dimension_numbers = #tpu.dot_dimension_numbers<[1], [0], [0], [1], [0, 0, 1, 1], [], []>} : vector<2x32xf32>, vector<32x128xf32>, vector<2x128xf32> -> vector<2x128xf32>
    %933 = arith.addf %931, %932 : vector<2x128xf32>
    %934 = vector.extract_strided_slice %933 {offsets = [0, 0], sizes = [2, 96], strides = [1, 1]} : vector<2x128xf32> to vector<2x96xf32>
    %935 = arith.negf %934 : vector<2x96xf32>
    %936 = math.exp %935 : vector<2x96xf32>
    %cst_315 = arith.constant 1.000000e+00 : f32
    %937 = vector.broadcast %cst_315 : f32 to vector<2x96xf32>
    %938 = arith.addf %937, %936 : vector<2x96xf32>
    %939 = arith.divf %937, %938 : vector<2x96xf32>
    %940 = vector.extract_strided_slice %939 {offsets = [0, 0], sizes = [2, 32], strides = [1, 1]} : vector<2x96xf32> to vector<2x32xf32>
    %941 = vector.extract_strided_slice %939 {offsets = [0, 32], sizes = [2, 32], strides = [1, 1]} : vector<2x96xf32> to vector<2x32xf32>
    %942 = vector.extract_strided_slice %939 {offsets = [0, 64], sizes = [2, 32], strides = [1, 1]} : vector<2x96xf32> to vector<2x32xf32>
    %943 = vector.extract_strided_slice %933 {offsets = [0, 96], sizes = [2, 32], strides = [1, 1]} : vector<2x128xf32> to vector<2x32xf32>
    %944 = math.tanh %943 : vector<2x32xf32>
    %945 = arith.mulf %941, %907 : vector<2x32xf32>
    %946 = arith.mulf %940, %944 : vector<2x32xf32>
    %947 = arith.addf %945, %946 : vector<2x32xf32>
    %948 = math.tanh %947 : vector<2x32xf32>
    %949 = arith.mulf %942, %948 : vector<2x32xf32>
    %cst_316 = arith.constant dense<0.000000e+00> : vector<2x128xf32>
    %950 = tpu.matmul %949, %398, %cst_316 {dimension_numbers = #tpu.dot_dimension_numbers<[1], [0], [0], [1], [0, 0, 1, 1], [], []>} : vector<2x32xf32>, vector<32x128xf32>, vector<2x128xf32> -> vector<2x128xf32>
    %cst_317 = arith.constant dense<0.000000e+00> : vector<2x128xf32>
    %951 = tpu.matmul %930, %400, %cst_317 {dimension_numbers = #tpu.dot_dimension_numbers<[1], [0], [0], [1], [0, 0, 1, 1], [], []>} : vector<2x32xf32>, vector<32x128xf32>, vector<2x128xf32> -> vector<2x128xf32>
    %952 = arith.addf %950, %951 : vector<2x128xf32>
    %953 = vector.broadcast %402 : vector<1x128xf32> to vector<2x128xf32>
    %954 = arith.addf %952, %953 : vector<2x128xf32>
    %955 = vector.extract_strided_slice %954 {offsets = [0, 0], sizes = [2, 96], strides = [1, 1]} : vector<2x128xf32> to vector<2x96xf32>
    %956 = arith.negf %955 : vector<2x96xf32>
    %957 = math.exp %956 : vector<2x96xf32>
    %cst_318 = arith.constant 1.000000e+00 : f32
    %958 = vector.broadcast %cst_318 : f32 to vector<2x96xf32>
    %959 = arith.addf %958, %957 : vector<2x96xf32>
    %960 = arith.divf %958, %959 : vector<2x96xf32>
    %961 = vector.extract_strided_slice %960 {offsets = [0, 0], sizes = [2, 32], strides = [1, 1]} : vector<2x96xf32> to vector<2x32xf32>
    %962 = vector.extract_strided_slice %960 {offsets = [0, 32], sizes = [2, 32], strides = [1, 1]} : vector<2x96xf32> to vector<2x32xf32>
    %963 = vector.extract_strided_slice %960 {offsets = [0, 64], sizes = [2, 32], strides = [1, 1]} : vector<2x96xf32> to vector<2x32xf32>
    %964 = vector.extract_strided_slice %954 {offsets = [0, 96], sizes = [2, 32], strides = [1, 1]} : vector<2x128xf32> to vector<2x32xf32>
    %965 = math.tanh %964 : vector<2x32xf32>
    %966 = arith.mulf %962, %928 : vector<2x32xf32>
    %967 = arith.mulf %961, %965 : vector<2x32xf32>
    %968 = arith.addf %966, %967 : vector<2x32xf32>
    %969 = math.tanh %968 : vector<2x32xf32>
    %970 = arith.mulf %963, %969 : vector<2x32xf32>
    %c28 = arith.constant 28 : index
    %c0_319 = arith.constant 0 : index
    %971 = vector.load %arg20[%c28, %c0_319] : memref<32x128xf32, #tpu.memory_space<vmem>>, vector<2x128xf32>
    %cst_320 = arith.constant dense<0.000000e+00> : vector<2x128xf32>
    %972 = tpu.matmul %949, %399, %cst_320 {dimension_numbers = #tpu.dot_dimension_numbers<[1], [0], [0], [1], [0, 0, 1, 1], [], []>} : vector<2x32xf32>, vector<32x128xf32>, vector<2x128xf32> -> vector<2x128xf32>
    %973 = arith.addf %971, %972 : vector<2x128xf32>
    %974 = vector.extract_strided_slice %973 {offsets = [0, 0], sizes = [2, 96], strides = [1, 1]} : vector<2x128xf32> to vector<2x96xf32>
    %975 = arith.negf %974 : vector<2x96xf32>
    %976 = math.exp %975 : vector<2x96xf32>
    %cst_321 = arith.constant 1.000000e+00 : f32
    %977 = vector.broadcast %cst_321 : f32 to vector<2x96xf32>
    %978 = arith.addf %977, %976 : vector<2x96xf32>
    %979 = arith.divf %977, %978 : vector<2x96xf32>
    %980 = vector.extract_strided_slice %979 {offsets = [0, 0], sizes = [2, 32], strides = [1, 1]} : vector<2x96xf32> to vector<2x32xf32>
    %981 = vector.extract_strided_slice %979 {offsets = [0, 32], sizes = [2, 32], strides = [1, 1]} : vector<2x96xf32> to vector<2x32xf32>
    %982 = vector.extract_strided_slice %979 {offsets = [0, 64], sizes = [2, 32], strides = [1, 1]} : vector<2x96xf32> to vector<2x32xf32>
    %983 = vector.extract_strided_slice %973 {offsets = [0, 96], sizes = [2, 32], strides = [1, 1]} : vector<2x128xf32> to vector<2x32xf32>
    %984 = math.tanh %983 : vector<2x32xf32>
    %985 = arith.mulf %981, %947 : vector<2x32xf32>
    %986 = arith.mulf %980, %984 : vector<2x32xf32>
    %987 = arith.addf %985, %986 : vector<2x32xf32>
    %988 = math.tanh %987 : vector<2x32xf32>
    %989 = arith.mulf %982, %988 : vector<2x32xf32>
    %cst_322 = arith.constant dense<0.000000e+00> : vector<2x128xf32>
    %990 = tpu.matmul %989, %398, %cst_322 {dimension_numbers = #tpu.dot_dimension_numbers<[1], [0], [0], [1], [0, 0, 1, 1], [], []>} : vector<2x32xf32>, vector<32x128xf32>, vector<2x128xf32> -> vector<2x128xf32>
    %cst_323 = arith.constant dense<0.000000e+00> : vector<2x128xf32>
    %991 = tpu.matmul %970, %400, %cst_323 {dimension_numbers = #tpu.dot_dimension_numbers<[1], [0], [0], [1], [0, 0, 1, 1], [], []>} : vector<2x32xf32>, vector<32x128xf32>, vector<2x128xf32> -> vector<2x128xf32>
    %992 = arith.addf %990, %991 : vector<2x128xf32>
    %993 = vector.broadcast %402 : vector<1x128xf32> to vector<2x128xf32>
    %994 = arith.addf %992, %993 : vector<2x128xf32>
    %995 = vector.extract_strided_slice %994 {offsets = [0, 0], sizes = [2, 96], strides = [1, 1]} : vector<2x128xf32> to vector<2x96xf32>
    %996 = arith.negf %995 : vector<2x96xf32>
    %997 = math.exp %996 : vector<2x96xf32>
    %cst_324 = arith.constant 1.000000e+00 : f32
    %998 = vector.broadcast %cst_324 : f32 to vector<2x96xf32>
    %999 = arith.addf %998, %997 : vector<2x96xf32>
    %1000 = arith.divf %998, %999 : vector<2x96xf32>
    %1001 = vector.extract_strided_slice %1000 {offsets = [0, 0], sizes = [2, 32], strides = [1, 1]} : vector<2x96xf32> to vector<2x32xf32>
    %1002 = vector.extract_strided_slice %1000 {offsets = [0, 32], sizes = [2, 32], strides = [1, 1]} : vector<2x96xf32> to vector<2x32xf32>
    %1003 = vector.extract_strided_slice %1000 {offsets = [0, 64], sizes = [2, 32], strides = [1, 1]} : vector<2x96xf32> to vector<2x32xf32>
    %1004 = vector.extract_strided_slice %994 {offsets = [0, 96], sizes = [2, 32], strides = [1, 1]} : vector<2x128xf32> to vector<2x32xf32>
    %1005 = math.tanh %1004 : vector<2x32xf32>
    %1006 = arith.mulf %1002, %968 : vector<2x32xf32>
    %1007 = arith.mulf %1001, %1005 : vector<2x32xf32>
    %1008 = arith.addf %1006, %1007 : vector<2x32xf32>
    %1009 = math.tanh %1008 : vector<2x32xf32>
    %1010 = arith.mulf %1003, %1009 : vector<2x32xf32>
    %c30 = arith.constant 30 : index
    %c0_325 = arith.constant 0 : index
    %1011 = vector.load %arg20[%c30, %c0_325] : memref<32x128xf32, #tpu.memory_space<vmem>>, vector<2x128xf32>
    %cst_326 = arith.constant dense<0.000000e+00> : vector<2x128xf32>
    %1012 = tpu.matmul %989, %399, %cst_326 {dimension_numbers = #tpu.dot_dimension_numbers<[1], [0], [0], [1], [0, 0, 1, 1], [], []>} : vector<2x32xf32>, vector<32x128xf32>, vector<2x128xf32> -> vector<2x128xf32>
    %1013 = arith.addf %1011, %1012 : vector<2x128xf32>
    %1014 = vector.extract_strided_slice %1013 {offsets = [0, 0], sizes = [2, 96], strides = [1, 1]} : vector<2x128xf32> to vector<2x96xf32>
    %1015 = arith.negf %1014 : vector<2x96xf32>
    %1016 = math.exp %1015 : vector<2x96xf32>
    %cst_327 = arith.constant 1.000000e+00 : f32
    %1017 = vector.broadcast %cst_327 : f32 to vector<2x96xf32>
    %1018 = arith.addf %1017, %1016 : vector<2x96xf32>
    %1019 = arith.divf %1017, %1018 : vector<2x96xf32>
    %1020 = vector.extract_strided_slice %1019 {offsets = [0, 0], sizes = [2, 32], strides = [1, 1]} : vector<2x96xf32> to vector<2x32xf32>
    %1021 = vector.extract_strided_slice %1019 {offsets = [0, 32], sizes = [2, 32], strides = [1, 1]} : vector<2x96xf32> to vector<2x32xf32>
    %1022 = vector.extract_strided_slice %1019 {offsets = [0, 64], sizes = [2, 32], strides = [1, 1]} : vector<2x96xf32> to vector<2x32xf32>
    %1023 = vector.extract_strided_slice %1013 {offsets = [0, 96], sizes = [2, 32], strides = [1, 1]} : vector<2x128xf32> to vector<2x32xf32>
    %1024 = math.tanh %1023 : vector<2x32xf32>
    %1025 = arith.mulf %1021, %987 : vector<2x32xf32>
    %1026 = arith.mulf %1020, %1024 : vector<2x32xf32>
    %1027 = arith.addf %1025, %1026 : vector<2x32xf32>
    %1028 = math.tanh %1027 : vector<2x32xf32>
    %1029 = arith.mulf %1022, %1028 : vector<2x32xf32>
    %cst_328 = arith.constant dense<0.000000e+00> : vector<2x128xf32>
    %1030 = tpu.matmul %1029, %398, %cst_328 {dimension_numbers = #tpu.dot_dimension_numbers<[1], [0], [0], [1], [0, 0, 1, 1], [], []>} : vector<2x32xf32>, vector<32x128xf32>, vector<2x128xf32> -> vector<2x128xf32>
    %cst_329 = arith.constant dense<0.000000e+00> : vector<2x128xf32>
    %1031 = tpu.matmul %1010, %400, %cst_329 {dimension_numbers = #tpu.dot_dimension_numbers<[1], [0], [0], [1], [0, 0, 1, 1], [], []>} : vector<2x32xf32>, vector<32x128xf32>, vector<2x128xf32> -> vector<2x128xf32>
    %1032 = arith.addf %1030, %1031 : vector<2x128xf32>
    %1033 = vector.broadcast %402 : vector<1x128xf32> to vector<2x128xf32>
    %1034 = arith.addf %1032, %1033 : vector<2x128xf32>
    %1035 = vector.extract_strided_slice %1034 {offsets = [0, 0], sizes = [2, 96], strides = [1, 1]} : vector<2x128xf32> to vector<2x96xf32>
    %1036 = arith.negf %1035 : vector<2x96xf32>
    %1037 = math.exp %1036 : vector<2x96xf32>
    %cst_330 = arith.constant 1.000000e+00 : f32
    %1038 = vector.broadcast %cst_330 : f32 to vector<2x96xf32>
    %1039 = arith.addf %1038, %1037 : vector<2x96xf32>
    %1040 = arith.divf %1038, %1039 : vector<2x96xf32>
    %1041 = vector.extract_strided_slice %1040 {offsets = [0, 0], sizes = [2, 32], strides = [1, 1]} : vector<2x96xf32> to vector<2x32xf32>
    %1042 = vector.extract_strided_slice %1040 {offsets = [0, 32], sizes = [2, 32], strides = [1, 1]} : vector<2x96xf32> to vector<2x32xf32>
    %1043 = vector.extract_strided_slice %1040 {offsets = [0, 64], sizes = [2, 32], strides = [1, 1]} : vector<2x96xf32> to vector<2x32xf32>
    %1044 = vector.extract_strided_slice %1034 {offsets = [0, 96], sizes = [2, 32], strides = [1, 1]} : vector<2x128xf32> to vector<2x32xf32>
    %1045 = math.tanh %1044 : vector<2x32xf32>
    %1046 = arith.mulf %1042, %1008 : vector<2x32xf32>
    %1047 = arith.mulf %1041, %1045 : vector<2x32xf32>
    %1048 = arith.addf %1046, %1047 : vector<2x32xf32>
    %1049 = math.tanh %1048 : vector<2x32xf32>
    %1050 = arith.mulf %1043, %1049 : vector<2x32xf32>
    %c0_331 = arith.constant 0 : index
    %c0_332 = arith.constant 0 : index
    %1051 = vector.load %arg17[%c0_331, %c0_332] : memref<32x5xf32, #tpu.memory_space<vmem>>, vector<32x5xf32>
    %cst_333 = arith.constant dense<0.000000e+00> : vector<2x5xf32>
    %1052 = tpu.matmul %1050, %1051, %cst_333 {dimension_numbers = #tpu.dot_dimension_numbers<[1], [0], [0], [1], [0, 0, 1, 1], [], []>} : vector<2x32xf32>, vector<32x5xf32>, vector<2x5xf32> -> vector<2x5xf32>
    %c0_334 = arith.constant 0 : index
    %c0_335 = arith.constant 0 : index
    %1053 = vector.load %arg18[%c0_334, %c0_335] : memref<1x5xf32, #tpu.memory_space<vmem>>, vector<1x5xf32>
    %1054 = vector.broadcast %1053 : vector<1x5xf32> to vector<2x5xf32>
    %1055 = arith.addf %1052, %1054 : vector<2x5xf32>
    %c0_336 = arith.constant 0 : index
    %c0_337 = arith.constant 0 : index
    %1056 = vector.load %arg19[%c0_336, %c0_337] : memref<2x5xf32, #tpu.memory_space<vmem>>, vector<2x5xf32>
    tpu.vector_store %arg19[%c0_336, %c0_337], %1055 {strides = array<i32>} : memref<2x5xf32, #tpu.memory_space<vmem>>, vector<2x5xf32>,
    return
  }
}

</mosaic_0001>

<llo_original>
// kernel: andi_model_forward.1
$region0: #{andi_model_forward.1}
  #allocation0 [shape = 'u32[]', space=smem, size = 0x4, offset = 0x4, fixed_abs, tag = 'smem constant byte address 0x4 - core index']
  #allocation1 [shape = 'u32[144,128]{1,0:T(1,128)}', space=vmem, size = 0x12000, scoped, tag = 'internal scratch']
  #allocation2 [shape = 'f32[32,128]{1,0:T(8,128)}', space=vmem, size = 0x4000, scoped, tag = 'scratch operand']
  %s0 = inlined_call_operand.vmem [shape: f32[32,4], index: 0, kind: input, shape index: {}]
  %s1 = inlined_call_operand.vmem [shape: f32[4,2,32,32], index: 1, kind: input, shape index: {}]
  %s2 = inlined_call_operand.vmem [shape: f32[4,96], index: 2, kind: input, shape index: {}]
  %s3 = inlined_call_operand.vmem [shape: f32[1,32], index: 3, kind: input, shape index: {}]
  %s4 = inlined_call_operand.vmem [shape: f32[16,32,64], index: 4, kind: input, shape index: {}]
  %s5 = inlined_call_operand.vmem [shape: f32[4,32,128], index: 5, kind: input, shape index: {}]
  %s6 = inlined_call_operand.vmem [shape: f32[16,1,64], index: 6, kind: input, shape index: {}]
  %s7 = inlined_call_operand.vmem [shape: f32[32,32], index: 7, kind: input, shape index: {}]
  %s8 = inlined_call_operand.vmem [shape: f32[1,32], index: 8, kind: input, shape index: {}]
  %s9 = inlined_call_operand.vmem [shape: f32[1,32], index: 9, kind: input, shape index: {}]
  %s10 = inlined_call_operand.vmem [shape: f32[1,32], index: 10, kind: input, shape index: {}]
  %s11 = inlined_call_operand.vmem [shape: f32[32,128], index: 11, kind: input, shape index: {}]
  %s12 = inlined_call_operand.vmem [shape: f32[32,128], index: 12, kind: input, shape index: {}]
  %s13 = inlined_call_operand.vmem [shape: f32[1,128], index: 13, kind: input, shape index: {}]
  %s14 = inlined_call_operand.vmem [shape: f32[32,128], index: 14, kind: input, shape index: {}]
  %s15 = inlined_call_operand.vmem [shape: f32[32,128], index: 15, kind: input, shape index: {}]
  %s16 = inlined_call_operand.vmem [shape: f32[1,128], index: 16, kind: input, shape index: {}]
  %s17 = inlined_call_operand.vmem [shape: f32[32,5], index: 17, kind: input, shape index: {}]
  %s18 = inlined_call_operand.vmem [shape: f32[1,5], index: 18, kind: input, shape index: {}]
  %s19 = inlined_call_operand.hbm [shape: f32[2,5], index: 19, kind: output, shape index: {}]
  %s20 = sld [smem:[#allocation0]]
  $region86: #{andi_model_forward.1} parent=0
    _
  %s22 = ssub.s32 1, %s20
  %s23 = scalar_select 0, %s22, %s20
  $region1: #{andi_model_forward.1} parent=0
    #allocation3 [shape = 'u8[1024]{0}', space=vmem, size = 0x400, scoped, tag = 'output window, operand 0, single buffered']
    #allocation4 [shape = 's32[1]{0}', space=sflag, size = 0x4, scoped, tag = 'scoped memory for andi_model_forward.1']
    %24 = vsyncpa [#allocation4], 0
    // Predicated region
    $region2: #{andi_model_forward.1} parent=1 // pred_check
      _
    $region3: #{andi_model_forward.1} parent=1 // pred_check_branch
      %26 = sbr.rel (0) target = $region5
    $region4: #{andi_model_forward.1} parent=1 // pred_region
      _
    $region5: #{andi_model_forward.1} parent=1 // pred_fallthru
      _
    // Predicated region
    $region6: #{andi_model_forward.1} parent=1 // pred_check
      _
    $region7: #{andi_model_forward.1} parent=1 // pred_check_branch
      %28 = sbr.rel (0) target = $region9
    $region8: #{andi_model_forward.1} parent=1 // pred_region
      _
    $region9: #{andi_model_forward.1} parent=1 // pred_fallthru
      _
    // Predicated region
    $region10: #{andi_model_forward.1} parent=1 // pred_check
      _
    $region11: #{andi_model_forward.1} parent=1 // pred_check_branch
      %30 = sbr.rel (0) target = $region13
    $region12: #{andi_model_forward.1} parent=1 // pred_region
      _
    $region13: #{andi_model_forward.1} parent=1 // pred_fallthru
      _
    // Predicated region
    $region14: #{andi_model_forward.1} parent=1 // pred_check
      _
    $region15: #{andi_model_forward.1} parent=1 // pred_check_branch
      %32 = sbr.rel (0) target = $region17
    $region16: #{andi_model_forward.1} parent=1 // pred_region
      _
    $region17: #{andi_model_forward.1} parent=1 // pred_fallthru
      _
    // Predicated region
    $region18: #{andi_model_forward.1} parent=1 // pred_check
      _
    $region19: #{andi_model_forward.1} parent=1 // pred_check_branch
      %34 = sbr.rel (0) target = $region21
    $region20: #{andi_model_forward.1} parent=1 // pred_region
      _
    $region21: #{andi_model_forward.1} parent=1 // pred_fallthru
      _
    // Predicated region
    $region22: #{andi_model_forward.1} parent=1 // pred_check
      _
    $region23: #{andi_model_forward.1} parent=1 // pred_check_branch
      %36 = sbr.rel (0) target = $region25
    $region24: #{andi_model_forward.1} parent=1 // pred_region
      _
    $region25: #{andi_model_forward.1} parent=1 // pred_fallthru
      _
    // Predicated region
    $region26: #{andi_model_forward.1} parent=1 // pred_check
      _
    $region27: #{andi_model_forward.1} parent=1 // pred_check_branch
      %38 = sbr.rel (0) target = $region29
    $region28: #{andi_model_forward.1} parent=1 // pred_region
      _
    $region29: #{andi_model_forward.1} parent=1 // pred_fallthru
      _
    // Predicated region
    $region30: #{andi_model_forward.1} parent=1 // pred_check
      _
    $region31: #{andi_model_forward.1} parent=1 // pred_check_branch
      %40 = sbr.rel (0) target = $region33
    $region32: #{andi_model_forward.1} parent=1 // pred_region
      _
    $region33: #{andi_model_forward.1} parent=1 // pred_fallthru
      _
    // Predicated region
    $region34: #{andi_model_forward.1} parent=1 // pred_check
      _
    $region35: #{andi_model_forward.1} parent=1 // pred_check_branch
      %42 = sbr.rel (0) target = $region37
    $region36: #{andi_model_forward.1} parent=1 // pred_region
      _
    $region37: #{andi_model_forward.1} parent=1 // pred_fallthru
      _
    // Predicated region
    $region38: #{andi_model_forward.1} parent=1 // pred_check
      _
    $region39: #{andi_model_forward.1} parent=1 // pred_check_branch
      %44 = sbr.rel (0) target = $region41
    $region40: #{andi_model_forward.1} parent=1 // pred_region
      _
    $region41: #{andi_model_forward.1} parent=1 // pred_fallthru
      _
    // Predicated region
    $region42: #{andi_model_forward.1} parent=1 // pred_check
      _
    $region43: #{andi_model_forward.1} parent=1 // pred_check_branch
      %46 = sbr.rel (0) target = $region45
    $region44: #{andi_model_forward.1} parent=1 // pred_region
      _
    $region45: #{andi_model_forward.1} parent=1 // pred_fallthru
      _
    // Predicated region
    $region46: #{andi_model_forward.1} parent=1 // pred_check
      _
    $region47: #{andi_model_forward.1} parent=1 // pred_check_branch
      %48 = sbr.rel (0) target = $region49
    $region48: #{andi_model_forward.1} parent=1 // pred_region
      _
    $region49: #{andi_model_forward.1} parent=1 // pred_fallthru
      _
    // Predicated region
    $region50: #{andi_model_forward.1} parent=1 // pred_check
      _
    $region51: #{andi_model_forward.1} parent=1 // pred_check_branch
      %50 = sbr.rel (0) target = $region53
    $region52: #{andi_model_forward.1} parent=1 // pred_region
      _
    $region53: #{andi_model_forward.1} parent=1 // pred_fallthru
      _
    // Predicated region
    $region54: #{andi_model_forward.1} parent=1 // pred_check
      _
    $region55: #{andi_model_forward.1} parent=1 // pred_check_branch
      %52 = sbr.rel (0) target = $region57
    $region56: #{andi_model_forward.1} parent=1 // pred_region
      _
    $region57: #{andi_model_forward.1} parent=1 // pred_fallthru
      _
    // Predicated region
    $region58: #{andi_model_forward.1} parent=1 // pred_check
      _
    $region59: #{andi_model_forward.1} parent=1 // pred_check_branch
      %54 = sbr.rel (0) target = $region61
    $region60: #{andi_model_forward.1} parent=1 // pred_region
      _
    $region61: #{andi_model_forward.1} parent=1 // pred_fallthru
      _
    // Predicated region
    $region62: #{andi_model_forward.1} parent=1 // pred_check
      _
    $region63: #{andi_model_forward.1} parent=1 // pred_check_branch
      %56 = sbr.rel (0) target = $region65
    $region64: #{andi_model_forward.1} parent=1 // pred_region
      _
    $region65: #{andi_model_forward.1} parent=1 // pred_fallthru
      _
    // Predicated region
    $region66: #{andi_model_forward.1} parent=1 // pred_check
      _
    $region67: #{andi_model_forward.1} parent=1 // pred_check_branch
      %58 = sbr.rel (0) target = $region69
    $region68: #{andi_model_forward.1} parent=1 // pred_region
      _
    $region69: #{andi_model_forward.1} parent=1 // pred_fallthru
      _
    // Predicated region
    $region70: #{andi_model_forward.1} parent=1 // pred_check
      _
    $region71: #{andi_model_forward.1} parent=1 // pred_check_branch
      %60 = sbr.rel (0) target = $region73
    $region72: #{andi_model_forward.1} parent=1 // pred_region
      _
    $region73: #{andi_model_forward.1} parent=1 // pred_fallthru
      _
    // Predicated region
    $region74: #{andi_model_forward.1} parent=1 // pred_check
      _
    $region75: #{andi_model_forward.1} parent=1 // pred_check_branch
      %62 = sbr.rel (0) target = $region77
    $region76: #{andi_model_forward.1} parent=1 // pred_region
      _
    $region77: #{andi_model_forward.1} parent=1 // pred_fallthru
      _
    %v63 = vld [vmem:[%s0] sm:$0xff]
    %v64 = vld [vmem:[%s0 + $0x8] sm:$0xff]
    %v65 = vld [vmem:[%s0 + $0x10] sm:$0xff]
    %v66 = vld [vmem:[%s0 + $0x18] sm:$0xff]
    %v67 = vld [vmem:[%s2] sm:$0xf]
    %vm68 = vcmask 31744
    %v70 = vsel %vm68, %v63, 0
    %v73 = vsel %vm68, %v64, 0
    %v76 = vsel %vm68, %v65, 0
    %v79 = vsel %vm68, %v66, 0
    %vm81 = vcmask 1043456
    %v83 = vsel %vm81, %v67, 0
    %85 = vmatprep.subr.mxu0 0.0
    %86 = vmatpush1.msra.mxu0 %v83
    %87 = vmatprep.subr.mxu0 0.0
    %88 = vmatpush1.msra.mxu0 0.0
    %89 = vmatprep.subr.mxu0 0.0
    %90 = vmatpush1.msra.mxu0 0.0
    %91 = vmatprep.subr.mxu0 0.0
    %92 = vmatpush1.msra.mxu0 0.0
    %93 = vmatprep.subr.mxu0 0.0
    %94 = vmatpush1.msra.mxu0 0.0
    %95 = vmatprep.subr.mxu0 0.0
    %96 = vmatpush1.msra.mxu0 0.0
    %97 = vmatprep.subr.mxu0 0.0
    %98 = vmatpush1.msra.mxu0 0.0
    %99 = vmatprep.subr.mxu0 0.0
    %100 = vmatpush1.msra.mxu0 0.0
    %101 = vmatprep.subr.mxu0 0.0
    %102 = vmatpush1.msra.mxu0 0.0
    %103 = vmatprep.subr.mxu0 0.0
    %104 = vmatpush1.msra.mxu0 0.0
    %105 = vmatprep.subr.mxu0 0.0
    %106 = vmatpush1.msra.mxu0 0.0
    %107 = vmatprep.subr.mxu0 0.0
    %108 = vmatpush1.msra.mxu0 0.0
    %109 = vmatprep.subr.mxu0 0.0
    %110 = vmatpush1.msra.mxu0 0.0
    %111 = vmatprep.subr.mxu0 0.0
    %112 = vmatpush1.msra.mxu0 0.0
    %113 = vmatprep.subr.mxu0 0.0
    %114 = vmatpush1.msra.mxu0 0.0
    %115 = vmatprep.subr.mxu0 0.0
    %116 = vmatpush1.msra.mxu0 0.0
    %117 = vmatprep.subr.mxu0 0.0
    %118 = vmatpush1.msra.mxu0 0.0
    %119 = vmatprep.subr.mxu0 0.0
    %120 = vmatpush1.msra.mxu0 0.0
    %121 = vmatprep.subr.mxu0 0.0
    %122 = vmatpush1.msra.mxu0 0.0
    %123 = vmatprep.subr.mxu0 0.0
    %124 = vmatpush1.msra.mxu0 0.0
    %125 = vmatprep.subr.mxu0 0.0
    %126 = vmatpush1.msra.mxu0 0.0
    %127 = vmatprep.subr.mxu0 0.0
    %128 = vmatpush1.msra.mxu0 0.0
    %129 = vmatprep.subr.mxu0 0.0
    %130 = vmatpush1.msra.mxu0 0.0
    %131 = vmatprep.subr.mxu0 0.0
    %132 = vmatpush1.msra.mxu0 0.0
    %133 = vmatprep.subr.mxu0 0.0
    %134 = vmatpush1.msra.mxu0 0.0
    %135 = vmatprep.subr.mxu0 0.0
    %136 = vmatpush1.msra.mxu0 0.0
    %137 = vmatprep.subr.mxu0 0.0
    %138 = vmatpush1.msra.mxu0 0.0
    %139 = vmatprep.subr.mxu0 0.0
    %140 = vmatpush1.msra.mxu0 0.0
    %141 = vmatprep.subr.mxu0 0.0
    %142 = vmatpush1.msra.mxu0 0.0
    %143 = vmatprep.subr.mxu0 0.0
    %144 = vmatpush1.msra.mxu0 0.0
    %145 = vmatprep.subr.mxu0 0.0
    %146 = vmatpush1.msra.mxu0 0.0
    %147 = vmatprep.subr.mxu0 0.0
    %148 = vmatpush1.msra.mxu0 0.0
    %149 = vmatprep.mubr.f32.mxu0 0.0
    %150 = vmatmul.mubr.f32.gmra.mrb[0].mxu0 %v70
    %v151 = vpop.f32.mrb[0].mxu0
    %v152 = vadd.f32 0.0, %v151
    %v153 = vpop.f32.mrb[0].mxu0
    %154 = vmatprep.mubr.f32.mxu0 0.0
    %155 = vmatmul.mubr.f32.gmra.mrb[0].mxu0 %v73
    %v156 = vpop.f32.mrb[0].mxu0
    %v157 = vadd.f32 0.0, %v156
    %v158 = vpop.f32.mrb[0].mxu0
    %159 = vmatprep.mubr.f32.mxu0 0.0
    %160 = vmatmul.mubr.f32.gmra.mrb[0].mxu0 %v76
    %v161 = vpop.f32.mrb[0].mxu0
    %v162 = vadd.f32 0.0, %v161
    %v163 = vpop.f32.mrb[0].mxu0
    %164 = vmatprep.mubr.f32.mxu0 0.0
    %165 = vmatmul.mubr.f32.gmra.mrb[0].mxu0 %v79
    %v166 = vpop.f32.mrb[0].mxu0
    %v167 = vadd.f32 0.0, %v166
    %v168 = vpop.f32.mrb[0].mxu0
    %169 = vdwg.mxu0
    %v170 = vld [vmem:[%s1] sm:$0xff]
    %v171 = vld [vmem:[%s1 + $0x8] sm:$0xff]
    %v172 = vld [vmem:[%s1 + $0x10] sm:$0xff]
    %v173 = vld [vmem:[%s1 + $0x18] sm:$0xff]
    %178 = vrot.lane.b32.xlu0 %v152, 96
    %v179 = vpop.permute.xlu0 %178
    %180 = vrot.lane.b32.xlu0 %v157, 96
    %v181 = vpop.permute.xlu0 %180
    %182 = vrot.lane.b32.xlu0 %v162, 96
    %v183 = vpop.permute.xlu0 %182
    %184 = vrot.lane.b32.xlu0 %v167, 96
    %v185 = vpop.permute.xlu0 %184
    %vm190 = vcmask 261120
    %v192 = vsel %vm190, %v170, 0
    %v195 = vsel %vm190, %v171, 0
    %v198 = vsel %vm190, %v172, 0
    %v201 = vsel %vm190, %v173, 0
    %203 = vmatprep.subr.mxu0 0.0
    %204 = vmatpush1.msra.mxu0 %v179
    %205 = vmatprep.subr.mxu0 0.0
    %206 = vmatpush1.msra.mxu0 %v181
    %207 = vmatprep.subr.mxu0 0.0
    %208 = vmatpush1.msra.mxu0 %v183
    %209 = vmatprep.subr.mxu0 0.0
    %210 = vmatpush1.msra.mxu0 %v185
    %211 = vmatprep.subr.mxu0 0.0
    %212 = vmatpush1.msra.mxu0 0.0
    %213 = vmatprep.subr.mxu0 0.0
    %214 = vmatpush1.msra.mxu0 0.0
    %215 = vmatprep.subr.mxu0 0.0
    %216 = vmatpush1.msra.mxu0 0.0
    %217 = vmatprep.subr.mxu0 0.0
    %218 = vmatpush1.msra.mxu0 0.0
    %219 = vmatprep.subr.mxu0 0.0
    %220 = vmatpush1.msra.mxu0 0.0
    %221 = vmatprep.subr.mxu0 0.0
    %222 = vmatpush1.msra.mxu0 0.0
    %223 = vmatprep.subr.mxu0 0.0
    %224 = vmatpush1.msra.mxu0 0.0
    %225 = vmatprep.subr.mxu0 0.0
    %226 = vmatpush1.msra.mxu0 0.0
    %227 = vmatprep.subr.mxu0 0.0
    %228 = vmatpush1.msra.mxu0 0.0
    %229 = vmatprep.subr.mxu0 0.0
    %230 = vmatpush1.msra.mxu0 0.0
    %231 = vmatprep.subr.mxu0 0.0
    %232 = vmatpush1.msra.mxu0 0.0
    %233 = vmatprep.subr.mxu0 0.0
    %234 = vmatpush1.msra.mxu0 0.0
    %235 = vmatprep.subr.mxu0 0.0
    %236 = vmatpush1.msra.mxu0 0.0
    %237 = vmatprep.subr.mxu0 0.0
    %238 = vmatpush1.msra.mxu0 0.0
    %239 = vmatprep.subr.mxu0 0.0
    %240 = vmatpush1.msra.mxu0 0.0
    %241 = vmatprep.subr.mxu0 0.0
    %242 = vmatpush1.msra.mxu0 0.0
    %243 = vmatprep.subr.mxu0 0.0
    %244 = vmatpush1.msra.mxu0 0.0
    %245 = vmatprep.subr.mxu0 0.0
    %246 = vmatpush1.msra.mxu0 0.0
    %247 = vmatprep.subr.mxu0 0.0
    %248 = vmatpush1.msra.mxu0 0.0
    %249 = vmatprep.subr.mxu0 0.0
    %250 = vmatpush1.msra.mxu0 0.0
    %251 = vmatprep.subr.mxu0 0.0
    %252 = vmatpush1.msra.mxu0 0.0
    %253 = vmatprep.subr.mxu0 0.0
    %254 = vmatpush1.msra.mxu0 0.0
    %255 = vmatprep.subr.mxu0 0.0
    %256 = vmatpush1.msra.mxu0 0.0
    %257 = vmatprep.subr.mxu0 0.0
    %258 = vmatpush1.msra.mxu0 0.0
    %259 = vmatprep.subr.mxu0 0.0
    %260 = vmatpush1.msra.mxu0 0.0
    %261 = vmatprep.subr.mxu0 0.0
    %262 = vmatpush1.msra.mxu0 0.0
    %263 = vmatprep.subr.mxu0 0.0
    %264 = vmatpush1.msra.mxu0 0.0
    %265 = vmatprep.subr.mxu0 0.0
    %266 = vmatpush1.msra.mxu0 0.0
    %267 = vmatprep.mubr.f32.mxu0 0.0
    %268 = vmatmul.mubr.f32.gmra.mrb[0].mxu0 %v192
    %v269 = vpop.f32.mrb[0].mxu0
    %v270 = vadd.f32 0.0, %v269
    %v271 = vpop.f32.mrb[0].mxu0
    %272 = vmatprep.mubr.f32.mxu0 0.0
    %273 = vmatmul.mubr.f32.gmra.mrb[0].mxu0 %v195
    %v274 = vpop.f32.mrb[0].mxu0
    %v275 = vadd.f32 0.0, %v274
    %v276 = vpop.f32.mrb[0].mxu0
    %277 = vmatprep.mubr.f32.mxu0 0.0
    %278 = vmatmul.mubr.f32.gmra.mrb[0].mxu0 %v198
    %v279 = vpop.f32.mrb[0].mxu0
    %v280 = vadd.f32 0.0, %v279
    %v281 = vpop.f32.mrb[0].mxu0
    %282 = vmatprep.mubr.f32.mxu0 0.0
    %283 = vmatmul.mubr.f32.gmra.mrb[0].mxu0 %v201
    %v284 = vpop.f32.mrb[0].mxu0
    %v285 = vadd.f32 0.0, %v284
    %v286 = vpop.f32.mrb[0].mxu0
    %287 = vdwg.mxu0
    %v288 = vadd.f32 %v152, %v270
    %v289 = vadd.f32 %v157, %v275
    %v290 = vadd.f32 %v162, %v280
    %v291 = vadd.f32 %v167, %v285
    %s292 = scalar_lea.vmem %s1, 32
    %v293 = vld [vmem:[%s292] sm:$0xff]
    %v294 = vld [vmem:[%s292 + $0x8] sm:$0xff]
    %v295 = vld [vmem:[%s292 + $0x10] sm:$0xff]
    %v296 = vld [vmem:[%s292 + $0x18] sm:$0xff]
    %297 = vrot.lane.b32.xlu0 %v152, 64
    %v298 = vpop.permute.xlu0 %297
    %299 = vrot.lane.b32.xlu0 %v157, 64
    %v300 = vpop.permute.xlu0 %299
    %301 = vrot.lane.b32.xlu0 %v162, 64
    %v302 = vpop.permute.xlu0 %301
    %303 = vrot.lane.b32.xlu0 %v167, 64
    %v304 = vpop.permute.xlu0 %303
    %v310 = vsel %vm190, %v293, 0
    %v313 = vsel %vm190, %v294, 0
    %v316 = vsel %vm190, %v295, 0
    %v319 = vsel %vm190, %v296, 0
    %321 = vmatprep.subr.mxu0 0.0
    %322 = vmatpush1.msra.mxu0 %v298
    %323 = vmatprep.subr.mxu0 0.0
    %324 = vmatpush1.msra.mxu0 %v300
    %325 = vmatprep.subr.mxu0 0.0
    %326 = vmatpush1.msra.mxu0 %v302
    %327 = vmatprep.subr.mxu0 0.0
    %328 = vmatpush1.msra.mxu0 %v304
    %329 = vmatprep.subr.mxu0 0.0
    %330 = vmatpush1.msra.mxu0 0.0
    %331 = vmatprep.subr.mxu0 0.0
    %332 = vmatpush1.msra.mxu0 0.0
    %333 = vmatprep.subr.mxu0 0.0
    %334 = vmatpush1.msra.mxu0 0.0
    %335 = vmatprep.subr.mxu0 0.0
    %336 = vmatpush1.msra.mxu0 0.0
    %337 = vmatprep.subr.mxu0 0.0
    %338 = vmatpush1.msra.mxu0 0.0
    %339 = vmatprep.subr.mxu0 0.0
    %340 = vmatpush1.msra.mxu0 0.0
    %341 = vmatprep.subr.mxu0 0.0
    %342 = vmatpush1.msra.mxu0 0.0
    %343 = vmatprep.subr.mxu0 0.0
    %344 = vmatpush1.msra.mxu0 0.0
    %345 = vmatprep.subr.mxu0 0.0
    %346 = vmatpush1.msra.mxu0 0.0
    %347 = vmatprep.subr.mxu0 0.0
    %348 = vmatpush1.msra.mxu0 0.0
    %349 = vmatprep.subr.mxu0 0.0
    %350 = vmatpush1.msra.mxu0 0.0
    %351 = vmatprep.subr.mxu0 0.0
    %352 = vmatpush1.msra.mxu0 0.0
    %353 = vmatprep.subr.mxu0 0.0
    %354 = vmatpush1.msra.mxu0 0.0
    %355 = vmatprep.subr.mxu0 0.0
    %356 = vmatpush1.msra.mxu0 0.0
    %357 = vmatprep.subr.mxu0 0.0
    %358 = vmatpush1.msra.mxu0 0.0
    %359 = vmatprep.subr.mxu0 0.0
    %360 = vmatpush1.msra.mxu0 0.0
    %361 = vmatprep.subr.mxu0 0.0
    %362 = vmatpush1.msra.mxu0 0.0
    %363 = vmatprep.subr.mxu0 0.0
    %364 = vmatpush1.msra.mxu0 0.0
    %365 = vmatprep.subr.mxu0 0.0
    %366 = vmatpush1.msra.mxu0 0.0
    %367 = vmatprep.subr.mxu0 0.0
    %368 = vmatpush1.msra.mxu0 0.0
    %369 = vmatprep.subr.mxu0 0.0
    %370 = vmatpush1.msra.mxu0 0.0
    %371 = vmatprep.subr.mxu0 0.0
    %372 = vmatpush1.msra.mxu0 0.0
    %373 = vmatprep.subr.mxu0 0.0
    %374 = vmatpush1.msra.mxu0 0.0
    %375 = vmatprep.subr.mxu0 0.0
    %376 = vmatpush1.msra.mxu0 0.0
    %377 = vmatprep.subr.mxu0 0.0
    %378 = vmatpush1.msra.mxu0 0.0
    %379 = vmatprep.subr.mxu0 0.0
    %380 = vmatpush1.msra.mxu0 0.0
    %381 = vmatprep.subr.mxu0 0.0
    %382 = vmatpush1.msra.mxu0 0.0
    %383 = vmatprep.subr.mxu0 0.0
    %384 = vmatpush1.msra.mxu0 0.0
    %385 = vmatprep.mubr.f32.mxu0 0.0
    %386 = vmatmul.mubr.f32.gmra.mrb[0].mxu0 %v310
    %v387 = vpop.f32.mrb[0].mxu0
    %v388 = vadd.f32 0.0, %v387
    %v389 = vpop.f32.mrb[0].mxu0
    %390 = vmatprep.mubr.f32.mxu0 0.0
    %391 = vmatmul.mubr.f32.gmra.mrb[0].mxu0 %v313
    %v392 = vpop.f32.mrb[0].mxu0
    %v393 = vadd.f32 0.0, %v392
    %v394 = vpop.f32.mrb[0].mxu0
    %395 = vmatprep.mubr.f32.mxu0 0.0
    %396 = vmatmul.mubr.f32.gmra.mrb[0].mxu0 %v316
    %v397 = vpop.f32.mrb[0].mxu0
    %v398 = vadd.f32 0.0, %v397
    %v399 = vpop.f32.mrb[0].mxu0
    %400 = vmatprep.mubr.f32.mxu0 0.0
    %401 = vmatmul.mubr.f32.gmra.mrb[0].mxu0 %v319
    %v402 = vpop.f32.mrb[0].mxu0
    %v403 = vadd.f32 0.0, %v402
    %v404 = vpop.f32.mrb[0].mxu0
    %405 = vdwg.mxu0
    %v406 = vadd.f32 %v288, %v388
    %v407 = vadd.f32 %v289, %v393
    %v408 = vadd.f32 %v290, %v398
    %v409 = vadd.f32 %v291, %v403
    %v410 = vld [vmem:[%s3] sm:$0x1]
    %v412 = vlaneseq
    %v413 = vshrl.u32 %v412, 7
    %v414 = vsub.s32 0, %v413
    %v415 = vrot.slane %v410, %v414
    %v417 = vadd.f32 %v406, %v415
    %v418 = vadd.f32 %v407, %v415
    %v419 = vadd.f32 %v408, %v415
    %v420 = vadd.f32 %v409, %v415
    %v421 = vld [vmem:[%s7] sm:$0xff]
    %v422 = vld [vmem:[%s7 + $0x8] sm:$0xff]
    %v423 = vld [vmem:[%s7 + $0x10] sm:$0xff]
    %v424 = vld [vmem:[%s7 + $0x18] sm:$0xff]
    %v425 = vld [vmem:[%s8] sm:$0x1]
    %v426 = vld [vmem:[%s4] sm:$0xff]
    %v427 = vld [vmem:[%s4 + $0x8] sm:$0xff]
    %v428 = vld [vmem:[%s4 + $0x10] sm:$0xff]
    %v429 = vld [vmem:[%s4 + $0x18] sm:$0xff]
    %v430 = vld [vmem:[%s6] sm:$0x1]
    %v432 = vlaneseq
    %v433 = vshrl.u32 %v432, 7
    %v434 = vsub.s32 0, %v433
    %v435 = vrot.slane %v430, %v434
    %v438 = vsel %vm190, %v417, 0
    %v441 = vsel %vm190, %v418, 0
    %v444 = vsel %vm190, %v419, 0
    %v447 = vsel %vm190, %v420, 0
    %449 = vmatprep.subr.mxu0 0.0
    %450 = vmatpush1.msra.mxu0 %v426
    %451 = vmatprep.subr.mxu0 0.0
    %452 = vmatpush1.msra.mxu0 %v427
    %453 = vmatprep.subr.mxu0 0.0
    %454 = vmatpush1.msra.mxu0 %v428
    %455 = vmatprep.subr.mxu0 0.0
    %456 = vmatpush1.msra.mxu0 %v429
    %457 = vmatprep.subr.mxu0 0.0
    %458 = vmatpush1.msra.mxu0 0.0
    %459 = vmatprep.subr.mxu0 0.0
    %460 = vmatpush1.msra.mxu0 0.0
    %461 = vmatprep.subr.mxu0 0.0
    %462 = vmatpush1.msra.mxu0 0.0
    %463 = vmatprep.subr.mxu0 0.0
    %464 = vmatpush1.msra.mxu0 0.0
    %465 = vmatprep.subr.mxu0 0.0
    %466 = vmatpush1.msra.mxu0 0.0
    %467 = vmatprep.subr.mxu0 0.0
    %468 = vmatpush1.msra.mxu0 0.0
    %469 = vmatprep.subr.mxu0 0.0
    %470 = vmatpush1.msra.mxu0 0.0
    %471 = vmatprep.subr.mxu0 0.0
    %472 = vmatpush1.msra.mxu0 0.0
    %473 = vmatprep.subr.mxu0 0.0
    %474 = vmatpush1.msra.mxu0 0.0
    %475 = vmatprep.subr.mxu0 0.0
    %476 = vmatpush1.msra.mxu0 0.0
    %477 = vmatprep.subr.mxu0 0.0
    %478 = vmatpush1.msra.mxu0 0.0
    %479 = vmatprep.subr.mxu0 0.0
    %480 = vmatpush1.msra.mxu0 0.0
    %481 = vmatprep.subr.mxu0 0.0
    %482 = vmatpush1.msra.mxu0 0.0
    %483 = vmatprep.subr.mxu0 0.0
    %484 = vmatpush1.msra.mxu0 0.0
    %485 = vmatprep.subr.mxu0 0.0
    %486 = vmatpush1.msra.mxu0 0.0
    %487 = vmatprep.subr.mxu0 0.0
    %488 = vmatpush1.msra.mxu0 0.0
    %489 = vmatprep.subr.mxu0 0.0
    %490 = vmatpush1.msra.mxu0 0.0
    %491 = vmatprep.subr.mxu0 0.0
    %492 = vmatpush1.msra.mxu0 0.0
    %493 = vmatprep.subr.mxu0 0.0
    %494 = vmatpush1.msra.mxu0 0.0
    %495 = vmatprep.subr.mxu0 0.0
    %496 = vmatpush1.msra.mxu0 0.0
    %497 = vmatprep.subr.mxu0 0.0
    %498 = vmatpush1.msra.mxu0 0.0
    %499 = vmatprep.subr.mxu0 0.0
    %500 = vmatpush1.msra.mxu0 0.0
    %501 = vmatprep.subr.mxu0 0.0
    %502 = vmatpush1.msra.mxu0 0.0
    %503 = vmatprep.subr.mxu0 0.0
    %504 = vmatpush1.msra.mxu0 0.0
    %505 = vmatprep.subr.mxu0 0.0
    %506 = vmatpush1.msra.mxu0 0.0
    %507 = vmatprep.subr.mxu0 0.0
    %508 = vmatpush1.msra.mxu0 0.0
    %509 = vmatprep.subr.mxu0 0.0
    %510 = vmatpush1.msra.mxu0 0.0
    %511 = vmatprep.subr.mxu0 0.0
    %512 = vmatpush1.msra.mxu0 0.0
    %513 = vmatprep.mubr.f32.mxu0 0.0
    %514 = vmatmul.mubr.f32.gmra.mrb[0].mxu0 %v438
    %v515 = vpop.f32.mrb[0].mxu0
    %v516 = vadd.f32 %v435, %v515
    %v517 = vpop.f32.mrb[0].mxu0
    %518 = vmatprep.mubr.f32.mxu0 0.0
    %519 = vmatmul.mubr.f32.gmra.mrb[0].mxu0 %v441
    %v520 = vpop.f32.mrb[0].mxu0
    %v521 = vadd.f32 %v435, %v520
    %v522 = vpop.f32.mrb[0].mxu0
    %523 = vmatprep.mubr.f32.mxu0 0.0
    %524 = vmatmul.mubr.f32.gmra.mrb[0].mxu0 %v444
    %v525 = vpop.f32.mrb[0].mxu0
    %v526 = vadd.f32 %v435, %v525
    %v527 = vpop.f32.mrb[0].mxu0
    %528 = vmatprep.mubr.f32.mxu0 0.0
    %529 = vmatmul.mubr.f32.gmra.mrb[0].mxu0 %v447
    %v530 = vpop.f32.mrb[0].mxu0
    %v531 = vadd.f32 %v435, %v530
    %v532 = vpop.f32.mrb[0].mxu0
    %533 = vdwg.mxu0
    %v534 = vld [vmem:[%s5] sm:$0xff]
    %v535 = vld [vmem:[%s5 + $0x8] sm:$0xff]
    %v536 = vld [vmem:[%s5 + $0x10] sm:$0xff]
    %v537 = vld [vmem:[%s5 + $0x18] sm:$0xff]
    %538 = vmatprep.subr.mxu0 0.0
    %539 = vmatpush1.msra.mxu0 %v534
    %540 = vmatprep.subr.mxu0 0.0
    %541 = vmatpush1.msra.mxu0 %v535
    %542 = vmatprep.subr.mxu0 0.0
    %543 = vmatpush1.msra.mxu0 %v536
    %544 = vmatprep.subr.mxu0 0.0
    %545 = vmatpush1.msra.mxu0 %v537
    %546 = vmatprep.subr.mxu0 0.0
    %547 = vmatpush1.msra.mxu0 0.0
    %548 = vmatprep.subr.mxu0 0.0
    %549 = vmatpush1.msra.mxu0 0.0
    %550 = vmatprep.subr.mxu0 0.0
    %551 = vmatpush1.msra.mxu0 0.0
    %552 = vmatprep.subr.mxu0 0.0
    %553 = vmatpush1.msra.mxu0 0.0
    %554 = vmatprep.subr.mxu0 0.0
    %555 = vmatpush1.msra.mxu0 0.0
    %556 = vmatprep.subr.mxu0 0.0
    %557 = vmatpush1.msra.mxu0 0.0
    %558 = vmatprep.subr.mxu0 0.0
    %559 = vmatpush1.msra.mxu0 0.0
    %560 = vmatprep.subr.mxu0 0.0
    %561 = vmatpush1.msra.mxu0 0.0
    %562 = vmatprep.subr.mxu0 0.0
    %563 = vmatpush1.msra.mxu0 0.0
    %564 = vmatprep.subr.mxu0 0.0
    %565 = vmatpush1.msra.mxu0 0.0
    %566 = vmatprep.subr.mxu0 0.0
    %567 = vmatpush1.msra.mxu0 0.0
    %568 = vmatprep.subr.mxu0 0.0
    %569 = vmatpush1.msra.mxu0 0.0
    %570 = vmatprep.subr.mxu0 0.0
    %571 = vmatpush1.msra.mxu0 0.0
    %572 = vmatprep.subr.mxu0 0.0
    %573 = vmatpush1.msra.mxu0 0.0
    %574 = vmatprep.subr.mxu0 0.0
    %575 = vmatpush1.msra.mxu0 0.0
    %576 = vmatprep.subr.mxu0 0.0
    %577 = vmatpush1.msra.mxu0 0.0
    %578 = vmatprep.subr.mxu0 0.0
    %579 = vmatpush1.msra.mxu0 0.0
    %580 = vmatprep.subr.mxu0 0.0
    %581 = vmatpush1.msra.mxu0 0.0
    %582 = vmatprep.subr.mxu0 0.0
    %583 = vmatpush1.msra.mxu0 0.0
    %584 = vmatprep.subr.mxu0 0.0
    %585 = vmatpush1.msra.mxu0 0.0
    %586 = vmatprep.subr.mxu0 0.0
    %587 = vmatpush1.msra.mxu0 0.0
    %588 = vmatprep.subr.mxu0 0.0
    %589 = vmatpush1.msra.mxu0 0.0
    %590 = vmatprep.subr.mxu0 0.0
    %591 = vmatpush1.msra.mxu0 0.0
    %592 = vmatprep.subr.mxu0 0.0
    %593 = vmatpush1.msra.mxu0 0.0
    %594 = vmatprep.subr.mxu0 0.0
    %595 = vmatpush1.msra.mxu0 0.0
    %596 = vmatprep.subr.mxu0 0.0
    %597 = vmatpush1.msra.mxu0 0.0
    %598 = vmatprep.subr.mxu0 0.0
    %599 = vmatpush1.msra.mxu0 0.0
    %600 = vmatprep.subr.mxu0 0.0
    %601 = vmatpush1.msra.mxu0 0.0
    %602 = vmatprep.mubr.f32.mxu0 0.0
    %603 = vmatmul.mubr.f32.gmra.mrb[0].mxu0 %v438
    %v604 = vpop.f32.mrb[0].mxu0
    %v605 = vadd.f32 0.0, %v604
    %v606 = vpop.f32.mrb[0].mxu0
    %607 = vmatprep.mubr.f32.mxu0 0.0
    %608 = vmatmul.mubr.f32.gmra.mrb[0].mxu0 %v441
    %v609 = vpop.f32.mrb[0].mxu0
    %v610 = vadd.f32 0.0, %v609
    %v611 = vpop.f32.mrb[0].mxu0
    %612 = vmatprep.mubr.f32.mxu0 0.0
    %613 = vmatmul.mubr.f32.gmra.mrb[0].mxu0 %v444
    %v614 = vpop.f32.mrb[0].mxu0
    %v615 = vadd.f32 0.0, %v614
    %v616 = vpop.f32.mrb[0].mxu0
    %617 = vmatprep.mubr.f32.mxu0 0.0
    %618 = vmatmul.mubr.f32.gmra.mrb[0].mxu0 %v447
    %v619 = vpop.f32.mrb[0].mxu0
    %v620 = vadd.f32 0.0, %v619
    %v621 = vpop.f32.mrb[0].mxu0
    %622 = vdwg.mxu0
    %623 = vmatprep.subr.mxu0 0.0
    %624 = vmatpush1.msra.mxu0 %v605
    %625 = vmatprep.subr.mxu0 0.0
    %626 = vmatpush1.msra.mxu0 %v610
    %627 = vmatprep.subr.mxu0 0.0
    %628 = vmatpush1.msra.mxu0 %v615
    %629 = vmatprep.subr.mxu0 0.0
    %630 = vmatpush1.msra.mxu0 %v620
    %631 = vmatprep.subr.mxu0 0.0
    %632 = vmatpush1.msra.mxu0 0.0
    %633 = vmatprep.subr.mxu0 0.0
    %634 = vmatpush1.msra.mxu0 0.0
    %635 = vmatprep.subr.mxu0 0.0
    %636 = vmatpush1.msra.mxu0 0.0
    %637 = vmatprep.subr.mxu0 0.0
    %638 = vmatpush1.msra.mxu0 0.0
    %639 = vmatprep.subr.mxu0 0.0
    %640 = vmatpush1.msra.mxu0 0.0
    %641 = vmatprep.subr.mxu0 0.0
    %642 = vmatpush1.msra.mxu0 0.0
    %643 = vmatprep.subr.mxu0 0.0
    %644 = vmatpush1.msra.mxu0 0.0
    %645 = vmatprep.subr.mxu0 0.0
    %646 = vmatpush1.msra.mxu0 0.0
    %647 = vmatprep.subr.mxu0 0.0
    %648 = vmatpush1.msra.mxu0 0.0
    %649 = vmatprep.subr.mxu0 0.0
    %650 = vmatpush1.msra.mxu0 0.0
    %651 = vmatprep.subr.mxu0 0.0
    %652 = vmatpush1.msra.mxu0 0.0
    %653 = vmatprep.subr.mxu0 0.0
    %654 = vmatpush1.msra.mxu0 0.0
    %655 = vmatprep.subr.mxu0 0.0
    %656 = vmatpush1.msra.mxu0 0.0
    %657 = vmatprep.subr.mxu0 0.0
    %658 = vmatpush1.msra.mxu0 0.0
    %659 = vmatprep.subr.mxu0 0.0
    %660 = vmatpush1.msra.mxu0 0.0
    %661 = vmatprep.subr.mxu0 0.0
    %662 = vmatpush1.msra.mxu0 0.0
    %663 = vmatprep.subr.mxu0 0.0
    %664 = vmatpush1.msra.mxu0 0.0
    %665 = vmatprep.subr.mxu0 0.0
    %666 = vmatpush1.msra.mxu0 0.0
    %667 = vmatprep.subr.mxu0 0.0
    %668 = vmatpush1.msra.mxu0 0.0
    %669 = vmatprep.subr.mxu0 0.0
    %670 = vmatpush1.msra.mxu0 0.0
    %671 = vmatprep.subr.mxu0 0.0
    %672 = vmatpush1.msra.mxu0 0.0
    %673 = vmatprep.subr.mxu0 0.0
    %674 = vmatpush1.msra.mxu0 0.0
    %675 = vmatprep.subr.mxu0 0.0
    %676 = vmatpush1.msra.mxu0 0.0
    %677 = vmatprep.subr.mxu0 0.0
    %678 = vmatpush1.msra.mxu0 0.0
    %679 = vmatprep.subr.mxu0 0.0
    %680 = vmatpush1.msra.mxu0 0.0
    %681 = vmatprep.subr.mxu0 0.0
    %682 = vmatpush1.msra.mxu0 0.0
    %683 = vmatprep.subr.mxu0 0.0
    %684 = vmatpush1.msra.mxu0 0.0
    %685 = vmatprep.subr.mxu0 0.0
    %686 = vmatpush1.msra.mxu0 0.0
    %687 = vmatprep.mubr.f32.mxu0 0.0
    %688 = vmatmul.mubr.f32.gmra.mrb[0].mxu0 %v192
    %v689 = vpop.f32.mrb[0].mxu0
    %v690 = vadd.f32 0.0, %v689
    %v691 = vpop.f32.mrb[0].mxu0
    %692 = vmatprep.mubr.f32.mxu0 0.0
    %693 = vmatmul.mubr.f32.gmra.mrb[0].mxu0 %v195
    %v694 = vpop.f32.mrb[0].mxu0
    %v695 = vadd.f32 0.0, %v694
    %v696 = vpop.f32.mrb[0].mxu0
    %697 = vmatprep.mubr.f32.mxu0 0.0
    %698 = vmatmul.mubr.f32.gmra.mrb[0].mxu0 %v198
    %v699 = vpop.f32.mrb[0].mxu0
    %v700 = vadd.f32 0.0, %v699
    %v701 = vpop.f32.mrb[0].mxu0
    %702 = vmatprep.mubr.f32.mxu0 0.0
    %703 = vmatmul.mubr.f32.gmra.mrb[0].mxu0 %v201
    %v704 = vpop.f32.mrb[0].mxu0
    %v705 = vadd.f32 0.0, %v704
    %v706 = vpop.f32.mrb[0].mxu0
    %707 = vdwg.mxu0
    %v708 = vadd.f32 %v516, %v690
    %v709 = vadd.f32 %v521, %v695
    %v710 = vadd.f32 %v526, %v700
    %v711 = vadd.f32 %v531, %v705
    %716 = vrot.lane.b32.xlu0 %v605, 64
    %v717 = vpop.permute.xlu0 %716
    %718 = vrot.lane.b32.xlu0 %v610, 64
    %v719 = vpop.permute.xlu0 %718
    %720 = vrot.lane.b32.xlu0 %v615, 64
    %v721 = vpop.permute.xlu0 %720
    %722 = vrot.lane.b32.xlu0 %v620, 64
    %v723 = vpop.permute.xlu0 %722
    %728 = vmatprep.subr.mxu0 0.0
    %729 = vmatpush1.msra.mxu0 %v717
    %730 = vmatprep.subr.mxu0 0.0
    %731 = vmatpush1.msra.mxu0 %v719
    %732 = vmatprep.subr.mxu0 0.0
    %733 = vmatpush1.msra.mxu0 %v721
    %734 = vmatprep.subr.mxu0 0.0
    %735 = vmatpush1.msra.mxu0 %v723
    %736 = vmatprep.subr.mxu0 0.0
    %737 = vmatpush1.msra.mxu0 0.0
    %738 = vmatprep.subr.mxu0 0.0
    %739 = vmatpush1.msra.mxu0 0.0
    %740 = vmatprep.subr.mxu0 0.0
    %741 = vmatpush1.msra.mxu0 0.0
    %742 = vmatprep.subr.mxu0 0.0
    %743 = vmatpush1.msra.mxu0 0.0
    %744 = vmatprep.subr.mxu0 0.0
    %745 = vmatpush1.msra.mxu0 0.0
    %746 = vmatprep.subr.mxu0 0.0
    %747 = vmatpush1.msra.mxu0 0.0
    %748 = vmatprep.subr.mxu0 0.0
    %749 = vmatpush1.msra.mxu0 0.0
    %750 = vmatprep.subr.mxu0 0.0
    %751 = vmatpush1.msra.mxu0 0.0
    %752 = vmatprep.subr.mxu0 0.0
    %753 = vmatpush1.msra.mxu0 0.0
    %754 = vmatprep.subr.mxu0 0.0
    %755 = vmatpush1.msra.mxu0 0.0
    %756 = vmatprep.subr.mxu0 0.0
    %757 = vmatpush1.msra.mxu0 0.0
    %758 = vmatprep.subr.mxu0 0.0
    %759 = vmatpush1.msra.mxu0 0.0
    %760 = vmatprep.subr.mxu0 0.0
    %761 = vmatpush1.msra.mxu0 0.0
    %762 = vmatprep.subr.mxu0 0.0
    %763 = vmatpush1.msra.mxu0 0.0
    %764 = vmatprep.subr.mxu0 0.0
    %765 = vmatpush1.msra.mxu0 0.0
    %766 = vmatprep.subr.mxu0 0.0
    %767 = vmatpush1.msra.mxu0 0.0
    %768 = vmatprep.subr.mxu0 0.0
    %769 = vmatpush1.msra.mxu0 0.0
    %770 = vmatprep.subr.mxu0 0.0
    %771 = vmatpush1.msra.mxu0 0.0
    %772 = vmatprep.subr.mxu0 0.0
    %773 = vmatpush1.msra.mxu0 0.0
    %774 = vmatprep.subr.mxu0 0.0
    %775 = vmatpush1.msra.mxu0 0.0
    %776 = vmatprep.subr.mxu0 0.0
    %777 = vmatpush1.msra.mxu0 0.0
    %778 = vmatprep.subr.mxu0 0.0
    %779 = vmatpush1.msra.mxu0 0.0
    %780 = vmatprep.subr.mxu0 0.0
    %781 = vmatpush1.msra.mxu0 0.0
    %782 = vmatprep.subr.mxu0 0.0
    %783 = vmatpush1.msra.mxu0 0.0
    %784 = vmatprep.subr.mxu0 0.0
    %785 = vmatpush1.msra.mxu0 0.0
    %786 = vmatprep.subr.mxu0 0.0
    %787 = vmatpush1.msra.mxu0 0.0
    %788 = vmatprep.subr.mxu0 0.0
    %789 = vmatpush1.msra.mxu0 0.0
    %790 = vmatprep.subr.mxu0 0.0
    %791 = vmatpush1.msra.mxu0 0.0
    %792 = vmatprep.mubr.f32.mxu0 0.0
    %793 = vmatmul.mubr.f32.gmra.mrb[0].mxu0 %v310
    %v794 = vpop.f32.mrb[0].mxu0
    %v795 = vadd.f32 0.0, %v794
    %v796 = vpop.f32.mrb[0].mxu0
    %797 = vmatprep.mubr.f32.mxu0 0.0
    %798 = vmatmul.mubr.f32.gmra.mrb[0].mxu0 %v313
    %v799 = vpop.f32.mrb[0].mxu0
    %v800 = vadd.f32 0.0, %v799
    %v801 = vpop.f32.mrb[0].mxu0
    %802 = vmatprep.mubr.f32.mxu0 0.0
    %803 = vmatmul.mubr.f32.gmra.mrb[0].mxu0 %v316
    %v804 = vpop.f32.mrb[0].mxu0
    %v805 = vadd.f32 0.0, %v804
    %v806 = vpop.f32.mrb[0].mxu0
    %807 = vmatprep.mubr.f32.mxu0 0.0
    %808 = vmatmul.mubr.f32.gmra.mrb[0].mxu0 %v319
    %v809 = vpop.f32.mrb[0].mxu0
    %v810 = vadd.f32 0.0, %v809
    %v811 = vpop.f32.mrb[0].mxu0
    %812 = vdwg.mxu0
    %v813 = vadd.f32 %v708, %v795
    %v814 = vadd.f32 %v709, %v800
    %v815 = vadd.f32 %v710, %v805
    %v816 = vadd.f32 %v711, %v810
    %v817 = vtanh.pop %v813
    %v818 = vtanh.pop %v814
    %v819 = vtanh.pop %v815
    %v820 = vtanh.pop %v816
    %v821 = vxor.u32 %v813, 2147483648
    %v822 = vxor.u32 %v814, 2147483648
    %v823 = vxor.u32 %v815, 2147483648
    %v824 = vxor.u32 %v816, 2147483648
    %v825 = vmul.f32 %v821, 1.442695
    %v826 = vpow.pop %v825
    %v827 = vmul.f32 %v822, 1.442695
    %v828 = vpow.pop %v827
    %v829 = vmul.f32 %v823, 1.442695
    %v830 = vpow.pop %v829
    %v831 = vmul.f32 %v824, 1.442695
    %v832 = vpow.pop %v831
    %v833 = vadd.f32 %v826, 1.0
    %v834 = vadd.f32 %v828, 1.0
    %v835 = vadd.f32 %v830, 1.0
    %v836 = vadd.f32 %v832, 1.0
    %v837 = vrcp.pop %v833
    %v838 = vmul.f32 1.0, %v837
    %v839 = vrcp.pop %v834
    %v840 = vmul.f32 1.0, %v839
    %v841 = vrcp.pop %v835
    %v842 = vmul.f32 1.0, %v841
    %v843 = vrcp.pop %v836
    %v844 = vmul.f32 1.0, %v843
    %849 = vrot.lane.b32.xlu0 %v838, 96
    %v850 = vpop.permute.xlu0 %849
    %851 = vrot.lane.b32.xlu0 %v840, 96
    %v852 = vpop.permute.xlu0 %851
    %853 = vrot.lane.b32.xlu0 %v842, 96
    %v854 = vpop.permute.xlu0 %853
    %855 = vrot.lane.b32.xlu0 %v844, 96
    %v856 = vpop.permute.xlu0 %855
    %v861 = vmul.f32 %v817, %v850
    %v862 = vmul.f32 %v818, %v852
    %v863 = vmul.f32 %v819, %v854
    %v864 = vmul.f32 %v820, %v856
    %v866 = vlaneseq
    %v867 = vshrl.u32 %v866, 7
    %v868 = vsub.s32 0, %v867
    %v869 = vrot.slane %v425, %v868
    %v872 = vsel %vm190, %v861, 0
    %v875 = vsel %vm190, %v862, 0
    %v878 = vsel %vm190, %v863, 0
    %v881 = vsel %vm190, %v864, 0
    %883 = vmatprep.subr.mxu0 0.0
    %884 = vmatpush1.msra.mxu0 %v421
    %885 = vmatprep.subr.mxu0 0.0
    %886 = vmatpush1.msra.mxu0 %v422
    %887 = vmatprep.subr.mxu0 0.0
    %888 = vmatpush1.msra.mxu0 %v423
    %889 = vmatprep.subr.mxu0 0.0
    %890 = vmatpush1.msra.mxu0 %v424
    %891 = vmatprep.subr.mxu0 0.0
    %892 = vmatpush1.msra.mxu0 0.0
    %893 = vmatprep.subr.mxu0 0.0
    %894 = vmatpush1.msra.mxu0 0.0
    %895 = vmatprep.subr.mxu0 0.0
    %896 = vmatpush1.msra.mxu0 0.0
    %897 = vmatprep.subr.mxu0 0.0
    %898 = vmatpush1.msra.mxu0 0.0
    %899 = vmatprep.subr.mxu0 0.0
    %900 = vmatpush1.msra.mxu0 0.0
    %901 = vmatprep.subr.mxu0 0.0
    %902 = vmatpush1.msra.mxu0 0.0
    %903 = vmatprep.subr.mxu0 0.0
    %904 = vmatpush1.msra.mxu0 0.0
    %905 = vmatprep.subr.mxu0 0.0
    %906 = vmatpush1.msra.mxu0 0.0
    %907 = vmatprep.subr.mxu0 0.0
    %908 = vmatpush1.msra.mxu0 0.0
    %909 = vmatprep.subr.mxu0 0.0
    %910 = vmatpush1.msra.mxu0 0.0
    %911 = vmatprep.subr.mxu0 0.0
    %912 = vmatpush1.msra.mxu0 0.0
    %913 = vmatprep.subr.mxu0 0.0
    %914 = vmatpush1.msra.mxu0 0.0
    %915 = vmatprep.subr.mxu0 0.0
    %916 = vmatpush1.msra.mxu0 0.0
    %917 = vmatprep.subr.mxu0 0.0
    %918 = vmatpush1.msra.mxu0 0.0
    %919 = vmatprep.subr.mxu0 0.0
    %920 = vmatpush1.msra.mxu0 0.0
    %921 = vmatprep.subr.mxu0 0.0
    %922 = vmatpush1.msra.mxu0 0.0
    %923 = vmatprep.subr.mxu0 0.0
    %924 = vmatpush1.msra.mxu0 0.0
    %925 = vmatprep.subr.mxu0 0.0
    %926 = vmatpush1.msra.mxu0 0.0
    %927 = vmatprep.subr.mxu0 0.0
    %928 = vmatpush1.msra.mxu0 0.0
    %929 = vmatprep.subr.mxu0 0.0
    %930 = vmatpush1.msra.mxu0 0.0
    %931 = vmatprep.subr.mxu0 0.0
    %932 = vmatpush1.msra.mxu0 0.0
    %933 = vmatprep.subr.mxu0 0.0
    %934 = vmatpush1.msra.mxu0 0.0
    %935 = vmatprep.subr.mxu0 0.0
    %936 = vmatpush1.msra.mxu0 0.0
    %937 = vmatprep.subr.mxu0 0.0
    %938 = vmatpush1.msra.mxu0 0.0
    %939 = vmatprep.subr.mxu0 0.0
    %940 = vmatpush1.msra.mxu0 0.0
    %941 = vmatprep.subr.mxu0 0.0
    %942 = vmatpush1.msra.mxu0 0.0
    %943 = vmatprep.subr.mxu0 0.0
    %944 = vmatpush1.msra.mxu0 0.0
    %945 = vmatprep.subr.mxu0 0.0
    %946 = vmatpush1.msra.mxu0 0.0
    %947 = vmatprep.mubr.f32.mxu0 0.0
    %948 = vmatmul.mubr.f32.gmra.mrb[0].mxu0 %v872
    %v949 = vpop.f32.mrb[0].mxu0
    %v950 = vadd.f32 %v869, %v949
    %v951 = vpop.f32.mrb[0].mxu0
    %952 = vmatprep.mubr.f32.mxu0 0.0
    %953 = vmatmul.mubr.f32.gmra.mrb[0].mxu0 %v875
    %v954 = vpop.f32.mrb[0].mxu0
    %v955 = vadd.f32 %v869, %v954
    %v956 = vpop.f32.mrb[0].mxu0
    %957 = vmatprep.mubr.f32.mxu0 0.0
    %958 = vmatmul.mubr.f32.gmra.mrb[0].mxu0 %v878
    %v959 = vpop.f32.mrb[0].mxu0
    %v960 = vadd.f32 %v869, %v959
    %v961 = vpop.f32.mrb[0].mxu0
    %962 = vmatprep.mubr.f32.mxu0 0.0
    %963 = vmatmul.mubr.f32.gmra.mrb[0].mxu0 %v881
    %v964 = vpop.f32.mrb[0].mxu0
    %v965 = vadd.f32 %v869, %v964
    %v966 = vpop.f32.mrb[0].mxu0
    %967 = vdwg.mxu0
    %v968 = vadd.f32 %v417, %v950
    %v969 = vadd.f32 %v418, %v955
    %v970 = vadd.f32 %v419, %v960
    %v971 = vadd.f32 %v420, %v965
    %s972 = scalar_lea.vmem %s4, 32
    %v973 = vld [vmem:[%s972] sm:$0xff]
    %v974 = vld [vmem:[%s972 + $0x8] sm:$0xff]
    %v975 = vld [vmem:[%s972 + $0x10] sm:$0xff]
    %v976 = vld [vmem:[%s972 + $0x18] sm:$0xff]
    %s977 = scalar_lea.vmem %s6, 1
    %v978 = vld [vmem:[%s977] sm:$0x1]
    %v980 = vlaneseq
    %v981 = vshrl.u32 %v980, 7
    %v982 = vsub.s32 0, %v981
    %v983 = vrot.slane %v978, %v982
    %v986 = vsel %vm190, %v950, 0
    %v989 = vsel %vm190, %v955, 0
    %v992 = vsel %vm190, %v960, 0
    %v995 = vsel %vm190, %v965, 0
    %997 = vmatprep.subr.mxu0 0.0
    %998 = vmatpush1.msra.mxu0 %v973
    %999 = vmatprep.subr.mxu0 0.0
    %1000 = vmatpush1.msra.mxu0 %v974
    %1001 = vmatprep.subr.mxu0 0.0
    %1002 = vmatpush1.msra.mxu0 %v975
    %1003 = vmatprep.subr.mxu0 0.0
    %1004 = vmatpush1.msra.mxu0 %v976
    %1005 = vmatprep.subr.mxu0 0.0
    %1006 = vmatpush1.msra.mxu0 0.0
    %1007 = vmatprep.subr.mxu0 0.0
    %1008 = vmatpush1.msra.mxu0 0.0
    %1009 = vmatprep.subr.mxu0 0.0
    %1010 = vmatpush1.msra.mxu0 0.0
    %1011 = vmatprep.subr.mxu0 0.0
    %1012 = vmatpush1.msra.mxu0 0.0
    %1013 = vmatprep.subr.mxu0 0.0
    %1014 = vmatpush1.msra.mxu0 0.0
    %1015 = vmatprep.subr.mxu0 0.0
    %1016 = vmatpush1.msra.mxu0 0.0
    %1017 = vmatprep.subr.mxu0 0.0
    %1018 = vmatpush1.msra.mxu0 0.0
    %1019 = vmatprep.subr.mxu0 0.0
    %1020 = vmatpush1.msra.mxu0 0.0
    %1021 = vmatprep.subr.mxu0 0.0
    %1022 = vmatpush1.msra.mxu0 0.0
    %1023 = vmatprep.subr.mxu0 0.0
    %1024 = vmatpush1.msra.mxu0 0.0
    %1025 = vmatprep.subr.mxu0 0.0
    %1026 = vmatpush1.msra.mxu0 0.0
    %1027 = vmatprep.subr.mxu0 0.0
    %1028 = vmatpush1.msra.mxu0 0.0
    %1029 = vmatprep.subr.mxu0 0.0
    %1030 = vmatpush1.msra.mxu0 0.0
    %1031 = vmatprep.subr.mxu0 0.0
    %1032 = vmatpush1.msra.mxu0 0.0
    %1033 = vmatprep.subr.mxu0 0.0
    %1034 = vmatpush1.msra.mxu0 0.0
    %1035 = vmatprep.subr.mxu0 0.0
    %1036 = vmatpush1.msra.mxu0 0.0
    %1037 = vmatprep.subr.mxu0 0.0
    %1038 = vmatpush1.msra.mxu0 0.0
    %1039 = vmatprep.subr.mxu0 0.0
    %1040 = vmatpush1.msra.mxu0 0.0
    %1041 = vmatprep.subr.mxu0 0.0
    %1042 = vmatpush1.msra.mxu0 0.0
    %1043 = vmatprep.subr.mxu0 0.0
    %1044 = vmatpush1.msra.mxu0 0.0
    %1045 = vmatprep.subr.mxu0 0.0
    %1046 = vmatpush1.msra.mxu0 0.0
    %1047 = vmatprep.subr.mxu0 0.0
    %1048 = vmatpush1.msra.mxu0 0.0
    %1049 = vmatprep.subr.mxu0 0.0
    %1050 = vmatpush1.msra.mxu0 0.0
    %1051 = vmatprep.subr.mxu0 0.0
    %1052 = vmatpush1.msra.mxu0 0.0
    %1053 = vmatprep.subr.mxu0 0.0
    %1054 = vmatpush1.msra.mxu0 0.0
    %1055 = vmatprep.subr.mxu0 0.0
    %1056 = vmatpush1.msra.mxu0 0.0
    %1057 = vmatprep.subr.mxu0 0.0
    %1058 = vmatpush1.msra.mxu0 0.0
    %1059 = vmatprep.subr.mxu0 0.0
    %1060 = vmatpush1.msra.mxu0 0.0
    %1061 = vmatprep.mubr.f32.mxu0 0.0
    %1062 = vmatmul.mubr.f32.gmra.mrb[0].mxu0 %v986
    %v1063 = vpop.f32.mrb[0].mxu0
    %v1064 = vadd.f32 %v983, %v1063
    %v1065 = vpop.f32.mrb[0].mxu0
    %1066 = vmatprep.mubr.f32.mxu0 0.0
    %1067 = vmatmul.mubr.f32.gmra.mrb[0].mxu0 %v989
    %v1068 = vpop.f32.mrb[0].mxu0
    %v1069 = vadd.f32 %v983, %v1068
    %v1070 = vpop.f32.mrb[0].mxu0
    %1071 = vmatprep.mubr.f32.mxu0 0.0
    %1072 = vmatmul.mubr.f32.gmra.mrb[0].mxu0 %v992
    %v1073 = vpop.f32.mrb[0].mxu0
    %v1074 = vadd.f32 %v983, %v1073
    %v1075 = vpop.f32.mrb[0].mxu0
    %1076 = vmatprep.mubr.f32.mxu0 0.0
    %1077 = vmatmul.mubr.f32.gmra.mrb[0].mxu0 %v995
    %v1078 = vpop.f32.mrb[0].mxu0
    %v1079 = vadd.f32 %v983, %v1078
    %v1080 = vpop.f32.mrb[0].mxu0
    %1081 = vdwg.mxu0
    %s1082 = scalar_lea.vmem %s5, 32
    %v1083 = vld [vmem:[%s1082] sm:$0xff]
    %v1084 = vld [vmem:[%s1082 + $0x8] sm:$0xff]
    %v1085 = vld [vmem:[%s1082 + $0x10] sm:$0xff]
    %v1086 = vld [vmem:[%s1082 + $0x18] sm:$0xff]
    %1087 = vmatprep.subr.mxu0 0.0
    %1088 = vmatpush1.msra.mxu0 %v1083
    %1089 = vmatprep.subr.mxu0 0.0
    %1090 = vmatpush1.msra.mxu0 %v1084
    %1091 = vmatprep.subr.mxu0 0.0
    %1092 = vmatpush1.msra.mxu0 %v1085
    %1093 = vmatprep.subr.mxu0 0.0
    %1094 = vmatpush1.msra.mxu0 %v1086
    %1095 = vmatprep.subr.mxu0 0.0
    %1096 = vmatpush1.msra.mxu0 0.0
    %1097 = vmatprep.subr.mxu0 0.0
    %1098 = vmatpush1.msra.mxu0 0.0
    %1099 = vmatprep.subr.mxu0 0.0
    %1100 = vmatpush1.msra.mxu0 0.0
    %1101 = vmatprep.subr.mxu0 0.0
    %1102 = vmatpush1.msra.mxu0 0.0
    %1103 = vmatprep.subr.mxu0 0.0
    %1104 = vmatpush1.msra.mxu0 0.0
    %1105 = vmatprep.subr.mxu0 0.0
    %1106 = vmatpush1.msra.mxu0 0.0
    %1107 = vmatprep.subr.mxu0 0.0
    %1108 = vmatpush1.msra.mxu0 0.0
    %1109 = vmatprep.subr.mxu0 0.0
    %1110 = vmatpush1.msra.mxu0 0.0
    %1111 = vmatprep.subr.mxu0 0.0
    %1112 = vmatpush1.msra.mxu0 0.0
    %1113 = vmatprep.subr.mxu0 0.0
    %1114 = vmatpush1.msra.mxu0 0.0
    %1115 = vmatprep.subr.mxu0 0.0
    %1116 = vmatpush1.msra.mxu0 0.0
    %1117 = vmatprep.subr.mxu0 0.0
    %1118 = vmatpush1.msra.mxu0 0.0
    %1119 = vmatprep.subr.mxu0 0.0
    %1120 = vmatpush1.msra.mxu0 0.0
    %1121 = vmatprep.subr.mxu0 0.0
    %1122 = vmatpush1.msra.mxu0 0.0
    %1123 = vmatprep.subr.mxu0 0.0
    %1124 = vmatpush1.msra.mxu0 0.0
    %1125 = vmatprep.subr.mxu0 0.0
    %1126 = vmatpush1.msra.mxu0 0.0
    %1127 = vmatprep.subr.mxu0 0.0
    %1128 = vmatpush1.msra.mxu0 0.0
    %1129 = vmatprep.subr.mxu0 0.0
    %1130 = vmatpush1.msra.mxu0 0.0
    %1131 = vmatprep.subr.mxu0 0.0
    %1132 = vmatpush1.msra.mxu0 0.0
    %1133 = vmatprep.subr.mxu0 0.0
    %1134 = vmatpush1.msra.mxu0 0.0
    %1135 = vmatprep.subr.mxu0 0.0
    %1136 = vmatpush1.msra.mxu0 0.0
    %1137 = vmatprep.subr.mxu0 0.0
    %1138 = vmatpush1.msra.mxu0 0.0
    %1139 = vmatprep.subr.mxu0 0.0
    %1140 = vmatpush1.msra.mxu0 0.0
    %1141 = vmatprep.subr.mxu0 0.0
    %1142 = vmatpush1.msra.mxu0 0.0
    %1143 = vmatprep.subr.mxu0 0.0
    %1144 = vmatpush1.msra.mxu0 0.0
    %1145 = vmatprep.subr.mxu0 0.0
    %1146 = vmatpush1.msra.mxu0 0.0
    %1147 = vmatprep.subr.mxu0 0.0
    %1148 = vmatpush1.msra.mxu0 0.0
    %1149 = vmatprep.subr.mxu0 0.0
    %1150 = vmatpush1.msra.mxu0 0.0
    %1151 = vmatprep.mubr.f32.mxu0 0.0
    %1152 = vmatmul.mubr.f32.gmra.mrb[0].mxu0 %v986
    %v1153 = vpop.f32.mrb[0].mxu0
    %v1154 = vadd.f32 0.0, %v1153
    %v1155 = vpop.f32.mrb[0].mxu0
    %1156 = vmatprep.mubr.f32.mxu0 0.0
    %1157 = vmatmul.mubr.f32.gmra.mrb[0].mxu0 %v989
    %v1158 = vpop.f32.mrb[0].mxu0
    %v1159 = vadd.f32 0.0, %v1158
    %v1160 = vpop.f32.mrb[0].mxu0
    %1161 = vmatprep.mubr.f32.mxu0 0.0
    %1162 = vmatmul.mubr.f32.gmra.mrb[0].mxu0 %v992
    %v1163 = vpop.f32.mrb[0].mxu0
    %v1164 = vadd.f32 0.0, %v1163
    %v1165 = vpop.f32.mrb[0].mxu0
    %1166 = vmatprep.mubr.f32.mxu0 0.0
    %1167 = vmatmul.mubr.f32.gmra.mrb[0].mxu0 %v995
    %v1168 = vpop.f32.mrb[0].mxu0
    %v1169 = vadd.f32 0.0, %v1168
    %v1170 = vpop.f32.mrb[0].mxu0
    %1171 = vdwg.mxu0
    %s1172 = scalar_lea.vmem %s1, 64
    %v1173 = vld [vmem:[%s1172] sm:$0xff]
    %v1174 = vld [vmem:[%s1172 + $0x8] sm:$0xff]
    %v1175 = vld [vmem:[%s1172 + $0x10] sm:$0xff]
    %v1176 = vld [vmem:[%s1172 + $0x18] sm:$0xff]
    %v1178 = vsel %vm190, %v1173, 0
    %v1181 = vsel %vm190, %v1174, 0
    %v1184 = vsel %vm190, %v1175, 0
    %v1187 = vsel %vm190, %v1176, 0
    %1189 = vmatprep.subr.mxu0 0.0
    %1190 = vmatpush1.msra.mxu0 %v1154
    %1191 = vmatprep.subr.mxu0 0.0
    %1192 = vmatpush1.msra.mxu0 %v1159
    %1193 = vmatprep.subr.mxu0 0.0
    %1194 = vmatpush1.msra.mxu0 %v1164
    %1195 = vmatprep.subr.mxu0 0.0
    %1196 = vmatpush1.msra.mxu0 %v1169
    %1197 = vmatprep.subr.mxu0 0.0
    %1198 = vmatpush1.msra.mxu0 0.0
    %1199 = vmatprep.subr.mxu0 0.0
    %1200 = vmatpush1.msra.mxu0 0.0
    %1201 = vmatprep.subr.mxu0 0.0
    %1202 = vmatpush1.msra.mxu0 0.0
    %1203 = vmatprep.subr.mxu0 0.0
    %1204 = vmatpush1.msra.mxu0 0.0
    %1205 = vmatprep.subr.mxu0 0.0
    %1206 = vmatpush1.msra.mxu0 0.0
    %1207 = vmatprep.subr.mxu0 0.0
    %1208 = vmatpush1.msra.mxu0 0.0
    %1209 = vmatprep.subr.mxu0 0.0
    %1210 = vmatpush1.msra.mxu0 0.0
    %1211 = vmatprep.subr.mxu0 0.0
    %1212 = vmatpush1.msra.mxu0 0.0
    %1213 = vmatprep.subr.mxu0 0.0
    %1214 = vmatpush1.msra.mxu0 0.0
    %1215 = vmatprep.subr.mxu0 0.0
    %1216 = vmatpush1.msra.mxu0 0.0
    %1217 = vmatprep.subr.mxu0 0.0
    %1218 = vmatpush1.msra.mxu0 0.0
    %1219 = vmatprep.subr.mxu0 0.0
    %1220 = vmatpush1.msra.mxu0 0.0
    %1221 = vmatprep.subr.mxu0 0.0
    %1222 = vmatpush1.msra.mxu0 0.0
    %1223 = vmatprep.subr.mxu0 0.0
    %1224 = vmatpush1.msra.mxu0 0.0
    %1225 = vmatprep.subr.mxu0 0.0
    %1226 = vmatpush1.msra.mxu0 0.0
    %1227 = vmatprep.subr.mxu0 0.0
    %1228 = vmatpush1.msra.mxu0 0.0
    %1229 = vmatprep.subr.mxu0 0.0
    %1230 = vmatpush1.msra.mxu0 0.0
    %1231 = vmatprep.subr.mxu0 0.0
    %1232 = vmatpush1.msra.mxu0 0.0
    %1233 = vmatprep.subr.mxu0 0.0
    %1234 = vmatpush1.msra.mxu0 0.0
    %1235 = vmatprep.subr.mxu0 0.0
    %1236 = vmatpush1.msra.mxu0 0.0
    %1237 = vmatprep.subr.mxu0 0.0
    %1238 = vmatpush1.msra.mxu0 0.0
    %1239 = vmatprep.subr.mxu0 0.0
    %1240 = vmatpush1.msra.mxu0 0.0
    %1241 = vmatprep.subr.mxu0 0.0
    %1242 = vmatpush1.msra.mxu0 0.0
    %1243 = vmatprep.subr.mxu0 0.0
    %1244 = vmatpush1.msra.mxu0 0.0
    %1245 = vmatprep.subr.mxu0 0.0
    %1246 = vmatpush1.msra.mxu0 0.0
    %1247 = vmatprep.subr.mxu0 0.0
    %1248 = vmatpush1.msra.mxu0 0.0
    %1249 = vmatprep.subr.mxu0 0.0
    %1250 = vmatpush1.msra.mxu0 0.0
    %1251 = vmatprep.subr.mxu0 0.0
    %1252 = vmatpush1.msra.mxu0 0.0
    %1253 = vmatprep.mubr.f32.mxu0 0.0
    %1254 = vmatmul.mubr.f32.gmra.mrb[0].mxu0 %v1178
    %v1255 = vpop.f32.mrb[0].mxu0
    %v1256 = vadd.f32 0.0, %v1255
    %v1257 = vpop.f32.mrb[0].mxu0
    %1258 = vmatprep.mubr.f32.mxu0 0.0
    %1259 = vmatmul.mubr.f32.gmra.mrb[0].mxu0 %v1181
    %v1260 = vpop.f32.mrb[0].mxu0
    %v1261 = vadd.f32 0.0, %v1260
    %v1262 = vpop.f32.mrb[0].mxu0
    %1263 = vmatprep.mubr.f32.mxu0 0.0
    %1264 = vmatmul.mubr.f32.gmra.mrb[0].mxu0 %v1184
    %v1265 = vpop.f32.mrb[0].mxu0
    %v1266 = vadd.f32 0.0, %v1265
    %v1267 = vpop.f32.mrb[0].mxu0
    %1268 = vmatprep.mubr.f32.mxu0 0.0
    %1269 = vmatmul.mubr.f32.gmra.mrb[0].mxu0 %v1187
    %v1270 = vpop.f32.mrb[0].mxu0
    %v1271 = vadd.f32 0.0, %v1270
    %v1272 = vpop.f32.mrb[0].mxu0
    %1273 = vdwg.mxu0
    %v1274 = vadd.f32 %v1064, %v1256
    %v1275 = vadd.f32 %v1069, %v1261
    %v1276 = vadd.f32 %v1074, %v1266
    %v1277 = vadd.f32 %v1079, %v1271
    %s1278 = scalar_lea.vmem %s1, 96
    %v1279 = vld [vmem:[%s1278] sm:$0xff]
    %v1280 = vld [vmem:[%s1278 + $0x8] sm:$0xff]
    %v1281 = vld [vmem:[%s1278 + $0x10] sm:$0xff]
    %v1282 = vld [vmem:[%s1278 + $0x18] sm:$0xff]
    %1287 = vrot.lane.b32.xlu0 %v1154, 64
    %v1288 = vpop.permute.xlu0 %1287
    %1289 = vrot.lane.b32.xlu0 %v1159, 64
    %v1290 = vpop.permute.xlu0 %1289
    %1291 = vrot.lane.b32.xlu0 %v1164, 64
    %v1292 = vpop.permute.xlu0 %1291
    %1293 = vrot.lane.b32.xlu0 %v1169, 64
    %v1294 = vpop.permute.xlu0 %1293
    %v1300 = vsel %vm190, %v1279, 0
    %v1303 = vsel %vm190, %v1280, 0
    %v1306 = vsel %vm190, %v1281, 0
    %v1309 = vsel %vm190, %v1282, 0
    %1311 = vmatprep.subr.mxu0 0.0
    %1312 = vmatpush1.msra.mxu0 %v1288
    %1313 = vmatprep.subr.mxu0 0.0
    %1314 = vmatpush1.msra.mxu0 %v1290
    %1315 = vmatprep.subr.mxu0 0.0
    %1316 = vmatpush1.msra.mxu0 %v1292
    %1317 = vmatprep.subr.mxu0 0.0
    %1318 = vmatpush1.msra.mxu0 %v1294
    %1319 = vmatprep.subr.mxu0 0.0
    %1320 = vmatpush1.msra.mxu0 0.0
    %1321 = vmatprep.subr.mxu0 0.0
    %1322 = vmatpush1.msra.mxu0 0.0
    %1323 = vmatprep.subr.mxu0 0.0
    %1324 = vmatpush1.msra.mxu0 0.0
    %1325 = vmatprep.subr.mxu0 0.0
    %1326 = vmatpush1.msra.mxu0 0.0
    %1327 = vmatprep.subr.mxu0 0.0
    %1328 = vmatpush1.msra.mxu0 0.0
    %1329 = vmatprep.subr.mxu0 0.0
    %1330 = vmatpush1.msra.mxu0 0.0
    %1331 = vmatprep.subr.mxu0 0.0
    %1332 = vmatpush1.msra.mxu0 0.0
    %1333 = vmatprep.subr.mxu0 0.0
    %1334 = vmatpush1.msra.mxu0 0.0
    %1335 = vmatprep.subr.mxu0 0.0
    %1336 = vmatpush1.msra.mxu0 0.0
    %1337 = vmatprep.subr.mxu0 0.0
    %1338 = vmatpush1.msra.mxu0 0.0
    %1339 = vmatprep.subr.mxu0 0.0
    %1340 = vmatpush1.msra.mxu0 0.0
    %1341 = vmatprep.subr.mxu0 0.0
    %1342 = vmatpush1.msra.mxu0 0.0
    %1343 = vmatprep.subr.mxu0 0.0
    %1344 = vmatpush1.msra.mxu0 0.0
    %1345 = vmatprep.subr.mxu0 0.0
    %1346 = vmatpush1.msra.mxu0 0.0
    %1347 = vmatprep.subr.mxu0 0.0
    %1348 = vmatpush1.msra.mxu0 0.0
    %1349 = vmatprep.subr.mxu0 0.0
    %1350 = vmatpush1.msra.mxu0 0.0
    %1351 = vmatprep.subr.mxu0 0.0
    %1352 = vmatpush1.msra.mxu0 0.0
    %1353 = vmatprep.subr.mxu0 0.0
    %1354 = vmatpush1.msra.mxu0 0.0
    %1355 = vmatprep.subr.mxu0 0.0
    %1356 = vmatpush1.msra.mxu0 0.0
    %1357 = vmatprep.subr.mxu0 0.0
    %1358 = vmatpush1.msra.mxu0 0.0
    %1359 = vmatprep.subr.mxu0 0.0
    %1360 = vmatpush1.msra.mxu0 0.0
    %1361 = vmatprep.subr.mxu0 0.0
    %1362 = vmatpush1.msra.mxu0 0.0
    %1363 = vmatprep.subr.mxu0 0.0
    %1364 = vmatpush1.msra.mxu0 0.0
    %1365 = vmatprep.subr.mxu0 0.0
    %1366 = vmatpush1.msra.mxu0 0.0
    %1367 = vmatprep.subr.mxu0 0.0
    %1368 = vmatpush1.msra.mxu0 0.0
    %1369 = vmatprep.subr.mxu0 0.0
    %1370 = vmatpush1.msra.mxu0 0.0
    %1371 = vmatprep.subr.mxu0 0.0
    %1372 = vmatpush1.msra.mxu0 0.0
    %1373 = vmatprep.subr.mxu0 0.0
    %1374 = vmatpush1.msra.mxu0 0.0
    %1375 = vmatprep.mubr.f32.mxu0 0.0
    %1376 = vmatmul.mubr.f32.gmra.mrb[0].mxu0 %v1300
    %v1377 = vpop.f32.mrb[0].mxu0
    %v1378 = vadd.f32 0.0, %v1377
    %v1379 = vpop.f32.mrb[0].mxu0
    %1380 = vmatprep.mubr.f32.mxu0 0.0
    %1381 = vmatmul.mubr.f32.gmra.mrb[0].mxu0 %v1303
    %v1382 = vpop.f32.mrb[0].mxu0
    %v1383 = vadd.f32 0.0, %v1382
    %v1384 = vpop.f32.mrb[0].mxu0
    %1385 = vmatprep.mubr.f32.mxu0 0.0
    %1386 = vmatmul.mubr.f32.gmra.mrb[0].mxu0 %v1306
    %v1387 = vpop.f32.mrb[0].mxu0
    %v1388 = vadd.f32 0.0, %v1387
    %v1389 = vpop.f32.mrb[0].mxu0
    %1390 = vmatprep.mubr.f32.mxu0 0.0
    %1391 = vmatmul.mubr.f32.gmra.mrb[0].mxu0 %v1309
    %v1392 = vpop.f32.mrb[0].mxu0
    %v1393 = vadd.f32 0.0, %v1392
    %v1394 = vpop.f32.mrb[0].mxu0
    %1395 = vdwg.mxu0
    %v1396 = vadd.f32 %v1274, %v1378
    %v1397 = vadd.f32 %v1275, %v1383
    %v1398 = vadd.f32 %v1276, %v1388
    %v1399 = vadd.f32 %v1277, %v1393
    %v1400 = vtanh.pop %v1396
    %v1401 = vtanh.pop %v1397
    %v1402 = vtanh.pop %v1398
    %v1403 = vtanh.pop %v1399
    %v1404 = vxor.u32 %v1396, 2147483648
    %v1405 = vxor.u32 %v1397, 2147483648
    %v1406 = vxor.u32 %v1398, 2147483648
    %v1407 = vxor.u32 %v1399, 2147483648
    %v1408 = vmul.f32 %v1404, 1.442695
    %v1409 = vpow.pop %v1408
    %v1410 = vmul.f32 %v1405, 1.442695
    %v1411 = vpow.pop %v1410
    %v1412 = vmul.f32 %v1406, 1.442695
    %v1413 = vpow.pop %v1412
    %v1414 = vmul.f32 %v1407, 1.442695
    %v1415 = vpow.pop %v1414
    %v1416 = vadd.f32 %v1409, 1.0
    %v1417 = vadd.f32 %v1411, 1.0
    %v1418 = vadd.f32 %v1413, 1.0
    %v1419 = vadd.f32 %v1415, 1.0
    %v1420 = vrcp.pop %v1416
    %v1421 = vmul.f32 1.0, %v1420
    %v1422 = vrcp.pop %v1417
    %v1423 = vmul.f32 1.0, %v1422
    %v1424 = vrcp.pop %v1418
    %v1425 = vmul.f32 1.0, %v1424
    %v1426 = vrcp.pop %v1419
    %v1427 = vmul.f32 1.0, %v1426
    %1432 = vrot.lane.b32.xlu0 %v1421, 96
    %v1433 = vpop.permute.xlu0 %1432
    %1434 = vrot.lane.b32.xlu0 %v1423, 96
    %v1435 = vpop.permute.xlu0 %1434
    %1436 = vrot.lane.b32.xlu0 %v1425, 96
    %v1437 = vpop.permute.xlu0 %1436
    %1438 = vrot.lane.b32.xlu0 %v1427, 96
    %v1439 = vpop.permute.xlu0 %1438
    %v1444 = vmul.f32 %v1400, %v1433
    %v1445 = vmul.f32 %v1401, %v1435
    %v1446 = vmul.f32 %v1402, %v1437
    %v1447 = vmul.f32 %v1403, %v1439
    %v1449 = vsel %vm190, %v1444, 0
    %v1452 = vsel %vm190, %v1445, 0
    %v1455 = vsel %vm190, %v1446, 0
    %v1458 = vsel %vm190, %v1447, 0
    %1460 = vmatprep.subr.mxu0 0.0
    %1461 = vmatpush1.msra.mxu0 %v421
    %1462 = vmatprep.subr.mxu0 0.0
    %1463 = vmatpush1.msra.mxu0 %v422
    %1464 = vmatprep.subr.mxu0 0.0
    %1465 = vmatpush1.msra.mxu0 %v423
    %1466 = vmatprep.subr.mxu0 0.0
    %1467 = vmatpush1.msra.mxu0 %v424
    %1468 = vmatprep.subr.mxu0 0.0
    %1469 = vmatpush1.msra.mxu0 0.0
    %1470 = vmatprep.subr.mxu0 0.0
    %1471 = vmatpush1.msra.mxu0 0.0
    %1472 = vmatprep.subr.mxu0 0.0
    %1473 = vmatpush1.msra.mxu0 0.0
    %1474 = vmatprep.subr.mxu0 0.0
    %1475 = vmatpush1.msra.mxu0 0.0
    %1476 = vmatprep.subr.mxu0 0.0
    %1477 = vmatpush1.msra.mxu0 0.0
    %1478 = vmatprep.subr.mxu0 0.0
    %1479 = vmatpush1.msra.mxu0 0.0
    %1480 = vmatprep.subr.mxu0 0.0
    %1481 = vmatpush1.msra.mxu0 0.0
    %1482 = vmatprep.subr.mxu0 0.0
    %1483 = vmatpush1.msra.mxu0 0.0
    %1484 = vmatprep.subr.mxu0 0.0
    %1485 = vmatpush1.msra.mxu0 0.0
    %1486 = vmatprep.subr.mxu0 0.0
    %1487 = vmatpush1.msra.mxu0 0.0
    %1488 = vmatprep.subr.mxu0 0.0
    %1489 = vmatpush1.msra.mxu0 0.0
    %1490 = vmatprep.subr.mxu0 0.0
    %1491 = vmatpush1.msra.mxu0 0.0
    %1492 = vmatprep.subr.mxu0 0.0
    %1493 = vmatpush1.msra.mxu0 0.0
    %1494 = vmatprep.subr.mxu0 0.0
    %1495 = vmatpush1.msra.mxu0 0.0
    %1496 = vmatprep.subr.mxu0 0.0
    %1497 = vmatpush1.msra.mxu0 0.0
    %1498 = vmatprep.subr.mxu0 0.0
    %1499 = vmatpush1.msra.mxu0 0.0
    %1500 = vmatprep.subr.mxu0 0.0
    %1501 = vmatpush1.msra.mxu0 0.0
    %1502 = vmatprep.subr.mxu0 0.0
    %1503 = vmatpush1.msra.mxu0 0.0
    %1504 = vmatprep.subr.mxu0 0.0
    %1505 = vmatpush1.msra.mxu0 0.0
    %1506 = vmatprep.subr.mxu0 0.0
    %1507 = vmatpush1.msra.mxu0 0.0
    %1508 = vmatprep.subr.mxu0 0.0
    %1509 = vmatpush1.msra.mxu0 0.0
    %1510 = vmatprep.subr.mxu0 0.0
    %1511 = vmatpush1.msra.mxu0 0.0
    %1512 = vmatprep.subr.mxu0 0.0
    %1513 = vmatpush1.msra.mxu0 0.0
    %1514 = vmatprep.subr.mxu0 0.0
    %1515 = vmatpush1.msra.mxu0 0.0
    %1516 = vmatprep.subr.mxu0 0.0
    %1517 = vmatpush1.msra.mxu0 0.0
    %1518 = vmatprep.subr.mxu0 0.0
    %1519 = vmatpush1.msra.mxu0 0.0
    %1520 = vmatprep.subr.mxu0 0.0
    %1521 = vmatpush1.msra.mxu0 0.0
    %1522 = vmatprep.subr.mxu0 0.0
    %1523 = vmatpush1.msra.mxu0 0.0
    %1524 = vmatprep.mubr.f32.mxu0 0.0
    %1525 = vmatmul.mubr.f32.gmra.mrb[0].mxu0 %v1449
    %v1526 = vpop.f32.mrb[0].mxu0
    %v1527 = vadd.f32 %v869, %v1526
    %v1528 = vpop.f32.mrb[0].mxu0
    %1529 = vmatprep.mubr.f32.mxu0 0.0
    %1530 = vmatmul.mubr.f32.gmra.mrb[0].mxu0 %v1452
    %v1531 = vpop.f32.mrb[0].mxu0
    %v1532 = vadd.f32 %v869, %v1531
    %v1533 = vpop.f32.mrb[0].mxu0
    %1534 = vmatprep.mubr.f32.mxu0 0.0
    %1535 = vmatmul.mubr.f32.gmra.mrb[0].mxu0 %v1455
    %v1536 = vpop.f32.mrb[0].mxu0
    %v1537 = vadd.f32 %v869, %v1536
    %v1538 = vpop.f32.mrb[0].mxu0
    %1539 = vmatprep.mubr.f32.mxu0 0.0
    %1540 = vmatmul.mubr.f32.gmra.mrb[0].mxu0 %v1458
    %v1541 = vpop.f32.mrb[0].mxu0
    %v1542 = vadd.f32 %v869, %v1541
    %v1543 = vpop.f32.mrb[0].mxu0
    %1544 = vdwg.mxu0
    %v1545 = vadd.f32 %v968, %v1527
    %v1546 = vadd.f32 %v969, %v1532
    %v1547 = vadd.f32 %v970, %v1537
    %v1548 = vadd.f32 %v971, %v1542
    %s1549 = scalar_lea.vmem %s4, 64
    %v1550 = vld [vmem:[%s1549] sm:$0xff]
    %v1551 = vld [vmem:[%s1549 + $0x8] sm:$0xff]
    %v1552 = vld [vmem:[%s1549 + $0x10] sm:$0xff]
    %v1553 = vld [vmem:[%s1549 + $0x18] sm:$0xff]
    %s1554 = scalar_lea.vmem %s6, 2
    %v1555 = vld [vmem:[%s1554] sm:$0x1]
    %v1557 = vlaneseq
    %v1558 = vshrl.u32 %v1557, 7
    %v1559 = vsub.s32 0, %v1558
    %v1560 = vrot.slane %v1555, %v1559
    %v1563 = vsel %vm190, %v1527, 0
    %v1566 = vsel %vm190, %v1532, 0
    %v1569 = vsel %vm190, %v1537, 0
    %v1572 = vsel %vm190, %v1542, 0
    %1574 = vmatprep.subr.mxu0 0.0
    %1575 = vmatpush1.msra.mxu0 %v1550
    %1576 = vmatprep.subr.mxu0 0.0
    %1577 = vmatpush1.msra.mxu0 %v1551
    %1578 = vmatprep.subr.mxu0 0.0
    %1579 = vmatpush1.msra.mxu0 %v1552
    %1580 = vmatprep.subr.mxu0 0.0
    %1581 = vmatpush1.msra.mxu0 %v1553
    %1582 = vmatprep.subr.mxu0 0.0
    %1583 = vmatpush1.msra.mxu0 0.0
    %1584 = vmatprep.subr.mxu0 0.0
    %1585 = vmatpush1.msra.mxu0 0.0
    %1586 = vmatprep.subr.mxu0 0.0
    %1587 = vmatpush1.msra.mxu0 0.0
    %1588 = vmatprep.subr.mxu0 0.0
    %1589 = vmatpush1.msra.mxu0 0.0
    %1590 = vmatprep.subr.mxu0 0.0
    %1591 = vmatpush1.msra.mxu0 0.0
    %1592 = vmatprep.subr.mxu0 0.0
    %1593 = vmatpush1.msra.mxu0 0.0
    %1594 = vmatprep.subr.mxu0 0.0
    %1595 = vmatpush1.msra.mxu0 0.0
    %1596 = vmatprep.subr.mxu0 0.0
    %1597 = vmatpush1.msra.mxu0 0.0
    %1598 = vmatprep.subr.mxu0 0.0
    %1599 = vmatpush1.msra.mxu0 0.0
    %1600 = vmatprep.subr.mxu0 0.0
    %1601 = vmatpush1.msra.mxu0 0.0
    %1602 = vmatprep.subr.mxu0 0.0
    %1603 = vmatpush1.msra.mxu0 0.0
    %1604 = vmatprep.subr.mxu0 0.0
    %1605 = vmatpush1.msra.mxu0 0.0
    %1606 = vmatprep.subr.mxu0 0.0
    %1607 = vmatpush1.msra.mxu0 0.0
    %1608 = vmatprep.subr.mxu0 0.0
    %1609 = vmatpush1.msra.mxu0 0.0
    %1610 = vmatprep.subr.mxu0 0.0
    %1611 = vmatpush1.msra.mxu0 0.0
    %1612 = vmatprep.subr.mxu0 0.0
    %1613 = vmatpush1.msra.mxu0 0.0
    %1614 = vmatprep.subr.mxu0 0.0
    %1615 = vmatpush1.msra.mxu0 0.0
    %1616 = vmatprep.subr.mxu0 0.0
    %1617 = vmatpush1.msra.mxu0 0.0
    %1618 = vmatprep.subr.mxu0 0.0
    %1619 = vmatpush1.msra.mxu0 0.0
    %1620 = vmatprep.subr.mxu0 0.0
    %1621 = vmatpush1.msra.mxu0 0.0
    %1622 = vmatprep.subr.mxu0 0.0
    %1623 = vmatpush1.msra.mxu0 0.0
    %1624 = vmatprep.subr.mxu0 0.0
    %1625 = vmatpush1.msra.mxu0 0.0
    %1626 = vmatprep.subr.mxu0 0.0
    %1627 = vmatpush1.msra.mxu0 0.0
    %1628 = vmatprep.subr.mxu0 0.0
    %1629 = vmatpush1.msra.mxu0 0.0
    %1630 = vmatprep.subr.mxu0 0.0
    %1631 = vmatpush1.msra.mxu0 0.0
    %1632 = vmatprep.subr.mxu0 0.0
    %1633 = vmatpush1.msra.mxu0 0.0
    %1634 = vmatprep.subr.mxu0 0.0
    %1635 = vmatpush1.msra.mxu0 0.0
    %1636 = vmatprep.subr.mxu0 0.0
    %1637 = vmatpush1.msra.mxu0 0.0
    %1638 = vmatprep.mubr.f32.mxu0 0.0
    %1639 = vmatmul.mubr.f32.gmra.mrb[0].mxu0 %v1563
    %v1640 = vpop.f32.mrb[0].mxu0
    %v1641 = vadd.f32 %v1560, %v1640
    %v1642 = vpop.f32.mrb[0].mxu0
    %1643 = vmatprep.mubr.f32.mxu0 0.0
    %1644 = vmatmul.mubr.f32.gmra.mrb[0].mxu0 %v1566
    %v1645 = vpop.f32.mrb[0].mxu0
    %v1646 = vadd.f32 %v1560, %v1645
    %v1647 = vpop.f32.mrb[0].mxu0
    %1648 = vmatprep.mubr.f32.mxu0 0.0
    %1649 = vmatmul.mubr.f32.gmra.mrb[0].mxu0 %v1569
    %v1650 = vpop.f32.mrb[0].mxu0
    %v1651 = vadd.f32 %v1560, %v1650
    %v1652 = vpop.f32.mrb[0].mxu0
    %1653 = vmatprep.mubr.f32.mxu0 0.0
    %1654 = vmatmul.mubr.f32.gmra.mrb[0].mxu0 %v1572
    %v1655 = vpop.f32.mrb[0].mxu0
    %v1656 = vadd.f32 %v1560, %v1655
    %v1657 = vpop.f32.mrb[0].mxu0
    %1658 = vdwg.mxu0
    %s1659 = scalar_lea.vmem %s5, 64
    %v1660 = vld [vmem:[%s1659] sm:$0xff]
    %v1661 = vld [vmem:[%s1659 + $0x8] sm:$0xff]
    %v1662 = vld [vmem:[%s1659 + $0x10] sm:$0xff]
    %v1663 = vld [vmem:[%s1659 + $0x18] sm:$0xff]
    %1664 = vmatprep.subr.mxu0 0.0
    %1665 = vmatpush1.msra.mxu0 %v1660
    %1666 = vmatprep.subr.mxu0 0.0
    %1667 = vmatpush1.msra.mxu0 %v1661
    %1668 = vmatprep.subr.mxu0 0.0
    %1669 = vmatpush1.msra.mxu0 %v1662
    %1670 = vmatprep.subr.mxu0 0.0
    %1671 = vmatpush1.msra.mxu0 %v1663
    %1672 = vmatprep.subr.mxu0 0.0
    %1673 = vmatpush1.msra.mxu0 0.0
    %1674 = vmatprep.subr.mxu0 0.0
    %1675 = vmatpush1.msra.mxu0 0.0
    %1676 = vmatprep.subr.mxu0 0.0
    %1677 = vmatpush1.msra.mxu0 0.0
    %1678 = vmatprep.subr.mxu0 0.0
    %1679 = vmatpush1.msra.mxu0 0.0
    %1680 = vmatprep.subr.mxu0 0.0
    %1681 = vmatpush1.msra.mxu0 0.0
    %1682 = vmatprep.subr.mxu0 0.0
    %1683 = vmatpush1.msra.mxu0 0.0
    %1684 = vmatprep.subr.mxu0 0.0
    %1685 = vmatpush1.msra.mxu0 0.0
    %1686 = vmatprep.subr.mxu0 0.0
    %1687 = vmatpush1.msra.mxu0 0.0
    %1688 = vmatprep.subr.mxu0 0.0
    %1689 = vmatpush1.msra.mxu0 0.0
    %1690 = vmatprep.subr.mxu0 0.0
    %1691 = vmatpush1.msra.mxu0 0.0
    %1692 = vmatprep.subr.mxu0 0.0
    %1693 = vmatpush1.msra.mxu0 0.0
    %1694 = vmatprep.subr.mxu0 0.0
    %1695 = vmatpush1.msra.mxu0 0.0
    %1696 = vmatprep.subr.mxu0 0.0
    %1697 = vmatpush1.msra.mxu0 0.0
    %1698 = vmatprep.subr.mxu0 0.0
    %1699 = vmatpush1.msra.mxu0 0.0
    %1700 = vmatprep.subr.mxu0 0.0
    %1701 = vmatpush1.msra.mxu0 0.0
    %1702 = vmatprep.subr.mxu0 0.0
    %1703 = vmatpush1.msra.mxu0 0.0
    %1704 = vmatprep.subr.mxu0 0.0
    %1705 = vmatpush1.msra.mxu0 0.0
    %1706 = vmatprep.subr.mxu0 0.0
    %1707 = vmatpush1.msra.mxu0 0.0
    %1708 = vmatprep.subr.mxu0 0.0
    %1709 = vmatpush1.msra.mxu0 0.0
    %1710 = vmatprep.subr.mxu0 0.0
    %1711 = vmatpush1.msra.mxu0 0.0
    %1712 = vmatprep.subr.mxu0 0.0
    %1713 = vmatpush1.msra.mxu0 0.0
    %1714 = vmatprep.subr.mxu0 0.0
    %1715 = vmatpush1.msra.mxu0 0.0
    %1716 = vmatprep.subr.mxu0 0.0
    %1717 = vmatpush1.msra.mxu0 0.0
    %1718 = vmatprep.subr.mxu0 0.0
    %1719 = vmatpush1.msra.mxu0 0.0
    %1720 = vmatprep.subr.mxu0 0.0
    %1721 = vmatpush1.msra.mxu0 0.0
    %1722 = vmatprep.subr.mxu0 0.0
    %1723 = vmatpush1.msra.mxu0 0.0
    %1724 = vmatprep.subr.mxu0 0.0
    %1725 = vmatpush1.msra.mxu0 0.0
    %1726 = vmatprep.subr.mxu0 0.0
    %1727 = vmatpush1.msra.mxu0 0.0
    %1728 = vmatprep.mubr.f32.mxu0 0.0
    %1729 = vmatmul.mubr.f32.gmra.mrb[0].mxu0 %v1563
    %v1730 = vpop.f32.mrb[0].mxu0
    %v1731 = vadd.f32 0.0, %v1730
    %v1732 = vpop.f32.mrb[0].mxu0
    %1733 = vmatprep.mubr.f32.mxu0 0.0
    %1734 = vmatmul.mubr.f32.gmra.mrb[0].mxu0 %v1566
    %v1735 = vpop.f32.mrb[0].mxu0
    %v1736 = vadd.f32 0.0, %v1735
    %v1737 = vpop.f32.mrb[0].mxu0
    %1738 = vmatprep.mubr.f32.mxu0 0.0
    %1739 = vmatmul.mubr.f32.gmra.mrb[0].mxu0 %v1569
    %v1740 = vpop.f32.mrb[0].mxu0
    %v1741 = vadd.f32 0.0, %v1740
    %v1742 = vpop.f32.mrb[0].mxu0
    %1743 = vmatprep.mubr.f32.mxu0 0.0
    %1744 = vmatmul.mubr.f32.gmra.mrb[0].mxu0 %v1572
    %v1745 = vpop.f32.mrb[0].mxu0
    %v1746 = vadd.f32 0.0, %v1745
    %v1747 = vpop.f32.mrb[0].mxu0
    %1748 = vdwg.mxu0
    %s1749 = scalar_lea.vmem %s1, 128
    %v1750 = vld [vmem:[%s1749] sm:$0xff]
    %v1751 = vld [vmem:[%s1749 + $0x8] sm:$0xff]
    %v1752 = vld [vmem:[%s1749 + $0x10] sm:$0xff]
    %v1753 = vld [vmem:[%s1749 + $0x18] sm:$0xff]
    %v1755 = vsel %vm190, %v1750, 0
    %v1758 = vsel %vm190, %v1751, 0
    %v1761 = vsel %vm190, %v1752, 0
    %v1764 = vsel %vm190, %v1753, 0
    %1766 = vmatprep.subr.mxu0 0.0
    %1767 = vmatpush1.msra.mxu0 %v1731
    %1768 = vmatprep.subr.mxu0 0.0
    %1769 = vmatpush1.msra.mxu0 %v1736
    %1770 = vmatprep.subr.mxu0 0.0
    %1771 = vmatpush1.msra.mxu0 %v1741
    %1772 = vmatprep.subr.mxu0 0.0
    %1773 = vmatpush1.msra.mxu0 %v1746
    %1774 = vmatprep.subr.mxu0 0.0
    %1775 = vmatpush1.msra.mxu0 0.0
    %1776 = vmatprep.subr.mxu0 0.0
    %1777 = vmatpush1.msra.mxu0 0.0
    %1778 = vmatprep.subr.mxu0 0.0
    %1779 = vmatpush1.msra.mxu0 0.0
    %1780 = vmatprep.subr.mxu0 0.0
    %1781 = vmatpush1.msra.mxu0 0.0
    %1782 = vmatprep.subr.mxu0 0.0
    %1783 = vmatpush1.msra.mxu0 0.0
    %1784 = vmatprep.subr.mxu0 0.0
    %1785 = vmatpush1.msra.mxu0 0.0
    %1786 = vmatprep.subr.mxu0 0.0
    %1787 = vmatpush1.msra.mxu0 0.0
    %1788 = vmatprep.subr.mxu0 0.0
    %1789 = vmatpush1.msra.mxu0 0.0
    %1790 = vmatprep.subr.mxu0 0.0
    %1791 = vmatpush1.msra.mxu0 0.0
    %1792 = vmatprep.subr.mxu0 0.0
    %1793 = vmatpush1.msra.mxu0 0.0
    %1794 = vmatprep.subr.mxu0 0.0
    %1795 = vmatpush1.msra.mxu0 0.0
    %1796 = vmatprep.subr.mxu0 0.0
    %1797 = vmatpush1.msra.mxu0 0.0
    %1798 = vmatprep.subr.mxu0 0.0
    %1799 = vmatpush1.msra.mxu0 0.0
    %1800 = vmatprep.subr.mxu0 0.0
    %1801 = vmatpush1.msra.mxu0 0.0
    %1802 = vmatprep.subr.mxu0 0.0
    %1803 = vmatpush1.msra.mxu0 0.0
    %1804 = vmatprep.subr.mxu0 0.0
    %1805 = vmatpush1.msra.mxu0 0.0
    %1806 = vmatprep.subr.mxu0 0.0
    %1807 = vmatpush1.msra.mxu0 0.0
    %1808 = vmatprep.subr.mxu0 0.0
    %1809 = vmatpush1.msra.mxu0 0.0
    %1810 = vmatprep.subr.mxu0 0.0
    %1811 = vmatpush1.msra.mxu0 0.0
    %1812 = vmatprep.subr.mxu0 0.0
    %1813 = vmatpush1.msra.mxu0 0.0
    %1814 = vmatprep.subr.mxu0 0.0
    %1815 = vmatpush1.msra.mxu0 0.0
    %1816 = vmatprep.subr.mxu0 0.0
    %1817 = vmatpush1.msra.mxu0 0.0
    %1818 = vmatprep.subr.mxu0 0.0
    %1819 = vmatpush1.msra.mxu0 0.0
    %1820 = vmatprep.subr.mxu0 0.0
    %1821 = vmatpush1.msra.mxu0 0.0
    %1822 = vmatprep.subr.mxu0 0.0
    %1823 = vmatpush1.msra.mxu0 0.0
    %1824 = vmatprep.subr.mxu0 0.0
    %1825 = vmatpush1.msra.mxu0 0.0
    %1826 = vmatprep.subr.mxu0 0.0
    %1827 = vmatpush1.msra.mxu0 0.0
    %1828 = vmatprep.subr.mxu0 0.0
    %1829 = vmatpush1.msra.mxu0 0.0
    %1830 = vmatprep.mubr.f32.mxu0 0.0
    %1831 = vmatmul.mubr.f32.gmra.mrb[0].mxu0 %v1755
    %v1832 = vpop.f32.mrb[0].mxu0
    %v1833 = vadd.f32 0.0, %v1832
    %v1834 = vpop.f32.mrb[0].mxu0
    %1835 = vmatprep.mubr.f32.mxu0 0.0
    %1836 = vmatmul.mubr.f32.gmra.mrb[0].mxu0 %v1758
    %v1837 = vpop.f32.mrb[0].mxu0
    %v1838 = vadd.f32 0.0, %v1837
    %v1839 = vpop.f32.mrb[0].mxu0
    %1840 = vmatprep.mubr.f32.mxu0 0.0
    %1841 = vmatmul.mubr.f32.gmra.mrb[0].mxu0 %v1761
    %v1842 = vpop.f32.mrb[0].mxu0
    %v1843 = vadd.f32 0.0, %v1842
    %v1844 = vpop.f32.mrb[0].mxu0
    %1845 = vmatprep.mubr.f32.mxu0 0.0
    %1846 = vmatmul.mubr.f32.gmra.mrb[0].mxu0 %v1764
    %v1847 = vpop.f32.mrb[0].mxu0
    %v1848 = vadd.f32 0.0, %v1847
    %v1849 = vpop.f32.mrb[0].mxu0
    %1850 = vdwg.mxu0
    %v1851 = vadd.f32 %v1641, %v1833
    %v1852 = vadd.f32 %v1646, %v1838
    %v1853 = vadd.f32 %v1651, %v1843
    %v1854 = vadd.f32 %v1656, %v1848
    %s1855 = scalar_lea.vmem %s1, 160
    %v1856 = vld [vmem:[%s1855] sm:$0xff]
    %v1857 = vld [vmem:[%s1855 + $0x8] sm:$0xff]
    %v1858 = vld [vmem:[%s1855 + $0x10] sm:$0xff]
    %v1859 = vld [vmem:[%s1855 + $0x18] sm:$0xff]
    %1864 = vrot.lane.b32.xlu0 %v1731, 64
    %v1865 = vpop.permute.xlu0 %1864
    %1866 = vrot.lane.b32.xlu0 %v1736, 64
    %v1867 = vpop.permute.xlu0 %1866
    %1868 = vrot.lane.b32.xlu0 %v1741, 64
    %v1869 = vpop.permute.xlu0 %1868
    %1870 = vrot.lane.b32.xlu0 %v1746, 64
    %v1871 = vpop.permute.xlu0 %1870
    %v1877 = vsel %vm190, %v1856, 0
    %v1880 = vsel %vm190, %v1857, 0
    %v1883 = vsel %vm190, %v1858, 0
    %v1886 = vsel %vm190, %v1859, 0
    %1888 = vmatprep.subr.mxu0 0.0
    %1889 = vmatpush1.msra.mxu0 %v1865
    %1890 = vmatprep.subr.mxu0 0.0
    %1891 = vmatpush1.msra.mxu0 %v1867
    %1892 = vmatprep.subr.mxu0 0.0
    %1893 = vmatpush1.msra.mxu0 %v1869
    %1894 = vmatprep.subr.mxu0 0.0
    %1895 = vmatpush1.msra.mxu0 %v1871
    %1896 = vmatprep.subr.mxu0 0.0
    %1897 = vmatpush1.msra.mxu0 0.0
    %1898 = vmatprep.subr.mxu0 0.0
    %1899 = vmatpush1.msra.mxu0 0.0
    %1900 = vmatprep.subr.mxu0 0.0
    %1901 = vmatpush1.msra.mxu0 0.0
    %1902 = vmatprep.subr.mxu0 0.0
    %1903 = vmatpush1.msra.mxu0 0.0
    %1904 = vmatprep.subr.mxu0 0.0
    %1905 = vmatpush1.msra.mxu0 0.0
    %1906 = vmatprep.subr.mxu0 0.0
    %1907 = vmatpush1.msra.mxu0 0.0
    %1908 = vmatprep.subr.mxu0 0.0
    %1909 = vmatpush1.msra.mxu0 0.0
    %1910 = vmatprep.subr.mxu0 0.0
    %1911 = vmatpush1.msra.mxu0 0.0
    %1912 = vmatprep.subr.mxu0 0.0
    %1913 = vmatpush1.msra.mxu0 0.0
    %1914 = vmatprep.subr.mxu0 0.0
    %1915 = vmatpush1.msra.mxu0 0.0
    %1916 = vmatprep.subr.mxu0 0.0
    %1917 = vmatpush1.msra.mxu0 0.0
    %1918 = vmatprep.subr.mxu0 0.0
    %1919 = vmatpush1.msra.mxu0 0.0
    %1920 = vmatprep.subr.mxu0 0.0
    %1921 = vmatpush1.msra.mxu0 0.0
    %1922 = vmatprep.subr.mxu0 0.0
    %1923 = vmatpush1.msra.mxu0 0.0
    %1924 = vmatprep.subr.mxu0 0.0
    %1925 = vmatpush1.msra.mxu0 0.0
    %1926 = vmatprep.subr.mxu0 0.0
    %1927 = vmatpush1.msra.mxu0 0.0
    %1928 = vmatprep.subr.mxu0 0.0
    %1929 = vmatpush1.msra.mxu0 0.0
    %1930 = vmatprep.subr.mxu0 0.0
    %1931 = vmatpush1.msra.mxu0 0.0
    %1932 = vmatprep.subr.mxu0 0.0
    %1933 = vmatpush1.msra.mxu0 0.0
    %1934 = vmatprep.subr.mxu0 0.0
    %1935 = vmatpush1.msra.mxu0 0.0
    %1936 = vmatprep.subr.mxu0 0.0
    %1937 = vmatpush1.msra.mxu0 0.0
    %1938 = vmatprep.subr.mxu0 0.0
    %1939 = vmatpush1.msra.mxu0 0.0
    %1940 = vmatprep.subr.mxu0 0.0
    %1941 = vmatpush1.msra.mxu0 0.0
    %1942 = vmatprep.subr.mxu0 0.0
    %1943 = vmatpush1.msra.mxu0 0.0
    %1944 = vmatprep.subr.mxu0 0.0
    %1945 = vmatpush1.msra.mxu0 0.0
    %1946 = vmatprep.subr.mxu0 0.0
    %1947 = vmatpush1.msra.mxu0 0.0
    %1948 = vmatprep.subr.mxu0 0.0
    %1949 = vmatpush1.msra.mxu0 0.0
    %1950 = vmatprep.subr.mxu0 0.0
    %1951 = vmatpush1.msra.mxu0 0.0
    %1952 = vmatprep.mubr.f32.mxu0 0.0
    %1953 = vmatmul.mubr.f32.gmra.mrb[0].mxu0 %v1877
    %v1954 = vpop.f32.mrb[0].mxu0
    %v1955 = vadd.f32 0.0, %v1954
    %v1956 = vpop.f32.mrb[0].mxu0
    %1957 = vmatprep.mubr.f32.mxu0 0.0
    %1958 = vmatmul.mubr.f32.gmra.mrb[0].mxu0 %v1880
    %v1959 = vpop.f32.mrb[0].mxu0
    %v1960 = vadd.f32 0.0, %v1959
    %v1961 = vpop.f32.mrb[0].mxu0
    %1962 = vmatprep.mubr.f32.mxu0 0.0
    %1963 = vmatmul.mubr.f32.gmra.mrb[0].mxu0 %v1883
    %v1964 = vpop.f32.mrb[0].mxu0
    %v1965 = vadd.f32 0.0, %v1964
    %v1966 = vpop.f32.mrb[0].mxu0
    %1967 = vmatprep.mubr.f32.mxu0 0.0
    %1968 = vmatmul.mubr.f32.gmra.mrb[0].mxu0 %v1886
    %v1969 = vpop.f32.mrb[0].mxu0
    %v1970 = vadd.f32 0.0, %v1969
    %v1971 = vpop.f32.mrb[0].mxu0
    %1972 = vdwg.mxu0
    %v1973 = vadd.f32 %v1851, %v1955
    %v1974 = vadd.f32 %v1852, %v1960
    %v1975 = vadd.f32 %v1853, %v1965
    %v1976 = vadd.f32 %v1854, %v1970
    %v1977 = vtanh.pop %v1973
    %v1978 = vtanh.pop %v1974
    %v1979 = vtanh.pop %v1975
    %v1980 = vtanh.pop %v1976
    %v1981 = vxor.u32 %v1973, 2147483648
    %v1982 = vxor.u32 %v1974, 2147483648
    %v1983 = vxor.u32 %v1975, 2147483648
    %v1984 = vxor.u32 %v1976, 2147483648
    %v1985 = vmul.f32 %v1981, 1.442695
    %v1986 = vpow.pop %v1985
    %v1987 = vmul.f32 %v1982, 1.442695
    %v1988 = vpow.pop %v1987
    %v1989 = vmul.f32 %v1983, 1.442695
    %v1990 = vpow.pop %v1989
    %v1991 = vmul.f32 %v1984, 1.442695
    %v1992 = vpow.pop %v1991
    %v1993 = vadd.f32 %v1986, 1.0
    %v1994 = vadd.f32 %v1988, 1.0
    %v1995 = vadd.f32 %v1990, 1.0
    %v1996 = vadd.f32 %v1992, 1.0
    %v1997 = vrcp.pop %v1993
    %v1998 = vmul.f32 1.0, %v1997
    %v1999 = vrcp.pop %v1994
    %v2000 = vmul.f32 1.0, %v1999
    %v2001 = vrcp.pop %v1995
    %v2002 = vmul.f32 1.0, %v2001
    %v2003 = vrcp.pop %v1996
    %v2004 = vmul.f32 1.0, %v2003
    %2009 = vrot.lane.b32.xlu0 %v1998, 96
    %v2010 = vpop.permute.xlu0 %2009
    %2011 = vrot.lane.b32.xlu0 %v2000, 96
    %v2012 = vpop.permute.xlu0 %2011
    %2013 = vrot.lane.b32.xlu0 %v2002, 96
    %v2014 = vpop.permute.xlu0 %2013
    %2015 = vrot.lane.b32.xlu0 %v2004, 96
    %v2016 = vpop.permute.xlu0 %2015
    %v2021 = vmul.f32 %v1977, %v2010
    %v2022 = vmul.f32 %v1978, %v2012
    %v2023 = vmul.f32 %v1979, %v2014
    %v2024 = vmul.f32 %v1980, %v2016
    %v2026 = vsel %vm190, %v2021, 0
    %v2029 = vsel %vm190, %v2022, 0
    %v2032 = vsel %vm190, %v2023, 0
    %v2035 = vsel %vm190, %v2024, 0
    %2037 = vmatprep.subr.mxu0 0.0
    %2038 = vmatpush1.msra.mxu0 %v421
    %2039 = vmatprep.subr.mxu0 0.0
    %2040 = vmatpush1.msra.mxu0 %v422
    %2041 = vmatprep.subr.mxu0 0.0
    %2042 = vmatpush1.msra.mxu0 %v423
    %2043 = vmatprep.subr.mxu0 0.0
    %2044 = vmatpush1.msra.mxu0 %v424
    %2045 = vmatprep.subr.mxu0 0.0
    %2046 = vmatpush1.msra.mxu0 0.0
    %2047 = vmatprep.subr.mxu0 0.0
    %2048 = vmatpush1.msra.mxu0 0.0
    %2049 = vmatprep.subr.mxu0 0.0
    %2050 = vmatpush1.msra.mxu0 0.0
    %2051 = vmatprep.subr.mxu0 0.0
    %2052 = vmatpush1.msra.mxu0 0.0
    %2053 = vmatprep.subr.mxu0 0.0
    %2054 = vmatpush1.msra.mxu0 0.0
    %2055 = vmatprep.subr.mxu0 0.0
    %2056 = vmatpush1.msra.mxu0 0.0
    %2057 = vmatprep.subr.mxu0 0.0
    %2058 = vmatpush1.msra.mxu0 0.0
    %2059 = vmatprep.subr.mxu0 0.0
    %2060 = vmatpush1.msra.mxu0 0.0
    %2061 = vmatprep.subr.mxu0 0.0
    %2062 = vmatpush1.msra.mxu0 0.0
    %2063 = vmatprep.subr.mxu0 0.0
    %2064 = vmatpush1.msra.mxu0 0.0
    %2065 = vmatprep.subr.mxu0 0.0
    %2066 = vmatpush1.msra.mxu0 0.0
    %2067 = vmatprep.subr.mxu0 0.0
    %2068 = vmatpush1.msra.mxu0 0.0
    %2069 = vmatprep.subr.mxu0 0.0
    %2070 = vmatpush1.msra.mxu0 0.0
    %2071 = vmatprep.subr.mxu0 0.0
    %2072 = vmatpush1.msra.mxu0 0.0
    %2073 = vmatprep.subr.mxu0 0.0
    %2074 = vmatpush1.msra.mxu0 0.0
    %2075 = vmatprep.subr.mxu0 0.0
    %2076 = vmatpush1.msra.mxu0 0.0
    %2077 = vmatprep.subr.mxu0 0.0
    %2078 = vmatpush1.msra.mxu0 0.0
    %2079 = vmatprep.subr.mxu0 0.0
    %2080 = vmatpush1.msra.mxu0 0.0
    %2081 = vmatprep.subr.mxu0 0.0
    %2082 = vmatpush1.msra.mxu0 0.0
    %2083 = vmatprep.subr.mxu0 0.0
    %2084 = vmatpush1.msra.mxu0 0.0
    %2085 = vmatprep.subr.mxu0 0.0
    %2086 = vmatpush1.msra.mxu0 0.0
    %2087 = vmatprep.subr.mxu0 0.0
    %2088 = vmatpush1.msra.mxu0 0.0
    %2089 = vmatprep.subr.mxu0 0.0
    %2090 = vmatpush1.msra.mxu0 0.0
    %2091 = vmatprep.subr.mxu0 0.0
    %2092 = vmatpush1.msra.mxu0 0.0
    %2093 = vmatprep.subr.mxu0 0.0
    %2094 = vmatpush1.msra.mxu0 0.0
    %2095 = vmatprep.subr.mxu0 0.0
    %2096 = vmatpush1.msra.mxu0 0.0
    %2097 = vmatprep.subr.mxu0 0.0
    %2098 = vmatpush1.msra.mxu0 0.0
    %2099 = vmatprep.subr.mxu0 0.0
    %2100 = vmatpush1.msra.mxu0 0.0
    %2101 = vmatprep.mubr.f32.mxu0 0.0
    %2102 = vmatmul.mubr.f32.gmra.mrb[0].mxu0 %v2026
    %v2103 = vpop.f32.mrb[0].mxu0
    %v2104 = vadd.f32 %v869, %v2103
    %v2105 = vpop.f32.mrb[0].mxu0
    %2106 = vmatprep.mubr.f32.mxu0 0.0
    %2107 = vmatmul.mubr.f32.gmra.mrb[0].mxu0 %v2029
    %v2108 = vpop.f32.mrb[0].mxu0
    %v2109 = vadd.f32 %v869, %v2108
    %v2110 = vpop.f32.mrb[0].mxu0
    %2111 = vmatprep.mubr.f32.mxu0 0.0
    %2112 = vmatmul.mubr.f32.gmra.mrb[0].mxu0 %v2032
    %v2113 = vpop.f32.mrb[0].mxu0
    %v2114 = vadd.f32 %v869, %v2113
    %v2115 = vpop.f32.mrb[0].mxu0
    %2116 = vmatprep.mubr.f32.mxu0 0.0
    %2117 = vmatmul.mubr.f32.gmra.mrb[0].mxu0 %v2035
    %v2118 = vpop.f32.mrb[0].mxu0
    %v2119 = vadd.f32 %v869, %v2118
    %v2120 = vpop.f32.mrb[0].mxu0
    %2121 = vdwg.mxu0
    %v2122 = vadd.f32 %v1545, %v2104
    %v2123 = vadd.f32 %v1546, %v2109
    %v2124 = vadd.f32 %v1547, %v2114
    %v2125 = vadd.f32 %v1548, %v2119
    %s2126 = scalar_lea.vmem %s4, 96
    %v2127 = vld [vmem:[%s2126] sm:$0xff]
    %v2128 = vld [vmem:[%s2126 + $0x8] sm:$0xff]
    %v2129 = vld [vmem:[%s2126 + $0x10] sm:$0xff]
    %v2130 = vld [vmem:[%s2126 + $0x18] sm:$0xff]
    %s2131 = scalar_lea.vmem %s6, 3
    %v2132 = vld [vmem:[%s2131] sm:$0x1]
    %v2134 = vlaneseq
    %v2135 = vshrl.u32 %v2134, 7
    %v2136 = vsub.s32 0, %v2135
    %v2137 = vrot.slane %v2132, %v2136
    %v2140 = vsel %vm190, %v2104, 0
    %v2143 = vsel %vm190, %v2109, 0
    %v2146 = vsel %vm190, %v2114, 0
    %v2149 = vsel %vm190, %v2119, 0
    %2151 = vmatprep.subr.mxu0 0.0
    %2152 = vmatpush1.msra.mxu0 %v2127
    %2153 = vmatprep.subr.mxu0 0.0
    %2154 = vmatpush1.msra.mxu0 %v2128
    %2155 = vmatprep.subr.mxu0 0.0
    %2156 = vmatpush1.msra.mxu0 %v2129
    %2157 = vmatprep.subr.mxu0 0.0
    %2158 = vmatpush1.msra.mxu0 %v2130
    %2159 = vmatprep.subr.mxu0 0.0
    %2160 = vmatpush1.msra.mxu0 0.0
    %2161 = vmatprep.subr.mxu0 0.0
    %2162 = vmatpush1.msra.mxu0 0.0
    %2163 = vmatprep.subr.mxu0 0.0
    %2164 = vmatpush1.msra.mxu0 0.0
    %2165 = vmatprep.subr.mxu0 0.0
    %2166 = vmatpush1.msra.mxu0 0.0
    %2167 = vmatprep.subr.mxu0 0.0
    %2168 = vmatpush1.msra.mxu0 0.0
    %2169 = vmatprep.subr.mxu0 0.0
    %2170 = vmatpush1.msra.mxu0 0.0
    %2171 = vmatprep.subr.mxu0 0.0
    %2172 = vmatpush1.msra.mxu0 0.0
    %2173 = vmatprep.subr.mxu0 0.0
    %2174 = vmatpush1.msra.mxu0 0.0
    %2175 = vmatprep.subr.mxu0 0.0
    %2176 = vmatpush1.msra.mxu0 0.0
    %2177 = vmatprep.subr.mxu0 0.0
    %2178 = vmatpush1.msra.mxu0 0.0
    %2179 = vmatprep.subr.mxu0 0.0
    %2180 = vmatpush1.msra.mxu0 0.0
    %2181 = vmatprep.subr.mxu0 0.0
    %2182 = vmatpush1.msra.mxu0 0.0
    %2183 = vmatprep.subr.mxu0 0.0
    %2184 = vmatpush1.msra.mxu0 0.0
    %2185 = vmatprep.subr.mxu0 0.0
    %2186 = vmatpush1.msra.mxu0 0.0
    %2187 = vmatprep.subr.mxu0 0.0
    %2188 = vmatpush1.msra.mxu0 0.0
    %2189 = vmatprep.subr.mxu0 0.0
    %2190 = vmatpush1.msra.mxu0 0.0
    %2191 = vmatprep.subr.mxu0 0.0
    %2192 = vmatpush1.msra.mxu0 0.0
    %2193 = vmatprep.subr.mxu0 0.0
    %2194 = vmatpush1.msra.mxu0 0.0
    %2195 = vmatprep.subr.mxu0 0.0
    %2196 = vmatpush1.msra.mxu0 0.0
    %2197 = vmatprep.subr.mxu0 0.0
    %2198 = vmatpush1.msra.mxu0 0.0
    %2199 = vmatprep.subr.mxu0 0.0
    %2200 = vmatpush1.msra.mxu0 0.0
    %2201 = vmatprep.subr.mxu0 0.0
    %2202 = vmatpush1.msra.mxu0 0.0
    %2203 = vmatprep.subr.mxu0 0.0
    %2204 = vmatpush1.msra.mxu0 0.0
    %2205 = vmatprep.subr.mxu0 0.0
    %2206 = vmatpush1.msra.mxu0 0.0
    %2207 = vmatprep.subr.mxu0 0.0
    %2208 = vmatpush1.msra.mxu0 0.0
    %2209 = vmatprep.subr.mxu0 0.0
    %2210 = vmatpush1.msra.mxu0 0.0
    %2211 = vmatprep.subr.mxu0 0.0
    %2212 = vmatpush1.msra.mxu0 0.0
    %2213 = vmatprep.subr.mxu0 0.0
    %2214 = vmatpush1.msra.mxu0 0.0
    %2215 = vmatprep.mubr.f32.mxu0 0.0
    %2216 = vmatmul.mubr.f32.gmra.mrb[0].mxu0 %v2140
    %v2217 = vpop.f32.mrb[0].mxu0
    %v2218 = vadd.f32 %v2137, %v2217
    %v2219 = vpop.f32.mrb[0].mxu0
    %2220 = vmatprep.mubr.f32.mxu0 0.0
    %2221 = vmatmul.mubr.f32.gmra.mrb[0].mxu0 %v2143
    %v2222 = vpop.f32.mrb[0].mxu0
    %v2223 = vadd.f32 %v2137, %v2222
    %v2224 = vpop.f32.mrb[0].mxu0
    %2225 = vmatprep.mubr.f32.mxu0 0.0
    %2226 = vmatmul.mubr.f32.gmra.mrb[0].mxu0 %v2146
    %v2227 = vpop.f32.mrb[0].mxu0
    %v2228 = vadd.f32 %v2137, %v2227
    %v2229 = vpop.f32.mrb[0].mxu0
    %2230 = vmatprep.mubr.f32.mxu0 0.0
    %2231 = vmatmul.mubr.f32.gmra.mrb[0].mxu0 %v2149
    %v2232 = vpop.f32.mrb[0].mxu0
    %v2233 = vadd.f32 %v2137, %v2232
    %v2234 = vpop.f32.mrb[0].mxu0
    %2235 = vdwg.mxu0
    %s2236 = scalar_lea.vmem %s5, 96
    %v2237 = vld [vmem:[%s2236] sm:$0xff]
    %v2238 = vld [vmem:[%s2236 + $0x8] sm:$0xff]
    %v2239 = vld [vmem:[%s2236 + $0x10] sm:$0xff]
    %v2240 = vld [vmem:[%s2236 + $0x18] sm:$0xff]
    %2241 = vmatprep.subr.mxu0 0.0
    %2242 = vmatpush1.msra.mxu0 %v2237
    %2243 = vmatprep.subr.mxu0 0.0
    %2244 = vmatpush1.msra.mxu0 %v2238
    %2245 = vmatprep.subr.mxu0 0.0
    %2246 = vmatpush1.msra.mxu0 %v2239
    %2247 = vmatprep.subr.mxu0 0.0
    %2248 = vmatpush1.msra.mxu0 %v2240
    %2249 = vmatprep.subr.mxu0 0.0
    %2250 = vmatpush1.msra.mxu0 0.0
    %2251 = vmatprep.subr.mxu0 0.0
    %2252 = vmatpush1.msra.mxu0 0.0
    %2253 = vmatprep.subr.mxu0 0.0
    %2254 = vmatpush1.msra.mxu0 0.0
    %2255 = vmatprep.subr.mxu0 0.0
    %2256 = vmatpush1.msra.mxu0 0.0
    %2257 = vmatprep.subr.mxu0 0.0
    %2258 = vmatpush1.msra.mxu0 0.0
    %2259 = vmatprep.subr.mxu0 0.0
    %2260 = vmatpush1.msra.mxu0 0.0
    %2261 = vmatprep.subr.mxu0 0.0
    %2262 = vmatpush1.msra.mxu0 0.0
    %2263 = vmatprep.subr.mxu0 0.0
    %2264 = vmatpush1.msra.mxu0 0.0
    %2265 = vmatprep.subr.mxu0 0.0
    %2266 = vmatpush1.msra.mxu0 0.0
    %2267 = vmatprep.subr.mxu0 0.0
    %2268 = vmatpush1.msra.mxu0 0.0
    %2269 = vmatprep.subr.mxu0 0.0
    %2270 = vmatpush1.msra.mxu0 0.0
    %2271 = vmatprep.subr.mxu0 0.0
    %2272 = vmatpush1.msra.mxu0 0.0
    %2273 = vmatprep.subr.mxu0 0.0
    %2274 = vmatpush1.msra.mxu0 0.0
    %2275 = vmatprep.subr.mxu0 0.0
    %2276 = vmatpush1.msra.mxu0 0.0
    %2277 = vmatprep.subr.mxu0 0.0
    %2278 = vmatpush1.msra.mxu0 0.0
    %2279 = vmatprep.subr.mxu0 0.0
    %2280 = vmatpush1.msra.mxu0 0.0
    %2281 = vmatprep.subr.mxu0 0.0
    %2282 = vmatpush1.msra.mxu0 0.0
    %2283 = vmatprep.subr.mxu0 0.0
    %2284 = vmatpush1.msra.mxu0 0.0
    %2285 = vmatprep.subr.mxu0 0.0
    %2286 = vmatpush1.msra.mxu0 0.0
    %2287 = vmatprep.subr.mxu0 0.0
    %2288 = vmatpush1.msra.mxu0 0.0
    %2289 = vmatprep.subr.mxu0 0.0
    %2290 = vmatpush1.msra.mxu0 0.0
    %2291 = vmatprep.subr.mxu0 0.0
    %2292 = vmatpush1.msra.mxu0 0.0
    %2293 = vmatprep.subr.mxu0 0.0
    %2294 = vmatpush1.msra.mxu0 0.0
    %2295 = vmatprep.subr.mxu0 0.0
    %2296 = vmatpush1.msra.mxu0 0.0
    %2297 = vmatprep.subr.mxu0 0.0
    %2298 = vmatpush1.msra.mxu0 0.0
    %2299 = vmatprep.subr.mxu0 0.0
    %2300 = vmatpush1.msra.mxu0 0.0
    %2301 = vmatprep.subr.mxu0 0.0
    %2302 = vmatpush1.msra.mxu0 0.0
    %2303 = vmatprep.subr.mxu0 0.0
    %2304 = vmatpush1.msra.mxu0 0.0
    %2305 = vmatprep.mubr.f32.mxu0 0.0
    %2306 = vmatmul.mubr.f32.gmra.mrb[0].mxu0 %v2140
    %v2307 = vpop.f32.mrb[0].mxu0
    %v2308 = vadd.f32 0.0, %v2307
    %v2309 = vpop.f32.mrb[0].mxu0
    %2310 = vmatprep.mubr.f32.mxu0 0.0
    %2311 = vmatmul.mubr.f32.gmra.mrb[0].mxu0 %v2143
    %v2312 = vpop.f32.mrb[0].mxu0
    %v2313 = vadd.f32 0.0, %v2312
    %v2314 = vpop.f32.mrb[0].mxu0
    %2315 = vmatprep.mubr.f32.mxu0 0.0
    %2316 = vmatmul.mubr.f32.gmra.mrb[0].mxu0 %v2146
    %v2317 = vpop.f32.mrb[0].mxu0
    %v2318 = vadd.f32 0.0, %v2317
    %v2319 = vpop.f32.mrb[0].mxu0
    %2320 = vmatprep.mubr.f32.mxu0 0.0
    %2321 = vmatmul.mubr.f32.gmra.mrb[0].mxu0 %v2149
    %v2322 = vpop.f32.mrb[0].mxu0
    %v2323 = vadd.f32 0.0, %v2322
    %v2324 = vpop.f32.mrb[0].mxu0
    %2325 = vdwg.mxu0
    %s2326 = scalar_lea.vmem %s1, 192
    %v2327 = vld [vmem:[%s2326] sm:$0xff]
    %v2328 = vld [vmem:[%s2326 + $0x8] sm:$0xff]
    %v2329 = vld [vmem:[%s2326 + $0x10] sm:$0xff]
    %v2330 = vld [vmem:[%s2326 + $0x18] sm:$0xff]
    %v2332 = vsel %vm190, %v2327, 0
    %v2335 = vsel %vm190, %v2328, 0
    %v2338 = vsel %vm190, %v2329, 0
    %v2341 = vsel %vm190, %v2330, 0
    %2343 = vmatprep.subr.mxu0 0.0
    %2344 = vmatpush1.msra.mxu0 %v2308
    %2345 = vmatprep.subr.mxu0 0.0
    %2346 = vmatpush1.msra.mxu0 %v2313
    %2347 = vmatprep.subr.mxu0 0.0
    %2348 = vmatpush1.msra.mxu0 %v2318
    %2349 = vmatprep.subr.mxu0 0.0
    %2350 = vmatpush1.msra.mxu0 %v2323
    %2351 = vmatprep.subr.mxu0 0.0
    %2352 = vmatpush1.msra.mxu0 0.0
    %2353 = vmatprep.subr.mxu0 0.0
    %2354 = vmatpush1.msra.mxu0 0.0
    %2355 = vmatprep.subr.mxu0 0.0
    %2356 = vmatpush1.msra.mxu0 0.0
    %2357 = vmatprep.subr.mxu0 0.0
    %2358 = vmatpush1.msra.mxu0 0.0
    %2359 = vmatprep.subr.mxu0 0.0
    %2360 = vmatpush1.msra.mxu0 0.0
    %2361 = vmatprep.subr.mxu0 0.0
    %2362 = vmatpush1.msra.mxu0 0.0
    %2363 = vmatprep.subr.mxu0 0.0
    %2364 = vmatpush1.msra.mxu0 0.0
    %2365 = vmatprep.subr.mxu0 0.0
    %2366 = vmatpush1.msra.mxu0 0.0
    %2367 = vmatprep.subr.mxu0 0.0
    %2368 = vmatpush1.msra.mxu0 0.0
    %2369 = vmatprep.subr.mxu0 0.0
    %2370 = vmatpush1.msra.mxu0 0.0
    %2371 = vmatprep.subr.mxu0 0.0
    %2372 = vmatpush1.msra.mxu0 0.0
    %2373 = vmatprep.subr.mxu0 0.0
    %2374 = vmatpush1.msra.mxu0 0.0
    %2375 = vmatprep.subr.mxu0 0.0
    %2376 = vmatpush1.msra.mxu0 0.0
    %2377 = vmatprep.subr.mxu0 0.0
    %2378 = vmatpush1.msra.mxu0 0.0
    %2379 = vmatprep.subr.mxu0 0.0
    %2380 = vmatpush1.msra.mxu0 0.0
    %2381 = vmatprep.subr.mxu0 0.0
    %2382 = vmatpush1.msra.mxu0 0.0
    %2383 = vmatprep.subr.mxu0 0.0
    %2384 = vmatpush1.msra.mxu0 0.0
    %2385 = vmatprep.subr.mxu0 0.0
    %2386 = vmatpush1.msra.mxu0 0.0
    %2387 = vmatprep.subr.mxu0 0.0
    %2388 = vmatpush1.msra.mxu0 0.0
    %2389 = vmatprep.subr.mxu0 0.0
    %2390 = vmatpush1.msra.mxu0 0.0
    %2391 = vmatprep.subr.mxu0 0.0
    %2392 = vmatpush1.msra.mxu0 0.0
    %2393 = vmatprep.subr.mxu0 0.0
    %2394 = vmatpush1.msra.mxu0 0.0
    %2395 = vmatprep.subr.mxu0 0.0
    %2396 = vmatpush1.msra.mxu0 0.0
    %2397 = vmatprep.subr.mxu0 0.0
    %2398 = vmatpush1.msra.mxu0 0.0
    %2399 = vmatprep.subr.mxu0 0.0
    %2400 = vmatpush1.msra.mxu0 0.0
    %2401 = vmatprep.subr.mxu0 0.0
    %2402 = vmatpush1.msra.mxu0 0.0
    %2403 = vmatprep.subr.mxu0 0.0
    %2404 = vmatpush1.msra.mxu0 0.0
    %2405 = vmatprep.subr.mxu0 0.0
    %2406 = vmatpush1.msra.mxu0 0.0
    %2407 = vmatprep.mubr.f32.mxu0 0.0
    %2408 = vmatmul.mubr.f32.gmra.mrb[0].mxu0 %v2332
    %v2409 = vpop.f32.mrb[0].mxu0
    %v2410 = vadd.f32 0.0, %v2409
    %v2411 = vpop.f32.mrb[0].mxu0
    %2412 = vmatprep.mubr.f32.mxu0 0.0
    %2413 = vmatmul.mubr.f32.gmra.mrb[0].mxu0 %v2335
    %v2414 = vpop.f32.mrb[0].mxu0
    %v2415 = vadd.f32 0.0, %v2414
    %v2416 = vpop.f32.mrb[0].mxu0
    %2417 = vmatprep.mubr.f32.mxu0 0.0
    %2418 = vmatmul.mubr.f32.gmra.mrb[0].mxu0 %v2338
    %v2419 = vpop.f32.mrb[0].mxu0
    %v2420 = vadd.f32 0.0, %v2419
    %v2421 = vpop.f32.mrb[0].mxu0
    %2422 = vmatprep.mubr.f32.mxu0 0.0
    %2423 = vmatmul.mubr.f32.gmra.mrb[0].mxu0 %v2341
    %v2424 = vpop.f32.mrb[0].mxu0
    %v2425 = vadd.f32 0.0, %v2424
    %v2426 = vpop.f32.mrb[0].mxu0
    %2427 = vdwg.mxu0
    %v2428 = vadd.f32 %v2218, %v2410
    %v2429 = vadd.f32 %v2223, %v2415
    %v2430 = vadd.f32 %v2228, %v2420
    %v2431 = vadd.f32 %v2233, %v2425
    %s2432 = scalar_lea.vmem %s1, 224
    %v2433 = vld [vmem:[%s2432] sm:$0xff]
    %v2434 = vld [vmem:[%s2432 + $0x8] sm:$0xff]
    %v2435 = vld [vmem:[%s2432 + $0x10] sm:$0xff]
    %v2436 = vld [vmem:[%s2432 + $0x18] sm:$0xff]
    %2441 = vrot.lane.b32.xlu0 %v2308, 64
    %v2442 = vpop.permute.xlu0 %2441
    %2443 = vrot.lane.b32.xlu0 %v2313, 64
    %v2444 = vpop.permute.xlu0 %2443
    %2445 = vrot.lane.b32.xlu0 %v2318, 64
    %v2446 = vpop.permute.xlu0 %2445
    %2447 = vrot.lane.b32.xlu0 %v2323, 64
    %v2448 = vpop.permute.xlu0 %2447
    %v2454 = vsel %vm190, %v2433, 0
    %v2457 = vsel %vm190, %v2434, 0
    %v2460 = vsel %vm190, %v2435, 0
    %v2463 = vsel %vm190, %v2436, 0
    %2465 = vmatprep.subr.mxu0 0.0
    %2466 = vmatpush1.msra.mxu0 %v2442
    %2467 = vmatprep.subr.mxu0 0.0
    %2468 = vmatpush1.msra.mxu0 %v2444
    %2469 = vmatprep.subr.mxu0 0.0
    %2470 = vmatpush1.msra.mxu0 %v2446
    %2471 = vmatprep.subr.mxu0 0.0
    %2472 = vmatpush1.msra.mxu0 %v2448
    %2473 = vmatprep.subr.mxu0 0.0
    %2474 = vmatpush1.msra.mxu0 0.0
    %2475 = vmatprep.subr.mxu0 0.0
    %2476 = vmatpush1.msra.mxu0 0.0
    %2477 = vmatprep.subr.mxu0 0.0
    %2478 = vmatpush1.msra.mxu0 0.0
    %2479 = vmatprep.subr.mxu0 0.0
    %2480 = vmatpush1.msra.mxu0 0.0
    %2481 = vmatprep.subr.mxu0 0.0
    %2482 = vmatpush1.msra.mxu0 0.0
    %2483 = vmatprep.subr.mxu0 0.0
    %2484 = vmatpush1.msra.mxu0 0.0
    %2485 = vmatprep.subr.mxu0 0.0
    %2486 = vmatpush1.msra.mxu0 0.0
    %2487 = vmatprep.subr.mxu0 0.0
    %2488 = vmatpush1.msra.mxu0 0.0
    %2489 = vmatprep.subr.mxu0 0.0
    %2490 = vmatpush1.msra.mxu0 0.0
    %2491 = vmatprep.subr.mxu0 0.0
    %2492 = vmatpush1.msra.mxu0 0.0
    %2493 = vmatprep.subr.mxu0 0.0
    %2494 = vmatpush1.msra.mxu0 0.0
    %2495 = vmatprep.subr.mxu0 0.0
    %2496 = vmatpush1.msra.mxu0 0.0
    %2497 = vmatprep.subr.mxu0 0.0
    %2498 = vmatpush1.msra.mxu0 0.0
    %2499 = vmatprep.subr.mxu0 0.0
    %2500 = vmatpush1.msra.mxu0 0.0
    %2501 = vmatprep.subr.mxu0 0.0
    %2502 = vmatpush1.msra.mxu0 0.0
    %2503 = vmatprep.subr.mxu0 0.0
    %2504 = vmatpush1.msra.mxu0 0.0
    %2505 = vmatprep.subr.mxu0 0.0
    %2506 = vmatpush1.msra.mxu0 0.0
    %2507 = vmatprep.subr.mxu0 0.0
    %2508 = vmatpush1.msra.mxu0 0.0
    %2509 = vmatprep.subr.mxu0 0.0
    %2510 = vmatpush1.msra.mxu0 0.0
    %2511 = vmatprep.subr.mxu0 0.0
    %2512 = vmatpush1.msra.mxu0 0.0
    %2513 = vmatprep.subr.mxu0 0.0
    %2514 = vmatpush1.msra.mxu0 0.0
    %2515 = vmatprep.subr.mxu0 0.0
    %2516 = vmatpush1.msra.mxu0 0.0
    %2517 = vmatprep.subr.mxu0 0.0
    %2518 = vmatpush1.msra.mxu0 0.0
    %2519 = vmatprep.subr.mxu0 0.0
    %2520 = vmatpush1.msra.mxu0 0.0
    %2521 = vmatprep.subr.mxu0 0.0
    %2522 = vmatpush1.msra.mxu0 0.0
    %2523 = vmatprep.subr.mxu0 0.0
    %2524 = vmatpush1.msra.mxu0 0.0
    %2525 = vmatprep.subr.mxu0 0.0
    %2526 = vmatpush1.msra.mxu0 0.0
    %2527 = vmatprep.subr.mxu0 0.0
    %2528 = vmatpush1.msra.mxu0 0.0
    %2529 = vmatprep.mubr.f32.mxu0 0.0
    %2530 = vmatmul.mubr.f32.gmra.mrb[0].mxu0 %v2454
    %v2531 = vpop.f32.mrb[0].mxu0
    %v2532 = vadd.f32 0.0, %v2531
    %v2533 = vpop.f32.mrb[0].mxu0
    %2534 = vmatprep.mubr.f32.mxu0 0.0
    %2535 = vmatmul.mubr.f32.gmra.mrb[0].mxu0 %v2457
    %v2536 = vpop.f32.mrb[0].mxu0
    %v2537 = vadd.f32 0.0, %v2536
    %v2538 = vpop.f32.mrb[0].mxu0
    %2539 = vmatprep.mubr.f32.mxu0 0.0
    %2540 = vmatmul.mubr.f32.gmra.mrb[0].mxu0 %v2460
    %v2541 = vpop.f32.mrb[0].mxu0
    %v2542 = vadd.f32 0.0, %v2541
    %v2543 = vpop.f32.mrb[0].mxu0
    %2544 = vmatprep.mubr.f32.mxu0 0.0
    %2545 = vmatmul.mubr.f32.gmra.mrb[0].mxu0 %v2463
    %v2546 = vpop.f32.mrb[0].mxu0
    %v2547 = vadd.f32 0.0, %v2546
    %v2548 = vpop.f32.mrb[0].mxu0
    %2549 = vdwg.mxu0
    %v2550 = vadd.f32 %v2428, %v2532
    %v2551 = vadd.f32 %v2429, %v2537
    %v2552 = vadd.f32 %v2430, %v2542
    %v2553 = vadd.f32 %v2431, %v2547
    %v2554 = vtanh.pop %v2550
    %v2555 = vtanh.pop %v2551
    %v2556 = vtanh.pop %v2552
    %v2557 = vtanh.pop %v2553
    %v2558 = vxor.u32 %v2550, 2147483648
    %v2559 = vxor.u32 %v2551, 2147483648
    %v2560 = vxor.u32 %v2552, 2147483648
    %v2561 = vxor.u32 %v2553, 2147483648
    %v2562 = vmul.f32 %v2558, 1.442695
    %v2563 = vpow.pop %v2562
    %v2564 = vmul.f32 %v2559, 1.442695
    %v2565 = vpow.pop %v2564
    %v2566 = vmul.f32 %v2560, 1.442695
    %v2567 = vpow.pop %v2566
    %v2568 = vmul.f32 %v2561, 1.442695
    %v2569 = vpow.pop %v2568
    %v2570 = vadd.f32 %v2563, 1.0
    %v2571 = vadd.f32 %v2565, 1.0
    %v2572 = vadd.f32 %v2567, 1.0
    %v2573 = vadd.f32 %v2569, 1.0
    %v2574 = vrcp.pop %v2570
    %v2575 = vmul.f32 1.0, %v2574
    %v2576 = vrcp.pop %v2571
    %v2577 = vmul.f32 1.0, %v2576
    %v2578 = vrcp.pop %v2572
    %v2579 = vmul.f32 1.0, %v2578
    %v2580 = vrcp.pop %v2573
    %v2581 = vmul.f32 1.0, %v2580
    %2586 = vrot.lane.b32.xlu0 %v2575, 96
    %v2587 = vpop.permute.xlu0 %2586
    %2588 = vrot.lane.b32.xlu0 %v2577, 96
    %v2589 = vpop.permute.xlu0 %2588
    %2590 = vrot.lane.b32.xlu0 %v2579, 96
    %v2591 = vpop.permute.xlu0 %2590
    %2592 = vrot.lane.b32.xlu0 %v2581, 96
    %v2593 = vpop.permute.xlu0 %2592
    %v2598 = vmul.f32 %v2554, %v2587
    %v2599 = vmul.f32 %v2555, %v2589
    %v2600 = vmul.f32 %v2556, %v2591
    %v2601 = vmul.f32 %v2557, %v2593
    %v2603 = vsel %vm190, %v2598, 0
    %v2606 = vsel %vm190, %v2599, 0
    %v2609 = vsel %vm190, %v2600, 0
    %v2612 = vsel %vm190, %v2601, 0
    %2614 = vmatprep.subr.mxu0 0.0
    %2615 = vmatpush1.msra.mxu0 %v421
    %2616 = vmatprep.subr.mxu0 0.0
    %2617 = vmatpush1.msra.mxu0 %v422
    %2618 = vmatprep.subr.mxu0 0.0
    %2619 = vmatpush1.msra.mxu0 %v423
    %2620 = vmatprep.subr.mxu0 0.0
    %2621 = vmatpush1.msra.mxu0 %v424
    %2622 = vmatprep.subr.mxu0 0.0
    %2623 = vmatpush1.msra.mxu0 0.0
    %2624 = vmatprep.subr.mxu0 0.0
    %2625 = vmatpush1.msra.mxu0 0.0
    %2626 = vmatprep.subr.mxu0 0.0
    %2627 = vmatpush1.msra.mxu0 0.0
    %2628 = vmatprep.subr.mxu0 0.0
    %2629 = vmatpush1.msra.mxu0 0.0
    %2630 = vmatprep.subr.mxu0 0.0
    %2631 = vmatpush1.msra.mxu0 0.0
    %2632 = vmatprep.subr.mxu0 0.0
    %2633 = vmatpush1.msra.mxu0 0.0
    %2634 = vmatprep.subr.mxu0 0.0
    %2635 = vmatpush1.msra.mxu0 0.0
    %2636 = vmatprep.subr.mxu0 0.0
    %2637 = vmatpush1.msra.mxu0 0.0
    %2638 = vmatprep.subr.mxu0 0.0
    %2639 = vmatpush1.msra.mxu0 0.0
    %2640 = vmatprep.subr.mxu0 0.0
    %2641 = vmatpush1.msra.mxu0 0.0
    %2642 = vmatprep.subr.mxu0 0.0
    %2643 = vmatpush1.msra.mxu0 0.0
    %2644 = vmatprep.subr.mxu0 0.0
    %2645 = vmatpush1.msra.mxu0 0.0
    %2646 = vmatprep.subr.mxu0 0.0
    %2647 = vmatpush1.msra.mxu0 0.0
    %2648 = vmatprep.subr.mxu0 0.0
    %2649 = vmatpush1.msra.mxu0 0.0
    %2650 = vmatprep.subr.mxu0 0.0
    %2651 = vmatpush1.msra.mxu0 0.0
    %2652 = vmatprep.subr.mxu0 0.0
    %2653 = vmatpush1.msra.mxu0 0.0
    %2654 = vmatprep.subr.mxu0 0.0
    %2655 = vmatpush1.msra.mxu0 0.0
    %2656 = vmatprep.subr.mxu0 0.0
    %2657 = vmatpush1.msra.mxu0 0.0
    %2658 = vmatprep.subr.mxu0 0.0
    %2659 = vmatpush1.msra.mxu0 0.0
    %2660 = vmatprep.subr.mxu0 0.0
    %2661 = vmatpush1.msra.mxu0 0.0
    %2662 = vmatprep.subr.mxu0 0.0
    %2663 = vmatpush1.msra.mxu0 0.0
    %2664 = vmatprep.subr.mxu0 0.0
    %2665 = vmatpush1.msra.mxu0 0.0
    %2666 = vmatprep.subr.mxu0 0.0
    %2667 = vmatpush1.msra.mxu0 0.0
    %2668 = vmatprep.subr.mxu0 0.0
    %2669 = vmatpush1.msra.mxu0 0.0
    %2670 = vmatprep.subr.mxu0 0.0
    %2671 = vmatpush1.msra.mxu0 0.0
    %2672 = vmatprep.subr.mxu0 0.0
    %2673 = vmatpush1.msra.mxu0 0.0
    %2674 = vmatprep.subr.mxu0 0.0
    %2675 = vmatpush1.msra.mxu0 0.0
    %2676 = vmatprep.subr.mxu0 0.0
    %2677 = vmatpush1.msra.mxu0 0.0
    %2678 = vmatprep.mubr.f32.mxu0 0.0
    %2679 = vmatmul.mubr.f32.gmra.mrb[0].mxu0 %v2603
    %v2680 = vpop.f32.mrb[0].mxu0
    %v2681 = vadd.f32 %v869, %v2680
    %v2682 = vpop.f32.mrb[0].mxu0
    %2683 = vmatprep.mubr.f32.mxu0 0.0
    %2684 = vmatmul.mubr.f32.gmra.mrb[0].mxu0 %v2606
    %v2685 = vpop.f32.mrb[0].mxu0
    %v2686 = vadd.f32 %v869, %v2685
    %v2687 = vpop.f32.mrb[0].mxu0
    %2688 = vmatprep.mubr.f32.mxu0 0.0
    %2689 = vmatmul.mubr.f32.gmra.mrb[0].mxu0 %v2609
    %v2690 = vpop.f32.mrb[0].mxu0
    %v2691 = vadd.f32 %v869, %v2690
    %v2692 = vpop.f32.mrb[0].mxu0
    %2693 = vmatprep.mubr.f32.mxu0 0.0
    %2694 = vmatmul.mubr.f32.gmra.mrb[0].mxu0 %v2612
    %v2695 = vpop.f32.mrb[0].mxu0
    %v2696 = vadd.f32 %v869, %v2695
    %v2697 = vpop.f32.mrb[0].mxu0
    %2698 = vdwg.mxu0
    %v2699 = vadd.f32 %v2122, %v2681
    %v2700 = vadd.f32 %v2123, %v2686
    %v2701 = vadd.f32 %v2124, %v2691
    %v2702 = vadd.f32 %v2125, %v2696
    %s2703 = scalar_lea.vmem %s4, 128
    %v2704 = vld [vmem:[%s2703] sm:$0xff]
    %v2705 = vld [vmem:[%s2703 + $0x8] sm:$0xff]
    %v2706 = vld [vmem:[%s2703 + $0x10] sm:$0xff]
    %v2707 = vld [vmem:[%s2703 + $0x18] sm:$0xff]
    %s2708 = scalar_lea.vmem %s6, 4
    %v2709 = vld [vmem:[%s2708] sm:$0x1]
    %v2711 = vlaneseq
    %v2712 = vshrl.u32 %v2711, 7
    %v2713 = vsub.s32 0, %v2712
    %v2714 = vrot.slane %v2709, %v2713
    %v2717 = vsel %vm190, %v2681, 0
    %v2720 = vsel %vm190, %v2686, 0
    %v2723 = vsel %vm190, %v2691, 0
    %v2726 = vsel %vm190, %v2696, 0
    %2728 = vmatprep.subr.mxu0 0.0
    %2729 = vmatpush1.msra.mxu0 %v2704
    %2730 = vmatprep.subr.mxu0 0.0
    %2731 = vmatpush1.msra.mxu0 %v2705
    %2732 = vmatprep.subr.mxu0 0.0
    %2733 = vmatpush1.msra.mxu0 %v2706
    %2734 = vmatprep.subr.mxu0 0.0
    %2735 = vmatpush1.msra.mxu0 %v2707
    %2736 = vmatprep.subr.mxu0 0.0
    %2737 = vmatpush1.msra.mxu0 0.0
    %2738 = vmatprep.subr.mxu0 0.0
    %2739 = vmatpush1.msra.mxu0 0.0
    %2740 = vmatprep.subr.mxu0 0.0
    %2741 = vmatpush1.msra.mxu0 0.0
    %2742 = vmatprep.subr.mxu0 0.0
    %2743 = vmatpush1.msra.mxu0 0.0
    %2744 = vmatprep.subr.mxu0 0.0
    %2745 = vmatpush1.msra.mxu0 0.0
    %2746 = vmatprep.subr.mxu0 0.0
    %2747 = vmatpush1.msra.mxu0 0.0
    %2748 = vmatprep.subr.mxu0 0.0
    %2749 = vmatpush1.msra.mxu0 0.0
    %2750 = vmatprep.subr.mxu0 0.0
    %2751 = vmatpush1.msra.mxu0 0.0
    %2752 = vmatprep.subr.mxu0 0.0
    %2753 = vmatpush1.msra.mxu0 0.0
    %2754 = vmatprep.subr.mxu0 0.0
    %2755 = vmatpush1.msra.mxu0 0.0
    %2756 = vmatprep.subr.mxu0 0.0
    %2757 = vmatpush1.msra.mxu0 0.0
    %2758 = vmatprep.subr.mxu0 0.0
    %2759 = vmatpush1.msra.mxu0 0.0
    %2760 = vmatprep.subr.mxu0 0.0
    %2761 = vmatpush1.msra.mxu0 0.0
    %2762 = vmatprep.subr.mxu0 0.0
    %2763 = vmatpush1.msra.mxu0 0.0
    %2764 = vmatprep.subr.mxu0 0.0
    %2765 = vmatpush1.msra.mxu0 0.0
    %2766 = vmatprep.subr.mxu0 0.0
    %2767 = vmatpush1.msra.mxu0 0.0
    %2768 = vmatprep.subr.mxu0 0.0
    %2769 = vmatpush1.msra.mxu0 0.0
    %2770 = vmatprep.subr.mxu0 0.0
    %2771 = vmatpush1.msra.mxu0 0.0
    %2772 = vmatprep.subr.mxu0 0.0
    %2773 = vmatpush1.msra.mxu0 0.0
    %2774 = vmatprep.subr.mxu0 0.0
    %2775 = vmatpush1.msra.mxu0 0.0
    %2776 = vmatprep.subr.mxu0 0.0
    %2777 = vmatpush1.msra.mxu0 0.0
    %2778 = vmatprep.subr.mxu0 0.0
    %2779 = vmatpush1.msra.mxu0 0.0
    %2780 = vmatprep.subr.mxu0 0.0
    %2781 = vmatpush1.msra.mxu0 0.0
    %2782 = vmatprep.subr.mxu0 0.0
    %2783 = vmatpush1.msra.mxu0 0.0
    %2784 = vmatprep.subr.mxu0 0.0
    %2785 = vmatpush1.msra.mxu0 0.0
    %2786 = vmatprep.subr.mxu0 0.0
    %2787 = vmatpush1.msra.mxu0 0.0
    %2788 = vmatprep.subr.mxu0 0.0
    %2789 = vmatpush1.msra.mxu0 0.0
    %2790 = vmatprep.subr.mxu0 0.0
    %2791 = vmatpush1.msra.mxu0 0.0
    %2792 = vmatprep.mubr.f32.mxu0 0.0
    %2793 = vmatmul.mubr.f32.gmra.mrb[0].mxu0 %v2717
    %v2794 = vpop.f32.mrb[0].mxu0
    %v2795 = vadd.f32 %v2714, %v2794
    %v2796 = vpop.f32.mrb[0].mxu0
    %2797 = vmatprep.mubr.f32.mxu0 0.0
    %2798 = vmatmul.mubr.f32.gmra.mrb[0].mxu0 %v2720
    %v2799 = vpop.f32.mrb[0].mxu0
    %v2800 = vadd.f32 %v2714, %v2799
    %v2801 = vpop.f32.mrb[0].mxu0
    %2802 = vmatprep.mubr.f32.mxu0 0.0
    %2803 = vmatmul.mubr.f32.gmra.mrb[0].mxu0 %v2723
    %v2804 = vpop.f32.mrb[0].mxu0
    %v2805 = vadd.f32 %v2714, %v2804
    %v2806 = vpop.f32.mrb[0].mxu0
    %2807 = vmatprep.mubr.f32.mxu0 0.0
    %2808 = vmatmul.mubr.f32.gmra.mrb[0].mxu0 %v2726
    %v2809 = vpop.f32.mrb[0].mxu0
    %v2810 = vadd.f32 %v2714, %v2809
    %v2811 = vpop.f32.mrb[0].mxu0
    %2812 = vdwg.mxu0
    %v2813 = vtanh.pop %v2795
    %v2814 = vtanh.pop %v2800
    %v2815 = vtanh.pop %v2805
    %v2816 = vtanh.pop %v2810
    %v2817 = vxor.u32 %v2795, 2147483648
    %v2818 = vxor.u32 %v2800, 2147483648
    %v2819 = vxor.u32 %v2805, 2147483648
    %v2820 = vxor.u32 %v2810, 2147483648
    %v2821 = vmul.f32 %v2817, 1.442695
    %v2822 = vpow.pop %v2821
    %v2823 = vmul.f32 %v2818, 1.442695
    %v2824 = vpow.pop %v2823
    %v2825 = vmul.f32 %v2819, 1.442695
    %v2826 = vpow.pop %v2825
    %v2827 = vmul.f32 %v2820, 1.442695
    %v2828 = vpow.pop %v2827
    %v2829 = vadd.f32 %v2822, 1.0
    %v2830 = vadd.f32 %v2824, 1.0
    %v2831 = vadd.f32 %v2826, 1.0
    %v2832 = vadd.f32 %v2828, 1.0
    %v2833 = vrcp.pop %v2829
    %v2834 = vmul.f32 1.0, %v2833
    %v2835 = vrcp.pop %v2830
    %v2836 = vmul.f32 1.0, %v2835
    %v2837 = vrcp.pop %v2831
    %v2838 = vmul.f32 1.0, %v2837
    %v2839 = vrcp.pop %v2832
    %v2840 = vmul.f32 1.0, %v2839
    %2845 = vrot.lane.b32.xlu0 %v2834, 96
    %v2846 = vpop.permute.xlu0 %2845
    %2847 = vrot.lane.b32.xlu0 %v2836, 96
    %v2848 = vpop.permute.xlu0 %2847
    %2849 = vrot.lane.b32.xlu0 %v2838, 96
    %v2850 = vpop.permute.xlu0 %2849
    %2851 = vrot.lane.b32.xlu0 %v2840, 96
    %v2852 = vpop.permute.xlu0 %2851
    %v2857 = vmul.f32 %v2813, %v2846
    %v2858 = vmul.f32 %v2814, %v2848
    %v2859 = vmul.f32 %v2815, %v2850
    %v2860 = vmul.f32 %v2816, %v2852
    %v2862 = vsel %vm190, %v2857, 0
    %v2865 = vsel %vm190, %v2858, 0
    %v2868 = vsel %vm190, %v2859, 0
    %v2871 = vsel %vm190, %v2860, 0
    %2873 = vmatprep.subr.mxu0 0.0
    %2874 = vmatpush1.msra.mxu0 %v421
    %2875 = vmatprep.subr.mxu0 0.0
    %2876 = vmatpush1.msra.mxu0 %v422
    %2877 = vmatprep.subr.mxu0 0.0
    %2878 = vmatpush1.msra.mxu0 %v423
    %2879 = vmatprep.subr.mxu0 0.0
    %2880 = vmatpush1.msra.mxu0 %v424
    %2881 = vmatprep.subr.mxu0 0.0
    %2882 = vmatpush1.msra.mxu0 0.0
    %2883 = vmatprep.subr.mxu0 0.0
    %2884 = vmatpush1.msra.mxu0 0.0
    %2885 = vmatprep.subr.mxu0 0.0
    %2886 = vmatpush1.msra.mxu0 0.0
    %2887 = vmatprep.subr.mxu0 0.0
    %2888 = vmatpush1.msra.mxu0 0.0
    %2889 = vmatprep.subr.mxu0 0.0
    %2890 = vmatpush1.msra.mxu0 0.0
    %2891 = vmatprep.subr.mxu0 0.0
    %2892 = vmatpush1.msra.mxu0 0.0
    %2893 = vmatprep.subr.mxu0 0.0
    %2894 = vmatpush1.msra.mxu0 0.0
    %2895 = vmatprep.subr.mxu0 0.0
    %2896 = vmatpush1.msra.mxu0 0.0
    %2897 = vmatprep.subr.mxu0 0.0
    %2898 = vmatpush1.msra.mxu0 0.0
    %2899 = vmatprep.subr.mxu0 0.0
    %2900 = vmatpush1.msra.mxu0 0.0
    %2901 = vmatprep.subr.mxu0 0.0
    %2902 = vmatpush1.msra.mxu0 0.0
    %2903 = vmatprep.subr.mxu0 0.0
    %2904 = vmatpush1.msra.mxu0 0.0
    %2905 = vmatprep.subr.mxu0 0.0
    %2906 = vmatpush1.msra.mxu0 0.0
    %2907 = vmatprep.subr.mxu0 0.0
    %2908 = vmatpush1.msra.mxu0 0.0
    %2909 = vmatprep.subr.mxu0 0.0
    %2910 = vmatpush1.msra.mxu0 0.0
    %2911 = vmatprep.subr.mxu0 0.0
    %2912 = vmatpush1.msra.mxu0 0.0
    %2913 = vmatprep.subr.mxu0 0.0
    %2914 = vmatpush1.msra.mxu0 0.0
    %2915 = vmatprep.subr.mxu0 0.0
    %2916 = vmatpush1.msra.mxu0 0.0
    %2917 = vmatprep.subr.mxu0 0.0
    %2918 = vmatpush1.msra.mxu0 0.0
    %2919 = vmatprep.subr.mxu0 0.0
    %2920 = vmatpush1.msra.mxu0 0.0
    %2921 = vmatprep.subr.mxu0 0.0
    %2922 = vmatpush1.msra.mxu0 0.0
    %2923 = vmatprep.subr.mxu0 0.0
    %2924 = vmatpush1.msra.mxu0 0.0
    %2925 = vmatprep.subr.mxu0 0.0
    %2926 = vmatpush1.msra.mxu0 0.0
    %2927 = vmatprep.subr.mxu0 0.0
    %2928 = vmatpush1.msra.mxu0 0.0
    %2929 = vmatprep.subr.mxu0 0.0
    %2930 = vmatpush1.msra.mxu0 0.0
    %2931 = vmatprep.subr.mxu0 0.0
    %2932 = vmatpush1.msra.mxu0 0.0
    %2933 = vmatprep.subr.mxu0 0.0
    %2934 = vmatpush1.msra.mxu0 0.0
    %2935 = vmatprep.subr.mxu0 0.0
    %2936 = vmatpush1.msra.mxu0 0.0
    %2937 = vmatprep.mubr.f32.mxu0 0.0
    %2938 = vmatmul.mubr.f32.gmra.mrb[0].mxu0 %v2862
    %v2939 = vpop.f32.mrb[0].mxu0
    %v2940 = vadd.f32 %v869, %v2939
    %v2941 = vpop.f32.mrb[0].mxu0
    %2942 = vmatprep.mubr.f32.mxu0 0.0
    %2943 = vmatmul.mubr.f32.gmra.mrb[0].mxu0 %v2865
    %v2944 = vpop.f32.mrb[0].mxu0
    %v2945 = vadd.f32 %v869, %v2944
    %v2946 = vpop.f32.mrb[0].mxu0
    %2947 = vmatprep.mubr.f32.mxu0 0.0
    %2948 = vmatmul.mubr.f32.gmra.mrb[0].mxu0 %v2868
    %v2949 = vpop.f32.mrb[0].mxu0
    %v2950 = vadd.f32 %v869, %v2949
    %v2951 = vpop.f32.mrb[0].mxu0
    %2952 = vmatprep.mubr.f32.mxu0 0.0
    %2953 = vmatmul.mubr.f32.gmra.mrb[0].mxu0 %v2871
    %v2954 = vpop.f32.mrb[0].mxu0
    %v2955 = vadd.f32 %v869, %v2954
    %v2956 = vpop.f32.mrb[0].mxu0
    %2957 = vdwg.mxu0
    %v2958 = vadd.f32 %v2699, %v2940
    %v2959 = vadd.f32 %v2700, %v2945
    %v2960 = vadd.f32 %v2701, %v2950
    %v2961 = vadd.f32 %v2702, %v2955
    %s2962 = scalar_lea.vmem %s4, 160
    %v2963 = vld [vmem:[%s2962] sm:$0xff]
    %v2964 = vld [vmem:[%s2962 + $0x8] sm:$0xff]
    %v2965 = vld [vmem:[%s2962 + $0x10] sm:$0xff]
    %v2966 = vld [vmem:[%s2962 + $0x18] sm:$0xff]
    %s2967 = scalar_lea.vmem %s6, 5
    %v2968 = vld [vmem:[%s2967] sm:$0x1]
    %v2970 = vlaneseq
    %v2971 = vshrl.u32 %v2970, 7
    %v2972 = vsub.s32 0, %v2971
    %v2973 = vrot.slane %v2968, %v2972
    %v2976 = vsel %vm190, %v2940, 0
    %v2979 = vsel %vm190, %v2945, 0
    %v2982 = vsel %vm190, %v2950, 0
    %v2985 = vsel %vm190, %v2955, 0
    %2987 = vmatprep.subr.mxu0 0.0
    %2988 = vmatpush1.msra.mxu0 %v2963
    %2989 = vmatprep.subr.mxu0 0.0
    %2990 = vmatpush1.msra.mxu0 %v2964
    %2991 = vmatprep.subr.mxu0 0.0
    %2992 = vmatpush1.msra.mxu0 %v2965
    %2993 = vmatprep.subr.mxu0 0.0
    %2994 = vmatpush1.msra.mxu0 %v2966
    %2995 = vmatprep.subr.mxu0 0.0
    %2996 = vmatpush1.msra.mxu0 0.0
    %2997 = vmatprep.subr.mxu0 0.0
    %2998 = vmatpush1.msra.mxu0 0.0
    %2999 = vmatprep.subr.mxu0 0.0
    %3000 = vmatpush1.msra.mxu0 0.0
    %3001 = vmatprep.subr.mxu0 0.0
    %3002 = vmatpush1.msra.mxu0 0.0
    %3003 = vmatprep.subr.mxu0 0.0
    %3004 = vmatpush1.msra.mxu0 0.0
    %3005 = vmatprep.subr.mxu0 0.0
    %3006 = vmatpush1.msra.mxu0 0.0
    %3007 = vmatprep.subr.mxu0 0.0
    %3008 = vmatpush1.msra.mxu0 0.0
    %3009 = vmatprep.subr.mxu0 0.0
    %3010 = vmatpush1.msra.mxu0 0.0
    %3011 = vmatprep.subr.mxu0 0.0
    %3012 = vmatpush1.msra.mxu0 0.0
    %3013 = vmatprep.subr.mxu0 0.0
    %3014 = vmatpush1.msra.mxu0 0.0
    %3015 = vmatprep.subr.mxu0 0.0
    %3016 = vmatpush1.msra.mxu0 0.0
    %3017 = vmatprep.subr.mxu0 0.0
    %3018 = vmatpush1.msra.mxu0 0.0
    %3019 = vmatprep.subr.mxu0 0.0
    %3020 = vmatpush1.msra.mxu0 0.0
    %3021 = vmatprep.subr.mxu0 0.0
    %3022 = vmatpush1.msra.mxu0 0.0
    %3023 = vmatprep.subr.mxu0 0.0
    %3024 = vmatpush1.msra.mxu0 0.0
    %3025 = vmatprep.subr.mxu0 0.0
    %3026 = vmatpush1.msra.mxu0 0.0
    %3027 = vmatprep.subr.mxu0 0.0
    %3028 = vmatpush1.msra.mxu0 0.0
    %3029 = vmatprep.subr.mxu0 0.0
    %3030 = vmatpush1.msra.mxu0 0.0
    %3031 = vmatprep.subr.mxu0 0.0
    %3032 = vmatpush1.msra.mxu0 0.0
    %3033 = vmatprep.subr.mxu0 0.0
    %3034 = vmatpush1.msra.mxu0 0.0
    %3035 = vmatprep.subr.mxu0 0.0
    %3036 = vmatpush1.msra.mxu0 0.0
    %3037 = vmatprep.subr.mxu0 0.0
    %3038 = vmatpush1.msra.mxu0 0.0
    %3039 = vmatprep.subr.mxu0 0.0
    %3040 = vmatpush1.msra.mxu0 0.0
    %3041 = vmatprep.subr.mxu0 0.0
    %3042 = vmatpush1.msra.mxu0 0.0
    %3043 = vmatprep.subr.mxu0 0.0
    %3044 = vmatpush1.msra.mxu0 0.0
    %3045 = vmatprep.subr.mxu0 0.0
    %3046 = vmatpush1.msra.mxu0 0.0
    %3047 = vmatprep.subr.mxu0 0.0
    %3048 = vmatpush1.msra.mxu0 0.0
    %3049 = vmatprep.subr.mxu0 0.0
    %3050 = vmatpush1.msra.mxu0 0.0
    %3051 = vmatprep.mubr.f32.mxu0 0.0
    %3052 = vmatmul.mubr.f32.gmra.mrb[0].mxu0 %v2976
    %v3053 = vpop.f32.mrb[0].mxu0
    %v3054 = vadd.f32 %v2973, %v3053
    %v3055 = vpop.f32.mrb[0].mxu0
    %3056 = vmatprep.mubr.f32.mxu0 0.0
    %3057 = vmatmul.mubr.f32.gmra.mrb[0].mxu0 %v2979
    %v3058 = vpop.f32.mrb[0].mxu0
    %v3059 = vadd.f32 %v2973, %v3058
    %v3060 = vpop.f32.mrb[0].mxu0
    %3061 = vmatprep.mubr.f32.mxu0 0.0
    %3062 = vmatmul.mubr.f32.gmra.mrb[0].mxu0 %v2982
    %v3063 = vpop.f32.mrb[0].mxu0
    %v3064 = vadd.f32 %v2973, %v3063
    %v3065 = vpop.f32.mrb[0].mxu0
    %3066 = vmatprep.mubr.f32.mxu0 0.0
    %3067 = vmatmul.mubr.f32.gmra.mrb[0].mxu0 %v2985
    %v3068 = vpop.f32.mrb[0].mxu0
    %v3069 = vadd.f32 %v2973, %v3068
    %v3070 = vpop.f32.mrb[0].mxu0
    %3071 = vdwg.mxu0
    %v3072 = vtanh.pop %v3054
    %v3073 = vtanh.pop %v3059
    %v3074 = vtanh.pop %v3064
    %v3075 = vtanh.pop %v3069
    %v3076 = vxor.u32 %v3054, 2147483648
    %v3077 = vxor.u32 %v3059, 2147483648
    %v3078 = vxor.u32 %v3064, 2147483648
    %v3079 = vxor.u32 %v3069, 2147483648
    %v3080 = vmul.f32 %v3076, 1.442695
    %v3081 = vpow.pop %v3080
    %v3082 = vmul.f32 %v3077, 1.442695
    %v3083 = vpow.pop %v3082
    %v3084 = vmul.f32 %v3078, 1.442695
    %v3085 = vpow.pop %v3084
    %v3086 = vmul.f32 %v3079, 1.442695
    %v3087 = vpow.pop %v3086
    %v3088 = vadd.f32 %v3081, 1.0
    %v3089 = vadd.f32 %v3083, 1.0
    %v3090 = vadd.f32 %v3085, 1.0
    %v3091 = vadd.f32 %v3087, 1.0
    %v3092 = vrcp.pop %v3088
    %v3093 = vmul.f32 1.0, %v3092
    %v3094 = vrcp.pop %v3089
    %v3095 = vmul.f32 1.0, %v3094
    %v3096 = vrcp.pop %v3090
    %v3097 = vmul.f32 1.0, %v3096
    %v3098 = vrcp.pop %v3091
    %v3099 = vmul.f32 1.0, %v3098
    %3104 = vrot.lane.b32.xlu0 %v3093, 96
    %v3105 = vpop.permute.xlu0 %3104
    %3106 = vrot.lane.b32.xlu0 %v3095, 96
    %v3107 = vpop.permute.xlu0 %3106
    %3108 = vrot.lane.b32.xlu0 %v3097, 96
    %v3109 = vpop.permute.xlu0 %3108
    %3110 = vrot.lane.b32.xlu0 %v3099, 96
    %v3111 = vpop.permute.xlu0 %3110
    %v3116 = vmul.f32 %v3072, %v3105
    %v3117 = vmul.f32 %v3073, %v3107
    %v3118 = vmul.f32 %v3074, %v3109
    %v3119 = vmul.f32 %v3075, %v3111
    %v3121 = vsel %vm190, %v3116, 0
    %v3124 = vsel %vm190, %v3117, 0
    %v3127 = vsel %vm190, %v3118, 0
    %v3130 = vsel %vm190, %v3119, 0
    %3132 = vmatprep.subr.mxu0 0.0
    %3133 = vmatpush1.msra.mxu0 %v421
    %3134 = vmatprep.subr.mxu0 0.0
    %3135 = vmatpush1.msra.mxu0 %v422
    %3136 = vmatprep.subr.mxu0 0.0
    %3137 = vmatpush1.msra.mxu0 %v423
    %3138 = vmatprep.subr.mxu0 0.0
    %3139 = vmatpush1.msra.mxu0 %v424
    %3140 = vmatprep.subr.mxu0 0.0
    %3141 = vmatpush1.msra.mxu0 0.0
    %3142 = vmatprep.subr.mxu0 0.0
    %3143 = vmatpush1.msra.mxu0 0.0
    %3144 = vmatprep.subr.mxu0 0.0
    %3145 = vmatpush1.msra.mxu0 0.0
    %3146 = vmatprep.subr.mxu0 0.0
    %3147 = vmatpush1.msra.mxu0 0.0
    %3148 = vmatprep.subr.mxu0 0.0
    %3149 = vmatpush1.msra.mxu0 0.0
    %3150 = vmatprep.subr.mxu0 0.0
    %3151 = vmatpush1.msra.mxu0 0.0
    %3152 = vmatprep.subr.mxu0 0.0
    %3153 = vmatpush1.msra.mxu0 0.0
    %3154 = vmatprep.subr.mxu0 0.0
    %3155 = vmatpush1.msra.mxu0 0.0
    %3156 = vmatprep.subr.mxu0 0.0
    %3157 = vmatpush1.msra.mxu0 0.0
    %3158 = vmatprep.subr.mxu0 0.0
    %3159 = vmatpush1.msra.mxu0 0.0
    %3160 = vmatprep.subr.mxu0 0.0
    %3161 = vmatpush1.msra.mxu0 0.0
    %3162 = vmatprep.subr.mxu0 0.0
    %3163 = vmatpush1.msra.mxu0 0.0
    %3164 = vmatprep.subr.mxu0 0.0
    %3165 = vmatpush1.msra.mxu0 0.0
    %3166 = vmatprep.subr.mxu0 0.0
    %3167 = vmatpush1.msra.mxu0 0.0
    %3168 = vmatprep.subr.mxu0 0.0
    %3169 = vmatpush1.msra.mxu0 0.0
    %3170 = vmatprep.subr.mxu0 0.0
    %3171 = vmatpush1.msra.mxu0 0.0
    %3172 = vmatprep.subr.mxu0 0.0
    %3173 = vmatpush1.msra.mxu0 0.0
    %3174 = vmatprep.subr.mxu0 0.0
    %3175 = vmatpush1.msra.mxu0 0.0
    %3176 = vmatprep.subr.mxu0 0.0
    %3177 = vmatpush1.msra.mxu0 0.0
    %3178 = vmatprep.subr.mxu0 0.0
    %3179 = vmatpush1.msra.mxu0 0.0
    %3180 = vmatprep.subr.mxu0 0.0
    %3181 = vmatpush1.msra.mxu0 0.0
    %3182 = vmatprep.subr.mxu0 0.0
    %3183 = vmatpush1.msra.mxu0 0.0
    %3184 = vmatprep.subr.mxu0 0.0
    %3185 = vmatpush1.msra.mxu0 0.0
    %3186 = vmatprep.subr.mxu0 0.0
    %3187 = vmatpush1.msra.mxu0 0.0
    %3188 = vmatprep.subr.mxu0 0.0
    %3189 = vmatpush1.msra.mxu0 0.0
    %3190 = vmatprep.subr.mxu0 0.0
    %3191 = vmatpush1.msra.mxu0 0.0
    %3192 = vmatprep.subr.mxu0 0.0
    %3193 = vmatpush1.msra.mxu0 0.0
    %3194 = vmatprep.subr.mxu0 0.0
    %3195 = vmatpush1.msra.mxu0 0.0
    %3196 = vmatprep.mubr.f32.mxu0 0.0
    %3197 = vmatmul.mubr.f32.gmra.mrb[0].mxu0 %v3121
    %v3198 = vpop.f32.mrb[0].mxu0
    %v3199 = vadd.f32 %v869, %v3198
    %v3200 = vpop.f32.mrb[0].mxu0
    %3201 = vmatprep.mubr.f32.mxu0 0.0
    %3202 = vmatmul.mubr.f32.gmra.mrb[0].mxu0 %v3124
    %v3203 = vpop.f32.mrb[0].mxu0
    %v3204 = vadd.f32 %v869, %v3203
    %v3205 = vpop.f32.mrb[0].mxu0
    %3206 = vmatprep.mubr.f32.mxu0 0.0
    %3207 = vmatmul.mubr.f32.gmra.mrb[0].mxu0 %v3127
    %v3208 = vpop.f32.mrb[0].mxu0
    %v3209 = vadd.f32 %v869, %v3208
    %v3210 = vpop.f32.mrb[0].mxu0
    %3211 = vmatprep.mubr.f32.mxu0 0.0
    %3212 = vmatmul.mubr.f32.gmra.mrb[0].mxu0 %v3130
    %v3213 = vpop.f32.mrb[0].mxu0
    %v3214 = vadd.f32 %v869, %v3213
    %v3215 = vpop.f32.mrb[0].mxu0
    %3216 = vdwg.mxu0
    %v3217 = vadd.f32 %v2958, %v3199
    %v3218 = vadd.f32 %v2959, %v3204
    %v3219 = vadd.f32 %v2960, %v3209
    %v3220 = vadd.f32 %v2961, %v3214
    %s3221 = scalar_lea.vmem %s4, 192
    %v3222 = vld [vmem:[%s3221] sm:$0xff]
    %v3223 = vld [vmem:[%s3221 + $0x8] sm:$0xff]
    %v3224 = vld [vmem:[%s3221 + $0x10] sm:$0xff]
    %v3225 = vld [vmem:[%s3221 + $0x18] sm:$0xff]
    %s3226 = scalar_lea.vmem %s6, 6
    %v3227 = vld [vmem:[%s3226] sm:$0x1]
    %v3229 = vlaneseq
    %v3230 = vshrl.u32 %v3229, 7
    %v3231 = vsub.s32 0, %v3230
    %v3232 = vrot.slane %v3227, %v3231
    %v3235 = vsel %vm190, %v3199, 0
    %v3238 = vsel %vm190, %v3204, 0
    %v3241 = vsel %vm190, %v3209, 0
    %v3244 = vsel %vm190, %v3214, 0
    %3246 = vmatprep.subr.mxu0 0.0
    %3247 = vmatpush1.msra.mxu0 %v3222
    %3248 = vmatprep.subr.mxu0 0.0
    %3249 = vmatpush1.msra.mxu0 %v3223
    %3250 = vmatprep.subr.mxu0 0.0
    %3251 = vmatpush1.msra.mxu0 %v3224
    %3252 = vmatprep.subr.mxu0 0.0
    %3253 = vmatpush1.msra.mxu0 %v3225
    %3254 = vmatprep.subr.mxu0 0.0
    %3255 = vmatpush1.msra.mxu0 0.0
    %3256 = vmatprep.subr.mxu0 0.0
    %3257 = vmatpush1.msra.mxu0 0.0
    %3258 = vmatprep.subr.mxu0 0.0
    %3259 = vmatpush1.msra.mxu0 0.0
    %3260 = vmatprep.subr.mxu0 0.0
    %3261 = vmatpush1.msra.mxu0 0.0
    %3262 = vmatprep.subr.mxu0 0.0
    %3263 = vmatpush1.msra.mxu0 0.0
    %3264 = vmatprep.subr.mxu0 0.0
    %3265 = vmatpush1.msra.mxu0 0.0
    %3266 = vmatprep.subr.mxu0 0.0
    %3267 = vmatpush1.msra.mxu0 0.0
    %3268 = vmatprep.subr.mxu0 0.0
    %3269 = vmatpush1.msra.mxu0 0.0
    %3270 = vmatprep.subr.mxu0 0.0
    %3271 = vmatpush1.msra.mxu0 0.0
    %3272 = vmatprep.subr.mxu0 0.0
    %3273 = vmatpush1.msra.mxu0 0.0
    %3274 = vmatprep.subr.mxu0 0.0
    %3275 = vmatpush1.msra.mxu0 0.0
    %3276 = vmatprep.subr.mxu0 0.0
    %3277 = vmatpush1.msra.mxu0 0.0
    %3278 = vmatprep.subr.mxu0 0.0
    %3279 = vmatpush1.msra.mxu0 0.0
    %3280 = vmatprep.subr.mxu0 0.0
    %3281 = vmatpush1.msra.mxu0 0.0
    %3282 = vmatprep.subr.mxu0 0.0
    %3283 = vmatpush1.msra.mxu0 0.0
    %3284 = vmatprep.subr.mxu0 0.0
    %3285 = vmatpush1.msra.mxu0 0.0
    %3286 = vmatprep.subr.mxu0 0.0
    %3287 = vmatpush1.msra.mxu0 0.0
    %3288 = vmatprep.subr.mxu0 0.0
    %3289 = vmatpush1.msra.mxu0 0.0
    %3290 = vmatprep.subr.mxu0 0.0
    %3291 = vmatpush1.msra.mxu0 0.0
    %3292 = vmatprep.subr.mxu0 0.0
    %3293 = vmatpush1.msra.mxu0 0.0
    %3294 = vmatprep.subr.mxu0 0.0
    %3295 = vmatpush1.msra.mxu0 0.0
    %3296 = vmatprep.subr.mxu0 0.0
    %3297 = vmatpush1.msra.mxu0 0.0
    %3298 = vmatprep.subr.mxu0 0.0
    %3299 = vmatpush1.msra.mxu0 0.0
    %3300 = vmatprep.subr.mxu0 0.0
    %3301 = vmatpush1.msra.mxu0 0.0
    %3302 = vmatprep.subr.mxu0 0.0
    %3303 = vmatpush1.msra.mxu0 0.0
    %3304 = vmatprep.subr.mxu0 0.0
    %3305 = vmatpush1.msra.mxu0 0.0
    %3306 = vmatprep.subr.mxu0 0.0
    %3307 = vmatpush1.msra.mxu0 0.0
    %3308 = vmatprep.subr.mxu0 0.0
    %3309 = vmatpush1.msra.mxu0 0.0
    %3310 = vmatprep.mubr.f32.mxu0 0.0
    %3311 = vmatmul.mubr.f32.gmra.mrb[0].mxu0 %v3235
    %v3312 = vpop.f32.mrb[0].mxu0
    %v3313 = vadd.f32 %v3232, %v3312
    %v3314 = vpop.f32.mrb[0].mxu0
    %3315 = vmatprep.mubr.f32.mxu0 0.0
    %3316 = vmatmul.mubr.f32.gmra.mrb[0].mxu0 %v3238
    %v3317 = vpop.f32.mrb[0].mxu0
    %v3318 = vadd.f32 %v3232, %v3317
    %v3319 = vpop.f32.mrb[0].mxu0
    %3320 = vmatprep.mubr.f32.mxu0 0.0
    %3321 = vmatmul.mubr.f32.gmra.mrb[0].mxu0 %v3241
    %v3322 = vpop.f32.mrb[0].mxu0
    %v3323 = vadd.f32 %v3232, %v3322
    %v3324 = vpop.f32.mrb[0].mxu0
    %3325 = vmatprep.mubr.f32.mxu0 0.0
    %3326 = vmatmul.mubr.f32.gmra.mrb[0].mxu0 %v3244
    %v3327 = vpop.f32.mrb[0].mxu0
    %v3328 = vadd.f32 %v3232, %v3327
    %v3329 = vpop.f32.mrb[0].mxu0
    %3330 = vdwg.mxu0
    %v3331 = vtanh.pop %v3313
    %v3332 = vtanh.pop %v3318
    %v3333 = vtanh.pop %v3323
    %v3334 = vtanh.pop %v3328
    %v3335 = vxor.u32 %v3313, 2147483648
    %v3336 = vxor.u32 %v3318, 2147483648
    %v3337 = vxor.u32 %v3323, 2147483648
    %v3338 = vxor.u32 %v3328, 2147483648
    %v3339 = vmul.f32 %v3335, 1.442695
    %v3340 = vpow.pop %v3339
    %v3341 = vmul.f32 %v3336, 1.442695
    %v3342 = vpow.pop %v3341
    %v3343 = vmul.f32 %v3337, 1.442695
    %v3344 = vpow.pop %v3343
    %v3345 = vmul.f32 %v3338, 1.442695
    %v3346 = vpow.pop %v3345
    %v3347 = vadd.f32 %v3340, 1.0
    %v3348 = vadd.f32 %v3342, 1.0
    %v3349 = vadd.f32 %v3344, 1.0
    %v3350 = vadd.f32 %v3346, 1.0
    %v3351 = vrcp.pop %v3347
    %v3352 = vmul.f32 1.0, %v3351
    %v3353 = vrcp.pop %v3348
    %v3354 = vmul.f32 1.0, %v3353
    %v3355 = vrcp.pop %v3349
    %v3356 = vmul.f32 1.0, %v3355
    %v3357 = vrcp.pop %v3350
    %v3358 = vmul.f32 1.0, %v3357
    %3363 = vrot.lane.b32.xlu0 %v3352, 96
    %v3364 = vpop.permute.xlu0 %3363
    %3365 = vrot.lane.b32.xlu0 %v3354, 96
    %v3366 = vpop.permute.xlu0 %3365
    %3367 = vrot.lane.b32.xlu0 %v3356, 96
    %v3368 = vpop.permute.xlu0 %3367
    %3369 = vrot.lane.b32.xlu0 %v3358, 96
    %v3370 = vpop.permute.xlu0 %3369
    %v3375 = vmul.f32 %v3331, %v3364
    %v3376 = vmul.f32 %v3332, %v3366
    %v3377 = vmul.f32 %v3333, %v3368
    %v3378 = vmul.f32 %v3334, %v3370
    %v3380 = vsel %vm190, %v3375, 0
    %v3383 = vsel %vm190, %v3376, 0
    %v3386 = vsel %vm190, %v3377, 0
    %v3389 = vsel %vm190, %v3378, 0
    %3391 = vmatprep.subr.mxu0 0.0
    %3392 = vmatpush1.msra.mxu0 %v421
    %3393 = vmatprep.subr.mxu0 0.0
    %3394 = vmatpush1.msra.mxu0 %v422
    %3395 = vmatprep.subr.mxu0 0.0
    %3396 = vmatpush1.msra.mxu0 %v423
    %3397 = vmatprep.subr.mxu0 0.0
    %3398 = vmatpush1.msra.mxu0 %v424
    %3399 = vmatprep.subr.mxu0 0.0
    %3400 = vmatpush1.msra.mxu0 0.0
    %3401 = vmatprep.subr.mxu0 0.0
    %3402 = vmatpush1.msra.mxu0 0.0
    %3403 = vmatprep.subr.mxu0 0.0
    %3404 = vmatpush1.msra.mxu0 0.0
    %3405 = vmatprep.subr.mxu0 0.0
    %3406 = vmatpush1.msra.mxu0 0.0
    %3407 = vmatprep.subr.mxu0 0.0
    %3408 = vmatpush1.msra.mxu0 0.0
    %3409 = vmatprep.subr.mxu0 0.0
    %3410 = vmatpush1.msra.mxu0 0.0
    %3411 = vmatprep.subr.mxu0 0.0
    %3412 = vmatpush1.msra.mxu0 0.0
    %3413 = vmatprep.subr.mxu0 0.0
    %3414 = vmatpush1.msra.mxu0 0.0
    %3415 = vmatprep.subr.mxu0 0.0
    %3416 = vmatpush1.msra.mxu0 0.0
    %3417 = vmatprep.subr.mxu0 0.0
    %3418 = vmatpush1.msra.mxu0 0.0
    %3419 = vmatprep.subr.mxu0 0.0
    %3420 = vmatpush1.msra.mxu0 0.0
    %3421 = vmatprep.subr.mxu0 0.0
    %3422 = vmatpush1.msra.mxu0 0.0
    %3423 = vmatprep.subr.mxu0 0.0
    %3424 = vmatpush1.msra.mxu0 0.0
    %3425 = vmatprep.subr.mxu0 0.0
    %3426 = vmatpush1.msra.mxu0 0.0
    %3427 = vmatprep.subr.mxu0 0.0
    %3428 = vmatpush1.msra.mxu0 0.0
    %3429 = vmatprep.subr.mxu0 0.0
    %3430 = vmatpush1.msra.mxu0 0.0
    %3431 = vmatprep.subr.mxu0 0.0
    %3432 = vmatpush1.msra.mxu0 0.0
    %3433 = vmatprep.subr.mxu0 0.0
    %3434 = vmatpush1.msra.mxu0 0.0
    %3435 = vmatprep.subr.mxu0 0.0
    %3436 = vmatpush1.msra.mxu0 0.0
    %3437 = vmatprep.subr.mxu0 0.0
    %3438 = vmatpush1.msra.mxu0 0.0
    %3439 = vmatprep.subr.mxu0 0.0
    %3440 = vmatpush1.msra.mxu0 0.0
    %3441 = vmatprep.subr.mxu0 0.0
    %3442 = vmatpush1.msra.mxu0 0.0
    %3443 = vmatprep.subr.mxu0 0.0
    %3444 = vmatpush1.msra.mxu0 0.0
    %3445 = vmatprep.subr.mxu0 0.0
    %3446 = vmatpush1.msra.mxu0 0.0
    %3447 = vmatprep.subr.mxu0 0.0
    %3448 = vmatpush1.msra.mxu0 0.0
    %3449 = vmatprep.subr.mxu0 0.0
    %3450 = vmatpush1.msra.mxu0 0.0
    %3451 = vmatprep.subr.mxu0 0.0
    %3452 = vmatpush1.msra.mxu0 0.0
    %3453 = vmatprep.subr.mxu0 0.0
    %3454 = vmatpush1.msra.mxu0 0.0
    %3455 = vmatprep.mubr.f32.mxu0 0.0
    %3456 = vmatmul.mubr.f32.gmra.mrb[0].mxu0 %v3380
    %v3457 = vpop.f32.mrb[0].mxu0
    %v3458 = vadd.f32 %v869, %v3457
    %v3459 = vpop.f32.mrb[0].mxu0
    %3460 = vmatprep.mubr.f32.mxu0 0.0
    %3461 = vmatmul.mubr.f32.gmra.mrb[0].mxu0 %v3383
    %v3462 = vpop.f32.mrb[0].mxu0
    %v3463 = vadd.f32 %v869, %v3462
    %v3464 = vpop.f32.mrb[0].mxu0
    %3465 = vmatprep.mubr.f32.mxu0 0.0
    %3466 = vmatmul.mubr.f32.gmra.mrb[0].mxu0 %v3386
    %v3467 = vpop.f32.mrb[0].mxu0
    %v3468 = vadd.f32 %v869, %v3467
    %v3469 = vpop.f32.mrb[0].mxu0
    %3470 = vmatprep.mubr.f32.mxu0 0.0
    %3471 = vmatmul.mubr.f32.gmra.mrb[0].mxu0 %v3389
    %v3472 = vpop.f32.mrb[0].mxu0
    %v3473 = vadd.f32 %v869, %v3472
    %v3474 = vpop.f32.mrb[0].mxu0
    %3475 = vdwg.mxu0
    %v3476 = vadd.f32 %v3217, %v3458
    %v3477 = vadd.f32 %v3218, %v3463
    %v3478 = vadd.f32 %v3219, %v3468
    %v3479 = vadd.f32 %v3220, %v3473
    %s3480 = scalar_lea.vmem %s4, 224
    %v3481 = vld [vmem:[%s3480] sm:$0xff]
    %v3482 = vld [vmem:[%s3480 + $0x8] sm:$0xff]
    %v3483 = vld [vmem:[%s3480 + $0x10] sm:$0xff]
    %v3484 = vld [vmem:[%s3480 + $0x18] sm:$0xff]
    %s3485 = scalar_lea.vmem %s6, 7
    %v3486 = vld [vmem:[%s3485] sm:$0x1]
    %v3488 = vlaneseq
    %v3489 = vshrl.u32 %v3488, 7
    %v3490 = vsub.s32 0, %v3489
    %v3491 = vrot.slane %v3486, %v3490
    %v3494 = vsel %vm190, %v3458, 0
    %v3497 = vsel %vm190, %v3463, 0
    %v3500 = vsel %vm190, %v3468, 0
    %v3503 = vsel %vm190, %v3473, 0
    %3505 = vmatprep.subr.mxu0 0.0
    %3506 = vmatpush1.msra.mxu0 %v3481
    %3507 = vmatprep.subr.mxu0 0.0
    %3508 = vmatpush1.msra.mxu0 %v3482
    %3509 = vmatprep.subr.mxu0 0.0
    %3510 = vmatpush1.msra.mxu0 %v3483
    %3511 = vmatprep.subr.mxu0 0.0
    %3512 = vmatpush1.msra.mxu0 %v3484
    %3513 = vmatprep.subr.mxu0 0.0
    %3514 = vmatpush1.msra.mxu0 0.0
    %3515 = vmatprep.subr.mxu0 0.0
    %3516 = vmatpush1.msra.mxu0 0.0
    %3517 = vmatprep.subr.mxu0 0.0
    %3518 = vmatpush1.msra.mxu0 0.0
    %3519 = vmatprep.subr.mxu0 0.0
    %3520 = vmatpush1.msra.mxu0 0.0
    %3521 = vmatprep.subr.mxu0 0.0
    %3522 = vmatpush1.msra.mxu0 0.0
    %3523 = vmatprep.subr.mxu0 0.0
    %3524 = vmatpush1.msra.mxu0 0.0
    %3525 = vmatprep.subr.mxu0 0.0
    %3526 = vmatpush1.msra.mxu0 0.0
    %3527 = vmatprep.subr.mxu0 0.0
    %3528 = vmatpush1.msra.mxu0 0.0
    %3529 = vmatprep.subr.mxu0 0.0
    %3530 = vmatpush1.msra.mxu0 0.0
    %3531 = vmatprep.subr.mxu0 0.0
    %3532 = vmatpush1.msra.mxu0 0.0
    %3533 = vmatprep.subr.mxu0 0.0
    %3534 = vmatpush1.msra.mxu0 0.0
    %3535 = vmatprep.subr.mxu0 0.0
    %3536 = vmatpush1.msra.mxu0 0.0
    %3537 = vmatprep.subr.mxu0 0.0
    %3538 = vmatpush1.msra.mxu0 0.0
    %3539 = vmatprep.subr.mxu0 0.0
    %3540 = vmatpush1.msra.mxu0 0.0
    %3541 = vmatprep.subr.mxu0 0.0
    %3542 = vmatpush1.msra.mxu0 0.0
    %3543 = vmatprep.subr.mxu0 0.0
    %3544 = vmatpush1.msra.mxu0 0.0
    %3545 = vmatprep.subr.mxu0 0.0
    %3546 = vmatpush1.msra.mxu0 0.0
    %3547 = vmatprep.subr.mxu0 0.0
    %3548 = vmatpush1.msra.mxu0 0.0
    %3549 = vmatprep.subr.mxu0 0.0
    %3550 = vmatpush1.msra.mxu0 0.0
    %3551 = vmatprep.subr.mxu0 0.0
    %3552 = vmatpush1.msra.mxu0 0.0
    %3553 = vmatprep.subr.mxu0 0.0
    %3554 = vmatpush1.msra.mxu0 0.0
    %3555 = vmatprep.subr.mxu0 0.0
    %3556 = vmatpush1.msra.mxu0 0.0
    %3557 = vmatprep.subr.mxu0 0.0
    %3558 = vmatpush1.msra.mxu0 0.0
    %3559 = vmatprep.subr.mxu0 0.0
    %3560 = vmatpush1.msra.mxu0 0.0
    %3561 = vmatprep.subr.mxu0 0.0
    %3562 = vmatpush1.msra.mxu0 0.0
    %3563 = vmatprep.subr.mxu0 0.0
    %3564 = vmatpush1.msra.mxu0 0.0
    %3565 = vmatprep.subr.mxu0 0.0
    %3566 = vmatpush1.msra.mxu0 0.0
    %3567 = vmatprep.subr.mxu0 0.0
    %3568 = vmatpush1.msra.mxu0 0.0
    %3569 = vmatprep.mubr.f32.mxu0 0.0
    %3570 = vmatmul.mubr.f32.gmra.mrb[0].mxu0 %v3494
    %v3571 = vpop.f32.mrb[0].mxu0
    %v3572 = vadd.f32 %v3491, %v3571
    %v3573 = vpop.f32.mrb[0].mxu0
    %3574 = vmatprep.mubr.f32.mxu0 0.0
    %3575 = vmatmul.mubr.f32.gmra.mrb[0].mxu0 %v3497
    %v3576 = vpop.f32.mrb[0].mxu0
    %v3577 = vadd.f32 %v3491, %v3576
    %v3578 = vpop.f32.mrb[0].mxu0
    %3579 = vmatprep.mubr.f32.mxu0 0.0
    %3580 = vmatmul.mubr.f32.gmra.mrb[0].mxu0 %v3500
    %v3581 = vpop.f32.mrb[0].mxu0
    %v3582 = vadd.f32 %v3491, %v3581
    %v3583 = vpop.f32.mrb[0].mxu0
    %3584 = vmatprep.mubr.f32.mxu0 0.0
    %3585 = vmatmul.mubr.f32.gmra.mrb[0].mxu0 %v3503
    %v3586 = vpop.f32.mrb[0].mxu0
    %v3587 = vadd.f32 %v3491, %v3586
    %v3588 = vpop.f32.mrb[0].mxu0
    %3589 = vdwg.mxu0
    %v3590 = vtanh.pop %v3572
    %v3591 = vtanh.pop %v3577
    %v3592 = vtanh.pop %v3582
    %v3593 = vtanh.pop %v3587
    %v3594 = vxor.u32 %v3572, 2147483648
    %v3595 = vxor.u32 %v3577, 2147483648
    %v3596 = vxor.u32 %v3582, 2147483648
    %v3597 = vxor.u32 %v3587, 2147483648
    %v3598 = vmul.f32 %v3594, 1.442695
    %v3599 = vpow.pop %v3598
    %v3600 = vmul.f32 %v3595, 1.442695
    %v3601 = vpow.pop %v3600
    %v3602 = vmul.f32 %v3596, 1.442695
    %v3603 = vpow.pop %v3602
    %v3604 = vmul.f32 %v3597, 1.442695
    %v3605 = vpow.pop %v3604
    %v3606 = vadd.f32 %v3599, 1.0
    %v3607 = vadd.f32 %v3601, 1.0
    %v3608 = vadd.f32 %v3603, 1.0
    %v3609 = vadd.f32 %v3605, 1.0
    %v3610 = vrcp.pop %v3606
    %v3611 = vmul.f32 1.0, %v3610
    %v3612 = vrcp.pop %v3607
    %v3613 = vmul.f32 1.0, %v3612
    %v3614 = vrcp.pop %v3608
    %v3615 = vmul.f32 1.0, %v3614
    %v3616 = vrcp.pop %v3609
    %v3617 = vmul.f32 1.0, %v3616
    %3622 = vrot.lane.b32.xlu0 %v3611, 96
    %v3623 = vpop.permute.xlu0 %3622
    %3624 = vrot.lane.b32.xlu0 %v3613, 96
    %v3625 = vpop.permute.xlu0 %3624
    %3626 = vrot.lane.b32.xlu0 %v3615, 96
    %v3627 = vpop.permute.xlu0 %3626
    %3628 = vrot.lane.b32.xlu0 %v3617, 96
    %v3629 = vpop.permute.xlu0 %3628
    %v3634 = vmul.f32 %v3590, %v3623
    %v3635 = vmul.f32 %v3591, %v3625
    %v3636 = vmul.f32 %v3592, %v3627
    %v3637 = vmul.f32 %v3593, %v3629
    %v3639 = vsel %vm190, %v3634, 0
    %v3642 = vsel %vm190, %v3635, 0
    %v3645 = vsel %vm190, %v3636, 0
    %v3648 = vsel %vm190, %v3637, 0
    %3650 = vmatprep.subr.mxu0 0.0
    %3651 = vmatpush1.msra.mxu0 %v421
    %3652 = vmatprep.subr.mxu0 0.0
    %3653 = vmatpush1.msra.mxu0 %v422
    %3654 = vmatprep.subr.mxu0 0.0
    %3655 = vmatpush1.msra.mxu0 %v423
    %3656 = vmatprep.subr.mxu0 0.0
    %3657 = vmatpush1.msra.mxu0 %v424
    %3658 = vmatprep.subr.mxu0 0.0
    %3659 = vmatpush1.msra.mxu0 0.0
    %3660 = vmatprep.subr.mxu0 0.0
    %3661 = vmatpush1.msra.mxu0 0.0
    %3662 = vmatprep.subr.mxu0 0.0
    %3663 = vmatpush1.msra.mxu0 0.0
    %3664 = vmatprep.subr.mxu0 0.0
    %3665 = vmatpush1.msra.mxu0 0.0
    %3666 = vmatprep.subr.mxu0 0.0
    %3667 = vmatpush1.msra.mxu0 0.0
    %3668 = vmatprep.subr.mxu0 0.0
    %3669 = vmatpush1.msra.mxu0 0.0
    %3670 = vmatprep.subr.mxu0 0.0
    %3671 = vmatpush1.msra.mxu0 0.0
    %3672 = vmatprep.subr.mxu0 0.0
    %3673 = vmatpush1.msra.mxu0 0.0
    %3674 = vmatprep.subr.mxu0 0.0
    %3675 = vmatpush1.msra.mxu0 0.0
    %3676 = vmatprep.subr.mxu0 0.0
    %3677 = vmatpush1.msra.mxu0 0.0
    %3678 = vmatprep.subr.mxu0 0.0
    %3679 = vmatpush1.msra.mxu0 0.0
    %3680 = vmatprep.subr.mxu0 0.0
    %3681 = vmatpush1.msra.mxu0 0.0
    %3682 = vmatprep.subr.mxu0 0.0
    %3683 = vmatpush1.msra.mxu0 0.0
    %3684 = vmatprep.subr.mxu0 0.0
    %3685 = vmatpush1.msra.mxu0 0.0
    %3686 = vmatprep.subr.mxu0 0.0
    %3687 = vmatpush1.msra.mxu0 0.0
    %3688 = vmatprep.subr.mxu0 0.0
    %3689 = vmatpush1.msra.mxu0 0.0
    %3690 = vmatprep.subr.mxu0 0.0
    %3691 = vmatpush1.msra.mxu0 0.0
    %3692 = vmatprep.subr.mxu0 0.0
    %3693 = vmatpush1.msra.mxu0 0.0
    %3694 = vmatprep.subr.mxu0 0.0
    %3695 = vmatpush1.msra.mxu0 0.0
    %3696 = vmatprep.subr.mxu0 0.0
    %3697 = vmatpush1.msra.mxu0 0.0
    %3698 = vmatprep.subr.mxu0 0.0
    %3699 = vmatpush1.msra.mxu0 0.0
    %3700 = vmatprep.subr.mxu0 0.0
    %3701 = vmatpush1.msra.mxu0 0.0
    %3702 = vmatprep.subr.mxu0 0.0
    %3703 = vmatpush1.msra.mxu0 0.0
    %3704 = vmatprep.subr.mxu0 0.0
    %3705 = vmatpush1.msra.mxu0 0.0
    %3706 = vmatprep.subr.mxu0 0.0
    %3707 = vmatpush1.msra.mxu0 0.0
    %3708 = vmatprep.subr.mxu0 0.0
    %3709 = vmatpush1.msra.mxu0 0.0
    %3710 = vmatprep.subr.mxu0 0.0
    %3711 = vmatpush1.msra.mxu0 0.0
    %3712 = vmatprep.subr.mxu0 0.0
    %3713 = vmatpush1.msra.mxu0 0.0
    %3714 = vmatprep.mubr.f32.mxu0 0.0
    %3715 = vmatmul.mubr.f32.gmra.mrb[0].mxu0 %v3639
    %v3716 = vpop.f32.mrb[0].mxu0
    %v3717 = vadd.f32 %v869, %v3716
    %v3718 = vpop.f32.mrb[0].mxu0
    %3719 = vmatprep.mubr.f32.mxu0 0.0
    %3720 = vmatmul.mubr.f32.gmra.mrb[0].mxu0 %v3642
    %v3721 = vpop.f32.mrb[0].mxu0
    %v3722 = vadd.f32 %v869, %v3721
    %v3723 = vpop.f32.mrb[0].mxu0
    %3724 = vmatprep.mubr.f32.mxu0 0.0
    %3725 = vmatmul.mubr.f32.gmra.mrb[0].mxu0 %v3645
    %v3726 = vpop.f32.mrb[0].mxu0
    %v3727 = vadd.f32 %v869, %v3726
    %v3728 = vpop.f32.mrb[0].mxu0
    %3729 = vmatprep.mubr.f32.mxu0 0.0
    %3730 = vmatmul.mubr.f32.gmra.mrb[0].mxu0 %v3648
    %v3731 = vpop.f32.mrb[0].mxu0
    %v3732 = vadd.f32 %v869, %v3731
    %v3733 = vpop.f32.mrb[0].mxu0
    %3734 = vdwg.mxu0
    %v3735 = vadd.f32 %v3476, %v3717
    %v3736 = vadd.f32 %v3477, %v3722
    %v3737 = vadd.f32 %v3478, %v3727
    %v3738 = vadd.f32 %v3479, %v3732
    %s3739 = scalar_lea.vmem %s4, 256
    %v3740 = vld [vmem:[%s3739] sm:$0xff]
    %v3741 = vld [vmem:[%s3739 + $0x8] sm:$0xff]
    %v3742 = vld [vmem:[%s3739 + $0x10] sm:$0xff]
    %v3743 = vld [vmem:[%s3739 + $0x18] sm:$0xff]
    %s3744 = scalar_lea.vmem %s6, 8
    %v3745 = vld [vmem:[%s3744] sm:$0x1]
    %v3747 = vlaneseq
    %v3748 = vshrl.u32 %v3747, 7
    %v3749 = vsub.s32 0, %v3748
    %v3750 = vrot.slane %v3745, %v3749
    %v3753 = vsel %vm190, %v3717, 0
    %v3756 = vsel %vm190, %v3722, 0
    %v3759 = vsel %vm190, %v3727, 0
    %v3762 = vsel %vm190, %v3732, 0
    %3764 = vmatprep.subr.mxu0 0.0
    %3765 = vmatpush1.msra.mxu0 %v3740
    %3766 = vmatprep.subr.mxu0 0.0
    %3767 = vmatpush1.msra.mxu0 %v3741
    %3768 = vmatprep.subr.mxu0 0.0
    %3769 = vmatpush1.msra.mxu0 %v3742
    %3770 = vmatprep.subr.mxu0 0.0
    %3771 = vmatpush1.msra.mxu0 %v3743
    %3772 = vmatprep.subr.mxu0 0.0
    %3773 = vmatpush1.msra.mxu0 0.0
    %3774 = vmatprep.subr.mxu0 0.0
    %3775 = vmatpush1.msra.mxu0 0.0
    %3776 = vmatprep.subr.mxu0 0.0
    %3777 = vmatpush1.msra.mxu0 0.0
    %3778 = vmatprep.subr.mxu0 0.0
    %3779 = vmatpush1.msra.mxu0 0.0
    %3780 = vmatprep.subr.mxu0 0.0
    %3781 = vmatpush1.msra.mxu0 0.0
    %3782 = vmatprep.subr.mxu0 0.0
    %3783 = vmatpush1.msra.mxu0 0.0
    %3784 = vmatprep.subr.mxu0 0.0
    %3785 = vmatpush1.msra.mxu0 0.0
    %3786 = vmatprep.subr.mxu0 0.0
    %3787 = vmatpush1.msra.mxu0 0.0
    %3788 = vmatprep.subr.mxu0 0.0
    %3789 = vmatpush1.msra.mxu0 0.0
    %3790 = vmatprep.subr.mxu0 0.0
    %3791 = vmatpush1.msra.mxu0 0.0
    %3792 = vmatprep.subr.mxu0 0.0
    %3793 = vmatpush1.msra.mxu0 0.0
    %3794 = vmatprep.subr.mxu0 0.0
    %3795 = vmatpush1.msra.mxu0 0.0
    %3796 = vmatprep.subr.mxu0 0.0
    %3797 = vmatpush1.msra.mxu0 0.0
    %3798 = vmatprep.subr.mxu0 0.0
    %3799 = vmatpush1.msra.mxu0 0.0
    %3800 = vmatprep.subr.mxu0 0.0
    %3801 = vmatpush1.msra.mxu0 0.0
    %3802 = vmatprep.subr.mxu0 0.0
    %3803 = vmatpush1.msra.mxu0 0.0
    %3804 = vmatprep.subr.mxu0 0.0
    %3805 = vmatpush1.msra.mxu0 0.0
    %3806 = vmatprep.subr.mxu0 0.0
    %3807 = vmatpush1.msra.mxu0 0.0
    %3808 = vmatprep.subr.mxu0 0.0
    %3809 = vmatpush1.msra.mxu0 0.0
    %3810 = vmatprep.subr.mxu0 0.0
    %3811 = vmatpush1.msra.mxu0 0.0
    %3812 = vmatprep.subr.mxu0 0.0
    %3813 = vmatpush1.msra.mxu0 0.0
    %3814 = vmatprep.subr.mxu0 0.0
    %3815 = vmatpush1.msra.mxu0 0.0
    %3816 = vmatprep.subr.mxu0 0.0
    %3817 = vmatpush1.msra.mxu0 0.0
    %3818 = vmatprep.subr.mxu0 0.0
    %3819 = vmatpush1.msra.mxu0 0.0
    %3820 = vmatprep.subr.mxu0 0.0
    %3821 = vmatpush1.msra.mxu0 0.0
    %3822 = vmatprep.subr.mxu0 0.0
    %3823 = vmatpush1.msra.mxu0 0.0
    %3824 = vmatprep.subr.mxu0 0.0
    %3825 = vmatpush1.msra.mxu0 0.0
    %3826 = vmatprep.subr.mxu0 0.0
    %3827 = vmatpush1.msra.mxu0 0.0
    %3828 = vmatprep.mubr.f32.mxu0 0.0
    %3829 = vmatmul.mubr.f32.gmra.mrb[0].mxu0 %v3753
    %v3830 = vpop.f32.mrb[0].mxu0
    %v3831 = vadd.f32 %v3750, %v3830
    %v3832 = vpop.f32.mrb[0].mxu0
    %3833 = vmatprep.mubr.f32.mxu0 0.0
    %3834 = vmatmul.mubr.f32.gmra.mrb[0].mxu0 %v3756
    %v3835 = vpop.f32.mrb[0].mxu0
    %v3836 = vadd.f32 %v3750, %v3835
    %v3837 = vpop.f32.mrb[0].mxu0
    %3838 = vmatprep.mubr.f32.mxu0 0.0
    %3839 = vmatmul.mubr.f32.gmra.mrb[0].mxu0 %v3759
    %v3840 = vpop.f32.mrb[0].mxu0
    %v3841 = vadd.f32 %v3750, %v3840
    %v3842 = vpop.f32.mrb[0].mxu0
    %3843 = vmatprep.mubr.f32.mxu0 0.0
    %3844 = vmatmul.mubr.f32.gmra.mrb[0].mxu0 %v3762
    %v3845 = vpop.f32.mrb[0].mxu0
    %v3846 = vadd.f32 %v3750, %v3845
    %v3847 = vpop.f32.mrb[0].mxu0
    %3848 = vdwg.mxu0
    %v3849 = vtanh.pop %v3831
    %v3850 = vtanh.pop %v3836
    %v3851 = vtanh.pop %v3841
    %v3852 = vtanh.pop %v3846
    %v3853 = vxor.u32 %v3831, 2147483648
    %v3854 = vxor.u32 %v3836, 2147483648
    %v3855 = vxor.u32 %v3841, 2147483648
    %v3856 = vxor.u32 %v3846, 2147483648
    %v3857 = vmul.f32 %v3853, 1.442695
    %v3858 = vpow.pop %v3857
    %v3859 = vmul.f32 %v3854, 1.442695
    %v3860 = vpow.pop %v3859
    %v3861 = vmul.f32 %v3855, 1.442695
    %v3862 = vpow.pop %v3861
    %v3863 = vmul.f32 %v3856, 1.442695
    %v3864 = vpow.pop %v3863
    %v3865 = vadd.f32 %v3858, 1.0
    %v3866 = vadd.f32 %v3860, 1.0
    %v3867 = vadd.f32 %v3862, 1.0
    %v3868 = vadd.f32 %v3864, 1.0
    %v3869 = vrcp.pop %v3865
    %v3870 = vmul.f32 1.0, %v3869
    %v3871 = vrcp.pop %v3866
    %v3872 = vmul.f32 1.0, %v3871
    %v3873 = vrcp.pop %v3867
    %v3874 = vmul.f32 1.0, %v3873
    %v3875 = vrcp.pop %v3868
    %v3876 = vmul.f32 1.0, %v3875
    %3881 = vrot.lane.b32.xlu0 %v3870, 96
    %v3882 = vpop.permute.xlu0 %3881
    %3883 = vrot.lane.b32.xlu0 %v3872, 96
    %v3884 = vpop.permute.xlu0 %3883
    %3885 = vrot.lane.b32.xlu0 %v3874, 96
    %v3886 = vpop.permute.xlu0 %3885
    %3887 = vrot.lane.b32.xlu0 %v3876, 96
    %v3888 = vpop.permute.xlu0 %3887
    %v3893 = vmul.f32 %v3849, %v3882
    %v3894 = vmul.f32 %v3850, %v3884
    %v3895 = vmul.f32 %v3851, %v3886
    %v3896 = vmul.f32 %v3852, %v3888
    %v3898 = vsel %vm190, %v3893, 0
    %v3901 = vsel %vm190, %v3894, 0
    %v3904 = vsel %vm190, %v3895, 0
    %v3907 = vsel %vm190, %v3896, 0
    %3909 = vmatprep.subr.mxu0 0.0
    %3910 = vmatpush1.msra.mxu0 %v421
    %3911 = vmatprep.subr.mxu0 0.0
    %3912 = vmatpush1.msra.mxu0 %v422
    %3913 = vmatprep.subr.mxu0 0.0
    %3914 = vmatpush1.msra.mxu0 %v423
    %3915 = vmatprep.subr.mxu0 0.0
    %3916 = vmatpush1.msra.mxu0 %v424
    %3917 = vmatprep.subr.mxu0 0.0
    %3918 = vmatpush1.msra.mxu0 0.0
    %3919 = vmatprep.subr.mxu0 0.0
    %3920 = vmatpush1.msra.mxu0 0.0
    %3921 = vmatprep.subr.mxu0 0.0
    %3922 = vmatpush1.msra.mxu0 0.0
    %3923 = vmatprep.subr.mxu0 0.0
    %3924 = vmatpush1.msra.mxu0 0.0
    %3925 = vmatprep.subr.mxu0 0.0
    %3926 = vmatpush1.msra.mxu0 0.0
    %3927 = vmatprep.subr.mxu0 0.0
    %3928 = vmatpush1.msra.mxu0 0.0
    %3929 = vmatprep.subr.mxu0 0.0
    %3930 = vmatpush1.msra.mxu0 0.0
    %3931 = vmatprep.subr.mxu0 0.0
    %3932 = vmatpush1.msra.mxu0 0.0
    %3933 = vmatprep.subr.mxu0 0.0
    %3934 = vmatpush1.msra.mxu0 0.0
    %3935 = vmatprep.subr.mxu0 0.0
    %3936 = vmatpush1.msra.mxu0 0.0
    %3937 = vmatprep.subr.mxu0 0.0
    %3938 = vmatpush1.msra.mxu0 0.0
    %3939 = vmatprep.subr.mxu0 0.0
    %3940 = vmatpush1.msra.mxu0 0.0
    %3941 = vmatprep.subr.mxu0 0.0
    %3942 = vmatpush1.msra.mxu0 0.0
    %3943 = vmatprep.subr.mxu0 0.0
    %3944 = vmatpush1.msra.mxu0 0.0
    %3945 = vmatprep.subr.mxu0 0.0
    %3946 = vmatpush1.msra.mxu0 0.0
    %3947 = vmatprep.subr.mxu0 0.0
    %3948 = vmatpush1.msra.mxu0 0.0
    %3949 = vmatprep.subr.mxu0 0.0
    %3950 = vmatpush1.msra.mxu0 0.0
    %3951 = vmatprep.subr.mxu0 0.0
    %3952 = vmatpush1.msra.mxu0 0.0
    %3953 = vmatprep.subr.mxu0 0.0
    %3954 = vmatpush1.msra.mxu0 0.0
    %3955 = vmatprep.subr.mxu0 0.0
    %3956 = vmatpush1.msra.mxu0 0.0
    %3957 = vmatprep.subr.mxu0 0.0
    %3958 = vmatpush1.msra.mxu0 0.0
    %3959 = vmatprep.subr.mxu0 0.0
    %3960 = vmatpush1.msra.mxu0 0.0
    %3961 = vmatprep.subr.mxu0 0.0
    %3962 = vmatpush1.msra.mxu0 0.0
    %3963 = vmatprep.subr.mxu0 0.0
    %3964 = vmatpush1.msra.mxu0 0.0
    %3965 = vmatprep.subr.mxu0 0.0
    %3966 = vmatpush1.msra.mxu0 0.0
    %3967 = vmatprep.subr.mxu0 0.0
    %3968 = vmatpush1.msra.mxu0 0.0
    %3969 = vmatprep.subr.mxu0 0.0
    %3970 = vmatpush1.msra.mxu0 0.0
    %3971 = vmatprep.subr.mxu0 0.0
    %3972 = vmatpush1.msra.mxu0 0.0
    %3973 = vmatprep.mubr.f32.mxu0 0.0
    %3974 = vmatmul.mubr.f32.gmra.mrb[0].mxu0 %v3898
    %v3975 = vpop.f32.mrb[0].mxu0
    %v3976 = vadd.f32 %v869, %v3975
    %v3977 = vpop.f32.mrb[0].mxu0
    %3978 = vmatprep.mubr.f32.mxu0 0.0
    %3979 = vmatmul.mubr.f32.gmra.mrb[0].mxu0 %v3901
    %v3980 = vpop.f32.mrb[0].mxu0
    %v3981 = vadd.f32 %v869, %v3980
    %v3982 = vpop.f32.mrb[0].mxu0
    %3983 = vmatprep.mubr.f32.mxu0 0.0
    %3984 = vmatmul.mubr.f32.gmra.mrb[0].mxu0 %v3904
    %v3985 = vpop.f32.mrb[0].mxu0
    %v3986 = vadd.f32 %v869, %v3985
    %v3987 = vpop.f32.mrb[0].mxu0
    %3988 = vmatprep.mubr.f32.mxu0 0.0
    %3989 = vmatmul.mubr.f32.gmra.mrb[0].mxu0 %v3907
    %v3990 = vpop.f32.mrb[0].mxu0
    %v3991 = vadd.f32 %v869, %v3990
    %v3992 = vpop.f32.mrb[0].mxu0
    %3993 = vdwg.mxu0
    %v3994 = vadd.f32 %v3735, %v3976
    %v3995 = vadd.f32 %v3736, %v3981
    %v3996 = vadd.f32 %v3737, %v3986
    %v3997 = vadd.f32 %v3738, %v3991
    %s3998 = scalar_lea.vmem %s4, 288
    %v3999 = vld [vmem:[%s3998] sm:$0xff]
    %v4000 = vld [vmem:[%s3998 + $0x8] sm:$0xff]
    %v4001 = vld [vmem:[%s3998 + $0x10] sm:$0xff]
    %v4002 = vld [vmem:[%s3998 + $0x18] sm:$0xff]
    %s4003 = scalar_lea.vmem %s6, 9
    %v4004 = vld [vmem:[%s4003] sm:$0x1]
    %v4006 = vlaneseq
    %v4007 = vshrl.u32 %v4006, 7
    %v4008 = vsub.s32 0, %v4007
    %v4009 = vrot.slane %v4004, %v4008
    %v4012 = vsel %vm190, %v3976, 0
    %v4015 = vsel %vm190, %v3981, 0
    %v4018 = vsel %vm190, %v3986, 0
    %v4021 = vsel %vm190, %v3991, 0
    %4023 = vmatprep.subr.mxu0 0.0
    %4024 = vmatpush1.msra.mxu0 %v3999
    %4025 = vmatprep.subr.mxu0 0.0
    %4026 = vmatpush1.msra.mxu0 %v4000
    %4027 = vmatprep.subr.mxu0 0.0
    %4028 = vmatpush1.msra.mxu0 %v4001
    %4029 = vmatprep.subr.mxu0 0.0
    %4030 = vmatpush1.msra.mxu0 %v4002
    %4031 = vmatprep.subr.mxu0 0.0
    %4032 = vmatpush1.msra.mxu0 0.0
    %4033 = vmatprep.subr.mxu0 0.0
    %4034 = vmatpush1.msra.mxu0 0.0
    %4035 = vmatprep.subr.mxu0 0.0
    %4036 = vmatpush1.msra.mxu0 0.0
    %4037 = vmatprep.subr.mxu0 0.0
    %4038 = vmatpush1.msra.mxu0 0.0
    %4039 = vmatprep.subr.mxu0 0.0
    %4040 = vmatpush1.msra.mxu0 0.0
    %4041 = vmatprep.subr.mxu0 0.0
    %4042 = vmatpush1.msra.mxu0 0.0
    %4043 = vmatprep.subr.mxu0 0.0
    %4044 = vmatpush1.msra.mxu0 0.0
    %4045 = vmatprep.subr.mxu0 0.0
    %4046 = vmatpush1.msra.mxu0 0.0
    %4047 = vmatprep.subr.mxu0 0.0
    %4048 = vmatpush1.msra.mxu0 0.0
    %4049 = vmatprep.subr.mxu0 0.0
    %4050 = vmatpush1.msra.mxu0 0.0
    %4051 = vmatprep.subr.mxu0 0.0
    %4052 = vmatpush1.msra.mxu0 0.0
    %4053 = vmatprep.subr.mxu0 0.0
    %4054 = vmatpush1.msra.mxu0 0.0
    %4055 = vmatprep.subr.mxu0 0.0
    %4056 = vmatpush1.msra.mxu0 0.0
    %4057 = vmatprep.subr.mxu0 0.0
    %4058 = vmatpush1.msra.mxu0 0.0
    %4059 = vmatprep.subr.mxu0 0.0
    %4060 = vmatpush1.msra.mxu0 0.0
    %4061 = vmatprep.subr.mxu0 0.0
    %4062 = vmatpush1.msra.mxu0 0.0
    %4063 = vmatprep.subr.mxu0 0.0
    %4064 = vmatpush1.msra.mxu0 0.0
    %4065 = vmatprep.subr.mxu0 0.0
    %4066 = vmatpush1.msra.mxu0 0.0
    %4067 = vmatprep.subr.mxu0 0.0
    %4068 = vmatpush1.msra.mxu0 0.0
    %4069 = vmatprep.subr.mxu0 0.0
    %4070 = vmatpush1.msra.mxu0 0.0
    %4071 = vmatprep.subr.mxu0 0.0
    %4072 = vmatpush1.msra.mxu0 0.0
    %4073 = vmatprep.subr.mxu0 0.0
    %4074 = vmatpush1.msra.mxu0 0.0
    %4075 = vmatprep.subr.mxu0 0.0
    %4076 = vmatpush1.msra.mxu0 0.0
    %4077 = vmatprep.subr.mxu0 0.0
    %4078 = vmatpush1.msra.mxu0 0.0
    %4079 = vmatprep.subr.mxu0 0.0
    %4080 = vmatpush1.msra.mxu0 0.0
    %4081 = vmatprep.subr.mxu0 0.0
    %4082 = vmatpush1.msra.mxu0 0.0
    %4083 = vmatprep.subr.mxu0 0.0
    %4084 = vmatpush1.msra.mxu0 0.0
    %4085 = vmatprep.subr.mxu0 0.0
    %4086 = vmatpush1.msra.mxu0 0.0
    %4087 = vmatprep.mubr.f32.mxu0 0.0
    %4088 = vmatmul.mubr.f32.gmra.mrb[0].mxu0 %v4012
    %v4089 = vpop.f32.mrb[0].mxu0
    %v4090 = vadd.f32 %v4009, %v4089
    %v4091 = vpop.f32.mrb[0].mxu0
    %4092 = vmatprep.mubr.f32.mxu0 0.0
    %4093 = vmatmul.mubr.f32.gmra.mrb[0].mxu0 %v4015
    %v4094 = vpop.f32.mrb[0].mxu0
    %v4095 = vadd.f32 %v4009, %v4094
    %v4096 = vpop.f32.mrb[0].mxu0
    %4097 = vmatprep.mubr.f32.mxu0 0.0
    %4098 = vmatmul.mubr.f32.gmra.mrb[0].mxu0 %v4018
    %v4099 = vpop.f32.mrb[0].mxu0
    %v4100 = vadd.f32 %v4009, %v4099
    %v4101 = vpop.f32.mrb[0].mxu0
    %4102 = vmatprep.mubr.f32.mxu0 0.0
    %4103 = vmatmul.mubr.f32.gmra.mrb[0].mxu0 %v4021
    %v4104 = vpop.f32.mrb[0].mxu0
    %v4105 = vadd.f32 %v4009, %v4104
    %v4106 = vpop.f32.mrb[0].mxu0
    %4107 = vdwg.mxu0
    %v4108 = vtanh.pop %v4090
    %v4109 = vtanh.pop %v4095
    %v4110 = vtanh.pop %v4100
    %v4111 = vtanh.pop %v4105
    %v4112 = vxor.u32 %v4090, 2147483648
    %v4113 = vxor.u32 %v4095, 2147483648
    %v4114 = vxor.u32 %v4100, 2147483648
    %v4115 = vxor.u32 %v4105, 2147483648
    %v4116 = vmul.f32 %v4112, 1.442695
    %v4117 = vpow.pop %v4116
    %v4118 = vmul.f32 %v4113, 1.442695
    %v4119 = vpow.pop %v4118
    %v4120 = vmul.f32 %v4114, 1.442695
    %v4121 = vpow.pop %v4120
    %v4122 = vmul.f32 %v4115, 1.442695
    %v4123 = vpow.pop %v4122
    %v4124 = vadd.f32 %v4117, 1.0
    %v4125 = vadd.f32 %v4119, 1.0
    %v4126 = vadd.f32 %v4121, 1.0
    %v4127 = vadd.f32 %v4123, 1.0
    %v4128 = vrcp.pop %v4124
    %v4129 = vmul.f32 1.0, %v4128
    %v4130 = vrcp.pop %v4125
    %v4131 = vmul.f32 1.0, %v4130
    %v4132 = vrcp.pop %v4126
    %v4133 = vmul.f32 1.0, %v4132
    %v4134 = vrcp.pop %v4127
    %v4135 = vmul.f32 1.0, %v4134
    %4140 = vrot.lane.b32.xlu0 %v4129, 96
    %v4141 = vpop.permute.xlu0 %4140
    %4142 = vrot.lane.b32.xlu0 %v4131, 96
    %v4143 = vpop.permute.xlu0 %4142
    %4144 = vrot.lane.b32.xlu0 %v4133, 96
    %v4145 = vpop.permute.xlu0 %4144
    %4146 = vrot.lane.b32.xlu0 %v4135, 96
    %v4147 = vpop.permute.xlu0 %4146
    %v4152 = vmul.f32 %v4108, %v4141
    %v4153 = vmul.f32 %v4109, %v4143
    %v4154 = vmul.f32 %v4110, %v4145
    %v4155 = vmul.f32 %v4111, %v4147
    %v4157 = vsel %vm190, %v4152, 0
    %v4160 = vsel %vm190, %v4153, 0
    %v4163 = vsel %vm190, %v4154, 0
    %v4166 = vsel %vm190, %v4155, 0
    %4168 = vmatprep.subr.mxu0 0.0
    %4169 = vmatpush1.msra.mxu0 %v421
    %4170 = vmatprep.subr.mxu0 0.0
    %4171 = vmatpush1.msra.mxu0 %v422
    %4172 = vmatprep.subr.mxu0 0.0
    %4173 = vmatpush1.msra.mxu0 %v423
    %4174 = vmatprep.subr.mxu0 0.0
    %4175 = vmatpush1.msra.mxu0 %v424
    %4176 = vmatprep.subr.mxu0 0.0
    %4177 = vmatpush1.msra.mxu0 0.0
    %4178 = vmatprep.subr.mxu0 0.0
    %4179 = vmatpush1.msra.mxu0 0.0
    %4180 = vmatprep.subr.mxu0 0.0
    %4181 = vmatpush1.msra.mxu0 0.0
    %4182 = vmatprep.subr.mxu0 0.0
    %4183 = vmatpush1.msra.mxu0 0.0
    %4184 = vmatprep.subr.mxu0 0.0
    %4185 = vmatpush1.msra.mxu0 0.0
    %4186 = vmatprep.subr.mxu0 0.0
    %4187 = vmatpush1.msra.mxu0 0.0
    %4188 = vmatprep.subr.mxu0 0.0
    %4189 = vmatpush1.msra.mxu0 0.0
    %4190 = vmatprep.subr.mxu0 0.0
    %4191 = vmatpush1.msra.mxu0 0.0
    %4192 = vmatprep.subr.mxu0 0.0
    %4193 = vmatpush1.msra.mxu0 0.0
    %4194 = vmatprep.subr.mxu0 0.0
    %4195 = vmatpush1.msra.mxu0 0.0
    %4196 = vmatprep.subr.mxu0 0.0
    %4197 = vmatpush1.msra.mxu0 0.0
    %4198 = vmatprep.subr.mxu0 0.0
    %4199 = vmatpush1.msra.mxu0 0.0
    %4200 = vmatprep.subr.mxu0 0.0
    %4201 = vmatpush1.msra.mxu0 0.0
    %4202 = vmatprep.subr.mxu0 0.0
    %4203 = vmatpush1.msra.mxu0 0.0
    %4204 = vmatprep.subr.mxu0 0.0
    %4205 = vmatpush1.msra.mxu0 0.0
    %4206 = vmatprep.subr.mxu0 0.0
    %4207 = vmatpush1.msra.mxu0 0.0
    %4208 = vmatprep.subr.mxu0 0.0
    %4209 = vmatpush1.msra.mxu0 0.0
    %4210 = vmatprep.subr.mxu0 0.0
    %4211 = vmatpush1.msra.mxu0 0.0
    %4212 = vmatprep.subr.mxu0 0.0
    %4213 = vmatpush1.msra.mxu0 0.0
    %4214 = vmatprep.subr.mxu0 0.0
    %4215 = vmatpush1.msra.mxu0 0.0
    %4216 = vmatprep.subr.mxu0 0.0
    %4217 = vmatpush1.msra.mxu0 0.0
    %4218 = vmatprep.subr.mxu0 0.0
    %4219 = vmatpush1.msra.mxu0 0.0
    %4220 = vmatprep.subr.mxu0 0.0
    %4221 = vmatpush1.msra.mxu0 0.0
    %4222 = vmatprep.subr.mxu0 0.0
    %4223 = vmatpush1.msra.mxu0 0.0
    %4224 = vmatprep.subr.mxu0 0.0
    %4225 = vmatpush1.msra.mxu0 0.0
    %4226 = vmatprep.subr.mxu0 0.0
    %4227 = vmatpush1.msra.mxu0 0.0
    %4228 = vmatprep.subr.mxu0 0.0
    %4229 = vmatpush1.msra.mxu0 0.0
    %4230 = vmatprep.subr.mxu0 0.0
    %4231 = vmatpush1.msra.mxu0 0.0
    %4232 = vmatprep.mubr.f32.mxu0 0.0
    %4233 = vmatmul.mubr.f32.gmra.mrb[0].mxu0 %v4157
    %v4234 = vpop.f32.mrb[0].mxu0
    %v4235 = vadd.f32 %v869, %v4234
    %v4236 = vpop.f32.mrb[0].mxu0
    %4237 = vmatprep.mubr.f32.mxu0 0.0
    %4238 = vmatmul.mubr.f32.gmra.mrb[0].mxu0 %v4160
    %v4239 = vpop.f32.mrb[0].mxu0
    %v4240 = vadd.f32 %v869, %v4239
    %v4241 = vpop.f32.mrb[0].mxu0
    %4242 = vmatprep.mubr.f32.mxu0 0.0
    %4243 = vmatmul.mubr.f32.gmra.mrb[0].mxu0 %v4163
    %v4244 = vpop.f32.mrb[0].mxu0
    %v4245 = vadd.f32 %v869, %v4244
    %v4246 = vpop.f32.mrb[0].mxu0
    %4247 = vmatprep.mubr.f32.mxu0 0.0
    %4248 = vmatmul.mubr.f32.gmra.mrb[0].mxu0 %v4166
    %v4249 = vpop.f32.mrb[0].mxu0
    %v4250 = vadd.f32 %v869, %v4249
    %v4251 = vpop.f32.mrb[0].mxu0
    %4252 = vdwg.mxu0
    %v4253 = vadd.f32 %v3994, %v4235
    %v4254 = vadd.f32 %v3995, %v4240
    %v4255 = vadd.f32 %v3996, %v4245
    %v4256 = vadd.f32 %v3997, %v4250
    %s4257 = scalar_lea.vmem %s4, 320
    %v4258 = vld [vmem:[%s4257] sm:$0xff]
    %v4259 = vld [vmem:[%s4257 + $0x8] sm:$0xff]
    %v4260 = vld [vmem:[%s4257 + $0x10] sm:$0xff]
    %v4261 = vld [vmem:[%s4257 + $0x18] sm:$0xff]
    %s4262 = scalar_lea.vmem %s6, 10
    %v4263 = vld [vmem:[%s4262] sm:$0x1]
    %v4265 = vlaneseq
    %v4266 = vshrl.u32 %v4265, 7
    %v4267 = vsub.s32 0, %v4266
    %v4268 = vrot.slane %v4263, %v4267
    %v4271 = vsel %vm190, %v4235, 0
    %v4274 = vsel %vm190, %v4240, 0
    %v4277 = vsel %vm190, %v4245, 0
    %v4280 = vsel %vm190, %v4250, 0
    %4282 = vmatprep.subr.mxu0 0.0
    %4283 = vmatpush1.msra.mxu0 %v4258
    %4284 = vmatprep.subr.mxu0 0.0
    %4285 = vmatpush1.msra.mxu0 %v4259
    %4286 = vmatprep.subr.mxu0 0.0
    %4287 = vmatpush1.msra.mxu0 %v4260
    %4288 = vmatprep.subr.mxu0 0.0
    %4289 = vmatpush1.msra.mxu0 %v4261
    %4290 = vmatprep.subr.mxu0 0.0
    %4291 = vmatpush1.msra.mxu0 0.0
    %4292 = vmatprep.subr.mxu0 0.0
    %4293 = vmatpush1.msra.mxu0 0.0
    %4294 = vmatprep.subr.mxu0 0.0
    %4295 = vmatpush1.msra.mxu0 0.0
    %4296 = vmatprep.subr.mxu0 0.0
    %4297 = vmatpush1.msra.mxu0 0.0
    %4298 = vmatprep.subr.mxu0 0.0
    %4299 = vmatpush1.msra.mxu0 0.0
    %4300 = vmatprep.subr.mxu0 0.0
    %4301 = vmatpush1.msra.mxu0 0.0
    %4302 = vmatprep.subr.mxu0 0.0
    %4303 = vmatpush1.msra.mxu0 0.0
    %4304 = vmatprep.subr.mxu0 0.0
    %4305 = vmatpush1.msra.mxu0 0.0
    %4306 = vmatprep.subr.mxu0 0.0
    %4307 = vmatpush1.msra.mxu0 0.0
    %4308 = vmatprep.subr.mxu0 0.0
    %4309 = vmatpush1.msra.mxu0 0.0
    %4310 = vmatprep.subr.mxu0 0.0
    %4311 = vmatpush1.msra.mxu0 0.0
    %4312 = vmatprep.subr.mxu0 0.0
    %4313 = vmatpush1.msra.mxu0 0.0
    %4314 = vmatprep.subr.mxu0 0.0
    %4315 = vmatpush1.msra.mxu0 0.0
    %4316 = vmatprep.subr.mxu0 0.0
    %4317 = vmatpush1.msra.mxu0 0.0
    %4318 = vmatprep.subr.mxu0 0.0
    %4319 = vmatpush1.msra.mxu0 0.0
    %4320 = vmatprep.subr.mxu0 0.0
    %4321 = vmatpush1.msra.mxu0 0.0
    %4322 = vmatprep.subr.mxu0 0.0
    %4323 = vmatpush1.msra.mxu0 0.0
    %4324 = vmatprep.subr.mxu0 0.0
    %4325 = vmatpush1.msra.mxu0 0.0
    %4326 = vmatprep.subr.mxu0 0.0
    %4327 = vmatpush1.msra.mxu0 0.0
    %4328 = vmatprep.subr.mxu0 0.0
    %4329 = vmatpush1.msra.mxu0 0.0
    %4330 = vmatprep.subr.mxu0 0.0
    %4331 = vmatpush1.msra.mxu0 0.0
    %4332 = vmatprep.subr.mxu0 0.0
    %4333 = vmatpush1.msra.mxu0 0.0
    %4334 = vmatprep.subr.mxu0 0.0
    %4335 = vmatpush1.msra.mxu0 0.0
    %4336 = vmatprep.subr.mxu0 0.0
    %4337 = vmatpush1.msra.mxu0 0.0
    %4338 = vmatprep.subr.mxu0 0.0
    %4339 = vmatpush1.msra.mxu0 0.0
    %4340 = vmatprep.subr.mxu0 0.0
    %4341 = vmatpush1.msra.mxu0 0.0
    %4342 = vmatprep.subr.mxu0 0.0
    %4343 = vmatpush1.msra.mxu0 0.0
    %4344 = vmatprep.subr.mxu0 0.0
    %4345 = vmatpush1.msra.mxu0 0.0
    %4346 = vmatprep.mubr.f32.mxu0 0.0
    %4347 = vmatmul.mubr.f32.gmra.mrb[0].mxu0 %v4271
    %v4348 = vpop.f32.mrb[0].mxu0
    %v4349 = vadd.f32 %v4268, %v4348
    %v4350 = vpop.f32.mrb[0].mxu0
    %4351 = vmatprep.mubr.f32.mxu0 0.0
    %4352 = vmatmul.mubr.f32.gmra.mrb[0].mxu0 %v4274
    %v4353 = vpop.f32.mrb[0].mxu0
    %v4354 = vadd.f32 %v4268, %v4353
    %v4355 = vpop.f32.mrb[0].mxu0
    %4356 = vmatprep.mubr.f32.mxu0 0.0
    %4357 = vmatmul.mubr.f32.gmra.mrb[0].mxu0 %v4277
    %v4358 = vpop.f32.mrb[0].mxu0
    %v4359 = vadd.f32 %v4268, %v4358
    %v4360 = vpop.f32.mrb[0].mxu0
    %4361 = vmatprep.mubr.f32.mxu0 0.0
    %4362 = vmatmul.mubr.f32.gmra.mrb[0].mxu0 %v4280
    %v4363 = vpop.f32.mrb[0].mxu0
    %v4364 = vadd.f32 %v4268, %v4363
    %v4365 = vpop.f32.mrb[0].mxu0
    %4366 = vdwg.mxu0
    %v4367 = vtanh.pop %v4349
    %v4368 = vtanh.pop %v4354
    %v4369 = vtanh.pop %v4359
    %v4370 = vtanh.pop %v4364
    %v4371 = vxor.u32 %v4349, 2147483648
    %v4372 = vxor.u32 %v4354, 2147483648
    %v4373 = vxor.u32 %v4359, 2147483648
    %v4374 = vxor.u32 %v4364, 2147483648
    %v4375 = vmul.f32 %v4371, 1.442695
    %v4376 = vpow.pop %v4375
    %v4377 = vmul.f32 %v4372, 1.442695
    %v4378 = vpow.pop %v4377
    %v4379 = vmul.f32 %v4373, 1.442695
    %v4380 = vpow.pop %v4379
    %v4381 = vmul.f32 %v4374, 1.442695
    %v4382 = vpow.pop %v4381
    %v4383 = vadd.f32 %v4376, 1.0
    %v4384 = vadd.f32 %v4378, 1.0
    %v4385 = vadd.f32 %v4380, 1.0
    %v4386 = vadd.f32 %v4382, 1.0
    %v4387 = vrcp.pop %v4383
    %v4388 = vmul.f32 1.0, %v4387
    %v4389 = vrcp.pop %v4384
    %v4390 = vmul.f32 1.0, %v4389
    %v4391 = vrcp.pop %v4385
    %v4392 = vmul.f32 1.0, %v4391
    %v4393 = vrcp.pop %v4386
    %v4394 = vmul.f32 1.0, %v4393
    %4399 = vrot.lane.b32.xlu0 %v4388, 96
    %v4400 = vpop.permute.xlu0 %4399
    %4401 = vrot.lane.b32.xlu0 %v4390, 96
    %v4402 = vpop.permute.xlu0 %4401
    %4403 = vrot.lane.b32.xlu0 %v4392, 96
    %v4404 = vpop.permute.xlu0 %4403
    %4405 = vrot.lane.b32.xlu0 %v4394, 96
    %v4406 = vpop.permute.xlu0 %4405
    %v4411 = vmul.f32 %v4367, %v4400
    %v4412 = vmul.f32 %v4368, %v4402
    %v4413 = vmul.f32 %v4369, %v4404
    %v4414 = vmul.f32 %v4370, %v4406
    %v4416 = vsel %vm190, %v4411, 0
    %v4419 = vsel %vm190, %v4412, 0
    %v4422 = vsel %vm190, %v4413, 0
    %v4425 = vsel %vm190, %v4414, 0
    %4427 = vmatprep.subr.mxu0 0.0
    %4428 = vmatpush1.msra.mxu0 %v421
    %4429 = vmatprep.subr.mxu0 0.0
    %4430 = vmatpush1.msra.mxu0 %v422
    %4431 = vmatprep.subr.mxu0 0.0
    %4432 = vmatpush1.msra.mxu0 %v423
    %4433 = vmatprep.subr.mxu0 0.0
    %4434 = vmatpush1.msra.mxu0 %v424
    %4435 = vmatprep.subr.mxu0 0.0
    %4436 = vmatpush1.msra.mxu0 0.0
    %4437 = vmatprep.subr.mxu0 0.0
    %4438 = vmatpush1.msra.mxu0 0.0
    %4439 = vmatprep.subr.mxu0 0.0
    %4440 = vmatpush1.msra.mxu0 0.0
    %4441 = vmatprep.subr.mxu0 0.0
    %4442 = vmatpush1.msra.mxu0 0.0
    %4443 = vmatprep.subr.mxu0 0.0
    %4444 = vmatpush1.msra.mxu0 0.0
    %4445 = vmatprep.subr.mxu0 0.0
    %4446 = vmatpush1.msra.mxu0 0.0
    %4447 = vmatprep.subr.mxu0 0.0
    %4448 = vmatpush1.msra.mxu0 0.0
    %4449 = vmatprep.subr.mxu0 0.0
    %4450 = vmatpush1.msra.mxu0 0.0
    %4451 = vmatprep.subr.mxu0 0.0
    %4452 = vmatpush1.msra.mxu0 0.0
    %4453 = vmatprep.subr.mxu0 0.0
    %4454 = vmatpush1.msra.mxu0 0.0
    %4455 = vmatprep.subr.mxu0 0.0
    %4456 = vmatpush1.msra.mxu0 0.0
    %4457 = vmatprep.subr.mxu0 0.0
    %4458 = vmatpush1.msra.mxu0 0.0
    %4459 = vmatprep.subr.mxu0 0.0
    %4460 = vmatpush1.msra.mxu0 0.0
    %4461 = vmatprep.subr.mxu0 0.0
    %4462 = vmatpush1.msra.mxu0 0.0
    %4463 = vmatprep.subr.mxu0 0.0
    %4464 = vmatpush1.msra.mxu0 0.0
    %4465 = vmatprep.subr.mxu0 0.0
    %4466 = vmatpush1.msra.mxu0 0.0
    %4467 = vmatprep.subr.mxu0 0.0
    %4468 = vmatpush1.msra.mxu0 0.0
    %4469 = vmatprep.subr.mxu0 0.0
    %4470 = vmatpush1.msra.mxu0 0.0
    %4471 = vmatprep.subr.mxu0 0.0
    %4472 = vmatpush1.msra.mxu0 0.0
    %4473 = vmatprep.subr.mxu0 0.0
    %4474 = vmatpush1.msra.mxu0 0.0
    %4475 = vmatprep.subr.mxu0 0.0
    %4476 = vmatpush1.msra.mxu0 0.0
    %4477 = vmatprep.subr.mxu0 0.0
    %4478 = vmatpush1.msra.mxu0 0.0
    %4479 = vmatprep.subr.mxu0 0.0
    %4480 = vmatpush1.msra.mxu0 0.0
    %4481 = vmatprep.subr.mxu0 0.0
    %4482 = vmatpush1.msra.mxu0 0.0
    %4483 = vmatprep.subr.mxu0 0.0
    %4484 = vmatpush1.msra.mxu0 0.0
    %4485 = vmatprep.subr.mxu0 0.0
    %4486 = vmatpush1.msra.mxu0 0.0
    %4487 = vmatprep.subr.mxu0 0.0
    %4488 = vmatpush1.msra.mxu0 0.0
    %4489 = vmatprep.subr.mxu0 0.0
    %4490 = vmatpush1.msra.mxu0 0.0
    %4491 = vmatprep.mubr.f32.mxu0 0.0
    %4492 = vmatmul.mubr.f32.gmra.mrb[0].mxu0 %v4416
    %v4493 = vpop.f32.mrb[0].mxu0
    %v4494 = vadd.f32 %v869, %v4493
    %v4495 = vpop.f32.mrb[0].mxu0
    %4496 = vmatprep.mubr.f32.mxu0 0.0
    %4497 = vmatmul.mubr.f32.gmra.mrb[0].mxu0 %v4419
    %v4498 = vpop.f32.mrb[0].mxu0
    %v4499 = vadd.f32 %v869, %v4498
    %v4500 = vpop.f32.mrb[0].mxu0
    %4501 = vmatprep.mubr.f32.mxu0 0.0
    %4502 = vmatmul.mubr.f32.gmra.mrb[0].mxu0 %v4422
    %v4503 = vpop.f32.mrb[0].mxu0
    %v4504 = vadd.f32 %v869, %v4503
    %v4505 = vpop.f32.mrb[0].mxu0
    %4506 = vmatprep.mubr.f32.mxu0 0.0
    %4507 = vmatmul.mubr.f32.gmra.mrb[0].mxu0 %v4425
    %v4508 = vpop.f32.mrb[0].mxu0
    %v4509 = vadd.f32 %v869, %v4508
    %v4510 = vpop.f32.mrb[0].mxu0
    %4511 = vdwg.mxu0
    %v4512 = vadd.f32 %v4253, %v4494
    %v4513 = vadd.f32 %v4254, %v4499
    %v4514 = vadd.f32 %v4255, %v4504
    %v4515 = vadd.f32 %v4256, %v4509
    %s4516 = scalar_lea.vmem %s4, 352
    %v4517 = vld [vmem:[%s4516] sm:$0xff]
    %v4518 = vld [vmem:[%s4516 + $0x8] sm:$0xff]
    %v4519 = vld [vmem:[%s4516 + $0x10] sm:$0xff]
    %v4520 = vld [vmem:[%s4516 + $0x18] sm:$0xff]
    %s4521 = scalar_lea.vmem %s6, 11
    %v4522 = vld [vmem:[%s4521] sm:$0x1]
    %v4524 = vlaneseq
    %v4525 = vshrl.u32 %v4524, 7
    %v4526 = vsub.s32 0, %v4525
    %v4527 = vrot.slane %v4522, %v4526
    %v4530 = vsel %vm190, %v4494, 0
    %v4533 = vsel %vm190, %v4499, 0
    %v4536 = vsel %vm190, %v4504, 0
    %v4539 = vsel %vm190, %v4509, 0
    %4541 = vmatprep.subr.mxu0 0.0
    %4542 = vmatpush1.msra.mxu0 %v4517
    %4543 = vmatprep.subr.mxu0 0.0
    %4544 = vmatpush1.msra.mxu0 %v4518
    %4545 = vmatprep.subr.mxu0 0.0
    %4546 = vmatpush1.msra.mxu0 %v4519
    %4547 = vmatprep.subr.mxu0 0.0
    %4548 = vmatpush1.msra.mxu0 %v4520
    %4549 = vmatprep.subr.mxu0 0.0
    %4550 = vmatpush1.msra.mxu0 0.0
    %4551 = vmatprep.subr.mxu0 0.0
    %4552 = vmatpush1.msra.mxu0 0.0
    %4553 = vmatprep.subr.mxu0 0.0
    %4554 = vmatpush1.msra.mxu0 0.0
    %4555 = vmatprep.subr.mxu0 0.0
    %4556 = vmatpush1.msra.mxu0 0.0
    %4557 = vmatprep.subr.mxu0 0.0
    %4558 = vmatpush1.msra.mxu0 0.0
    %4559 = vmatprep.subr.mxu0 0.0
    %4560 = vmatpush1.msra.mxu0 0.0
    %4561 = vmatprep.subr.mxu0 0.0
    %4562 = vmatpush1.msra.mxu0 0.0
    %4563 = vmatprep.subr.mxu0 0.0
    %4564 = vmatpush1.msra.mxu0 0.0
    %4565 = vmatprep.subr.mxu0 0.0
    %4566 = vmatpush1.msra.mxu0 0.0
    %4567 = vmatprep.subr.mxu0 0.0
    %4568 = vmatpush1.msra.mxu0 0.0
    %4569 = vmatprep.subr.mxu0 0.0
    %4570 = vmatpush1.msra.mxu0 0.0
    %4571 = vmatprep.subr.mxu0 0.0
    %4572 = vmatpush1.msra.mxu0 0.0
    %4573 = vmatprep.subr.mxu0 0.0
    %4574 = vmatpush1.msra.mxu0 0.0
    %4575 = vmatprep.subr.mxu0 0.0
    %4576 = vmatpush1.msra.mxu0 0.0
    %4577 = vmatprep.subr.mxu0 0.0
    %4578 = vmatpush1.msra.mxu0 0.0
    %4579 = vmatprep.subr.mxu0 0.0
    %4580 = vmatpush1.msra.mxu0 0.0
    %4581 = vmatprep.subr.mxu0 0.0
    %4582 = vmatpush1.msra.mxu0 0.0
    %4583 = vmatprep.subr.mxu0 0.0
    %4584 = vmatpush1.msra.mxu0 0.0
    %4585 = vmatprep.subr.mxu0 0.0
    %4586 = vmatpush1.msra.mxu0 0.0
    %4587 = vmatprep.subr.mxu0 0.0
    %4588 = vmatpush1.msra.mxu0 0.0
    %4589 = vmatprep.subr.mxu0 0.0
    %4590 = vmatpush1.msra.mxu0 0.0
    %4591 = vmatprep.subr.mxu0 0.0
    %4592 = vmatpush1.msra.mxu0 0.0
    %4593 = vmatprep.subr.mxu0 0.0
    %4594 = vmatpush1.msra.mxu0 0.0
    %4595 = vmatprep.subr.mxu0 0.0
    %4596 = vmatpush1.msra.mxu0 0.0
    %4597 = vmatprep.subr.mxu0 0.0
    %4598 = vmatpush1.msra.mxu0 0.0
    %4599 = vmatprep.subr.mxu0 0.0
    %4600 = vmatpush1.msra.mxu0 0.0
    %4601 = vmatprep.subr.mxu0 0.0
    %4602 = vmatpush1.msra.mxu0 0.0
    %4603 = vmatprep.subr.mxu0 0.0
    %4604 = vmatpush1.msra.mxu0 0.0
    %4605 = vmatprep.mubr.f32.mxu0 0.0
    %4606 = vmatmul.mubr.f32.gmra.mrb[0].mxu0 %v4530
    %v4607 = vpop.f32.mrb[0].mxu0
    %v4608 = vadd.f32 %v4527, %v4607
    %v4609 = vpop.f32.mrb[0].mxu0
    %4610 = vmatprep.mubr.f32.mxu0 0.0
    %4611 = vmatmul.mubr.f32.gmra.mrb[0].mxu0 %v4533
    %v4612 = vpop.f32.mrb[0].mxu0
    %v4613 = vadd.f32 %v4527, %v4612
    %v4614 = vpop.f32.mrb[0].mxu0
    %4615 = vmatprep.mubr.f32.mxu0 0.0
    %4616 = vmatmul.mubr.f32.gmra.mrb[0].mxu0 %v4536
    %v4617 = vpop.f32.mrb[0].mxu0
    %v4618 = vadd.f32 %v4527, %v4617
    %v4619 = vpop.f32.mrb[0].mxu0
    %4620 = vmatprep.mubr.f32.mxu0 0.0
    %4621 = vmatmul.mubr.f32.gmra.mrb[0].mxu0 %v4539
    %v4622 = vpop.f32.mrb[0].mxu0
    %v4623 = vadd.f32 %v4527, %v4622
    %v4624 = vpop.f32.mrb[0].mxu0
    %4625 = vdwg.mxu0
    %v4626 = vtanh.pop %v4608
    %v4627 = vtanh.pop %v4613
    %v4628 = vtanh.pop %v4618
    %v4629 = vtanh.pop %v4623
    %v4630 = vxor.u32 %v4608, 2147483648
    %v4631 = vxor.u32 %v4613, 2147483648
    %v4632 = vxor.u32 %v4618, 2147483648
    %v4633 = vxor.u32 %v4623, 2147483648
    %v4634 = vmul.f32 %v4630, 1.442695
    %v4635 = vpow.pop %v4634
    %v4636 = vmul.f32 %v4631, 1.442695
    %v4637 = vpow.pop %v4636
    %v4638 = vmul.f32 %v4632, 1.442695
    %v4639 = vpow.pop %v4638
    %v4640 = vmul.f32 %v4633, 1.442695
    %v4641 = vpow.pop %v4640
    %v4642 = vadd.f32 %v4635, 1.0
    %v4643 = vadd.f32 %v4637, 1.0
    %v4644 = vadd.f32 %v4639, 1.0
    %v4645 = vadd.f32 %v4641, 1.0
    %v4646 = vrcp.pop %v4642
    %v4647 = vmul.f32 1.0, %v4646
    %v4648 = vrcp.pop %v4643
    %v4649 = vmul.f32 1.0, %v4648
    %v4650 = vrcp.pop %v4644
    %v4651 = vmul.f32 1.0, %v4650
    %v4652 = vrcp.pop %v4645
    %v4653 = vmul.f32 1.0, %v4652
    %4658 = vrot.lane.b32.xlu0 %v4647, 96
    %v4659 = vpop.permute.xlu0 %4658
    %4660 = vrot.lane.b32.xlu0 %v4649, 96
    %v4661 = vpop.permute.xlu0 %4660
    %4662 = vrot.lane.b32.xlu0 %v4651, 96
    %v4663 = vpop.permute.xlu0 %4662
    %4664 = vrot.lane.b32.xlu0 %v4653, 96
    %v4665 = vpop.permute.xlu0 %4664
    %v4670 = vmul.f32 %v4626, %v4659
    %v4671 = vmul.f32 %v4627, %v4661
    %v4672 = vmul.f32 %v4628, %v4663
    %v4673 = vmul.f32 %v4629, %v4665
    %v4675 = vsel %vm190, %v4670, 0
    %v4678 = vsel %vm190, %v4671, 0
    %v4681 = vsel %vm190, %v4672, 0
    %v4684 = vsel %vm190, %v4673, 0
    %4686 = vmatprep.subr.mxu0 0.0
    %4687 = vmatpush1.msra.mxu0 %v421
    %4688 = vmatprep.subr.mxu0 0.0
    %4689 = vmatpush1.msra.mxu0 %v422
    %4690 = vmatprep.subr.mxu0 0.0
    %4691 = vmatpush1.msra.mxu0 %v423
    %4692 = vmatprep.subr.mxu0 0.0
    %4693 = vmatpush1.msra.mxu0 %v424
    %4694 = vmatprep.subr.mxu0 0.0
    %4695 = vmatpush1.msra.mxu0 0.0
    %4696 = vmatprep.subr.mxu0 0.0
    %4697 = vmatpush1.msra.mxu0 0.0
    %4698 = vmatprep.subr.mxu0 0.0
    %4699 = vmatpush1.msra.mxu0 0.0
    %4700 = vmatprep.subr.mxu0 0.0
    %4701 = vmatpush1.msra.mxu0 0.0
    %4702 = vmatprep.subr.mxu0 0.0
    %4703 = vmatpush1.msra.mxu0 0.0
    %4704 = vmatprep.subr.mxu0 0.0
    %4705 = vmatpush1.msra.mxu0 0.0
    %4706 = vmatprep.subr.mxu0 0.0
    %4707 = vmatpush1.msra.mxu0 0.0
    %4708 = vmatprep.subr.mxu0 0.0
    %4709 = vmatpush1.msra.mxu0 0.0
    %4710 = vmatprep.subr.mxu0 0.0
    %4711 = vmatpush1.msra.mxu0 0.0
    %4712 = vmatprep.subr.mxu0 0.0
    %4713 = vmatpush1.msra.mxu0 0.0
    %4714 = vmatprep.subr.mxu0 0.0
    %4715 = vmatpush1.msra.mxu0 0.0
    %4716 = vmatprep.subr.mxu0 0.0
    %4717 = vmatpush1.msra.mxu0 0.0
    %4718 = vmatprep.subr.mxu0 0.0
    %4719 = vmatpush1.msra.mxu0 0.0
    %4720 = vmatprep.subr.mxu0 0.0
    %4721 = vmatpush1.msra.mxu0 0.0
    %4722 = vmatprep.subr.mxu0 0.0
    %4723 = vmatpush1.msra.mxu0 0.0
    %4724 = vmatprep.subr.mxu0 0.0
    %4725 = vmatpush1.msra.mxu0 0.0
    %4726 = vmatprep.subr.mxu0 0.0
    %4727 = vmatpush1.msra.mxu0 0.0
    %4728 = vmatprep.subr.mxu0 0.0
    %4729 = vmatpush1.msra.mxu0 0.0
    %4730 = vmatprep.subr.mxu0 0.0
    %4731 = vmatpush1.msra.mxu0 0.0
    %4732 = vmatprep.subr.mxu0 0.0
    %4733 = vmatpush1.msra.mxu0 0.0
    %4734 = vmatprep.subr.mxu0 0.0
    %4735 = vmatpush1.msra.mxu0 0.0
    %4736 = vmatprep.subr.mxu0 0.0
    %4737 = vmatpush1.msra.mxu0 0.0
    %4738 = vmatprep.subr.mxu0 0.0
    %4739 = vmatpush1.msra.mxu0 0.0
    %4740 = vmatprep.subr.mxu0 0.0
    %4741 = vmatpush1.msra.mxu0 0.0
    %4742 = vmatprep.subr.mxu0 0.0
    %4743 = vmatpush1.msra.mxu0 0.0
    %4744 = vmatprep.subr.mxu0 0.0
    %4745 = vmatpush1.msra.mxu0 0.0
    %4746 = vmatprep.subr.mxu0 0.0
    %4747 = vmatpush1.msra.mxu0 0.0
    %4748 = vmatprep.subr.mxu0 0.0
    %4749 = vmatpush1.msra.mxu0 0.0
    %4750 = vmatprep.mubr.f32.mxu0 0.0
    %4751 = vmatmul.mubr.f32.gmra.mrb[0].mxu0 %v4675
    %v4752 = vpop.f32.mrb[0].mxu0
    %v4753 = vadd.f32 %v869, %v4752
    %v4754 = vpop.f32.mrb[0].mxu0
    %4755 = vmatprep.mubr.f32.mxu0 0.0
    %4756 = vmatmul.mubr.f32.gmra.mrb[0].mxu0 %v4678
    %v4757 = vpop.f32.mrb[0].mxu0
    %v4758 = vadd.f32 %v869, %v4757
    %v4759 = vpop.f32.mrb[0].mxu0
    %4760 = vmatprep.mubr.f32.mxu0 0.0
    %4761 = vmatmul.mubr.f32.gmra.mrb[0].mxu0 %v4681
    %v4762 = vpop.f32.mrb[0].mxu0
    %v4763 = vadd.f32 %v869, %v4762
    %v4764 = vpop.f32.mrb[0].mxu0
    %4765 = vmatprep.mubr.f32.mxu0 0.0
    %4766 = vmatmul.mubr.f32.gmra.mrb[0].mxu0 %v4684
    %v4767 = vpop.f32.mrb[0].mxu0
    %v4768 = vadd.f32 %v869, %v4767
    %v4769 = vpop.f32.mrb[0].mxu0
    %4770 = vdwg.mxu0
    %v4771 = vadd.f32 %v4512, %v4753
    %v4772 = vadd.f32 %v4513, %v4758
    %v4773 = vadd.f32 %v4514, %v4763
    %v4774 = vadd.f32 %v4515, %v4768
    %s4775 = scalar_lea.vmem %s4, 384
    %v4776 = vld [vmem:[%s4775] sm:$0xff]
    %v4777 = vld [vmem:[%s4775 + $0x8] sm:$0xff]
    %v4778 = vld [vmem:[%s4775 + $0x10] sm:$0xff]
    %v4779 = vld [vmem:[%s4775 + $0x18] sm:$0xff]
    %s4780 = scalar_lea.vmem %s6, 12
    %v4781 = vld [vmem:[%s4780] sm:$0x1]
    %v4783 = vlaneseq
    %v4784 = vshrl.u32 %v4783, 7
    %v4785 = vsub.s32 0, %v4784
    %v4786 = vrot.slane %v4781, %v4785
    %v4789 = vsel %vm190, %v4753, 0
    %v4792 = vsel %vm190, %v4758, 0
    %v4795 = vsel %vm190, %v4763, 0
    %v4798 = vsel %vm190, %v4768, 0
    %4800 = vmatprep.subr.mxu0 0.0
    %4801 = vmatpush1.msra.mxu0 %v4776
    %4802 = vmatprep.subr.mxu0 0.0
    %4803 = vmatpush1.msra.mxu0 %v4777
    %4804 = vmatprep.subr.mxu0 0.0
    %4805 = vmatpush1.msra.mxu0 %v4778
    %4806 = vmatprep.subr.mxu0 0.0
    %4807 = vmatpush1.msra.mxu0 %v4779
    %4808 = vmatprep.subr.mxu0 0.0
    %4809 = vmatpush1.msra.mxu0 0.0
    %4810 = vmatprep.subr.mxu0 0.0
    %4811 = vmatpush1.msra.mxu0 0.0
    %4812 = vmatprep.subr.mxu0 0.0
    %4813 = vmatpush1.msra.mxu0 0.0
    %4814 = vmatprep.subr.mxu0 0.0
    %4815 = vmatpush1.msra.mxu0 0.0
    %4816 = vmatprep.subr.mxu0 0.0
    %4817 = vmatpush1.msra.mxu0 0.0
    %4818 = vmatprep.subr.mxu0 0.0
    %4819 = vmatpush1.msra.mxu0 0.0
    %4820 = vmatprep.subr.mxu0 0.0
    %4821 = vmatpush1.msra.mxu0 0.0
    %4822 = vmatprep.subr.mxu0 0.0
    %4823 = vmatpush1.msra.mxu0 0.0
    %4824 = vmatprep.subr.mxu0 0.0
    %4825 = vmatpush1.msra.mxu0 0.0
    %4826 = vmatprep.subr.mxu0 0.0
    %4827 = vmatpush1.msra.mxu0 0.0
    %4828 = vmatprep.subr.mxu0 0.0
    %4829 = vmatpush1.msra.mxu0 0.0
    %4830 = vmatprep.subr.mxu0 0.0
    %4831 = vmatpush1.msra.mxu0 0.0
    %4832 = vmatprep.subr.mxu0 0.0
    %4833 = vmatpush1.msra.mxu0 0.0
    %4834 = vmatprep.subr.mxu0 0.0
    %4835 = vmatpush1.msra.mxu0 0.0
    %4836 = vmatprep.subr.mxu0 0.0
    %4837 = vmatpush1.msra.mxu0 0.0
    %4838 = vmatprep.subr.mxu0 0.0
    %4839 = vmatpush1.msra.mxu0 0.0
    %4840 = vmatprep.subr.mxu0 0.0
    %4841 = vmatpush1.msra.mxu0 0.0
    %4842 = vmatprep.subr.mxu0 0.0
    %4843 = vmatpush1.msra.mxu0 0.0
    %4844 = vmatprep.subr.mxu0 0.0
    %4845 = vmatpush1.msra.mxu0 0.0
    %4846 = vmatprep.subr.mxu0 0.0
    %4847 = vmatpush1.msra.mxu0 0.0
    %4848 = vmatprep.subr.mxu0 0.0
    %4849 = vmatpush1.msra.mxu0 0.0
    %4850 = vmatprep.subr.mxu0 0.0
    %4851 = vmatpush1.msra.mxu0 0.0
    %4852 = vmatprep.subr.mxu0 0.0
    %4853 = vmatpush1.msra.mxu0 0.0
    %4854 = vmatprep.subr.mxu0 0.0
    %4855 = vmatpush1.msra.mxu0 0.0
    %4856 = vmatprep.subr.mxu0 0.0
    %4857 = vmatpush1.msra.mxu0 0.0
    %4858 = vmatprep.subr.mxu0 0.0
    %4859 = vmatpush1.msra.mxu0 0.0
    %4860 = vmatprep.subr.mxu0 0.0
    %4861 = vmatpush1.msra.mxu0 0.0
    %4862 = vmatprep.subr.mxu0 0.0
    %4863 = vmatpush1.msra.mxu0 0.0
    %4864 = vmatprep.mubr.f32.mxu0 0.0
    %4865 = vmatmul.mubr.f32.gmra.mrb[0].mxu0 %v4789
    %v4866 = vpop.f32.mrb[0].mxu0
    %v4867 = vadd.f32 %v4786, %v4866
    %v4868 = vpop.f32.mrb[0].mxu0
    %4869 = vmatprep.mubr.f32.mxu0 0.0
    %4870 = vmatmul.mubr.f32.gmra.mrb[0].mxu0 %v4792
    %v4871 = vpop.f32.mrb[0].mxu0
    %v4872 = vadd.f32 %v4786, %v4871
    %v4873 = vpop.f32.mrb[0].mxu0
    %4874 = vmatprep.mubr.f32.mxu0 0.0
    %4875 = vmatmul.mubr.f32.gmra.mrb[0].mxu0 %v4795
    %v4876 = vpop.f32.mrb[0].mxu0
    %v4877 = vadd.f32 %v4786, %v4876
    %v4878 = vpop.f32.mrb[0].mxu0
    %4879 = vmatprep.mubr.f32.mxu0 0.0
    %4880 = vmatmul.mubr.f32.gmra.mrb[0].mxu0 %v4798
    %v4881 = vpop.f32.mrb[0].mxu0
    %v4882 = vadd.f32 %v4786, %v4881
    %v4883 = vpop.f32.mrb[0].mxu0
    %4884 = vdwg.mxu0
    %v4885 = vtanh.pop %v4867
    %v4886 = vtanh.pop %v4872
    %v4887 = vtanh.pop %v4877
    %v4888 = vtanh.pop %v4882
    %v4889 = vxor.u32 %v4867, 2147483648
    %v4890 = vxor.u32 %v4872, 2147483648
    %v4891 = vxor.u32 %v4877, 2147483648
    %v4892 = vxor.u32 %v4882, 2147483648
    %v4893 = vmul.f32 %v4889, 1.442695
    %v4894 = vpow.pop %v4893
    %v4895 = vmul.f32 %v4890, 1.442695
    %v4896 = vpow.pop %v4895
    %v4897 = vmul.f32 %v4891, 1.442695
    %v4898 = vpow.pop %v4897
    %v4899 = vmul.f32 %v4892, 1.442695
    %v4900 = vpow.pop %v4899
    %v4901 = vadd.f32 %v4894, 1.0
    %v4902 = vadd.f32 %v4896, 1.0
    %v4903 = vadd.f32 %v4898, 1.0
    %v4904 = vadd.f32 %v4900, 1.0
    %v4905 = vrcp.pop %v4901
    %v4906 = vmul.f32 1.0, %v4905
    %v4907 = vrcp.pop %v4902
    %v4908 = vmul.f32 1.0, %v4907
    %v4909 = vrcp.pop %v4903
    %v4910 = vmul.f32 1.0, %v4909
    %v4911 = vrcp.pop %v4904
    %v4912 = vmul.f32 1.0, %v4911
    %4917 = vrot.lane.b32.xlu0 %v4906, 96
    %v4918 = vpop.permute.xlu0 %4917
    %4919 = vrot.lane.b32.xlu0 %v4908, 96
    %v4920 = vpop.permute.xlu0 %4919
    %4921 = vrot.lane.b32.xlu0 %v4910, 96
    %v4922 = vpop.permute.xlu0 %4921
    %4923 = vrot.lane.b32.xlu0 %v4912, 96
    %v4924 = vpop.permute.xlu0 %4923
    %v4929 = vmul.f32 %v4885, %v4918
    %v4930 = vmul.f32 %v4886, %v4920
    %v4931 = vmul.f32 %v4887, %v4922
    %v4932 = vmul.f32 %v4888, %v4924
    %v4934 = vsel %vm190, %v4929, 0
    %v4937 = vsel %vm190, %v4930, 0
    %v4940 = vsel %vm190, %v4931, 0
    %v4943 = vsel %vm190, %v4932, 0
    %4945 = vmatprep.subr.mxu0 0.0
    %4946 = vmatpush1.msra.mxu0 %v421
    %4947 = vmatprep.subr.mxu0 0.0
    %4948 = vmatpush1.msra.mxu0 %v422
    %4949 = vmatprep.subr.mxu0 0.0
    %4950 = vmatpush1.msra.mxu0 %v423
    %4951 = vmatprep.subr.mxu0 0.0
    %4952 = vmatpush1.msra.mxu0 %v424
    %4953 = vmatprep.subr.mxu0 0.0
    %4954 = vmatpush1.msra.mxu0 0.0
    %4955 = vmatprep.subr.mxu0 0.0
    %4956 = vmatpush1.msra.mxu0 0.0
    %4957 = vmatprep.subr.mxu0 0.0
    %4958 = vmatpush1.msra.mxu0 0.0
    %4959 = vmatprep.subr.mxu0 0.0
    %4960 = vmatpush1.msra.mxu0 0.0
    %4961 = vmatprep.subr.mxu0 0.0
    %4962 = vmatpush1.msra.mxu0 0.0
    %4963 = vmatprep.subr.mxu0 0.0
    %4964 = vmatpush1.msra.mxu0 0.0
    %4965 = vmatprep.subr.mxu0 0.0
    %4966 = vmatpush1.msra.mxu0 0.0
    %4967 = vmatprep.subr.mxu0 0.0
    %4968 = vmatpush1.msra.mxu0 0.0
    %4969 = vmatprep.subr.mxu0 0.0
    %4970 = vmatpush1.msra.mxu0 0.0
    %4971 = vmatprep.subr.mxu0 0.0
    %4972 = vmatpush1.msra.mxu0 0.0
    %4973 = vmatprep.subr.mxu0 0.0
    %4974 = vmatpush1.msra.mxu0 0.0
    %4975 = vmatprep.subr.mxu0 0.0
    %4976 = vmatpush1.msra.mxu0 0.0
    %4977 = vmatprep.subr.mxu0 0.0
    %4978 = vmatpush1.msra.mxu0 0.0
    %4979 = vmatprep.subr.mxu0 0.0
    %4980 = vmatpush1.msra.mxu0 0.0
    %4981 = vmatprep.subr.mxu0 0.0
    %4982 = vmatpush1.msra.mxu0 0.0
    %4983 = vmatprep.subr.mxu0 0.0
    %4984 = vmatpush1.msra.mxu0 0.0
    %4985 = vmatprep.subr.mxu0 0.0
    %4986 = vmatpush1.msra.mxu0 0.0
    %4987 = vmatprep.subr.mxu0 0.0
    %4988 = vmatpush1.msra.mxu0 0.0
    %4989 = vmatprep.subr.mxu0 0.0
    %4990 = vmatpush1.msra.mxu0 0.0
    %4991 = vmatprep.subr.mxu0 0.0
    %4992 = vmatpush1.msra.mxu0 0.0
    %4993 = vmatprep.subr.mxu0 0.0
    %4994 = vmatpush1.msra.mxu0 0.0
    %4995 = vmatprep.subr.mxu0 0.0
    %4996 = vmatpush1.msra.mxu0 0.0
    %4997 = vmatprep.subr.mxu0 0.0
    %4998 = vmatpush1.msra.mxu0 0.0
    %4999 = vmatprep.subr.mxu0 0.0
    %5000 = vmatpush1.msra.mxu0 0.0
    %5001 = vmatprep.subr.mxu0 0.0
    %5002 = vmatpush1.msra.mxu0 0.0
    %5003 = vmatprep.subr.mxu0 0.0
    %5004 = vmatpush1.msra.mxu0 0.0
    %5005 = vmatprep.subr.mxu0 0.0
    %5006 = vmatpush1.msra.mxu0 0.0
    %5007 = vmatprep.subr.mxu0 0.0
    %5008 = vmatpush1.msra.mxu0 0.0
    %5009 = vmatprep.mubr.f32.mxu0 0.0
    %5010 = vmatmul.mubr.f32.gmra.mrb[0].mxu0 %v4934
    %v5011 = vpop.f32.mrb[0].mxu0
    %v5012 = vadd.f32 %v869, %v5011
    %v5013 = vpop.f32.mrb[0].mxu0
    %5014 = vmatprep.mubr.f32.mxu0 0.0
    %5015 = vmatmul.mubr.f32.gmra.mrb[0].mxu0 %v4937
    %v5016 = vpop.f32.mrb[0].mxu0
    %v5017 = vadd.f32 %v869, %v5016
    %v5018 = vpop.f32.mrb[0].mxu0
    %5019 = vmatprep.mubr.f32.mxu0 0.0
    %5020 = vmatmul.mubr.f32.gmra.mrb[0].mxu0 %v4940
    %v5021 = vpop.f32.mrb[0].mxu0
    %v5022 = vadd.f32 %v869, %v5021
    %v5023 = vpop.f32.mrb[0].mxu0
    %5024 = vmatprep.mubr.f32.mxu0 0.0
    %5025 = vmatmul.mubr.f32.gmra.mrb[0].mxu0 %v4943
    %v5026 = vpop.f32.mrb[0].mxu0
    %v5027 = vadd.f32 %v869, %v5026
    %v5028 = vpop.f32.mrb[0].mxu0
    %5029 = vdwg.mxu0
    %v5030 = vadd.f32 %v4771, %v5012
    %v5031 = vadd.f32 %v4772, %v5017
    %v5032 = vadd.f32 %v4773, %v5022
    %v5033 = vadd.f32 %v4774, %v5027
    %s5034 = scalar_lea.vmem %s4, 416
    %v5035 = vld [vmem:[%s5034] sm:$0xff]
    %v5036 = vld [vmem:[%s5034 + $0x8] sm:$0xff]
    %v5037 = vld [vmem:[%s5034 + $0x10] sm:$0xff]
    %v5038 = vld [vmem:[%s5034 + $0x18] sm:$0xff]
    %s5039 = scalar_lea.vmem %s6, 13
    %v5040 = vld [vmem:[%s5039] sm:$0x1]
    %v5042 = vlaneseq
    %v5043 = vshrl.u32 %v5042, 7
    %v5044 = vsub.s32 0, %v5043
    %v5045 = vrot.slane %v5040, %v5044
    %v5048 = vsel %vm190, %v5012, 0
    %v5051 = vsel %vm190, %v5017, 0
    %v5054 = vsel %vm190, %v5022, 0
    %v5057 = vsel %vm190, %v5027, 0
    %5059 = vmatprep.subr.mxu0 0.0
    %5060 = vmatpush1.msra.mxu0 %v5035
    %5061 = vmatprep.subr.mxu0 0.0
    %5062 = vmatpush1.msra.mxu0 %v5036
    %5063 = vmatprep.subr.mxu0 0.0
    %5064 = vmatpush1.msra.mxu0 %v5037
    %5065 = vmatprep.subr.mxu0 0.0
    %5066 = vmatpush1.msra.mxu0 %v5038
    %5067 = vmatprep.subr.mxu0 0.0
    %5068 = vmatpush1.msra.mxu0 0.0
    %5069 = vmatprep.subr.mxu0 0.0
    %5070 = vmatpush1.msra.mxu0 0.0
    %5071 = vmatprep.subr.mxu0 0.0
    %5072 = vmatpush1.msra.mxu0 0.0
    %5073 = vmatprep.subr.mxu0 0.0
    %5074 = vmatpush1.msra.mxu0 0.0
    %5075 = vmatprep.subr.mxu0 0.0
    %5076 = vmatpush1.msra.mxu0 0.0
    %5077 = vmatprep.subr.mxu0 0.0
    %5078 = vmatpush1.msra.mxu0 0.0
    %5079 = vmatprep.subr.mxu0 0.0
    %5080 = vmatpush1.msra.mxu0 0.0
    %5081 = vmatprep.subr.mxu0 0.0
    %5082 = vmatpush1.msra.mxu0 0.0
    %5083 = vmatprep.subr.mxu0 0.0
    %5084 = vmatpush1.msra.mxu0 0.0
    %5085 = vmatprep.subr.mxu0 0.0
    %5086 = vmatpush1.msra.mxu0 0.0
    %5087 = vmatprep.subr.mxu0 0.0
    %5088 = vmatpush1.msra.mxu0 0.0
    %5089 = vmatprep.subr.mxu0 0.0
    %5090 = vmatpush1.msra.mxu0 0.0
    %5091 = vmatprep.subr.mxu0 0.0
    %5092 = vmatpush1.msra.mxu0 0.0
    %5093 = vmatprep.subr.mxu0 0.0
    %5094 = vmatpush1.msra.mxu0 0.0
    %5095 = vmatprep.subr.mxu0 0.0
    %5096 = vmatpush1.msra.mxu0 0.0
    %5097 = vmatprep.subr.mxu0 0.0
    %5098 = vmatpush1.msra.mxu0 0.0
    %5099 = vmatprep.subr.mxu0 0.0
    %5100 = vmatpush1.msra.mxu0 0.0
    %5101 = vmatprep.subr.mxu0 0.0
    %5102 = vmatpush1.msra.mxu0 0.0
    %5103 = vmatprep.subr.mxu0 0.0
    %5104 = vmatpush1.msra.mxu0 0.0
    %5105 = vmatprep.subr.mxu0 0.0
    %5106 = vmatpush1.msra.mxu0 0.0
    %5107 = vmatprep.subr.mxu0 0.0
    %5108 = vmatpush1.msra.mxu0 0.0
    %5109 = vmatprep.subr.mxu0 0.0
    %5110 = vmatpush1.msra.mxu0 0.0
    %5111 = vmatprep.subr.mxu0 0.0
    %5112 = vmatpush1.msra.mxu0 0.0
    %5113 = vmatprep.subr.mxu0 0.0
    %5114 = vmatpush1.msra.mxu0 0.0
    %5115 = vmatprep.subr.mxu0 0.0
    %5116 = vmatpush1.msra.mxu0 0.0
    %5117 = vmatprep.subr.mxu0 0.0
    %5118 = vmatpush1.msra.mxu0 0.0
    %5119 = vmatprep.subr.mxu0 0.0
    %5120 = vmatpush1.msra.mxu0 0.0
    %5121 = vmatprep.subr.mxu0 0.0
    %5122 = vmatpush1.msra.mxu0 0.0
    %5123 = vmatprep.mubr.f32.mxu0 0.0
    %5124 = vmatmul.mubr.f32.gmra.mrb[0].mxu0 %v5048
    %v5125 = vpop.f32.mrb[0].mxu0
    %v5126 = vadd.f32 %v5045, %v5125
    %v5127 = vpop.f32.mrb[0].mxu0
    %5128 = vmatprep.mubr.f32.mxu0 0.0
    %5129 = vmatmul.mubr.f32.gmra.mrb[0].mxu0 %v5051
    %v5130 = vpop.f32.mrb[0].mxu0
    %v5131 = vadd.f32 %v5045, %v5130
    %v5132 = vpop.f32.mrb[0].mxu0
    %5133 = vmatprep.mubr.f32.mxu0 0.0
    %5134 = vmatmul.mubr.f32.gmra.mrb[0].mxu0 %v5054
    %v5135 = vpop.f32.mrb[0].mxu0
    %v5136 = vadd.f32 %v5045, %v5135
    %v5137 = vpop.f32.mrb[0].mxu0
    %5138 = vmatprep.mubr.f32.mxu0 0.0
    %5139 = vmatmul.mubr.f32.gmra.mrb[0].mxu0 %v5057
    %v5140 = vpop.f32.mrb[0].mxu0
    %v5141 = vadd.f32 %v5045, %v5140
    %v5142 = vpop.f32.mrb[0].mxu0
    %5143 = vdwg.mxu0
    %v5144 = vtanh.pop %v5126
    %v5145 = vtanh.pop %v5131
    %v5146 = vtanh.pop %v5136
    %v5147 = vtanh.pop %v5141
    %v5148 = vxor.u32 %v5126, 2147483648
    %v5149 = vxor.u32 %v5131, 2147483648
    %v5150 = vxor.u32 %v5136, 2147483648
    %v5151 = vxor.u32 %v5141, 2147483648
    %v5152 = vmul.f32 %v5148, 1.442695
    %v5153 = vpow.pop %v5152
    %v5154 = vmul.f32 %v5149, 1.442695
    %v5155 = vpow.pop %v5154
    %v5156 = vmul.f32 %v5150, 1.442695
    %v5157 = vpow.pop %v5156
    %v5158 = vmul.f32 %v5151, 1.442695
    %v5159 = vpow.pop %v5158
    %v5160 = vadd.f32 %v5153, 1.0
    %v5161 = vadd.f32 %v5155, 1.0
    %v5162 = vadd.f32 %v5157, 1.0
    %v5163 = vadd.f32 %v5159, 1.0
    %v5164 = vrcp.pop %v5160
    %v5165 = vmul.f32 1.0, %v5164
    %v5166 = vrcp.pop %v5161
    %v5167 = vmul.f32 1.0, %v5166
    %v5168 = vrcp.pop %v5162
    %v5169 = vmul.f32 1.0, %v5168
    %v5170 = vrcp.pop %v5163
    %v5171 = vmul.f32 1.0, %v5170
    %5176 = vrot.lane.b32.xlu0 %v5165, 96
    %v5177 = vpop.permute.xlu0 %5176
    %5178 = vrot.lane.b32.xlu0 %v5167, 96
    %v5179 = vpop.permute.xlu0 %5178
    %5180 = vrot.lane.b32.xlu0 %v5169, 96
    %v5181 = vpop.permute.xlu0 %5180
    %5182 = vrot.lane.b32.xlu0 %v5171, 96
    %v5183 = vpop.permute.xlu0 %5182
    %v5188 = vmul.f32 %v5144, %v5177
    %v5189 = vmul.f32 %v5145, %v5179
    %v5190 = vmul.f32 %v5146, %v5181
    %v5191 = vmul.f32 %v5147, %v5183
    %v5193 = vsel %vm190, %v5188, 0
    %v5196 = vsel %vm190, %v5189, 0
    %v5199 = vsel %vm190, %v5190, 0
    %v5202 = vsel %vm190, %v5191, 0
    %5204 = vmatprep.subr.mxu0 0.0
    %5205 = vmatpush1.msra.mxu0 %v421
    %5206 = vmatprep.subr.mxu0 0.0
    %5207 = vmatpush1.msra.mxu0 %v422
    %5208 = vmatprep.subr.mxu0 0.0
    %5209 = vmatpush1.msra.mxu0 %v423
    %5210 = vmatprep.subr.mxu0 0.0
    %5211 = vmatpush1.msra.mxu0 %v424
    %5212 = vmatprep.subr.mxu0 0.0
    %5213 = vmatpush1.msra.mxu0 0.0
    %5214 = vmatprep.subr.mxu0 0.0
    %5215 = vmatpush1.msra.mxu0 0.0
    %5216 = vmatprep.subr.mxu0 0.0
    %5217 = vmatpush1.msra.mxu0 0.0
    %5218 = vmatprep.subr.mxu0 0.0
    %5219 = vmatpush1.msra.mxu0 0.0
    %5220 = vmatprep.subr.mxu0 0.0
    %5221 = vmatpush1.msra.mxu0 0.0
    %5222 = vmatprep.subr.mxu0 0.0
    %5223 = vmatpush1.msra.mxu0 0.0
    %5224 = vmatprep.subr.mxu0 0.0
    %5225 = vmatpush1.msra.mxu0 0.0
    %5226 = vmatprep.subr.mxu0 0.0
    %5227 = vmatpush1.msra.mxu0 0.0
    %5228 = vmatprep.subr.mxu0 0.0
    %5229 = vmatpush1.msra.mxu0 0.0
    %5230 = vmatprep.subr.mxu0 0.0
    %5231 = vmatpush1.msra.mxu0 0.0
    %5232 = vmatprep.subr.mxu0 0.0
    %5233 = vmatpush1.msra.mxu0 0.0
    %5234 = vmatprep.subr.mxu0 0.0
    %5235 = vmatpush1.msra.mxu0 0.0
    %5236 = vmatprep.subr.mxu0 0.0
    %5237 = vmatpush1.msra.mxu0 0.0
    %5238 = vmatprep.subr.mxu0 0.0
    %5239 = vmatpush1.msra.mxu0 0.0
    %5240 = vmatprep.subr.mxu0 0.0
    %5241 = vmatpush1.msra.mxu0 0.0
    %5242 = vmatprep.subr.mxu0 0.0
    %5243 = vmatpush1.msra.mxu0 0.0
    %5244 = vmatprep.subr.mxu0 0.0
    %5245 = vmatpush1.msra.mxu0 0.0
    %5246 = vmatprep.subr.mxu0 0.0
    %5247 = vmatpush1.msra.mxu0 0.0
    %5248 = vmatprep.subr.mxu0 0.0
    %5249 = vmatpush1.msra.mxu0 0.0
    %5250 = vmatprep.subr.mxu0 0.0
    %5251 = vmatpush1.msra.mxu0 0.0
    %5252 = vmatprep.subr.mxu0 0.0
    %5253 = vmatpush1.msra.mxu0 0.0
    %5254 = vmatprep.subr.mxu0 0.0
    %5255 = vmatpush1.msra.mxu0 0.0
    %5256 = vmatprep.subr.mxu0 0.0
    %5257 = vmatpush1.msra.mxu0 0.0
    %5258 = vmatprep.subr.mxu0 0.0
    %5259 = vmatpush1.msra.mxu0 0.0
    %5260 = vmatprep.subr.mxu0 0.0
    %5261 = vmatpush1.msra.mxu0 0.0
    %5262 = vmatprep.subr.mxu0 0.0
    %5263 = vmatpush1.msra.mxu0 0.0
    %5264 = vmatprep.subr.mxu0 0.0
    %5265 = vmatpush1.msra.mxu0 0.0
    %5266 = vmatprep.subr.mxu0 0.0
    %5267 = vmatpush1.msra.mxu0 0.0
    %5268 = vmatprep.mubr.f32.mxu0 0.0
    %5269 = vmatmul.mubr.f32.gmra.mrb[0].mxu0 %v5193
    %v5270 = vpop.f32.mrb[0].mxu0
    %v5271 = vadd.f32 %v869, %v5270
    %v5272 = vpop.f32.mrb[0].mxu0
    %5273 = vmatprep.mubr.f32.mxu0 0.0
    %5274 = vmatmul.mubr.f32.gmra.mrb[0].mxu0 %v5196
    %v5275 = vpop.f32.mrb[0].mxu0
    %v5276 = vadd.f32 %v869, %v5275
    %v5277 = vpop.f32.mrb[0].mxu0
    %5278 = vmatprep.mubr.f32.mxu0 0.0
    %5279 = vmatmul.mubr.f32.gmra.mrb[0].mxu0 %v5199
    %v5280 = vpop.f32.mrb[0].mxu0
    %v5281 = vadd.f32 %v869, %v5280
    %v5282 = vpop.f32.mrb[0].mxu0
    %5283 = vmatprep.mubr.f32.mxu0 0.0
    %5284 = vmatmul.mubr.f32.gmra.mrb[0].mxu0 %v5202
    %v5285 = vpop.f32.mrb[0].mxu0
    %v5286 = vadd.f32 %v869, %v5285
    %v5287 = vpop.f32.mrb[0].mxu0
    %5288 = vdwg.mxu0
    %v5289 = vadd.f32 %v5030, %v5271
    %v5290 = vadd.f32 %v5031, %v5276
    %v5291 = vadd.f32 %v5032, %v5281
    %v5292 = vadd.f32 %v5033, %v5286
    %s5293 = scalar_lea.vmem %s4, 448
    %v5294 = vld [vmem:[%s5293] sm:$0xff]
    %v5295 = vld [vmem:[%s5293 + $0x8] sm:$0xff]
    %v5296 = vld [vmem:[%s5293 + $0x10] sm:$0xff]
    %v5297 = vld [vmem:[%s5293 + $0x18] sm:$0xff]
    %s5298 = scalar_lea.vmem %s6, 14
    %v5299 = vld [vmem:[%s5298] sm:$0x1]
    %v5301 = vlaneseq
    %v5302 = vshrl.u32 %v5301, 7
    %v5303 = vsub.s32 0, %v5302
    %v5304 = vrot.slane %v5299, %v5303
    %v5307 = vsel %vm190, %v5271, 0
    %v5310 = vsel %vm190, %v5276, 0
    %v5313 = vsel %vm190, %v5281, 0
    %v5316 = vsel %vm190, %v5286, 0
    %5318 = vmatprep.subr.mxu0 0.0
    %5319 = vmatpush1.msra.mxu0 %v5294
    %5320 = vmatprep.subr.mxu0 0.0
    %5321 = vmatpush1.msra.mxu0 %v5295
    %5322 = vmatprep.subr.mxu0 0.0
    %5323 = vmatpush1.msra.mxu0 %v5296
    %5324 = vmatprep.subr.mxu0 0.0
    %5325 = vmatpush1.msra.mxu0 %v5297
    %5326 = vmatprep.subr.mxu0 0.0
    %5327 = vmatpush1.msra.mxu0 0.0
    %5328 = vmatprep.subr.mxu0 0.0
    %5329 = vmatpush1.msra.mxu0 0.0
    %5330 = vmatprep.subr.mxu0 0.0
    %5331 = vmatpush1.msra.mxu0 0.0
    %5332 = vmatprep.subr.mxu0 0.0
    %5333 = vmatpush1.msra.mxu0 0.0
    %5334 = vmatprep.subr.mxu0 0.0
    %5335 = vmatpush1.msra.mxu0 0.0
    %5336 = vmatprep.subr.mxu0 0.0
    %5337 = vmatpush1.msra.mxu0 0.0
    %5338 = vmatprep.subr.mxu0 0.0
    %5339 = vmatpush1.msra.mxu0 0.0
    %5340 = vmatprep.subr.mxu0 0.0
    %5341 = vmatpush1.msra.mxu0 0.0
    %5342 = vmatprep.subr.mxu0 0.0
    %5343 = vmatpush1.msra.mxu0 0.0
    %5344 = vmatprep.subr.mxu0 0.0
    %5345 = vmatpush1.msra.mxu0 0.0
    %5346 = vmatprep.subr.mxu0 0.0
    %5347 = vmatpush1.msra.mxu0 0.0
    %5348 = vmatprep.subr.mxu0 0.0
    %5349 = vmatpush1.msra.mxu0 0.0
    %5350 = vmatprep.subr.mxu0 0.0
    %5351 = vmatpush1.msra.mxu0 0.0
    %5352 = vmatprep.subr.mxu0 0.0
    %5353 = vmatpush1.msra.mxu0 0.0
    %5354 = vmatprep.subr.mxu0 0.0
    %5355 = vmatpush1.msra.mxu0 0.0
    %5356 = vmatprep.subr.mxu0 0.0
    %5357 = vmatpush1.msra.mxu0 0.0
    %5358 = vmatprep.subr.mxu0 0.0
    %5359 = vmatpush1.msra.mxu0 0.0
    %5360 = vmatprep.subr.mxu0 0.0
    %5361 = vmatpush1.msra.mxu0 0.0
    %5362 = vmatprep.subr.mxu0 0.0
    %5363 = vmatpush1.msra.mxu0 0.0
    %5364 = vmatprep.subr.mxu0 0.0
    %5365 = vmatpush1.msra.mxu0 0.0
    %5366 = vmatprep.subr.mxu0 0.0
    %5367 = vmatpush1.msra.mxu0 0.0
    %5368 = vmatprep.subr.mxu0 0.0
    %5369 = vmatpush1.msra.mxu0 0.0
    %5370 = vmatprep.subr.mxu0 0.0
    %5371 = vmatpush1.msra.mxu0 0.0
    %5372 = vmatprep.subr.mxu0 0.0
    %5373 = vmatpush1.msra.mxu0 0.0
    %5374 = vmatprep.subr.mxu0 0.0
    %5375 = vmatpush1.msra.mxu0 0.0
    %5376 = vmatprep.subr.mxu0 0.0
    %5377 = vmatpush1.msra.mxu0 0.0
    %5378 = vmatprep.subr.mxu0 0.0
    %5379 = vmatpush1.msra.mxu0 0.0
    %5380 = vmatprep.subr.mxu0 0.0
    %5381 = vmatpush1.msra.mxu0 0.0
    %5382 = vmatprep.mubr.f32.mxu0 0.0
    %5383 = vmatmul.mubr.f32.gmra.mrb[0].mxu0 %v5307
    %v5384 = vpop.f32.mrb[0].mxu0
    %v5385 = vadd.f32 %v5304, %v5384
    %v5386 = vpop.f32.mrb[0].mxu0
    %5387 = vmatprep.mubr.f32.mxu0 0.0
    %5388 = vmatmul.mubr.f32.gmra.mrb[0].mxu0 %v5310
    %v5389 = vpop.f32.mrb[0].mxu0
    %v5390 = vadd.f32 %v5304, %v5389
    %v5391 = vpop.f32.mrb[0].mxu0
    %5392 = vmatprep.mubr.f32.mxu0 0.0
    %5393 = vmatmul.mubr.f32.gmra.mrb[0].mxu0 %v5313
    %v5394 = vpop.f32.mrb[0].mxu0
    %v5395 = vadd.f32 %v5304, %v5394
    %v5396 = vpop.f32.mrb[0].mxu0
    %5397 = vmatprep.mubr.f32.mxu0 0.0
    %5398 = vmatmul.mubr.f32.gmra.mrb[0].mxu0 %v5316
    %v5399 = vpop.f32.mrb[0].mxu0
    %v5400 = vadd.f32 %v5304, %v5399
    %v5401 = vpop.f32.mrb[0].mxu0
    %5402 = vdwg.mxu0
    %v5403 = vtanh.pop %v5385
    %v5404 = vtanh.pop %v5390
    %v5405 = vtanh.pop %v5395
    %v5406 = vtanh.pop %v5400
    %v5407 = vxor.u32 %v5385, 2147483648
    %v5408 = vxor.u32 %v5390, 2147483648
    %v5409 = vxor.u32 %v5395, 2147483648
    %v5410 = vxor.u32 %v5400, 2147483648
    %v5411 = vmul.f32 %v5407, 1.442695
    %v5412 = vpow.pop %v5411
    %v5413 = vmul.f32 %v5408, 1.442695
    %v5414 = vpow.pop %v5413
    %v5415 = vmul.f32 %v5409, 1.442695
    %v5416 = vpow.pop %v5415
    %v5417 = vmul.f32 %v5410, 1.442695
    %v5418 = vpow.pop %v5417
    %v5419 = vadd.f32 %v5412, 1.0
    %v5420 = vadd.f32 %v5414, 1.0
    %v5421 = vadd.f32 %v5416, 1.0
    %v5422 = vadd.f32 %v5418, 1.0
    %v5423 = vrcp.pop %v5419
    %v5424 = vmul.f32 1.0, %v5423
    %v5425 = vrcp.pop %v5420
    %v5426 = vmul.f32 1.0, %v5425
    %v5427 = vrcp.pop %v5421
    %v5428 = vmul.f32 1.0, %v5427
    %v5429 = vrcp.pop %v5422
    %v5430 = vmul.f32 1.0, %v5429
    %5435 = vrot.lane.b32.xlu0 %v5424, 96
    %v5436 = vpop.permute.xlu0 %5435
    %5437 = vrot.lane.b32.xlu0 %v5426, 96
    %v5438 = vpop.permute.xlu0 %5437
    %5439 = vrot.lane.b32.xlu0 %v5428, 96
    %v5440 = vpop.permute.xlu0 %5439
    %5441 = vrot.lane.b32.xlu0 %v5430, 96
    %v5442 = vpop.permute.xlu0 %5441
    %v5447 = vmul.f32 %v5403, %v5436
    %v5448 = vmul.f32 %v5404, %v5438
    %v5449 = vmul.f32 %v5405, %v5440
    %v5450 = vmul.f32 %v5406, %v5442
    %v5452 = vsel %vm190, %v5447, 0
    %v5455 = vsel %vm190, %v5448, 0
    %v5458 = vsel %vm190, %v5449, 0
    %v5461 = vsel %vm190, %v5450, 0
    %5463 = vmatprep.subr.mxu0 0.0
    %5464 = vmatpush1.msra.mxu0 %v421
    %5465 = vmatprep.subr.mxu0 0.0
    %5466 = vmatpush1.msra.mxu0 %v422
    %5467 = vmatprep.subr.mxu0 0.0
    %5468 = vmatpush1.msra.mxu0 %v423
    %5469 = vmatprep.subr.mxu0 0.0
    %5470 = vmatpush1.msra.mxu0 %v424
    %5471 = vmatprep.subr.mxu0 0.0
    %5472 = vmatpush1.msra.mxu0 0.0
    %5473 = vmatprep.subr.mxu0 0.0
    %5474 = vmatpush1.msra.mxu0 0.0
    %5475 = vmatprep.subr.mxu0 0.0
    %5476 = vmatpush1.msra.mxu0 0.0
    %5477 = vmatprep.subr.mxu0 0.0
    %5478 = vmatpush1.msra.mxu0 0.0
    %5479 = vmatprep.subr.mxu0 0.0
    %5480 = vmatpush1.msra.mxu0 0.0
    %5481 = vmatprep.subr.mxu0 0.0
    %5482 = vmatpush1.msra.mxu0 0.0
    %5483 = vmatprep.subr.mxu0 0.0
    %5484 = vmatpush1.msra.mxu0 0.0
    %5485 = vmatprep.subr.mxu0 0.0
    %5486 = vmatpush1.msra.mxu0 0.0
    %5487 = vmatprep.subr.mxu0 0.0
    %5488 = vmatpush1.msra.mxu0 0.0
    %5489 = vmatprep.subr.mxu0 0.0
    %5490 = vmatpush1.msra.mxu0 0.0
    %5491 = vmatprep.subr.mxu0 0.0
    %5492 = vmatpush1.msra.mxu0 0.0
    %5493 = vmatprep.subr.mxu0 0.0
    %5494 = vmatpush1.msra.mxu0 0.0
    %5495 = vmatprep.subr.mxu0 0.0
    %5496 = vmatpush1.msra.mxu0 0.0
    %5497 = vmatprep.subr.mxu0 0.0
    %5498 = vmatpush1.msra.mxu0 0.0
    %5499 = vmatprep.subr.mxu0 0.0
    %5500 = vmatpush1.msra.mxu0 0.0
    %5501 = vmatprep.subr.mxu0 0.0
    %5502 = vmatpush1.msra.mxu0 0.0
    %5503 = vmatprep.subr.mxu0 0.0
    %5504 = vmatpush1.msra.mxu0 0.0
    %5505 = vmatprep.subr.mxu0 0.0
    %5506 = vmatpush1.msra.mxu0 0.0
    %5507 = vmatprep.subr.mxu0 0.0
    %5508 = vmatpush1.msra.mxu0 0.0
    %5509 = vmatprep.subr.mxu0 0.0
    %5510 = vmatpush1.msra.mxu0 0.0
    %5511 = vmatprep.subr.mxu0 0.0
    %5512 = vmatpush1.msra.mxu0 0.0
    %5513 = vmatprep.subr.mxu0 0.0
    %5514 = vmatpush1.msra.mxu0 0.0
    %5515 = vmatprep.subr.mxu0 0.0
    %5516 = vmatpush1.msra.mxu0 0.0
    %5517 = vmatprep.subr.mxu0 0.0
    %5518 = vmatpush1.msra.mxu0 0.0
    %5519 = vmatprep.subr.mxu0 0.0
    %5520 = vmatpush1.msra.mxu0 0.0
    %5521 = vmatprep.subr.mxu0 0.0
    %5522 = vmatpush1.msra.mxu0 0.0
    %5523 = vmatprep.subr.mxu0 0.0
    %5524 = vmatpush1.msra.mxu0 0.0
    %5525 = vmatprep.subr.mxu0 0.0
    %5526 = vmatpush1.msra.mxu0 0.0
    %5527 = vmatprep.mubr.f32.mxu0 0.0
    %5528 = vmatmul.mubr.f32.gmra.mrb[0].mxu0 %v5452
    %v5529 = vpop.f32.mrb[0].mxu0
    %v5530 = vadd.f32 %v869, %v5529
    %v5531 = vpop.f32.mrb[0].mxu0
    %5532 = vmatprep.mubr.f32.mxu0 0.0
    %5533 = vmatmul.mubr.f32.gmra.mrb[0].mxu0 %v5455
    %v5534 = vpop.f32.mrb[0].mxu0
    %v5535 = vadd.f32 %v869, %v5534
    %v5536 = vpop.f32.mrb[0].mxu0
    %5537 = vmatprep.mubr.f32.mxu0 0.0
    %5538 = vmatmul.mubr.f32.gmra.mrb[0].mxu0 %v5458
    %v5539 = vpop.f32.mrb[0].mxu0
    %v5540 = vadd.f32 %v869, %v5539
    %v5541 = vpop.f32.mrb[0].mxu0
    %5542 = vmatprep.mubr.f32.mxu0 0.0
    %5543 = vmatmul.mubr.f32.gmra.mrb[0].mxu0 %v5461
    %v5544 = vpop.f32.mrb[0].mxu0
    %v5545 = vadd.f32 %v869, %v5544
    %v5546 = vpop.f32.mrb[0].mxu0
    %5547 = vdwg.mxu0
    %v5548 = vadd.f32 %v5289, %v5530
    %v5549 = vadd.f32 %v5290, %v5535
    %v5550 = vadd.f32 %v5291, %v5540
    %v5551 = vadd.f32 %v5292, %v5545
    %s5552 = scalar_lea.vmem %s4, 480
    %v5553 = vld [vmem:[%s5552] sm:$0xff]
    %v5554 = vld [vmem:[%s5552 + $0x8] sm:$0xff]
    %v5555 = vld [vmem:[%s5552 + $0x10] sm:$0xff]
    %v5556 = vld [vmem:[%s5552 + $0x18] sm:$0xff]
    %s5557 = scalar_lea.vmem %s6, 15
    %v5558 = vld [vmem:[%s5557] sm:$0x1]
    %v5560 = vlaneseq
    %v5561 = vshrl.u32 %v5560, 7
    %v5562 = vsub.s32 0, %v5561
    %v5563 = vrot.slane %v5558, %v5562
    %v5566 = vsel %vm190, %v5530, 0
    %v5569 = vsel %vm190, %v5535, 0
    %v5572 = vsel %vm190, %v5540, 0
    %v5575 = vsel %vm190, %v5545, 0
    %5577 = vmatprep.subr.mxu0 0.0
    %5578 = vmatpush1.msra.mxu0 %v5553
    %5579 = vmatprep.subr.mxu0 0.0
    %5580 = vmatpush1.msra.mxu0 %v5554
    %5581 = vmatprep.subr.mxu0 0.0
    %5582 = vmatpush1.msra.mxu0 %v5555
    %5583 = vmatprep.subr.mxu0 0.0
    %5584 = vmatpush1.msra.mxu0 %v5556
    %5585 = vmatprep.subr.mxu0 0.0
    %5586 = vmatpush1.msra.mxu0 0.0
    %5587 = vmatprep.subr.mxu0 0.0
    %5588 = vmatpush1.msra.mxu0 0.0
    %5589 = vmatprep.subr.mxu0 0.0
    %5590 = vmatpush1.msra.mxu0 0.0
    %5591 = vmatprep.subr.mxu0 0.0
    %5592 = vmatpush1.msra.mxu0 0.0
    %5593 = vmatprep.subr.mxu0 0.0
    %5594 = vmatpush1.msra.mxu0 0.0
    %5595 = vmatprep.subr.mxu0 0.0
    %5596 = vmatpush1.msra.mxu0 0.0
    %5597 = vmatprep.subr.mxu0 0.0
    %5598 = vmatpush1.msra.mxu0 0.0
    %5599 = vmatprep.subr.mxu0 0.0
    %5600 = vmatpush1.msra.mxu0 0.0
    %5601 = vmatprep.subr.mxu0 0.0
    %5602 = vmatpush1.msra.mxu0 0.0
    %5603 = vmatprep.subr.mxu0 0.0
    %5604 = vmatpush1.msra.mxu0 0.0
    %5605 = vmatprep.subr.mxu0 0.0
    %5606 = vmatpush1.msra.mxu0 0.0
    %5607 = vmatprep.subr.mxu0 0.0
    %5608 = vmatpush1.msra.mxu0 0.0
    %5609 = vmatprep.subr.mxu0 0.0
    %5610 = vmatpush1.msra.mxu0 0.0
    %5611 = vmatprep.subr.mxu0 0.0
    %5612 = vmatpush1.msra.mxu0 0.0
    %5613 = vmatprep.subr.mxu0 0.0
    %5614 = vmatpush1.msra.mxu0 0.0
    %5615 = vmatprep.subr.mxu0 0.0
    %5616 = vmatpush1.msra.mxu0 0.0
    %5617 = vmatprep.subr.mxu0 0.0
    %5618 = vmatpush1.msra.mxu0 0.0
    %5619 = vmatprep.subr.mxu0 0.0
    %5620 = vmatpush1.msra.mxu0 0.0
    %5621 = vmatprep.subr.mxu0 0.0
    %5622 = vmatpush1.msra.mxu0 0.0
    %5623 = vmatprep.subr.mxu0 0.0
    %5624 = vmatpush1.msra.mxu0 0.0
    %5625 = vmatprep.subr.mxu0 0.0
    %5626 = vmatpush1.msra.mxu0 0.0
    %5627 = vmatprep.subr.mxu0 0.0
    %5628 = vmatpush1.msra.mxu0 0.0
    %5629 = vmatprep.subr.mxu0 0.0
    %5630 = vmatpush1.msra.mxu0 0.0
    %5631 = vmatprep.subr.mxu0 0.0
    %5632 = vmatpush1.msra.mxu0 0.0
    %5633 = vmatprep.subr.mxu0 0.0
    %5634 = vmatpush1.msra.mxu0 0.0
    %5635 = vmatprep.subr.mxu0 0.0
    %5636 = vmatpush1.msra.mxu0 0.0
    %5637 = vmatprep.subr.mxu0 0.0
    %5638 = vmatpush1.msra.mxu0 0.0
    %5639 = vmatprep.subr.mxu0 0.0
    %5640 = vmatpush1.msra.mxu0 0.0
    %5641 = vmatprep.mubr.f32.mxu0 0.0
    %5642 = vmatmul.mubr.f32.gmra.mrb[0].mxu0 %v5566
    %v5643 = vpop.f32.mrb[0].mxu0
    %v5644 = vadd.f32 %v5563, %v5643
    %v5645 = vpop.f32.mrb[0].mxu0
    %5646 = vmatprep.mubr.f32.mxu0 0.0
    %5647 = vmatmul.mubr.f32.gmra.mrb[0].mxu0 %v5569
    %v5648 = vpop.f32.mrb[0].mxu0
    %v5649 = vadd.f32 %v5563, %v5648
    %v5650 = vpop.f32.mrb[0].mxu0
    %5651 = vmatprep.mubr.f32.mxu0 0.0
    %5652 = vmatmul.mubr.f32.gmra.mrb[0].mxu0 %v5572
    %v5653 = vpop.f32.mrb[0].mxu0
    %v5654 = vadd.f32 %v5563, %v5653
    %v5655 = vpop.f32.mrb[0].mxu0
    %5656 = vmatprep.mubr.f32.mxu0 0.0
    %5657 = vmatmul.mubr.f32.gmra.mrb[0].mxu0 %v5575
    %v5658 = vpop.f32.mrb[0].mxu0
    %v5659 = vadd.f32 %v5563, %v5658
    %v5660 = vpop.f32.mrb[0].mxu0
    %5661 = vdwg.mxu0
    %v5662 = vtanh.pop %v5644
    %v5663 = vtanh.pop %v5649
    %v5664 = vtanh.pop %v5654
    %v5665 = vtanh.pop %v5659
    %v5666 = vxor.u32 %v5644, 2147483648
    %v5667 = vxor.u32 %v5649, 2147483648
    %v5668 = vxor.u32 %v5654, 2147483648
    %v5669 = vxor.u32 %v5659, 2147483648
    %v5670 = vmul.f32 %v5666, 1.442695
    %v5671 = vpow.pop %v5670
    %v5672 = vmul.f32 %v5667, 1.442695
    %v5673 = vpow.pop %v5672
    %v5674 = vmul.f32 %v5668, 1.442695
    %v5675 = vpow.pop %v5674
    %v5676 = vmul.f32 %v5669, 1.442695
    %v5677 = vpow.pop %v5676
    %v5678 = vadd.f32 %v5671, 1.0
    %v5679 = vadd.f32 %v5673, 1.0
    %v5680 = vadd.f32 %v5675, 1.0
    %v5681 = vadd.f32 %v5677, 1.0
    %v5682 = vrcp.pop %v5678
    %v5683 = vmul.f32 1.0, %v5682
    %v5684 = vrcp.pop %v5679
    %v5685 = vmul.f32 1.0, %v5684
    %v5686 = vrcp.pop %v5680
    %v5687 = vmul.f32 1.0, %v5686
    %v5688 = vrcp.pop %v5681
    %v5689 = vmul.f32 1.0, %v5688
    %5694 = vrot.lane.b32.xlu0 %v5683, 96
    %v5695 = vpop.permute.xlu0 %5694
    %5696 = vrot.lane.b32.xlu0 %v5685, 96
    %v5697 = vpop.permute.xlu0 %5696
    %5698 = vrot.lane.b32.xlu0 %v5687, 96
    %v5699 = vpop.permute.xlu0 %5698
    %5700 = vrot.lane.b32.xlu0 %v5689, 96
    %v5701 = vpop.permute.xlu0 %5700
    %v5706 = vmul.f32 %v5662, %v5695
    %v5707 = vmul.f32 %v5663, %v5697
    %v5708 = vmul.f32 %v5664, %v5699
    %v5709 = vmul.f32 %v5665, %v5701
    %v5711 = vsel %vm190, %v5706, 0
    %v5714 = vsel %vm190, %v5707, 0
    %v5717 = vsel %vm190, %v5708, 0
    %v5720 = vsel %vm190, %v5709, 0
    %5722 = vmatprep.subr.mxu0 0.0
    %5723 = vmatpush1.msra.mxu0 %v421
    %5724 = vmatprep.subr.mxu0 0.0
    %5725 = vmatpush1.msra.mxu0 %v422
    %5726 = vmatprep.subr.mxu0 0.0
    %5727 = vmatpush1.msra.mxu0 %v423
    %5728 = vmatprep.subr.mxu0 0.0
    %5729 = vmatpush1.msra.mxu0 %v424
    %5730 = vmatprep.subr.mxu0 0.0
    %5731 = vmatpush1.msra.mxu0 0.0
    %5732 = vmatprep.subr.mxu0 0.0
    %5733 = vmatpush1.msra.mxu0 0.0
    %5734 = vmatprep.subr.mxu0 0.0
    %5735 = vmatpush1.msra.mxu0 0.0
    %5736 = vmatprep.subr.mxu0 0.0
    %5737 = vmatpush1.msra.mxu0 0.0
    %5738 = vmatprep.subr.mxu0 0.0
    %5739 = vmatpush1.msra.mxu0 0.0
    %5740 = vmatprep.subr.mxu0 0.0
    %5741 = vmatpush1.msra.mxu0 0.0
    %5742 = vmatprep.subr.mxu0 0.0
    %5743 = vmatpush1.msra.mxu0 0.0
    %5744 = vmatprep.subr.mxu0 0.0
    %5745 = vmatpush1.msra.mxu0 0.0
    %5746 = vmatprep.subr.mxu0 0.0
    %5747 = vmatpush1.msra.mxu0 0.0
    %5748 = vmatprep.subr.mxu0 0.0
    %5749 = vmatpush1.msra.mxu0 0.0
    %5750 = vmatprep.subr.mxu0 0.0
    %5751 = vmatpush1.msra.mxu0 0.0
    %5752 = vmatprep.subr.mxu0 0.0
    %5753 = vmatpush1.msra.mxu0 0.0
    %5754 = vmatprep.subr.mxu0 0.0
    %5755 = vmatpush1.msra.mxu0 0.0
    %5756 = vmatprep.subr.mxu0 0.0
    %5757 = vmatpush1.msra.mxu0 0.0
    %5758 = vmatprep.subr.mxu0 0.0
    %5759 = vmatpush1.msra.mxu0 0.0
    %5760 = vmatprep.subr.mxu0 0.0
    %5761 = vmatpush1.msra.mxu0 0.0
    %5762 = vmatprep.subr.mxu0 0.0
    %5763 = vmatpush1.msra.mxu0 0.0
    %5764 = vmatprep.subr.mxu0 0.0
    %5765 = vmatpush1.msra.mxu0 0.0
    %5766 = vmatprep.subr.mxu0 0.0
    %5767 = vmatpush1.msra.mxu0 0.0
    %5768 = vmatprep.subr.mxu0 0.0
    %5769 = vmatpush1.msra.mxu0 0.0
    %5770 = vmatprep.subr.mxu0 0.0
    %5771 = vmatpush1.msra.mxu0 0.0
    %5772 = vmatprep.subr.mxu0 0.0
    %5773 = vmatpush1.msra.mxu0 0.0
    %5774 = vmatprep.subr.mxu0 0.0
    %5775 = vmatpush1.msra.mxu0 0.0
    %5776 = vmatprep.subr.mxu0 0.0
    %5777 = vmatpush1.msra.mxu0 0.0
    %5778 = vmatprep.subr.mxu0 0.0
    %5779 = vmatpush1.msra.mxu0 0.0
    %5780 = vmatprep.subr.mxu0 0.0
    %5781 = vmatpush1.msra.mxu0 0.0
    %5782 = vmatprep.subr.mxu0 0.0
    %5783 = vmatpush1.msra.mxu0 0.0
    %5784 = vmatprep.subr.mxu0 0.0
    %5785 = vmatpush1.msra.mxu0 0.0
    %5786 = vmatprep.mubr.f32.mxu0 0.0
    %5787 = vmatmul.mubr.f32.gmra.mrb[0].mxu0 %v5711
    %v5788 = vpop.f32.mrb[0].mxu0
    %v5789 = vadd.f32 %v869, %v5788
    %v5790 = vpop.f32.mrb[0].mxu0
    %5791 = vmatprep.mubr.f32.mxu0 0.0
    %5792 = vmatmul.mubr.f32.gmra.mrb[0].mxu0 %v5714
    %v5793 = vpop.f32.mrb[0].mxu0
    %v5794 = vadd.f32 %v869, %v5793
    %v5795 = vpop.f32.mrb[0].mxu0
    %5796 = vmatprep.mubr.f32.mxu0 0.0
    %5797 = vmatmul.mubr.f32.gmra.mrb[0].mxu0 %v5717
    %v5798 = vpop.f32.mrb[0].mxu0
    %v5799 = vadd.f32 %v869, %v5798
    %v5800 = vpop.f32.mrb[0].mxu0
    %5801 = vmatprep.mubr.f32.mxu0 0.0
    %5802 = vmatmul.mubr.f32.gmra.mrb[0].mxu0 %v5720
    %v5803 = vpop.f32.mrb[0].mxu0
    %v5804 = vadd.f32 %v869, %v5803
    %v5805 = vpop.f32.mrb[0].mxu0
    %5806 = vdwg.mxu0
    %v5807 = vadd.f32 %v5548, %v5789
    %v5808 = vadd.f32 %v5549, %v5794
    %v5809 = vadd.f32 %v5550, %v5799
    %v5810 = vadd.f32 %v5551, %v5804
    %v5811 = vld [vmem:[%s9] sm:$0x1]
    %v5813 = vlaneseq
    %v5814 = vshrl.u32 %v5813, 7
    %v5815 = vsub.s32 0, %v5814
    %v5816 = vrot.slane %v5811, %v5815
    %v5818 = vmul.f32 %v5807, %v5816
    %v5819 = vmul.f32 %v5808, %v5816
    %v5820 = vmul.f32 %v5809, %v5816
    %v5821 = vmul.f32 %v5810, %v5816
    %v5822 = vld [vmem:[%s10] sm:$0x1]
    %v5824 = vlaneseq
    %v5825 = vshrl.u32 %v5824, 7
    %v5826 = vsub.s32 0, %v5825
    %v5827 = vrot.slane %v5822, %v5826
    %v5829 = vadd.f32 %v5818, %v5827
    %v5830 = vadd.f32 %v5819, %v5827
    %v5831 = vadd.f32 %v5820, %v5827
    %v5832 = vadd.f32 %v5821, %v5827
    %v5833 = vld [vmem:[%s11] sm:$0xff]
    %v5834 = vld [vmem:[%s11 + $0x8] sm:$0xff]
    %v5835 = vld [vmem:[%s11 + $0x10] sm:$0xff]
    %v5836 = vld [vmem:[%s11 + $0x18] sm:$0xff]
    %v5837 = vld [vmem:[%s14] sm:$0xff]
    %v5838 = vld [vmem:[%s14 + $0x8] sm:$0xff]
    %v5839 = vld [vmem:[%s14 + $0x10] sm:$0xff]
    %v5840 = vld [vmem:[%s14 + $0x18] sm:$0xff]
    %v5841 = vld [vmem:[%s12] sm:$0xff]
    %v5842 = vld [vmem:[%s12 + $0x8] sm:$0xff]
    %v5843 = vld [vmem:[%s12 + $0x10] sm:$0xff]
    %v5844 = vld [vmem:[%s12 + $0x18] sm:$0xff]
    %v5845 = vld [vmem:[%s15] sm:$0xff]
    %v5846 = vld [vmem:[%s15 + $0x8] sm:$0xff]
    %v5847 = vld [vmem:[%s15 + $0x10] sm:$0xff]
    %v5848 = vld [vmem:[%s15 + $0x18] sm:$0xff]
    %v5849 = vld [vmem:[%s13] sm:$0x1]
    %v5850 = vld [vmem:[%s16] sm:$0x1]
    %v5852 = vlaneseq
    %v5853 = vshrl.u32 %v5852, 7
    %v5854 = vsub.s32 0, %v5853
    %v5855 = vrot.slane %v5849, %v5854
    %v5858 = vsel %vm190, %v5829, 0
    %v5861 = vsel %vm190, %v5830, 0
    %v5864 = vsel %vm190, %v5831, 0
    %v5867 = vsel %vm190, %v5832, 0
    %5869 = vmatprep.subr.mxu0 0.0
    %5870 = vmatpush1.msra.mxu0 %v5833
    %5871 = vmatprep.subr.mxu0 0.0
    %5872 = vmatpush1.msra.mxu0 %v5834
    %5873 = vmatprep.subr.mxu0 0.0
    %5874 = vmatpush1.msra.mxu0 %v5835
    %5875 = vmatprep.subr.mxu0 0.0
    %5876 = vmatpush1.msra.mxu0 %v5836
    %5877 = vmatprep.subr.mxu0 0.0
    %5878 = vmatpush1.msra.mxu0 0.0
    %5879 = vmatprep.subr.mxu0 0.0
    %5880 = vmatpush1.msra.mxu0 0.0
    %5881 = vmatprep.subr.mxu0 0.0
    %5882 = vmatpush1.msra.mxu0 0.0
    %5883 = vmatprep.subr.mxu0 0.0
    %5884 = vmatpush1.msra.mxu0 0.0
    %5885 = vmatprep.subr.mxu0 0.0
    %5886 = vmatpush1.msra.mxu0 0.0
    %5887 = vmatprep.subr.mxu0 0.0
    %5888 = vmatpush1.msra.mxu0 0.0
    %5889 = vmatprep.subr.mxu0 0.0
    %5890 = vmatpush1.msra.mxu0 0.0
    %5891 = vmatprep.subr.mxu0 0.0
    %5892 = vmatpush1.msra.mxu0 0.0
    %5893 = vmatprep.subr.mxu0 0.0
    %5894 = vmatpush1.msra.mxu0 0.0
    %5895 = vmatprep.subr.mxu0 0.0
    %5896 = vmatpush1.msra.mxu0 0.0
    %5897 = vmatprep.subr.mxu0 0.0
    %5898 = vmatpush1.msra.mxu0 0.0
    %5899 = vmatprep.subr.mxu0 0.0
    %5900 = vmatpush1.msra.mxu0 0.0
    %5901 = vmatprep.subr.mxu0 0.0
    %5902 = vmatpush1.msra.mxu0 0.0
    %5903 = vmatprep.subr.mxu0 0.0
    %5904 = vmatpush1.msra.mxu0 0.0
    %5905 = vmatprep.subr.mxu0 0.0
    %5906 = vmatpush1.msra.mxu0 0.0
    %5907 = vmatprep.subr.mxu0 0.0
    %5908 = vmatpush1.msra.mxu0 0.0
    %5909 = vmatprep.subr.mxu0 0.0
    %5910 = vmatpush1.msra.mxu0 0.0
    %5911 = vmatprep.subr.mxu0 0.0
    %5912 = vmatpush1.msra.mxu0 0.0
    %5913 = vmatprep.subr.mxu0 0.0
    %5914 = vmatpush1.msra.mxu0 0.0
    %5915 = vmatprep.subr.mxu0 0.0
    %5916 = vmatpush1.msra.mxu0 0.0
    %5917 = vmatprep.subr.mxu0 0.0
    %5918 = vmatpush1.msra.mxu0 0.0
    %5919 = vmatprep.subr.mxu0 0.0
    %5920 = vmatpush1.msra.mxu0 0.0
    %5921 = vmatprep.subr.mxu0 0.0
    %5922 = vmatpush1.msra.mxu0 0.0
    %5923 = vmatprep.subr.mxu0 0.0
    %5924 = vmatpush1.msra.mxu0 0.0
    %5925 = vmatprep.subr.mxu0 0.0
    %5926 = vmatpush1.msra.mxu0 0.0
    %5927 = vmatprep.subr.mxu0 0.0
    %5928 = vmatpush1.msra.mxu0 0.0
    %5929 = vmatprep.subr.mxu0 0.0
    %5930 = vmatpush1.msra.mxu0 0.0
    %5931 = vmatprep.subr.mxu0 0.0
    %5932 = vmatpush1.msra.mxu0 0.0
    %5933 = vmatprep.mubr.f32.mxu0 0.0
    %5934 = vmatmul.mubr.f32.gmra.mrb[0].mxu0 %v5858
    %v5935 = vpop.f32.mrb[0].mxu0
    %v5936 = vadd.f32 %v5855, %v5935
    %v5937 = vpop.f32.mrb[0].mxu0
    %5938 = vmatprep.mubr.f32.mxu0 0.0
    %5939 = vmatmul.mubr.f32.gmra.mrb[0].mxu0 %v5861
    %v5940 = vpop.f32.mrb[0].mxu0
    %v5941 = vadd.f32 %v5855, %v5940
    %v5942 = vpop.f32.mrb[0].mxu0
    %5943 = vmatprep.mubr.f32.mxu0 0.0
    %5944 = vmatmul.mubr.f32.gmra.mrb[0].mxu0 %v5864
    %v5945 = vpop.f32.mrb[0].mxu0
    %v5946 = vadd.f32 %v5855, %v5945
    %v5947 = vpop.f32.mrb[0].mxu0
    %5948 = vmatprep.mubr.f32.mxu0 0.0
    %5949 = vmatmul.mubr.f32.gmra.mrb[0].mxu0 %v5867
    %v5950 = vpop.f32.mrb[0].mxu0
    %v5951 = vadd.f32 %v5855, %v5950
    %v5952 = vpop.f32.mrb[0].mxu0
    %5953 = vdwg.mxu0
    %5954 = vst [vmem:[#allocation2] sm:$0xff] %v5936
    %5955 = vst [vmem:[#allocation2 + $0x8] sm:$0xff] %v5941
    %5956 = vst [vmem:[#allocation2 + $0x10] sm:$0xff] %v5946
    %5957 = vst [vmem:[#allocation2 + $0x18] sm:$0xff] %v5951
    %v5958 = vld [vmem:[#allocation2] sm:$0x3]
    %v5960 = vsel %vm190, 0.0, 0
    %5962 = vmatprep.subr.mxu0 0.0
    %5963 = vmatpush1.msra.mxu0 %v5841
    %5964 = vmatprep.subr.mxu0 0.0
    %5965 = vmatpush1.msra.mxu0 %v5842
    %5966 = vmatprep.subr.mxu0 0.0
    %5967 = vmatpush1.msra.mxu0 %v5843
    %5968 = vmatprep.subr.mxu0 0.0
    %5969 = vmatpush1.msra.mxu0 %v5844
    %5970 = vmatprep.subr.mxu0 0.0
    %5971 = vmatpush1.msra.mxu0 0.0
    %5972 = vmatprep.subr.mxu0 0.0
    %5973 = vmatpush1.msra.mxu0 0.0
    %5974 = vmatprep.subr.mxu0 0.0
    %5975 = vmatpush1.msra.mxu0 0.0
    %5976 = vmatprep.subr.mxu0 0.0
    %5977 = vmatpush1.msra.mxu0 0.0
    %5978 = vmatprep.subr.mxu0 0.0
    %5979 = vmatpush1.msra.mxu0 0.0
    %5980 = vmatprep.subr.mxu0 0.0
    %5981 = vmatpush1.msra.mxu0 0.0
    %5982 = vmatprep.subr.mxu0 0.0
    %5983 = vmatpush1.msra.mxu0 0.0
    %5984 = vmatprep.subr.mxu0 0.0
    %5985 = vmatpush1.msra.mxu0 0.0
    %5986 = vmatprep.subr.mxu0 0.0
    %5987 = vmatpush1.msra.mxu0 0.0
    %5988 = vmatprep.subr.mxu0 0.0
    %5989 = vmatpush1.msra.mxu0 0.0
    %5990 = vmatprep.subr.mxu0 0.0
    %5991 = vmatpush1.msra.mxu0 0.0
    %5992 = vmatprep.subr.mxu0 0.0
    %5993 = vmatpush1.msra.mxu0 0.0
    %5994 = vmatprep.subr.mxu0 0.0
    %5995 = vmatpush1.msra.mxu0 0.0
    %5996 = vmatprep.subr.mxu0 0.0
    %5997 = vmatpush1.msra.mxu0 0.0
    %5998 = vmatprep.subr.mxu0 0.0
    %5999 = vmatpush1.msra.mxu0 0.0
    %6000 = vmatprep.subr.mxu0 0.0
    %6001 = vmatpush1.msra.mxu0 0.0
    %6002 = vmatprep.subr.mxu0 0.0
    %6003 = vmatpush1.msra.mxu0 0.0
    %6004 = vmatprep.subr.mxu0 0.0
    %6005 = vmatpush1.msra.mxu0 0.0
    %6006 = vmatprep.subr.mxu0 0.0
    %6007 = vmatpush1.msra.mxu0 0.0
    %6008 = vmatprep.subr.mxu0 0.0
    %6009 = vmatpush1.msra.mxu0 0.0
    %6010 = vmatprep.subr.mxu0 0.0
    %6011 = vmatpush1.msra.mxu0 0.0
    %6012 = vmatprep.subr.mxu0 0.0
    %6013 = vmatpush1.msra.mxu0 0.0
    %6014 = vmatprep.subr.mxu0 0.0
    %6015 = vmatpush1.msra.mxu0 0.0
    %6016 = vmatprep.subr.mxu0 0.0
    %6017 = vmatpush1.msra.mxu0 0.0
    %6018 = vmatprep.subr.mxu0 0.0
    %6019 = vmatpush1.msra.mxu0 0.0
    %6020 = vmatprep.subr.mxu0 0.0
    %6021 = vmatpush1.msra.mxu0 0.0
    %6022 = vmatprep.subr.mxu0 0.0
    %6023 = vmatpush1.msra.mxu0 0.0
    %6024 = vmatprep.subr.mxu0 0.0
    %6025 = vmatpush1.msra.mxu0 0.0
    %6026 = vmatprep.mubr.f32.mxu0 0.0
    %6027 = vmatmul.mubr.f32.gmra.mrb[0].mxu0 %v5960
    %v6028 = vpop.f32.mrb[0].mxu0
    %v6029 = vadd.f32 0.0, %v6028
    %v6030 = vpop.f32.mrb[0].mxu0
    %6031 = vdwg.mxu0
    %v6032 = vadd.f32 %v5958, %v6029
    %v6033 = vxor.u32 %v6032, 2147483648
    %v6034 = vmul.f32 %v6033, 1.442695
    %v6035 = vpow.pop %v6034
    %v6036 = vadd.f32 %v6035, 1.0
    %v6037 = vrcp.pop %v6036
    %v6038 = vmul.f32 1.0, %v6037
    %v6039 = vtanh.pop %v6032
    %v6040 = vmul.f32 %v6038, 0.0
    %6042 = vrot.lane.b32.xlu0 %v6039, 32
    %v6043 = vpop.permute.xlu0 %6042
    %v6045 = vmul.f32 %v6038, %v6043
    %6047 = vrot.lane.b32.xlu0 %v6045, 32
    %v6048 = vpop.permute.xlu0 %6047
    %v6050 = vadd.f32 %v6040, %v6048
    %v6051 = vtanh.pop %v6050
    %6053 = vrot.lane.b32.xlu0 %v6051, 32
    %v6054 = vpop.permute.xlu0 %6053
    %v6056 = vmul.f32 %v6038, %v6054
    %6057 = vmatprep.subr.mxu0 0.0
    %6058 = vmatpush1.msra.mxu0 %v5845
    %6059 = vmatprep.subr.mxu0 0.0
    %6060 = vmatpush1.msra.mxu0 %v5846
    %6061 = vmatprep.subr.mxu0 0.0
    %6062 = vmatpush1.msra.mxu0 %v5847
    %6063 = vmatprep.subr.mxu0 0.0
    %6064 = vmatpush1.msra.mxu0 %v5848
    %6065 = vmatprep.subr.mxu0 0.0
    %6066 = vmatpush1.msra.mxu0 0.0
    %6067 = vmatprep.subr.mxu0 0.0
    %6068 = vmatpush1.msra.mxu0 0.0
    %6069 = vmatprep.subr.mxu0 0.0
    %6070 = vmatpush1.msra.mxu0 0.0
    %6071 = vmatprep.subr.mxu0 0.0
    %6072 = vmatpush1.msra.mxu0 0.0
    %6073 = vmatprep.subr.mxu0 0.0
    %6074 = vmatpush1.msra.mxu0 0.0
    %6075 = vmatprep.subr.mxu0 0.0
    %6076 = vmatpush1.msra.mxu0 0.0
    %6077 = vmatprep.subr.mxu0 0.0
    %6078 = vmatpush1.msra.mxu0 0.0
    %6079 = vmatprep.subr.mxu0 0.0
    %6080 = vmatpush1.msra.mxu0 0.0
    %6081 = vmatprep.subr.mxu0 0.0
    %6082 = vmatpush1.msra.mxu0 0.0
    %6083 = vmatprep.subr.mxu0 0.0
    %6084 = vmatpush1.msra.mxu0 0.0
    %6085 = vmatprep.subr.mxu0 0.0
    %6086 = vmatpush1.msra.mxu0 0.0
    %6087 = vmatprep.subr.mxu0 0.0
    %6088 = vmatpush1.msra.mxu0 0.0
    %6089 = vmatprep.subr.mxu0 0.0
    %6090 = vmatpush1.msra.mxu0 0.0
    %6091 = vmatprep.subr.mxu0 0.0
    %6092 = vmatpush1.msra.mxu0 0.0
    %6093 = vmatprep.subr.mxu0 0.0
    %6094 = vmatpush1.msra.mxu0 0.0
    %6095 = vmatprep.subr.mxu0 0.0
    %6096 = vmatpush1.msra.mxu0 0.0
    %6097 = vmatprep.subr.mxu0 0.0
    %6098 = vmatpush1.msra.mxu0 0.0
    %6099 = vmatprep.subr.mxu0 0.0
    %6100 = vmatpush1.msra.mxu0 0.0
    %6101 = vmatprep.subr.mxu0 0.0
    %6102 = vmatpush1.msra.mxu0 0.0
    %6103 = vmatprep.subr.mxu0 0.0
    %6104 = vmatpush1.msra.mxu0 0.0
    %6105 = vmatprep.subr.mxu0 0.0
    %6106 = vmatpush1.msra.mxu0 0.0
    %6107 = vmatprep.subr.mxu0 0.0
    %6108 = vmatpush1.msra.mxu0 0.0
    %6109 = vmatprep.subr.mxu0 0.0
    %6110 = vmatpush1.msra.mxu0 0.0
    %6111 = vmatprep.subr.mxu0 0.0
    %6112 = vmatpush1.msra.mxu0 0.0
    %6113 = vmatprep.subr.mxu0 0.0
    %6114 = vmatpush1.msra.mxu0 0.0
    %6115 = vmatprep.subr.mxu0 0.0
    %6116 = vmatpush1.msra.mxu0 0.0
    %6117 = vmatprep.subr.mxu0 0.0
    %6118 = vmatpush1.msra.mxu0 0.0
    %6119 = vmatprep.subr.mxu0 0.0
    %6120 = vmatpush1.msra.mxu0 0.0
    %6121 = vmatprep.mubr.f32.mxu0 0.0
    %6122 = vmatmul.mubr.f32.gmra.mrb[0].mxu0 %v5960
    %v6123 = vpop.f32.mrb[0].mxu0
    %v6124 = vadd.f32 0.0, %v6123
    %v6125 = vpop.f32.mrb[0].mxu0
    %6126 = vdwg.mxu0
    %6128 = vrot.lane.b32.xlu0 %v6056, 64
    %v6129 = vpop.permute.xlu0 %6128
    %v6130 = vsel %vm190, %v6129, 0
    %6132 = vmatprep.subr.mxu0 0.0
    %6133 = vmatpush1.msra.mxu0 %v5837
    %6134 = vmatprep.subr.mxu0 0.0
    %6135 = vmatpush1.msra.mxu0 %v5838
    %6136 = vmatprep.subr.mxu0 0.0
    %6137 = vmatpush1.msra.mxu0 %v5839
    %6138 = vmatprep.subr.mxu0 0.0
    %6139 = vmatpush1.msra.mxu0 %v5840
    %6140 = vmatprep.subr.mxu0 0.0
    %6141 = vmatpush1.msra.mxu0 0.0
    %6142 = vmatprep.subr.mxu0 0.0
    %6143 = vmatpush1.msra.mxu0 0.0
    %6144 = vmatprep.subr.mxu0 0.0
    %6145 = vmatpush1.msra.mxu0 0.0
    %6146 = vmatprep.subr.mxu0 0.0
    %6147 = vmatpush1.msra.mxu0 0.0
    %6148 = vmatprep.subr.mxu0 0.0
    %6149 = vmatpush1.msra.mxu0 0.0
    %6150 = vmatprep.subr.mxu0 0.0
    %6151 = vmatpush1.msra.mxu0 0.0
    %6152 = vmatprep.subr.mxu0 0.0
    %6153 = vmatpush1.msra.mxu0 0.0
    %6154 = vmatprep.subr.mxu0 0.0
    %6155 = vmatpush1.msra.mxu0 0.0
    %6156 = vmatprep.subr.mxu0 0.0
    %6157 = vmatpush1.msra.mxu0 0.0
    %6158 = vmatprep.subr.mxu0 0.0
    %6159 = vmatpush1.msra.mxu0 0.0
    %6160 = vmatprep.subr.mxu0 0.0
    %6161 = vmatpush1.msra.mxu0 0.0
    %6162 = vmatprep.subr.mxu0 0.0
    %6163 = vmatpush1.msra.mxu0 0.0
    %6164 = vmatprep.subr.mxu0 0.0
    %6165 = vmatpush1.msra.mxu0 0.0
    %6166 = vmatprep.subr.mxu0 0.0
    %6167 = vmatpush1.msra.mxu0 0.0
    %6168 = vmatprep.subr.mxu0 0.0
    %6169 = vmatpush1.msra.mxu0 0.0
    %6170 = vmatprep.subr.mxu0 0.0
    %6171 = vmatpush1.msra.mxu0 0.0
    %6172 = vmatprep.subr.mxu0 0.0
    %6173 = vmatpush1.msra.mxu0 0.0
    %6174 = vmatprep.subr.mxu0 0.0
    %6175 = vmatpush1.msra.mxu0 0.0
    %6176 = vmatprep.subr.mxu0 0.0
    %6177 = vmatpush1.msra.mxu0 0.0
    %6178 = vmatprep.subr.mxu0 0.0
    %6179 = vmatpush1.msra.mxu0 0.0
    %6180 = vmatprep.subr.mxu0 0.0
    %6181 = vmatpush1.msra.mxu0 0.0
    %6182 = vmatprep.subr.mxu0 0.0
    %6183 = vmatpush1.msra.mxu0 0.0
    %6184 = vmatprep.subr.mxu0 0.0
    %6185 = vmatpush1.msra.mxu0 0.0
    %6186 = vmatprep.subr.mxu0 0.0
    %6187 = vmatpush1.msra.mxu0 0.0
    %6188 = vmatprep.subr.mxu0 0.0
    %6189 = vmatpush1.msra.mxu0 0.0
    %6190 = vmatprep.subr.mxu0 0.0
    %6191 = vmatpush1.msra.mxu0 0.0
    %6192 = vmatprep.subr.mxu0 0.0
    %6193 = vmatpush1.msra.mxu0 0.0
    %6194 = vmatprep.subr.mxu0 0.0
    %6195 = vmatpush1.msra.mxu0 0.0
    %6196 = vmatprep.mubr.f32.mxu0 0.0
    %6197 = vmatmul.mubr.f32.gmra.mrb[0].mxu0 %v6130
    %v6198 = vpop.f32.mrb[0].mxu0
    %v6199 = vadd.f32 %v6124, %v6198
    %v6200 = vpop.f32.mrb[0].mxu0
    %6201 = vdwg.mxu0
    %v6203 = vlaneseq
    %v6204 = vshrl.u32 %v6203, 7
    %v6205 = vsub.s32 0, %v6204
    %v6206 = vrot.slane %v5850, %v6205
    %v6208 = vadd.f32 %v6199, %v6206
    %v6209 = vxor.u32 %v6208, 2147483648
    %v6210 = vmul.f32 %v6209, 1.442695
    %v6211 = vpow.pop %v6210
    %v6212 = vadd.f32 %v6211, 1.0
    %v6213 = vrcp.pop %v6212
    %v6214 = vmul.f32 1.0, %v6213
    %v6215 = vtanh.pop %v6208
    %v6216 = vmul.f32 %v6214, 0.0
    %6218 = vrot.lane.b32.xlu0 %v6215, 32
    %v6219 = vpop.permute.xlu0 %6218
    %v6221 = vmul.f32 %v6214, %v6219
    %6223 = vrot.lane.b32.xlu0 %v6221, 32
    %v6224 = vpop.permute.xlu0 %6223
    %v6226 = vadd.f32 %v6216, %v6224
    %v6227 = vtanh.pop %v6226
    %6229 = vrot.lane.b32.xlu0 %v6227, 32
    %v6230 = vpop.permute.xlu0 %6229
    %v6232 = vmul.f32 %v6214, %v6230
    %v6233 = vld [vmem:[#allocation2 + $0x2] sm:$0x3]
    %6234 = vmatprep.subr.mxu0 0.0
    %6235 = vmatpush1.msra.mxu0 %v5841
    %6236 = vmatprep.subr.mxu0 0.0
    %6237 = vmatpush1.msra.mxu0 %v5842
    %6238 = vmatprep.subr.mxu0 0.0
    %6239 = vmatpush1.msra.mxu0 %v5843
    %6240 = vmatprep.subr.mxu0 0.0
    %6241 = vmatpush1.msra.mxu0 %v5844
    %6242 = vmatprep.subr.mxu0 0.0
    %6243 = vmatpush1.msra.mxu0 0.0
    %6244 = vmatprep.subr.mxu0 0.0
    %6245 = vmatpush1.msra.mxu0 0.0
    %6246 = vmatprep.subr.mxu0 0.0
    %6247 = vmatpush1.msra.mxu0 0.0
    %6248 = vmatprep.subr.mxu0 0.0
    %6249 = vmatpush1.msra.mxu0 0.0
    %6250 = vmatprep.subr.mxu0 0.0
    %6251 = vmatpush1.msra.mxu0 0.0
    %6252 = vmatprep.subr.mxu0 0.0
    %6253 = vmatpush1.msra.mxu0 0.0
    %6254 = vmatprep.subr.mxu0 0.0
    %6255 = vmatpush1.msra.mxu0 0.0
    %6256 = vmatprep.subr.mxu0 0.0
    %6257 = vmatpush1.msra.mxu0 0.0
    %6258 = vmatprep.subr.mxu0 0.0
    %6259 = vmatpush1.msra.mxu0 0.0
    %6260 = vmatprep.subr.mxu0 0.0
    %6261 = vmatpush1.msra.mxu0 0.0
    %6262 = vmatprep.subr.mxu0 0.0
    %6263 = vmatpush1.msra.mxu0 0.0
    %6264 = vmatprep.subr.mxu0 0.0
    %6265 = vmatpush1.msra.mxu0 0.0
    %6266 = vmatprep.subr.mxu0 0.0
    %6267 = vmatpush1.msra.mxu0 0.0
    %6268 = vmatprep.subr.mxu0 0.0
    %6269 = vmatpush1.msra.mxu0 0.0
    %6270 = vmatprep.subr.mxu0 0.0
    %6271 = vmatpush1.msra.mxu0 0.0
    %6272 = vmatprep.subr.mxu0 0.0
    %6273 = vmatpush1.msra.mxu0 0.0
    %6274 = vmatprep.subr.mxu0 0.0
    %6275 = vmatpush1.msra.mxu0 0.0
    %6276 = vmatprep.subr.mxu0 0.0
    %6277 = vmatpush1.msra.mxu0 0.0
    %6278 = vmatprep.subr.mxu0 0.0
    %6279 = vmatpush1.msra.mxu0 0.0
    %6280 = vmatprep.subr.mxu0 0.0
    %6281 = vmatpush1.msra.mxu0 0.0
    %6282 = vmatprep.subr.mxu0 0.0
    %6283 = vmatpush1.msra.mxu0 0.0
    %6284 = vmatprep.subr.mxu0 0.0
    %6285 = vmatpush1.msra.mxu0 0.0
    %6286 = vmatprep.subr.mxu0 0.0
    %6287 = vmatpush1.msra.mxu0 0.0
    %6288 = vmatprep.subr.mxu0 0.0
    %6289 = vmatpush1.msra.mxu0 0.0
    %6290 = vmatprep.subr.mxu0 0.0
    %6291 = vmatpush1.msra.mxu0 0.0
    %6292 = vmatprep.subr.mxu0 0.0
    %6293 = vmatpush1.msra.mxu0 0.0
    %6294 = vmatprep.subr.mxu0 0.0
    %6295 = vmatpush1.msra.mxu0 0.0
    %6296 = vmatprep.subr.mxu0 0.0
    %6297 = vmatpush1.msra.mxu0 0.0
    %6298 = vmatprep.mubr.f32.mxu0 0.0
    %6299 = vmatmul.mubr.f32.gmra.mrb[0].mxu0 %v6130
    %v6300 = vpop.f32.mrb[0].mxu0
    %v6301 = vadd.f32 0.0, %v6300
    %v6302 = vpop.f32.mrb[0].mxu0
    %6303 = vdwg.mxu0
    %v6304 = vadd.f32 %v6233, %v6301
    %v6305 = vxor.u32 %v6304, 2147483648
    %v6306 = vmul.f32 %v6305, 1.442695
    %v6307 = vpow.pop %v6306
    %v6308 = vadd.f32 %v6307, 1.0
    %v6309 = vrcp.pop %v6308
    %v6310 = vmul.f32 1.0, %v6309
    %v6311 = vtanh.pop %v6304
    %v6312 = vmul.f32 %v6310, %v6050
    %6314 = vrot.lane.b32.xlu0 %v6311, 32
    %v6315 = vpop.permute.xlu0 %6314
    %v6317 = vmul.f32 %v6310, %v6315
    %6319 = vrot.lane.b32.xlu0 %v6317, 32
    %v6320 = vpop.permute.xlu0 %6319
    %v6322 = vadd.f32 %v6312, %v6320
    %v6323 = vtanh.pop %v6322
    %6325 = vrot.lane.b32.xlu0 %v6323, 32
    %v6326 = vpop.permute.xlu0 %6325
    %v6328 = vmul.f32 %v6310, %v6326
    %6330 = vrot.lane.b32.xlu0 %v6232, 64
    %v6331 = vpop.permute.xlu0 %6330
    %v6332 = vsel %vm190, %v6331, 0
    %6334 = vmatprep.subr.mxu0 0.0
    %6335 = vmatpush1.msra.mxu0 %v5845
    %6336 = vmatprep.subr.mxu0 0.0
    %6337 = vmatpush1.msra.mxu0 %v5846
    %6338 = vmatprep.subr.mxu0 0.0
    %6339 = vmatpush1.msra.mxu0 %v5847
    %6340 = vmatprep.subr.mxu0 0.0
    %6341 = vmatpush1.msra.mxu0 %v5848
    %6342 = vmatprep.subr.mxu0 0.0
    %6343 = vmatpush1.msra.mxu0 0.0
    %6344 = vmatprep.subr.mxu0 0.0
    %6345 = vmatpush1.msra.mxu0 0.0
    %6346 = vmatprep.subr.mxu0 0.0
    %6347 = vmatpush1.msra.mxu0 0.0
    %6348 = vmatprep.subr.mxu0 0.0
    %6349 = vmatpush1.msra.mxu0 0.0
    %6350 = vmatprep.subr.mxu0 0.0
    %6351 = vmatpush1.msra.mxu0 0.0
    %6352 = vmatprep.subr.mxu0 0.0
    %6353 = vmatpush1.msra.mxu0 0.0
    %6354 = vmatprep.subr.mxu0 0.0
    %6355 = vmatpush1.msra.mxu0 0.0
    %6356 = vmatprep.subr.mxu0 0.0
    %6357 = vmatpush1.msra.mxu0 0.0
    %6358 = vmatprep.subr.mxu0 0.0
    %6359 = vmatpush1.msra.mxu0 0.0
    %6360 = vmatprep.subr.mxu0 0.0
    %6361 = vmatpush1.msra.mxu0 0.0
    %6362 = vmatprep.subr.mxu0 0.0
    %6363 = vmatpush1.msra.mxu0 0.0
    %6364 = vmatprep.subr.mxu0 0.0
    %6365 = vmatpush1.msra.mxu0 0.0
    %6366 = vmatprep.subr.mxu0 0.0
    %6367 = vmatpush1.msra.mxu0 0.0
    %6368 = vmatprep.subr.mxu0 0.0
    %6369 = vmatpush1.msra.mxu0 0.0
    %6370 = vmatprep.subr.mxu0 0.0
    %6371 = vmatpush1.msra.mxu0 0.0
    %6372 = vmatprep.subr.mxu0 0.0
    %6373 = vmatpush1.msra.mxu0 0.0
    %6374 = vmatprep.subr.mxu0 0.0
    %6375 = vmatpush1.msra.mxu0 0.0
    %6376 = vmatprep.subr.mxu0 0.0
    %6377 = vmatpush1.msra.mxu0 0.0
    %6378 = vmatprep.subr.mxu0 0.0
    %6379 = vmatpush1.msra.mxu0 0.0
    %6380 = vmatprep.subr.mxu0 0.0
    %6381 = vmatpush1.msra.mxu0 0.0
    %6382 = vmatprep.subr.mxu0 0.0
    %6383 = vmatpush1.msra.mxu0 0.0
    %6384 = vmatprep.subr.mxu0 0.0
    %6385 = vmatpush1.msra.mxu0 0.0
    %6386 = vmatprep.subr.mxu0 0.0
    %6387 = vmatpush1.msra.mxu0 0.0
    %6388 = vmatprep.subr.mxu0 0.0
    %6389 = vmatpush1.msra.mxu0 0.0
    %6390 = vmatprep.subr.mxu0 0.0
    %6391 = vmatpush1.msra.mxu0 0.0
    %6392 = vmatprep.subr.mxu0 0.0
    %6393 = vmatpush1.msra.mxu0 0.0
    %6394 = vmatprep.subr.mxu0 0.0
    %6395 = vmatpush1.msra.mxu0 0.0
    %6396 = vmatprep.subr.mxu0 0.0
    %6397 = vmatpush1.msra.mxu0 0.0
    %6398 = vmatprep.mubr.f32.mxu0 0.0
    %6399 = vmatmul.mubr.f32.gmra.mrb[0].mxu0 %v6332
    %v6400 = vpop.f32.mrb[0].mxu0
    %v6401 = vadd.f32 0.0, %v6400
    %v6402 = vpop.f32.mrb[0].mxu0
    %6403 = vdwg.mxu0
    %6405 = vrot.lane.b32.xlu0 %v6328, 64
    %v6406 = vpop.permute.xlu0 %6405
    %v6407 = vsel %vm190, %v6406, 0
    %6409 = vmatprep.subr.mxu0 0.0
    %6410 = vmatpush1.msra.mxu0 %v5837
    %6411 = vmatprep.subr.mxu0 0.0
    %6412 = vmatpush1.msra.mxu0 %v5838
    %6413 = vmatprep.subr.mxu0 0.0
    %6414 = vmatpush1.msra.mxu0 %v5839
    %6415 = vmatprep.subr.mxu0 0.0
    %6416 = vmatpush1.msra.mxu0 %v5840
    %6417 = vmatprep.subr.mxu0 0.0
    %6418 = vmatpush1.msra.mxu0 0.0
    %6419 = vmatprep.subr.mxu0 0.0
    %6420 = vmatpush1.msra.mxu0 0.0
    %6421 = vmatprep.subr.mxu0 0.0
    %6422 = vmatpush1.msra.mxu0 0.0
    %6423 = vmatprep.subr.mxu0 0.0
    %6424 = vmatpush1.msra.mxu0 0.0
    %6425 = vmatprep.subr.mxu0 0.0
    %6426 = vmatpush1.msra.mxu0 0.0
    %6427 = vmatprep.subr.mxu0 0.0
    %6428 = vmatpush1.msra.mxu0 0.0
    %6429 = vmatprep.subr.mxu0 0.0
    %6430 = vmatpush1.msra.mxu0 0.0
    %6431 = vmatprep.subr.mxu0 0.0
    %6432 = vmatpush1.msra.mxu0 0.0
    %6433 = vmatprep.subr.mxu0 0.0
    %6434 = vmatpush1.msra.mxu0 0.0
    %6435 = vmatprep.subr.mxu0 0.0
    %6436 = vmatpush1.msra.mxu0 0.0
    %6437 = vmatprep.subr.mxu0 0.0
    %6438 = vmatpush1.msra.mxu0 0.0
    %6439 = vmatprep.subr.mxu0 0.0
    %6440 = vmatpush1.msra.mxu0 0.0
    %6441 = vmatprep.subr.mxu0 0.0
    %6442 = vmatpush1.msra.mxu0 0.0
    %6443 = vmatprep.subr.mxu0 0.0
    %6444 = vmatpush1.msra.mxu0 0.0
    %6445 = vmatprep.subr.mxu0 0.0
    %6446 = vmatpush1.msra.mxu0 0.0
    %6447 = vmatprep.subr.mxu0 0.0
    %6448 = vmatpush1.msra.mxu0 0.0
    %6449 = vmatprep.subr.mxu0 0.0
    %6450 = vmatpush1.msra.mxu0 0.0
    %6451 = vmatprep.subr.mxu0 0.0
    %6452 = vmatpush1.msra.mxu0 0.0
    %6453 = vmatprep.subr.mxu0 0.0
    %6454 = vmatpush1.msra.mxu0 0.0
    %6455 = vmatprep.subr.mxu0 0.0
    %6456 = vmatpush1.msra.mxu0 0.0
    %6457 = vmatprep.subr.mxu0 0.0
    %6458 = vmatpush1.msra.mxu0 0.0
    %6459 = vmatprep.subr.mxu0 0.0
    %6460 = vmatpush1.msra.mxu0 0.0
    %6461 = vmatprep.subr.mxu0 0.0
    %6462 = vmatpush1.msra.mxu0 0.0
    %6463 = vmatprep.subr.mxu0 0.0
    %6464 = vmatpush1.msra.mxu0 0.0
    %6465 = vmatprep.subr.mxu0 0.0
    %6466 = vmatpush1.msra.mxu0 0.0
    %6467 = vmatprep.subr.mxu0 0.0
    %6468 = vmatpush1.msra.mxu0 0.0
    %6469 = vmatprep.subr.mxu0 0.0
    %6470 = vmatpush1.msra.mxu0 0.0
    %6471 = vmatprep.subr.mxu0 0.0
    %6472 = vmatpush1.msra.mxu0 0.0
    %6473 = vmatprep.mubr.f32.mxu0 0.0
    %6474 = vmatmul.mubr.f32.gmra.mrb[0].mxu0 %v6407
    %v6475 = vpop.f32.mrb[0].mxu0
    %v6476 = vadd.f32 %v6401, %v6475
    %v6477 = vpop.f32.mrb[0].mxu0
    %6478 = vdwg.mxu0
    %v6479 = vadd.f32 %v6476, %v6206
    %v6480 = vxor.u32 %v6479, 2147483648
    %v6481 = vmul.f32 %v6480, 1.442695
    %v6482 = vpow.pop %v6481
    %v6483 = vadd.f32 %v6482, 1.0
    %v6484 = vrcp.pop %v6483
    %v6485 = vmul.f32 1.0, %v6484
    %v6486 = vtanh.pop %v6479
    %v6487 = vmul.f32 %v6485, %v6226
    %6489 = vrot.lane.b32.xlu0 %v6486, 32
    %v6490 = vpop.permute.xlu0 %6489
    %v6492 = vmul.f32 %v6485, %v6490
    %6494 = vrot.lane.b32.xlu0 %v6492, 32
    %v6495 = vpop.permute.xlu0 %6494
    %v6497 = vadd.f32 %v6487, %v6495
    %v6498 = vtanh.pop %v6497
    %6500 = vrot.lane.b32.xlu0 %v6498, 32
    %v6501 = vpop.permute.xlu0 %6500
    %v6503 = vmul.f32 %v6485, %v6501
    %v6504 = vld [vmem:[#allocation2 + $0x4] sm:$0x3]
    %6505 = vmatprep.subr.mxu0 0.0
    %6506 = vmatpush1.msra.mxu0 %v5841
    %6507 = vmatprep.subr.mxu0 0.0
    %6508 = vmatpush1.msra.mxu0 %v5842
    %6509 = vmatprep.subr.mxu0 0.0
    %6510 = vmatpush1.msra.mxu0 %v5843
    %6511 = vmatprep.subr.mxu0 0.0
    %6512 = vmatpush1.msra.mxu0 %v5844
    %6513 = vmatprep.subr.mxu0 0.0
    %6514 = vmatpush1.msra.mxu0 0.0
    %6515 = vmatprep.subr.mxu0 0.0
    %6516 = vmatpush1.msra.mxu0 0.0
    %6517 = vmatprep.subr.mxu0 0.0
    %6518 = vmatpush1.msra.mxu0 0.0
    %6519 = vmatprep.subr.mxu0 0.0
    %6520 = vmatpush1.msra.mxu0 0.0
    %6521 = vmatprep.subr.mxu0 0.0
    %6522 = vmatpush1.msra.mxu0 0.0
    %6523 = vmatprep.subr.mxu0 0.0
    %6524 = vmatpush1.msra.mxu0 0.0
    %6525 = vmatprep.subr.mxu0 0.0
    %6526 = vmatpush1.msra.mxu0 0.0
    %6527 = vmatprep.subr.mxu0 0.0
    %6528 = vmatpush1.msra.mxu0 0.0
    %6529 = vmatprep.subr.mxu0 0.0
    %6530 = vmatpush1.msra.mxu0 0.0
    %6531 = vmatprep.subr.mxu0 0.0
    %6532 = vmatpush1.msra.mxu0 0.0
    %6533 = vmatprep.subr.mxu0 0.0
    %6534 = vmatpush1.msra.mxu0 0.0
    %6535 = vmatprep.subr.mxu0 0.0
    %6536 = vmatpush1.msra.mxu0 0.0
    %6537 = vmatprep.subr.mxu0 0.0
    %6538 = vmatpush1.msra.mxu0 0.0
    %6539 = vmatprep.subr.mxu0 0.0
    %6540 = vmatpush1.msra.mxu0 0.0
    %6541 = vmatprep.subr.mxu0 0.0
    %6542 = vmatpush1.msra.mxu0 0.0
    %6543 = vmatprep.subr.mxu0 0.0
    %6544 = vmatpush1.msra.mxu0 0.0
    %6545 = vmatprep.subr.mxu0 0.0
    %6546 = vmatpush1.msra.mxu0 0.0
    %6547 = vmatprep.subr.mxu0 0.0
    %6548 = vmatpush1.msra.mxu0 0.0
    %6549 = vmatprep.subr.mxu0 0.0
    %6550 = vmatpush1.msra.mxu0 0.0
    %6551 = vmatprep.subr.mxu0 0.0
    %6552 = vmatpush1.msra.mxu0 0.0
    %6553 = vmatprep.subr.mxu0 0.0
    %6554 = vmatpush1.msra.mxu0 0.0
    %6555 = vmatprep.subr.mxu0 0.0
    %6556 = vmatpush1.msra.mxu0 0.0
    %6557 = vmatprep.subr.mxu0 0.0
    %6558 = vmatpush1.msra.mxu0 0.0
    %6559 = vmatprep.subr.mxu0 0.0
    %6560 = vmatpush1.msra.mxu0 0.0
    %6561 = vmatprep.subr.mxu0 0.0
    %6562 = vmatpush1.msra.mxu0 0.0
    %6563 = vmatprep.subr.mxu0 0.0
    %6564 = vmatpush1.msra.mxu0 0.0
    %6565 = vmatprep.subr.mxu0 0.0
    %6566 = vmatpush1.msra.mxu0 0.0
    %6567 = vmatprep.subr.mxu0 0.0
    %6568 = vmatpush1.msra.mxu0 0.0
    %6569 = vmatprep.mubr.f32.mxu0 0.0
    %6570 = vmatmul.mubr.f32.gmra.mrb[0].mxu0 %v6407
    %v6571 = vpop.f32.mrb[0].mxu0
    %v6572 = vadd.f32 0.0, %v6571
    %v6573 = vpop.f32.mrb[0].mxu0
    %6574 = vdwg.mxu0
    %v6575 = vadd.f32 %v6504, %v6572
    %v6576 = vxor.u32 %v6575, 2147483648
    %v6577 = vmul.f32 %v6576, 1.442695
    %v6578 = vpow.pop %v6577
    %v6579 = vadd.f32 %v6578, 1.0
    %v6580 = vrcp.pop %v6579
    %v6581 = vmul.f32 1.0, %v6580
    %v6582 = vtanh.pop %v6575
    %v6583 = vmul.f32 %v6581, %v6322
    %6585 = vrot.lane.b32.xlu0 %v6582, 32
    %v6586 = vpop.permute.xlu0 %6585
    %v6588 = vmul.f32 %v6581, %v6586
    %6590 = vrot.lane.b32.xlu0 %v6588, 32
    %v6591 = vpop.permute.xlu0 %6590
    %v6593 = vadd.f32 %v6583, %v6591
    %v6594 = vtanh.pop %v6593
    %6596 = vrot.lane.b32.xlu0 %v6594, 32
    %v6597 = vpop.permute.xlu0 %6596
    %v6599 = vmul.f32 %v6581, %v6597
    %6601 = vrot.lane.b32.xlu0 %v6503, 64
    %v6602 = vpop.permute.xlu0 %6601
    %v6603 = vsel %vm190, %v6602, 0
    %6605 = vmatprep.subr.mxu0 0.0
    %6606 = vmatpush1.msra.mxu0 %v5845
    %6607 = vmatprep.subr.mxu0 0.0
    %6608 = vmatpush1.msra.mxu0 %v5846
    %6609 = vmatprep.subr.mxu0 0.0
    %6610 = vmatpush1.msra.mxu0 %v5847
    %6611 = vmatprep.subr.mxu0 0.0
    %6612 = vmatpush1.msra.mxu0 %v5848
    %6613 = vmatprep.subr.mxu0 0.0
    %6614 = vmatpush1.msra.mxu0 0.0
    %6615 = vmatprep.subr.mxu0 0.0
    %6616 = vmatpush1.msra.mxu0 0.0
    %6617 = vmatprep.subr.mxu0 0.0
    %6618 = vmatpush1.msra.mxu0 0.0
    %6619 = vmatprep.subr.mxu0 0.0
    %6620 = vmatpush1.msra.mxu0 0.0
    %6621 = vmatprep.subr.mxu0 0.0
    %6622 = vmatpush1.msra.mxu0 0.0
    %6623 = vmatprep.subr.mxu0 0.0
    %6624 = vmatpush1.msra.mxu0 0.0
    %6625 = vmatprep.subr.mxu0 0.0
    %6626 = vmatpush1.msra.mxu0 0.0
    %6627 = vmatprep.subr.mxu0 0.0
    %6628 = vmatpush1.msra.mxu0 0.0
    %6629 = vmatprep.subr.mxu0 0.0
    %6630 = vmatpush1.msra.mxu0 0.0
    %6631 = vmatprep.subr.mxu0 0.0
    %6632 = vmatpush1.msra.mxu0 0.0
    %6633 = vmatprep.subr.mxu0 0.0
    %6634 = vmatpush1.msra.mxu0 0.0
    %6635 = vmatprep.subr.mxu0 0.0
    %6636 = vmatpush1.msra.mxu0 0.0
    %6637 = vmatprep.subr.mxu0 0.0
    %6638 = vmatpush1.msra.mxu0 0.0
    %6639 = vmatprep.subr.mxu0 0.0
    %6640 = vmatpush1.msra.mxu0 0.0
    %6641 = vmatprep.subr.mxu0 0.0
    %6642 = vmatpush1.msra.mxu0 0.0
    %6643 = vmatprep.subr.mxu0 0.0
    %6644 = vmatpush1.msra.mxu0 0.0
    %6645 = vmatprep.subr.mxu0 0.0
    %6646 = vmatpush1.msra.mxu0 0.0
    %6647 = vmatprep.subr.mxu0 0.0
    %6648 = vmatpush1.msra.mxu0 0.0
    %6649 = vmatprep.subr.mxu0 0.0
    %6650 = vmatpush1.msra.mxu0 0.0
    %6651 = vmatprep.subr.mxu0 0.0
    %6652 = vmatpush1.msra.mxu0 0.0
    %6653 = vmatprep.subr.mxu0 0.0
    %6654 = vmatpush1.msra.mxu0 0.0
    %6655 = vmatprep.subr.mxu0 0.0
    %6656 = vmatpush1.msra.mxu0 0.0
    %6657 = vmatprep.subr.mxu0 0.0
    %6658 = vmatpush1.msra.mxu0 0.0
    %6659 = vmatprep.subr.mxu0 0.0
    %6660 = vmatpush1.msra.mxu0 0.0
    %6661 = vmatprep.subr.mxu0 0.0
    %6662 = vmatpush1.msra.mxu0 0.0
    %6663 = vmatprep.subr.mxu0 0.0
    %6664 = vmatpush1.msra.mxu0 0.0
    %6665 = vmatprep.subr.mxu0 0.0
    %6666 = vmatpush1.msra.mxu0 0.0
    %6667 = vmatprep.subr.mxu0 0.0
    %6668 = vmatpush1.msra.mxu0 0.0
    %6669 = vmatprep.mubr.f32.mxu0 0.0
    %6670 = vmatmul.mubr.f32.gmra.mrb[0].mxu0 %v6603
    %v6671 = vpop.f32.mrb[0].mxu0
    %v6672 = vadd.f32 0.0, %v6671
    %v6673 = vpop.f32.mrb[0].mxu0
    %6674 = vdwg.mxu0
    %6676 = vrot.lane.b32.xlu0 %v6599, 64
    %v6677 = vpop.permute.xlu0 %6676
    %v6678 = vsel %vm190, %v6677, 0
    %6680 = vmatprep.subr.mxu0 0.0
    %6681 = vmatpush1.msra.mxu0 %v5837
    %6682 = vmatprep.subr.mxu0 0.0
    %6683 = vmatpush1.msra.mxu0 %v5838
    %6684 = vmatprep.subr.mxu0 0.0
    %6685 = vmatpush1.msra.mxu0 %v5839
    %6686 = vmatprep.subr.mxu0 0.0
    %6687 = vmatpush1.msra.mxu0 %v5840
    %6688 = vmatprep.subr.mxu0 0.0
    %6689 = vmatpush1.msra.mxu0 0.0
    %6690 = vmatprep.subr.mxu0 0.0
    %6691 = vmatpush1.msra.mxu0 0.0
    %6692 = vmatprep.subr.mxu0 0.0
    %6693 = vmatpush1.msra.mxu0 0.0
    %6694 = vmatprep.subr.mxu0 0.0
    %6695 = vmatpush1.msra.mxu0 0.0
    %6696 = vmatprep.subr.mxu0 0.0
    %6697 = vmatpush1.msra.mxu0 0.0
    %6698 = vmatprep.subr.mxu0 0.0
    %6699 = vmatpush1.msra.mxu0 0.0
    %6700 = vmatprep.subr.mxu0 0.0
    %6701 = vmatpush1.msra.mxu0 0.0
    %6702 = vmatprep.subr.mxu0 0.0
    %6703 = vmatpush1.msra.mxu0 0.0
    %6704 = vmatprep.subr.mxu0 0.0
    %6705 = vmatpush1.msra.mxu0 0.0
    %6706 = vmatprep.subr.mxu0 0.0
    %6707 = vmatpush1.msra.mxu0 0.0
    %6708 = vmatprep.subr.mxu0 0.0
    %6709 = vmatpush1.msra.mxu0 0.0
    %6710 = vmatprep.subr.mxu0 0.0
    %6711 = vmatpush1.msra.mxu0 0.0
    %6712 = vmatprep.subr.mxu0 0.0
    %6713 = vmatpush1.msra.mxu0 0.0
    %6714 = vmatprep.subr.mxu0 0.0
    %6715 = vmatpush1.msra.mxu0 0.0
    %6716 = vmatprep.subr.mxu0 0.0
    %6717 = vmatpush1.msra.mxu0 0.0
    %6718 = vmatprep.subr.mxu0 0.0
    %6719 = vmatpush1.msra.mxu0 0.0
    %6720 = vmatprep.subr.mxu0 0.0
    %6721 = vmatpush1.msra.mxu0 0.0
    %6722 = vmatprep.subr.mxu0 0.0
    %6723 = vmatpush1.msra.mxu0 0.0
    %6724 = vmatprep.subr.mxu0 0.0
    %6725 = vmatpush1.msra.mxu0 0.0
    %6726 = vmatprep.subr.mxu0 0.0
    %6727 = vmatpush1.msra.mxu0 0.0
    %6728 = vmatprep.subr.mxu0 0.0
    %6729 = vmatpush1.msra.mxu0 0.0
    %6730 = vmatprep.subr.mxu0 0.0
    %6731 = vmatpush1.msra.mxu0 0.0
    %6732 = vmatprep.subr.mxu0 0.0
    %6733 = vmatpush1.msra.mxu0 0.0
    %6734 = vmatprep.subr.mxu0 0.0
    %6735 = vmatpush1.msra.mxu0 0.0
    %6736 = vmatprep.subr.mxu0 0.0
    %6737 = vmatpush1.msra.mxu0 0.0
    %6738 = vmatprep.subr.mxu0 0.0
    %6739 = vmatpush1.msra.mxu0 0.0
    %6740 = vmatprep.subr.mxu0 0.0
    %6741 = vmatpush1.msra.mxu0 0.0
    %6742 = vmatprep.subr.mxu0 0.0
    %6743 = vmatpush1.msra.mxu0 0.0
    %6744 = vmatprep.mubr.f32.mxu0 0.0
    %6745 = vmatmul.mubr.f32.gmra.mrb[0].mxu0 %v6678
    %v6746 = vpop.f32.mrb[0].mxu0
    %v6747 = vadd.f32 %v6672, %v6746
    %v6748 = vpop.f32.mrb[0].mxu0
    %6749 = vdwg.mxu0
    %v6750 = vadd.f32 %v6747, %v6206
    %v6751 = vxor.u32 %v6750, 2147483648
    %v6752 = vmul.f32 %v6751, 1.442695
    %v6753 = vpow.pop %v6752
    %v6754 = vadd.f32 %v6753, 1.0
    %v6755 = vrcp.pop %v6754
    %v6756 = vmul.f32 1.0, %v6755
    %v6757 = vtanh.pop %v6750
    %v6758 = vmul.f32 %v6756, %v6497
    %6760 = vrot.lane.b32.xlu0 %v6757, 32
    %v6761 = vpop.permute.xlu0 %6760
    %v6763 = vmul.f32 %v6756, %v6761
    %6765 = vrot.lane.b32.xlu0 %v6763, 32
    %v6766 = vpop.permute.xlu0 %6765
    %v6768 = vadd.f32 %v6758, %v6766
    %v6769 = vtanh.pop %v6768
    %6771 = vrot.lane.b32.xlu0 %v6769, 32
    %v6772 = vpop.permute.xlu0 %6771
    %v6774 = vmul.f32 %v6756, %v6772
    %v6775 = vld [vmem:[#allocation2 + $0x6] sm:$0x3]
    %6776 = vmatprep.subr.mxu0 0.0
    %6777 = vmatpush1.msra.mxu0 %v5841
    %6778 = vmatprep.subr.mxu0 0.0
    %6779 = vmatpush1.msra.mxu0 %v5842
    %6780 = vmatprep.subr.mxu0 0.0
    %6781 = vmatpush1.msra.mxu0 %v5843
    %6782 = vmatprep.subr.mxu0 0.0
    %6783 = vmatpush1.msra.mxu0 %v5844
    %6784 = vmatprep.subr.mxu0 0.0
    %6785 = vmatpush1.msra.mxu0 0.0
    %6786 = vmatprep.subr.mxu0 0.0
    %6787 = vmatpush1.msra.mxu0 0.0
    %6788 = vmatprep.subr.mxu0 0.0
    %6789 = vmatpush1.msra.mxu0 0.0
    %6790 = vmatprep.subr.mxu0 0.0
    %6791 = vmatpush1.msra.mxu0 0.0
    %6792 = vmatprep.subr.mxu0 0.0
    %6793 = vmatpush1.msra.mxu0 0.0
    %6794 = vmatprep.subr.mxu0 0.0
    %6795 = vmatpush1.msra.mxu0 0.0
    %6796 = vmatprep.subr.mxu0 0.0
    %6797 = vmatpush1.msra.mxu0 0.0
    %6798 = vmatprep.subr.mxu0 0.0
    %6799 = vmatpush1.msra.mxu0 0.0
    %6800 = vmatprep.subr.mxu0 0.0
    %6801 = vmatpush1.msra.mxu0 0.0
    %6802 = vmatprep.subr.mxu0 0.0
    %6803 = vmatpush1.msra.mxu0 0.0
    %6804 = vmatprep.subr.mxu0 0.0
    %6805 = vmatpush1.msra.mxu0 0.0
    %6806 = vmatprep.subr.mxu0 0.0
    %6807 = vmatpush1.msra.mxu0 0.0
    %6808 = vmatprep.subr.mxu0 0.0
    %6809 = vmatpush1.msra.mxu0 0.0
    %6810 = vmatprep.subr.mxu0 0.0
    %6811 = vmatpush1.msra.mxu0 0.0
    %6812 = vmatprep.subr.mxu0 0.0
    %6813 = vmatpush1.msra.mxu0 0.0
    %6814 = vmatprep.subr.mxu0 0.0
    %6815 = vmatpush1.msra.mxu0 0.0
    %6816 = vmatprep.subr.mxu0 0.0
    %6817 = vmatpush1.msra.mxu0 0.0
    %6818 = vmatprep.subr.mxu0 0.0
    %6819 = vmatpush1.msra.mxu0 0.0
    %6820 = vmatprep.subr.mxu0 0.0
    %6821 = vmatpush1.msra.mxu0 0.0
    %6822 = vmatprep.subr.mxu0 0.0
    %6823 = vmatpush1.msra.mxu0 0.0
    %6824 = vmatprep.subr.mxu0 0.0
    %6825 = vmatpush1.msra.mxu0 0.0
    %6826 = vmatprep.subr.mxu0 0.0
    %6827 = vmatpush1.msra.mxu0 0.0
    %6828 = vmatprep.subr.mxu0 0.0
    %6829 = vmatpush1.msra.mxu0 0.0
    %6830 = vmatprep.subr.mxu0 0.0
    %6831 = vmatpush1.msra.mxu0 0.0
    %6832 = vmatprep.subr.mxu0 0.0
    %6833 = vmatpush1.msra.mxu0 0.0
    %6834 = vmatprep.subr.mxu0 0.0
    %6835 = vmatpush1.msra.mxu0 0.0
    %6836 = vmatprep.subr.mxu0 0.0
    %6837 = vmatpush1.msra.mxu0 0.0
    %6838 = vmatprep.subr.mxu0 0.0
    %6839 = vmatpush1.msra.mxu0 0.0
    %6840 = vmatprep.mubr.f32.mxu0 0.0
    %6841 = vmatmul.mubr.f32.gmra.mrb[0].mxu0 %v6678
    %v6842 = vpop.f32.mrb[0].mxu0
    %v6843 = vadd.f32 0.0, %v6842
    %v6844 = vpop.f32.mrb[0].mxu0
    %6845 = vdwg.mxu0
    %v6846 = vadd.f32 %v6775, %v6843
    %v6847 = vxor.u32 %v6846, 2147483648
    %v6848 = vmul.f32 %v6847, 1.442695
    %v6849 = vpow.pop %v6848
    %v6850 = vadd.f32 %v6849, 1.0
    %v6851 = vrcp.pop %v6850
    %v6852 = vmul.f32 1.0, %v6851
    %v6853 = vtanh.pop %v6846
    %v6854 = vmul.f32 %v6852, %v6593
    %6856 = vrot.lane.b32.xlu0 %v6853, 32
    %v6857 = vpop.permute.xlu0 %6856
    %v6859 = vmul.f32 %v6852, %v6857
    %6861 = vrot.lane.b32.xlu0 %v6859, 32
    %v6862 = vpop.permute.xlu0 %6861
    %v6864 = vadd.f32 %v6854, %v6862
    %v6865 = vtanh.pop %v6864
    %6867 = vrot.lane.b32.xlu0 %v6865, 32
    %v6868 = vpop.permute.xlu0 %6867
    %v6870 = vmul.f32 %v6852, %v6868
    %6872 = vrot.lane.b32.xlu0 %v6774, 64
    %v6873 = vpop.permute.xlu0 %6872
    %v6874 = vsel %vm190, %v6873, 0
    %6876 = vmatprep.subr.mxu0 0.0
    %6877 = vmatpush1.msra.mxu0 %v5845
    %6878 = vmatprep.subr.mxu0 0.0
    %6879 = vmatpush1.msra.mxu0 %v5846
    %6880 = vmatprep.subr.mxu0 0.0
    %6881 = vmatpush1.msra.mxu0 %v5847
    %6882 = vmatprep.subr.mxu0 0.0
    %6883 = vmatpush1.msra.mxu0 %v5848
    %6884 = vmatprep.subr.mxu0 0.0
    %6885 = vmatpush1.msra.mxu0 0.0
    %6886 = vmatprep.subr.mxu0 0.0
    %6887 = vmatpush1.msra.mxu0 0.0
    %6888 = vmatprep.subr.mxu0 0.0
    %6889 = vmatpush1.msra.mxu0 0.0
    %6890 = vmatprep.subr.mxu0 0.0
    %6891 = vmatpush1.msra.mxu0 0.0
    %6892 = vmatprep.subr.mxu0 0.0
    %6893 = vmatpush1.msra.mxu0 0.0
    %6894 = vmatprep.subr.mxu0 0.0
    %6895 = vmatpush1.msra.mxu0 0.0
    %6896 = vmatprep.subr.mxu0 0.0
    %6897 = vmatpush1.msra.mxu0 0.0
    %6898 = vmatprep.subr.mxu0 0.0
    %6899 = vmatpush1.msra.mxu0 0.0
    %6900 = vmatprep.subr.mxu0 0.0
    %6901 = vmatpush1.msra.mxu0 0.0
    %6902 = vmatprep.subr.mxu0 0.0
    %6903 = vmatpush1.msra.mxu0 0.0
    %6904 = vmatprep.subr.mxu0 0.0
    %6905 = vmatpush1.msra.mxu0 0.0
    %6906 = vmatprep.subr.mxu0 0.0
    %6907 = vmatpush1.msra.mxu0 0.0
    %6908 = vmatprep.subr.mxu0 0.0
    %6909 = vmatpush1.msra.mxu0 0.0
    %6910 = vmatprep.subr.mxu0 0.0
    %6911 = vmatpush1.msra.mxu0 0.0
    %6912 = vmatprep.subr.mxu0 0.0
    %6913 = vmatpush1.msra.mxu0 0.0
    %6914 = vmatprep.subr.mxu0 0.0
    %6915 = vmatpush1.msra.mxu0 0.0
    %6916 = vmatprep.subr.mxu0 0.0
    %6917 = vmatpush1.msra.mxu0 0.0
    %6918 = vmatprep.subr.mxu0 0.0
    %6919 = vmatpush1.msra.mxu0 0.0
    %6920 = vmatprep.subr.mxu0 0.0
    %6921 = vmatpush1.msra.mxu0 0.0
    %6922 = vmatprep.subr.mxu0 0.0
    %6923 = vmatpush1.msra.mxu0 0.0
    %6924 = vmatprep.subr.mxu0 0.0
    %6925 = vmatpush1.msra.mxu0 0.0
    %6926 = vmatprep.subr.mxu0 0.0
    %6927 = vmatpush1.msra.mxu0 0.0
    %6928 = vmatprep.subr.mxu0 0.0
    %6929 = vmatpush1.msra.mxu0 0.0
    %6930 = vmatprep.subr.mxu0 0.0
    %6931 = vmatpush1.msra.mxu0 0.0
    %6932 = vmatprep.subr.mxu0 0.0
    %6933 = vmatpush1.msra.mxu0 0.0
    %6934 = vmatprep.subr.mxu0 0.0
    %6935 = vmatpush1.msra.mxu0 0.0
    %6936 = vmatprep.subr.mxu0 0.0
    %6937 = vmatpush1.msra.mxu0 0.0
    %6938 = vmatprep.subr.mxu0 0.0
    %6939 = vmatpush1.msra.mxu0 0.0
    %6940 = vmatprep.mubr.f32.mxu0 0.0
    %6941 = vmatmul.mubr.f32.gmra.mrb[0].mxu0 %v6874
    %v6942 = vpop.f32.mrb[0].mxu0
    %v6943 = vadd.f32 0.0, %v6942
    %v6944 = vpop.f32.mrb[0].mxu0
    %6945 = vdwg.mxu0
    %6947 = vrot.lane.b32.xlu0 %v6870, 64
    %v6948 = vpop.permute.xlu0 %6947
    %v6949 = vsel %vm190, %v6948, 0
    %6951 = vmatprep.subr.mxu0 0.0
    %6952 = vmatpush1.msra.mxu0 %v5837
    %6953 = vmatprep.subr.mxu0 0.0
    %6954 = vmatpush1.msra.mxu0 %v5838
    %6955 = vmatprep.subr.mxu0 0.0
    %6956 = vmatpush1.msra.mxu0 %v5839
    %6957 = vmatprep.subr.mxu0 0.0
    %6958 = vmatpush1.msra.mxu0 %v5840
    %6959 = vmatprep.subr.mxu0 0.0
    %6960 = vmatpush1.msra.mxu0 0.0
    %6961 = vmatprep.subr.mxu0 0.0
    %6962 = vmatpush1.msra.mxu0 0.0
    %6963 = vmatprep.subr.mxu0 0.0
    %6964 = vmatpush1.msra.mxu0 0.0
    %6965 = vmatprep.subr.mxu0 0.0
    %6966 = vmatpush1.msra.mxu0 0.0
    %6967 = vmatprep.subr.mxu0 0.0
    %6968 = vmatpush1.msra.mxu0 0.0
    %6969 = vmatprep.subr.mxu0 0.0
    %6970 = vmatpush1.msra.mxu0 0.0
    %6971 = vmatprep.subr.mxu0 0.0
    %6972 = vmatpush1.msra.mxu0 0.0
    %6973 = vmatprep.subr.mxu0 0.0
    %6974 = vmatpush1.msra.mxu0 0.0
    %6975 = vmatprep.subr.mxu0 0.0
    %6976 = vmatpush1.msra.mxu0 0.0
    %6977 = vmatprep.subr.mxu0 0.0
    %6978 = vmatpush1.msra.mxu0 0.0
    %6979 = vmatprep.subr.mxu0 0.0
    %6980 = vmatpush1.msra.mxu0 0.0
    %6981 = vmatprep.subr.mxu0 0.0
    %6982 = vmatpush1.msra.mxu0 0.0
    %6983 = vmatprep.subr.mxu0 0.0
    %6984 = vmatpush1.msra.mxu0 0.0
    %6985 = vmatprep.subr.mxu0 0.0
    %6986 = vmatpush1.msra.mxu0 0.0
    %6987 = vmatprep.subr.mxu0 0.0
    %6988 = vmatpush1.msra.mxu0 0.0
    %6989 = vmatprep.subr.mxu0 0.0
    %6990 = vmatpush1.msra.mxu0 0.0
    %6991 = vmatprep.subr.mxu0 0.0
    %6992 = vmatpush1.msra.mxu0 0.0
    %6993 = vmatprep.subr.mxu0 0.0
    %6994 = vmatpush1.msra.mxu0 0.0
    %6995 = vmatprep.subr.mxu0 0.0
    %6996 = vmatpush1.msra.mxu0 0.0
    %6997 = vmatprep.subr.mxu0 0.0
    %6998 = vmatpush1.msra.mxu0 0.0
    %6999 = vmatprep.subr.mxu0 0.0
    %7000 = vmatpush1.msra.mxu0 0.0
    %7001 = vmatprep.subr.mxu0 0.0
    %7002 = vmatpush1.msra.mxu0 0.0
    %7003 = vmatprep.subr.mxu0 0.0
    %7004 = vmatpush1.msra.mxu0 0.0
    %7005 = vmatprep.subr.mxu0 0.0
    %7006 = vmatpush1.msra.mxu0 0.0
    %7007 = vmatprep.subr.mxu0 0.0
    %7008 = vmatpush1.msra.mxu0 0.0
    %7009 = vmatprep.subr.mxu0 0.0
    %7010 = vmatpush1.msra.mxu0 0.0
    %7011 = vmatprep.subr.mxu0 0.0
    %7012 = vmatpush1.msra.mxu0 0.0
    %7013 = vmatprep.subr.mxu0 0.0
    %7014 = vmatpush1.msra.mxu0 0.0
    %7015 = vmatprep.mubr.f32.mxu0 0.0
    %7016 = vmatmul.mubr.f32.gmra.mrb[0].mxu0 %v6949
    %v7017 = vpop.f32.mrb[0].mxu0
    %v7018 = vadd.f32 %v6943, %v7017
    %v7019 = vpop.f32.mrb[0].mxu0
    %7020 = vdwg.mxu0
    %v7021 = vadd.f32 %v7018, %v6206
    %v7022 = vxor.u32 %v7021, 2147483648
    %v7023 = vmul.f32 %v7022, 1.442695
    %v7024 = vpow.pop %v7023
    %v7025 = vadd.f32 %v7024, 1.0
    %v7026 = vrcp.pop %v7025
    %v7027 = vmul.f32 1.0, %v7026
    %v7028 = vtanh.pop %v7021
    %v7029 = vmul.f32 %v7027, %v6768
    %7031 = vrot.lane.b32.xlu0 %v7028, 32
    %v7032 = vpop.permute.xlu0 %7031
    %v7034 = vmul.f32 %v7027, %v7032
    %7036 = vrot.lane.b32.xlu0 %v7034, 32
    %v7037 = vpop.permute.xlu0 %7036
    %v7039 = vadd.f32 %v7029, %v7037
    %v7040 = vtanh.pop %v7039
    %7042 = vrot.lane.b32.xlu0 %v7040, 32
    %v7043 = vpop.permute.xlu0 %7042
    %v7045 = vmul.f32 %v7027, %v7043
    %v7046 = vld [vmem:[#allocation2 + $0x8] sm:$0x3]
    %7047 = vmatprep.subr.mxu0 0.0
    %7048 = vmatpush1.msra.mxu0 %v5841
    %7049 = vmatprep.subr.mxu0 0.0
    %7050 = vmatpush1.msra.mxu0 %v5842
    %7051 = vmatprep.subr.mxu0 0.0
    %7052 = vmatpush1.msra.mxu0 %v5843
    %7053 = vmatprep.subr.mxu0 0.0
    %7054 = vmatpush1.msra.mxu0 %v5844
    %7055 = vmatprep.subr.mxu0 0.0
    %7056 = vmatpush1.msra.mxu0 0.0
    %7057 = vmatprep.subr.mxu0 0.0
    %7058 = vmatpush1.msra.mxu0 0.0
    %7059 = vmatprep.subr.mxu0 0.0
    %7060 = vmatpush1.msra.mxu0 0.0
    %7061 = vmatprep.subr.mxu0 0.0
    %7062 = vmatpush1.msra.mxu0 0.0
    %7063 = vmatprep.subr.mxu0 0.0
    %7064 = vmatpush1.msra.mxu0 0.0
    %7065 = vmatprep.subr.mxu0 0.0
    %7066 = vmatpush1.msra.mxu0 0.0
    %7067 = vmatprep.subr.mxu0 0.0
    %7068 = vmatpush1.msra.mxu0 0.0
    %7069 = vmatprep.subr.mxu0 0.0
    %7070 = vmatpush1.msra.mxu0 0.0
    %7071 = vmatprep.subr.mxu0 0.0
    %7072 = vmatpush1.msra.mxu0 0.0
    %7073 = vmatprep.subr.mxu0 0.0
    %7074 = vmatpush1.msra.mxu0 0.0
    %7075 = vmatprep.subr.mxu0 0.0
    %7076 = vmatpush1.msra.mxu0 0.0
    %7077 = vmatprep.subr.mxu0 0.0
    %7078 = vmatpush1.msra.mxu0 0.0
    %7079 = vmatprep.subr.mxu0 0.0
    %7080 = vmatpush1.msra.mxu0 0.0
    %7081 = vmatprep.subr.mxu0 0.0
    %7082 = vmatpush1.msra.mxu0 0.0
    %7083 = vmatprep.subr.mxu0 0.0
    %7084 = vmatpush1.msra.mxu0 0.0
    %7085 = vmatprep.subr.mxu0 0.0
    %7086 = vmatpush1.msra.mxu0 0.0
    %7087 = vmatprep.subr.mxu0 0.0
    %7088 = vmatpush1.msra.mxu0 0.0
    %7089 = vmatprep.subr.mxu0 0.0
    %7090 = vmatpush1.msra.mxu0 0.0
    %7091 = vmatprep.subr.mxu0 0.0
    %7092 = vmatpush1.msra.mxu0 0.0
    %7093 = vmatprep.subr.mxu0 0.0
    %7094 = vmatpush1.msra.mxu0 0.0
    %7095 = vmatprep.subr.mxu0 0.0
    %7096 = vmatpush1.msra.mxu0 0.0
    %7097 = vmatprep.subr.mxu0 0.0
    %7098 = vmatpush1.msra.mxu0 0.0
    %7099 = vmatprep.subr.mxu0 0.0
    %7100 = vmatpush1.msra.mxu0 0.0
    %7101 = vmatprep.subr.mxu0 0.0
    %7102 = vmatpush1.msra.mxu0 0.0
    %7103 = vmatprep.subr.mxu0 0.0
    %7104 = vmatpush1.msra.mxu0 0.0
    %7105 = vmatprep.subr.mxu0 0.0
    %7106 = vmatpush1.msra.mxu0 0.0
    %7107 = vmatprep.subr.mxu0 0.0
    %7108 = vmatpush1.msra.mxu0 0.0
    %7109 = vmatprep.subr.mxu0 0.0
    %7110 = vmatpush1.msra.mxu0 0.0
    %7111 = vmatprep.mubr.f32.mxu0 0.0
    %7112 = vmatmul.mubr.f32.gmra.mrb[0].mxu0 %v6949
    %v7113 = vpop.f32.mrb[0].mxu0
    %v7114 = vadd.f32 0.0, %v7113
    %v7115 = vpop.f32.mrb[0].mxu0
    %7116 = vdwg.mxu0
    %v7117 = vadd.f32 %v7046, %v7114
    %v7118 = vxor.u32 %v7117, 2147483648
    %v7119 = vmul.f32 %v7118, 1.442695
    %v7120 = vpow.pop %v7119
    %v7121 = vadd.f32 %v7120, 1.0
    %v7122 = vrcp.pop %v7121
    %v7123 = vmul.f32 1.0, %v7122
    %v7124 = vtanh.pop %v7117
    %v7125 = vmul.f32 %v7123, %v6864
    %7127 = vrot.lane.b32.xlu0 %v7124, 32
    %v7128 = vpop.permute.xlu0 %7127
    %v7130 = vmul.f32 %v7123, %v7128
    %7132 = vrot.lane.b32.xlu0 %v7130, 32
    %v7133 = vpop.permute.xlu0 %7132
    %v7135 = vadd.f32 %v7125, %v7133
    %v7136 = vtanh.pop %v7135
    %7138 = vrot.lane.b32.xlu0 %v7136, 32
    %v7139 = vpop.permute.xlu0 %7138
    %v7141 = vmul.f32 %v7123, %v7139
    %7143 = vrot.lane.b32.xlu0 %v7045, 64
    %v7144 = vpop.permute.xlu0 %7143
    %v7145 = vsel %vm190, %v7144, 0
    %7147 = vmatprep.subr.mxu0 0.0
    %7148 = vmatpush1.msra.mxu0 %v5845
    %7149 = vmatprep.subr.mxu0 0.0
    %7150 = vmatpush1.msra.mxu0 %v5846
    %7151 = vmatprep.subr.mxu0 0.0
    %7152 = vmatpush1.msra.mxu0 %v5847
    %7153 = vmatprep.subr.mxu0 0.0
    %7154 = vmatpush1.msra.mxu0 %v5848
    %7155 = vmatprep.subr.mxu0 0.0
    %7156 = vmatpush1.msra.mxu0 0.0
    %7157 = vmatprep.subr.mxu0 0.0
    %7158 = vmatpush1.msra.mxu0 0.0
    %7159 = vmatprep.subr.mxu0 0.0
    %7160 = vmatpush1.msra.mxu0 0.0
    %7161 = vmatprep.subr.mxu0 0.0
    %7162 = vmatpush1.msra.mxu0 0.0
    %7163 = vmatprep.subr.mxu0 0.0
    %7164 = vmatpush1.msra.mxu0 0.0
    %7165 = vmatprep.subr.mxu0 0.0
    %7166 = vmatpush1.msra.mxu0 0.0
    %7167 = vmatprep.subr.mxu0 0.0
    %7168 = vmatpush1.msra.mxu0 0.0
    %7169 = vmatprep.subr.mxu0 0.0
    %7170 = vmatpush1.msra.mxu0 0.0
    %7171 = vmatprep.subr.mxu0 0.0
    %7172 = vmatpush1.msra.mxu0 0.0
    %7173 = vmatprep.subr.mxu0 0.0
    %7174 = vmatpush1.msra.mxu0 0.0
    %7175 = vmatprep.subr.mxu0 0.0
    %7176 = vmatpush1.msra.mxu0 0.0
    %7177 = vmatprep.subr.mxu0 0.0
    %7178 = vmatpush1.msra.mxu0 0.0
    %7179 = vmatprep.subr.mxu0 0.0
    %7180 = vmatpush1.msra.mxu0 0.0
    %7181 = vmatprep.subr.mxu0 0.0
    %7182 = vmatpush1.msra.mxu0 0.0
    %7183 = vmatprep.subr.mxu0 0.0
    %7184 = vmatpush1.msra.mxu0 0.0
    %7185 = vmatprep.subr.mxu0 0.0
    %7186 = vmatpush1.msra.mxu0 0.0
    %7187 = vmatprep.subr.mxu0 0.0
    %7188 = vmatpush1.msra.mxu0 0.0
    %7189 = vmatprep.subr.mxu0 0.0
    %7190 = vmatpush1.msra.mxu0 0.0
    %7191 = vmatprep.subr.mxu0 0.0
    %7192 = vmatpush1.msra.mxu0 0.0
    %7193 = vmatprep.subr.mxu0 0.0
    %7194 = vmatpush1.msra.mxu0 0.0
    %7195 = vmatprep.subr.mxu0 0.0
    %7196 = vmatpush1.msra.mxu0 0.0
    %7197 = vmatprep.subr.mxu0 0.0
    %7198 = vmatpush1.msra.mxu0 0.0
    %7199 = vmatprep.subr.mxu0 0.0
    %7200 = vmatpush1.msra.mxu0 0.0
    %7201 = vmatprep.subr.mxu0 0.0
    %7202 = vmatpush1.msra.mxu0 0.0
    %7203 = vmatprep.subr.mxu0 0.0
    %7204 = vmatpush1.msra.mxu0 0.0
    %7205 = vmatprep.subr.mxu0 0.0
    %7206 = vmatpush1.msra.mxu0 0.0
    %7207 = vmatprep.subr.mxu0 0.0
    %7208 = vmatpush1.msra.mxu0 0.0
    %7209 = vmatprep.subr.mxu0 0.0
    %7210 = vmatpush1.msra.mxu0 0.0
    %7211 = vmatprep.mubr.f32.mxu0 0.0
    %7212 = vmatmul.mubr.f32.gmra.mrb[0].mxu0 %v7145
    %v7213 = vpop.f32.mrb[0].mxu0
    %v7214 = vadd.f32 0.0, %v7213
    %v7215 = vpop.f32.mrb[0].mxu0
    %7216 = vdwg.mxu0
    %7218 = vrot.lane.b32.xlu0 %v7141, 64
    %v7219 = vpop.permute.xlu0 %7218
    %v7220 = vsel %vm190, %v7219, 0
    %7222 = vmatprep.subr.mxu0 0.0
    %7223 = vmatpush1.msra.mxu0 %v5837
    %7224 = vmatprep.subr.mxu0 0.0
    %7225 = vmatpush1.msra.mxu0 %v5838
    %7226 = vmatprep.subr.mxu0 0.0
    %7227 = vmatpush1.msra.mxu0 %v5839
    %7228 = vmatprep.subr.mxu0 0.0
    %7229 = vmatpush1.msra.mxu0 %v5840
    %7230 = vmatprep.subr.mxu0 0.0
    %7231 = vmatpush1.msra.mxu0 0.0
    %7232 = vmatprep.subr.mxu0 0.0
    %7233 = vmatpush1.msra.mxu0 0.0
    %7234 = vmatprep.subr.mxu0 0.0
    %7235 = vmatpush1.msra.mxu0 0.0
    %7236 = vmatprep.subr.mxu0 0.0
    %7237 = vmatpush1.msra.mxu0 0.0
    %7238 = vmatprep.subr.mxu0 0.0
    %7239 = vmatpush1.msra.mxu0 0.0
    %7240 = vmatprep.subr.mxu0 0.0
    %7241 = vmatpush1.msra.mxu0 0.0
    %7242 = vmatprep.subr.mxu0 0.0
    %7243 = vmatpush1.msra.mxu0 0.0
    %7244 = vmatprep.subr.mxu0 0.0
    %7245 = vmatpush1.msra.mxu0 0.0
    %7246 = vmatprep.subr.mxu0 0.0
    %7247 = vmatpush1.msra.mxu0 0.0
    %7248 = vmatprep.subr.mxu0 0.0
    %7249 = vmatpush1.msra.mxu0 0.0
    %7250 = vmatprep.subr.mxu0 0.0
    %7251 = vmatpush1.msra.mxu0 0.0
    %7252 = vmatprep.subr.mxu0 0.0
    %7253 = vmatpush1.msra.mxu0 0.0
    %7254 = vmatprep.subr.mxu0 0.0
    %7255 = vmatpush1.msra.mxu0 0.0
    %7256 = vmatprep.subr.mxu0 0.0
    %7257 = vmatpush1.msra.mxu0 0.0
    %7258 = vmatprep.subr.mxu0 0.0
    %7259 = vmatpush1.msra.mxu0 0.0
    %7260 = vmatprep.subr.mxu0 0.0
    %7261 = vmatpush1.msra.mxu0 0.0
    %7262 = vmatprep.subr.mxu0 0.0
    %7263 = vmatpush1.msra.mxu0 0.0
    %7264 = vmatprep.subr.mxu0 0.0
    %7265 = vmatpush1.msra.mxu0 0.0
    %7266 = vmatprep.subr.mxu0 0.0
    %7267 = vmatpush1.msra.mxu0 0.0
    %7268 = vmatprep.subr.mxu0 0.0
    %7269 = vmatpush1.msra.mxu0 0.0
    %7270 = vmatprep.subr.mxu0 0.0
    %7271 = vmatpush1.msra.mxu0 0.0
    %7272 = vmatprep.subr.mxu0 0.0
    %7273 = vmatpush1.msra.mxu0 0.0
    %7274 = vmatprep.subr.mxu0 0.0
    %7275 = vmatpush1.msra.mxu0 0.0
    %7276 = vmatprep.subr.mxu0 0.0
    %7277 = vmatpush1.msra.mxu0 0.0
    %7278 = vmatprep.subr.mxu0 0.0
    %7279 = vmatpush1.msra.mxu0 0.0
    %7280 = vmatprep.subr.mxu0 0.0
    %7281 = vmatpush1.msra.mxu0 0.0
    %7282 = vmatprep.subr.mxu0 0.0
    %7283 = vmatpush1.msra.mxu0 0.0
    %7284 = vmatprep.subr.mxu0 0.0
    %7285 = vmatpush1.msra.mxu0 0.0
    %7286 = vmatprep.mubr.f32.mxu0 0.0
    %7287 = vmatmul.mubr.f32.gmra.mrb[0].mxu0 %v7220
    %v7288 = vpop.f32.mrb[0].mxu0
    %v7289 = vadd.f32 %v7214, %v7288
    %v7290 = vpop.f32.mrb[0].mxu0
    %7291 = vdwg.mxu0
    %v7292 = vadd.f32 %v7289, %v6206
    %v7293 = vxor.u32 %v7292, 2147483648
    %v7294 = vmul.f32 %v7293, 1.442695
    %v7295 = vpow.pop %v7294
    %v7296 = vadd.f32 %v7295, 1.0
    %v7297 = vrcp.pop %v7296
    %v7298 = vmul.f32 1.0, %v7297
    %v7299 = vtanh.pop %v7292
    %v7300 = vmul.f32 %v7298, %v7039
    %7302 = vrot.lane.b32.xlu0 %v7299, 32
    %v7303 = vpop.permute.xlu0 %7302
    %v7305 = vmul.f32 %v7298, %v7303
    %7307 = vrot.lane.b32.xlu0 %v7305, 32
    %v7308 = vpop.permute.xlu0 %7307
    %v7310 = vadd.f32 %v7300, %v7308
    %v7311 = vtanh.pop %v7310
    %7313 = vrot.lane.b32.xlu0 %v7311, 32
    %v7314 = vpop.permute.xlu0 %7313
    %v7316 = vmul.f32 %v7298, %v7314
    %v7317 = vld [vmem:[#allocation2 + $0xa] sm:$0x3]
    %7318 = vmatprep.subr.mxu0 0.0
    %7319 = vmatpush1.msra.mxu0 %v5841
    %7320 = vmatprep.subr.mxu0 0.0
    %7321 = vmatpush1.msra.mxu0 %v5842
    %7322 = vmatprep.subr.mxu0 0.0
    %7323 = vmatpush1.msra.mxu0 %v5843
    %7324 = vmatprep.subr.mxu0 0.0
    %7325 = vmatpush1.msra.mxu0 %v5844
    %7326 = vmatprep.subr.mxu0 0.0
    %7327 = vmatpush1.msra.mxu0 0.0
    %7328 = vmatprep.subr.mxu0 0.0
    %7329 = vmatpush1.msra.mxu0 0.0
    %7330 = vmatprep.subr.mxu0 0.0
    %7331 = vmatpush1.msra.mxu0 0.0
    %7332 = vmatprep.subr.mxu0 0.0
    %7333 = vmatpush1.msra.mxu0 0.0
    %7334 = vmatprep.subr.mxu0 0.0
    %7335 = vmatpush1.msra.mxu0 0.0
    %7336 = vmatprep.subr.mxu0 0.0
    %7337 = vmatpush1.msra.mxu0 0.0
    %7338 = vmatprep.subr.mxu0 0.0
    %7339 = vmatpush1.msra.mxu0 0.0
    %7340 = vmatprep.subr.mxu0 0.0
    %7341 = vmatpush1.msra.mxu0 0.0
    %7342 = vmatprep.subr.mxu0 0.0
    %7343 = vmatpush1.msra.mxu0 0.0
    %7344 = vmatprep.subr.mxu0 0.0
    %7345 = vmatpush1.msra.mxu0 0.0
    %7346 = vmatprep.subr.mxu0 0.0
    %7347 = vmatpush1.msra.mxu0 0.0
    %7348 = vmatprep.subr.mxu0 0.0
    %7349 = vmatpush1.msra.mxu0 0.0
    %7350 = vmatprep.subr.mxu0 0.0
    %7351 = vmatpush1.msra.mxu0 0.0
    %7352 = vmatprep.subr.mxu0 0.0
    %7353 = vmatpush1.msra.mxu0 0.0
    %7354 = vmatprep.subr.mxu0 0.0
    %7355 = vmatpush1.msra.mxu0 0.0
    %7356 = vmatprep.subr.mxu0 0.0
    %7357 = vmatpush1.msra.mxu0 0.0
    %7358 = vmatprep.subr.mxu0 0.0
    %7359 = vmatpush1.msra.mxu0 0.0
    %7360 = vmatprep.subr.mxu0 0.0
    %7361 = vmatpush1.msra.mxu0 0.0
    %7362 = vmatprep.subr.mxu0 0.0
    %7363 = vmatpush1.msra.mxu0 0.0
    %7364 = vmatprep.subr.mxu0 0.0
    %7365 = vmatpush1.msra.mxu0 0.0
    %7366 = vmatprep.subr.mxu0 0.0
    %7367 = vmatpush1.msra.mxu0 0.0
    %7368 = vmatprep.subr.mxu0 0.0
    %7369 = vmatpush1.msra.mxu0 0.0
    %7370 = vmatprep.subr.mxu0 0.0
    %7371 = vmatpush1.msra.mxu0 0.0
    %7372 = vmatprep.subr.mxu0 0.0
    %7373 = vmatpush1.msra.mxu0 0.0
    %7374 = vmatprep.subr.mxu0 0.0
    %7375 = vmatpush1.msra.mxu0 0.0
    %7376 = vmatprep.subr.mxu0 0.0
    %7377 = vmatpush1.msra.mxu0 0.0
    %7378 = vmatprep.subr.mxu0 0.0
    %7379 = vmatpush1.msra.mxu0 0.0
    %7380 = vmatprep.subr.mxu0 0.0
    %7381 = vmatpush1.msra.mxu0 0.0
    %7382 = vmatprep.mubr.f32.mxu0 0.0
    %7383 = vmatmul.mubr.f32.gmra.mrb[0].mxu0 %v7220
    %v7384 = vpop.f32.mrb[0].mxu0
    %v7385 = vadd.f32 0.0, %v7384
    %v7386 = vpop.f32.mrb[0].mxu0
    %7387 = vdwg.mxu0
    %v7388 = vadd.f32 %v7317, %v7385
    %v7389 = vxor.u32 %v7388, 2147483648
    %v7390 = vmul.f32 %v7389, 1.442695
    %v7391 = vpow.pop %v7390
    %v7392 = vadd.f32 %v7391, 1.0
    %v7393 = vrcp.pop %v7392
    %v7394 = vmul.f32 1.0, %v7393
    %v7395 = vtanh.pop %v7388
    %v7396 = vmul.f32 %v7394, %v7135
    %7398 = vrot.lane.b32.xlu0 %v7395, 32
    %v7399 = vpop.permute.xlu0 %7398
    %v7401 = vmul.f32 %v7394, %v7399
    %7403 = vrot.lane.b32.xlu0 %v7401, 32
    %v7404 = vpop.permute.xlu0 %7403
    %v7406 = vadd.f32 %v7396, %v7404
    %v7407 = vtanh.pop %v7406
    %7409 = vrot.lane.b32.xlu0 %v7407, 32
    %v7410 = vpop.permute.xlu0 %7409
    %v7412 = vmul.f32 %v7394, %v7410
    %7414 = vrot.lane.b32.xlu0 %v7316, 64
    %v7415 = vpop.permute.xlu0 %7414
    %v7416 = vsel %vm190, %v7415, 0
    %7418 = vmatprep.subr.mxu0 0.0
    %7419 = vmatpush1.msra.mxu0 %v5845
    %7420 = vmatprep.subr.mxu0 0.0
    %7421 = vmatpush1.msra.mxu0 %v5846
    %7422 = vmatprep.subr.mxu0 0.0
    %7423 = vmatpush1.msra.mxu0 %v5847
    %7424 = vmatprep.subr.mxu0 0.0
    %7425 = vmatpush1.msra.mxu0 %v5848
    %7426 = vmatprep.subr.mxu0 0.0
    %7427 = vmatpush1.msra.mxu0 0.0
    %7428 = vmatprep.subr.mxu0 0.0
    %7429 = vmatpush1.msra.mxu0 0.0
    %7430 = vmatprep.subr.mxu0 0.0
    %7431 = vmatpush1.msra.mxu0 0.0
    %7432 = vmatprep.subr.mxu0 0.0
    %7433 = vmatpush1.msra.mxu0 0.0
    %7434 = vmatprep.subr.mxu0 0.0
    %7435 = vmatpush1.msra.mxu0 0.0
    %7436 = vmatprep.subr.mxu0 0.0
    %7437 = vmatpush1.msra.mxu0 0.0
    %7438 = vmatprep.subr.mxu0 0.0
    %7439 = vmatpush1.msra.mxu0 0.0
    %7440 = vmatprep.subr.mxu0 0.0
    %7441 = vmatpush1.msra.mxu0 0.0
    %7442 = vmatprep.subr.mxu0 0.0
    %7443 = vmatpush1.msra.mxu0 0.0
    %7444 = vmatprep.subr.mxu0 0.0
    %7445 = vmatpush1.msra.mxu0 0.0
    %7446 = vmatprep.subr.mxu0 0.0
    %7447 = vmatpush1.msra.mxu0 0.0
    %7448 = vmatprep.subr.mxu0 0.0
    %7449 = vmatpush1.msra.mxu0 0.0
    %7450 = vmatprep.subr.mxu0 0.0
    %7451 = vmatpush1.msra.mxu0 0.0
    %7452 = vmatprep.subr.mxu0 0.0
    %7453 = vmatpush1.msra.mxu0 0.0
    %7454 = vmatprep.subr.mxu0 0.0
    %7455 = vmatpush1.msra.mxu0 0.0
    %7456 = vmatprep.subr.mxu0 0.0
    %7457 = vmatpush1.msra.mxu0 0.0
    %7458 = vmatprep.subr.mxu0 0.0
    %7459 = vmatpush1.msra.mxu0 0.0
    %7460 = vmatprep.subr.mxu0 0.0
    %7461 = vmatpush1.msra.mxu0 0.0
    %7462 = vmatprep.subr.mxu0 0.0
    %7463 = vmatpush1.msra.mxu0 0.0
    %7464 = vmatprep.subr.mxu0 0.0
    %7465 = vmatpush1.msra.mxu0 0.0
    %7466 = vmatprep.subr.mxu0 0.0
    %7467 = vmatpush1.msra.mxu0 0.0
    %7468 = vmatprep.subr.mxu0 0.0
    %7469 = vmatpush1.msra.mxu0 0.0
    %7470 = vmatprep.subr.mxu0 0.0
    %7471 = vmatpush1.msra.mxu0 0.0
    %7472 = vmatprep.subr.mxu0 0.0
    %7473 = vmatpush1.msra.mxu0 0.0
    %7474 = vmatprep.subr.mxu0 0.0
    %7475 = vmatpush1.msra.mxu0 0.0
    %7476 = vmatprep.subr.mxu0 0.0
    %7477 = vmatpush1.msra.mxu0 0.0
    %7478 = vmatprep.subr.mxu0 0.0
    %7479 = vmatpush1.msra.mxu0 0.0
    %7480 = vmatprep.subr.mxu0 0.0
    %7481 = vmatpush1.msra.mxu0 0.0
    %7482 = vmatprep.mubr.f32.mxu0 0.0
    %7483 = vmatmul.mubr.f32.gmra.mrb[0].mxu0 %v7416
    %v7484 = vpop.f32.mrb[0].mxu0
    %v7485 = vadd.f32 0.0, %v7484
    %v7486 = vpop.f32.mrb[0].mxu0
    %7487 = vdwg.mxu0
    %7489 = vrot.lane.b32.xlu0 %v7412, 64
    %v7490 = vpop.permute.xlu0 %7489
    %v7491 = vsel %vm190, %v7490, 0
    %7493 = vmatprep.subr.mxu0 0.0
    %7494 = vmatpush1.msra.mxu0 %v5837
    %7495 = vmatprep.subr.mxu0 0.0
    %7496 = vmatpush1.msra.mxu0 %v5838
    %7497 = vmatprep.subr.mxu0 0.0
    %7498 = vmatpush1.msra.mxu0 %v5839
    %7499 = vmatprep.subr.mxu0 0.0
    %7500 = vmatpush1.msra.mxu0 %v5840
    %7501 = vmatprep.subr.mxu0 0.0
    %7502 = vmatpush1.msra.mxu0 0.0
    %7503 = vmatprep.subr.mxu0 0.0
    %7504 = vmatpush1.msra.mxu0 0.0
    %7505 = vmatprep.subr.mxu0 0.0
    %7506 = vmatpush1.msra.mxu0 0.0
    %7507 = vmatprep.subr.mxu0 0.0
    %7508 = vmatpush1.msra.mxu0 0.0
    %7509 = vmatprep.subr.mxu0 0.0
    %7510 = vmatpush1.msra.mxu0 0.0
    %7511 = vmatprep.subr.mxu0 0.0
    %7512 = vmatpush1.msra.mxu0 0.0
    %7513 = vmatprep.subr.mxu0 0.0
    %7514 = vmatpush1.msra.mxu0 0.0
    %7515 = vmatprep.subr.mxu0 0.0
    %7516 = vmatpush1.msra.mxu0 0.0
    %7517 = vmatprep.subr.mxu0 0.0
    %7518 = vmatpush1.msra.mxu0 0.0
    %7519 = vmatprep.subr.mxu0 0.0
    %7520 = vmatpush1.msra.mxu0 0.0
    %7521 = vmatprep.subr.mxu0 0.0
    %7522 = vmatpush1.msra.mxu0 0.0
    %7523 = vmatprep.subr.mxu0 0.0
    %7524 = vmatpush1.msra.mxu0 0.0
    %7525 = vmatprep.subr.mxu0 0.0
    %7526 = vmatpush1.msra.mxu0 0.0
    %7527 = vmatprep.subr.mxu0 0.0
    %7528 = vmatpush1.msra.mxu0 0.0
    %7529 = vmatprep.subr.mxu0 0.0
    %7530 = vmatpush1.msra.mxu0 0.0
    %7531 = vmatprep.subr.mxu0 0.0
    %7532 = vmatpush1.msra.mxu0 0.0
    %7533 = vmatprep.subr.mxu0 0.0
    %7534 = vmatpush1.msra.mxu0 0.0
    %7535 = vmatprep.subr.mxu0 0.0
    %7536 = vmatpush1.msra.mxu0 0.0
    %7537 = vmatprep.subr.mxu0 0.0
    %7538 = vmatpush1.msra.mxu0 0.0
    %7539 = vmatprep.subr.mxu0 0.0
    %7540 = vmatpush1.msra.mxu0 0.0
    %7541 = vmatprep.subr.mxu0 0.0
    %7542 = vmatpush1.msra.mxu0 0.0
    %7543 = vmatprep.subr.mxu0 0.0
    %7544 = vmatpush1.msra.mxu0 0.0
    %7545 = vmatprep.subr.mxu0 0.0
    %7546 = vmatpush1.msra.mxu0 0.0
    %7547 = vmatprep.subr.mxu0 0.0
    %7548 = vmatpush1.msra.mxu0 0.0
    %7549 = vmatprep.subr.mxu0 0.0
    %7550 = vmatpush1.msra.mxu0 0.0
    %7551 = vmatprep.subr.mxu0 0.0
    %7552 = vmatpush1.msra.mxu0 0.0
    %7553 = vmatprep.subr.mxu0 0.0
    %7554 = vmatpush1.msra.mxu0 0.0
    %7555 = vmatprep.subr.mxu0 0.0
    %7556 = vmatpush1.msra.mxu0 0.0
    %7557 = vmatprep.mubr.f32.mxu0 0.0
    %7558 = vmatmul.mubr.f32.gmra.mrb[0].mxu0 %v7491
    %v7559 = vpop.f32.mrb[0].mxu0
    %v7560 = vadd.f32 %v7485, %v7559
    %v7561 = vpop.f32.mrb[0].mxu0
    %7562 = vdwg.mxu0
    %v7563 = vadd.f32 %v7560, %v6206
    %v7564 = vxor.u32 %v7563, 2147483648
    %v7565 = vmul.f32 %v7564, 1.442695
    %v7566 = vpow.pop %v7565
    %v7567 = vadd.f32 %v7566, 1.0
    %v7568 = vrcp.pop %v7567
    %v7569 = vmul.f32 1.0, %v7568
    %v7570 = vtanh.pop %v7563
    %v7571 = vmul.f32 %v7569, %v7310
    %7573 = vrot.lane.b32.xlu0 %v7570, 32
    %v7574 = vpop.permute.xlu0 %7573
    %v7576 = vmul.f32 %v7569, %v7574
    %7578 = vrot.lane.b32.xlu0 %v7576, 32
    %v7579 = vpop.permute.xlu0 %7578
    %v7581 = vadd.f32 %v7571, %v7579
    %v7582 = vtanh.pop %v7581
    %7584 = vrot.lane.b32.xlu0 %v7582, 32
    %v7585 = vpop.permute.xlu0 %7584
    %v7587 = vmul.f32 %v7569, %v7585
    %v7588 = vld [vmem:[#allocation2 + $0xc] sm:$0x3]
    %7589 = vmatprep.subr.mxu0 0.0
    %7590 = vmatpush1.msra.mxu0 %v5841
    %7591 = vmatprep.subr.mxu0 0.0
    %7592 = vmatpush1.msra.mxu0 %v5842
    %7593 = vmatprep.subr.mxu0 0.0
    %7594 = vmatpush1.msra.mxu0 %v5843
    %7595 = vmatprep.subr.mxu0 0.0
    %7596 = vmatpush1.msra.mxu0 %v5844
    %7597 = vmatprep.subr.mxu0 0.0
    %7598 = vmatpush1.msra.mxu0 0.0
    %7599 = vmatprep.subr.mxu0 0.0
    %7600 = vmatpush1.msra.mxu0 0.0
    %7601 = vmatprep.subr.mxu0 0.0
    %7602 = vmatpush1.msra.mxu0 0.0
    %7603 = vmatprep.subr.mxu0 0.0
    %7604 = vmatpush1.msra.mxu0 0.0
    %7605 = vmatprep.subr.mxu0 0.0
    %7606 = vmatpush1.msra.mxu0 0.0
    %7607 = vmatprep.subr.mxu0 0.0
    %7608 = vmatpush1.msra.mxu0 0.0
    %7609 = vmatprep.subr.mxu0 0.0
    %7610 = vmatpush1.msra.mxu0 0.0
    %7611 = vmatprep.subr.mxu0 0.0
    %7612 = vmatpush1.msra.mxu0 0.0
    %7613 = vmatprep.subr.mxu0 0.0
    %7614 = vmatpush1.msra.mxu0 0.0
    %7615 = vmatprep.subr.mxu0 0.0
    %7616 = vmatpush1.msra.mxu0 0.0
    %7617 = vmatprep.subr.mxu0 0.0
    %7618 = vmatpush1.msra.mxu0 0.0
    %7619 = vmatprep.subr.mxu0 0.0
    %7620 = vmatpush1.msra.mxu0 0.0
    %7621 = vmatprep.subr.mxu0 0.0
    %7622 = vmatpush1.msra.mxu0 0.0
    %7623 = vmatprep.subr.mxu0 0.0
    %7624 = vmatpush1.msra.mxu0 0.0
    %7625 = vmatprep.subr.mxu0 0.0
    %7626 = vmatpush1.msra.mxu0 0.0
    %7627 = vmatprep.subr.mxu0 0.0
    %7628 = vmatpush1.msra.mxu0 0.0
    %7629 = vmatprep.subr.mxu0 0.0
    %7630 = vmatpush1.msra.mxu0 0.0
    %7631 = vmatprep.subr.mxu0 0.0
    %7632 = vmatpush1.msra.mxu0 0.0
    %7633 = vmatprep.subr.mxu0 0.0
    %7634 = vmatpush1.msra.mxu0 0.0
    %7635 = vmatprep.subr.mxu0 0.0
    %7636 = vmatpush1.msra.mxu0 0.0
    %7637 = vmatprep.subr.mxu0 0.0
    %7638 = vmatpush1.msra.mxu0 0.0
    %7639 = vmatprep.subr.mxu0 0.0
    %7640 = vmatpush1.msra.mxu0 0.0
    %7641 = vmatprep.subr.mxu0 0.0
    %7642 = vmatpush1.msra.mxu0 0.0
    %7643 = vmatprep.subr.mxu0 0.0
    %7644 = vmatpush1.msra.mxu0 0.0
    %7645 = vmatprep.subr.mxu0 0.0
    %7646 = vmatpush1.msra.mxu0 0.0
    %7647 = vmatprep.subr.mxu0 0.0
    %7648 = vmatpush1.msra.mxu0 0.0
    %7649 = vmatprep.subr.mxu0 0.0
    %7650 = vmatpush1.msra.mxu0 0.0
    %7651 = vmatprep.subr.mxu0 0.0
    %7652 = vmatpush1.msra.mxu0 0.0
    %7653 = vmatprep.mubr.f32.mxu0 0.0
    %7654 = vmatmul.mubr.f32.gmra.mrb[0].mxu0 %v7491
    %v7655 = vpop.f32.mrb[0].mxu0
    %v7656 = vadd.f32 0.0, %v7655
    %v7657 = vpop.f32.mrb[0].mxu0
    %7658 = vdwg.mxu0
    %v7659 = vadd.f32 %v7588, %v7656
    %v7660 = vxor.u32 %v7659, 2147483648
    %v7661 = vmul.f32 %v7660, 1.442695
    %v7662 = vpow.pop %v7661
    %v7663 = vadd.f32 %v7662, 1.0
    %v7664 = vrcp.pop %v7663
    %v7665 = vmul.f32 1.0, %v7664
    %v7666 = vtanh.pop %v7659
    %v7667 = vmul.f32 %v7665, %v7406
    %7669 = vrot.lane.b32.xlu0 %v7666, 32
    %v7670 = vpop.permute.xlu0 %7669
    %v7672 = vmul.f32 %v7665, %v7670
    %7674 = vrot.lane.b32.xlu0 %v7672, 32
    %v7675 = vpop.permute.xlu0 %7674
    %v7677 = vadd.f32 %v7667, %v7675
    %v7678 = vtanh.pop %v7677
    %7680 = vrot.lane.b32.xlu0 %v7678, 32
    %v7681 = vpop.permute.xlu0 %7680
    %v7683 = vmul.f32 %v7665, %v7681
    %7685 = vrot.lane.b32.xlu0 %v7587, 64
    %v7686 = vpop.permute.xlu0 %7685
    %v7687 = vsel %vm190, %v7686, 0
    %7689 = vmatprep.subr.mxu0 0.0
    %7690 = vmatpush1.msra.mxu0 %v5845
    %7691 = vmatprep.subr.mxu0 0.0
    %7692 = vmatpush1.msra.mxu0 %v5846
    %7693 = vmatprep.subr.mxu0 0.0
    %7694 = vmatpush1.msra.mxu0 %v5847
    %7695 = vmatprep.subr.mxu0 0.0
    %7696 = vmatpush1.msra.mxu0 %v5848
    %7697 = vmatprep.subr.mxu0 0.0
    %7698 = vmatpush1.msra.mxu0 0.0
    %7699 = vmatprep.subr.mxu0 0.0
    %7700 = vmatpush1.msra.mxu0 0.0
    %7701 = vmatprep.subr.mxu0 0.0
    %7702 = vmatpush1.msra.mxu0 0.0
    %7703 = vmatprep.subr.mxu0 0.0
    %7704 = vmatpush1.msra.mxu0 0.0
    %7705 = vmatprep.subr.mxu0 0.0
    %7706 = vmatpush1.msra.mxu0 0.0
    %7707 = vmatprep.subr.mxu0 0.0
    %7708 = vmatpush1.msra.mxu0 0.0
    %7709 = vmatprep.subr.mxu0 0.0
    %7710 = vmatpush1.msra.mxu0 0.0
    %7711 = vmatprep.subr.mxu0 0.0
    %7712 = vmatpush1.msra.mxu0 0.0
    %7713 = vmatprep.subr.mxu0 0.0
    %7714 = vmatpush1.msra.mxu0 0.0
    %7715 = vmatprep.subr.mxu0 0.0
    %7716 = vmatpush1.msra.mxu0 0.0
    %7717 = vmatprep.subr.mxu0 0.0
    %7718 = vmatpush1.msra.mxu0 0.0
    %7719 = vmatprep.subr.mxu0 0.0
    %7720 = vmatpush1.msra.mxu0 0.0
    %7721 = vmatprep.subr.mxu0 0.0
    %7722 = vmatpush1.msra.mxu0 0.0
    %7723 = vmatprep.subr.mxu0 0.0
    %7724 = vmatpush1.msra.mxu0 0.0
    %7725 = vmatprep.subr.mxu0 0.0
    %7726 = vmatpush1.msra.mxu0 0.0
    %7727 = vmatprep.subr.mxu0 0.0
    %7728 = vmatpush1.msra.mxu0 0.0
    %7729 = vmatprep.subr.mxu0 0.0
    %7730 = vmatpush1.msra.mxu0 0.0
    %7731 = vmatprep.subr.mxu0 0.0
    %7732 = vmatpush1.msra.mxu0 0.0
    %7733 = vmatprep.subr.mxu0 0.0
    %7734 = vmatpush1.msra.mxu0 0.0
    %7735 = vmatprep.subr.mxu0 0.0
    %7736 = vmatpush1.msra.mxu0 0.0
    %7737 = vmatprep.subr.mxu0 0.0
    %7738 = vmatpush1.msra.mxu0 0.0
    %7739 = vmatprep.subr.mxu0 0.0
    %7740 = vmatpush1.msra.mxu0 0.0
    %7741 = vmatprep.subr.mxu0 0.0
    %7742 = vmatpush1.msra.mxu0 0.0
    %7743 = vmatprep.subr.mxu0 0.0
    %7744 = vmatpush1.msra.mxu0 0.0
    %7745 = vmatprep.subr.mxu0 0.0
    %7746 = vmatpush1.msra.mxu0 0.0
    %7747 = vmatprep.subr.mxu0 0.0
    %7748 = vmatpush1.msra.mxu0 0.0
    %7749 = vmatprep.subr.mxu0 0.0
    %7750 = vmatpush1.msra.mxu0 0.0
    %7751 = vmatprep.subr.mxu0 0.0
    %7752 = vmatpush1.msra.mxu0 0.0
    %7753 = vmatprep.mubr.f32.mxu0 0.0
    %7754 = vmatmul.mubr.f32.gmra.mrb[0].mxu0 %v7687
    %v7755 = vpop.f32.mrb[0].mxu0
    %v7756 = vadd.f32 0.0, %v7755
    %v7757 = vpop.f32.mrb[0].mxu0
    %7758 = vdwg.mxu0
    %7760 = vrot.lane.b32.xlu0 %v7683, 64
    %v7761 = vpop.permute.xlu0 %7760
    %v7762 = vsel %vm190, %v7761, 0
    %7764 = vmatprep.subr.mxu0 0.0
    %7765 = vmatpush1.msra.mxu0 %v5837
    %7766 = vmatprep.subr.mxu0 0.0
    %7767 = vmatpush1.msra.mxu0 %v5838
    %7768 = vmatprep.subr.mxu0 0.0
    %7769 = vmatpush1.msra.mxu0 %v5839
    %7770 = vmatprep.subr.mxu0 0.0
    %7771 = vmatpush1.msra.mxu0 %v5840
    %7772 = vmatprep.subr.mxu0 0.0
    %7773 = vmatpush1.msra.mxu0 0.0
    %7774 = vmatprep.subr.mxu0 0.0
    %7775 = vmatpush1.msra.mxu0 0.0
    %7776 = vmatprep.subr.mxu0 0.0
    %7777 = vmatpush1.msra.mxu0 0.0
    %7778 = vmatprep.subr.mxu0 0.0
    %7779 = vmatpush1.msra.mxu0 0.0
    %7780 = vmatprep.subr.mxu0 0.0
    %7781 = vmatpush1.msra.mxu0 0.0
    %7782 = vmatprep.subr.mxu0 0.0
    %7783 = vmatpush1.msra.mxu0 0.0
    %7784 = vmatprep.subr.mxu0 0.0
    %7785 = vmatpush1.msra.mxu0 0.0
    %7786 = vmatprep.subr.mxu0 0.0
    %7787 = vmatpush1.msra.mxu0 0.0
    %7788 = vmatprep.subr.mxu0 0.0
    %7789 = vmatpush1.msra.mxu0 0.0
    %7790 = vmatprep.subr.mxu0 0.0
    %7791 = vmatpush1.msra.mxu0 0.0
    %7792 = vmatprep.subr.mxu0 0.0
    %7793 = vmatpush1.msra.mxu0 0.0
    %7794 = vmatprep.subr.mxu0 0.0
    %7795 = vmatpush1.msra.mxu0 0.0
    %7796 = vmatprep.subr.mxu0 0.0
    %7797 = vmatpush1.msra.mxu0 0.0
    %7798 = vmatprep.subr.mxu0 0.0
    %7799 = vmatpush1.msra.mxu0 0.0
    %7800 = vmatprep.subr.mxu0 0.0
    %7801 = vmatpush1.msra.mxu0 0.0
    %7802 = vmatprep.subr.mxu0 0.0
    %7803 = vmatpush1.msra.mxu0 0.0
    %7804 = vmatprep.subr.mxu0 0.0
    %7805 = vmatpush1.msra.mxu0 0.0
    %7806 = vmatprep.subr.mxu0 0.0
    %7807 = vmatpush1.msra.mxu0 0.0
    %7808 = vmatprep.subr.mxu0 0.0
    %7809 = vmatpush1.msra.mxu0 0.0
    %7810 = vmatprep.subr.mxu0 0.0
    %7811 = vmatpush1.msra.mxu0 0.0
    %7812 = vmatprep.subr.mxu0 0.0
    %7813 = vmatpush1.msra.mxu0 0.0
    %7814 = vmatprep.subr.mxu0 0.0
    %7815 = vmatpush1.msra.mxu0 0.0
    %7816 = vmatprep.subr.mxu0 0.0
    %7817 = vmatpush1.msra.mxu0 0.0
    %7818 = vmatprep.subr.mxu0 0.0
    %7819 = vmatpush1.msra.mxu0 0.0
    %7820 = vmatprep.subr.mxu0 0.0
    %7821 = vmatpush1.msra.mxu0 0.0
    %7822 = vmatprep.subr.mxu0 0.0
    %7823 = vmatpush1.msra.mxu0 0.0
    %7824 = vmatprep.subr.mxu0 0.0
    %7825 = vmatpush1.msra.mxu0 0.0
    %7826 = vmatprep.subr.mxu0 0.0
    %7827 = vmatpush1.msra.mxu0 0.0
    %7828 = vmatprep.mubr.f32.mxu0 0.0
    %7829 = vmatmul.mubr.f32.gmra.mrb[0].mxu0 %v7762
    %v7830 = vpop.f32.mrb[0].mxu0
    %v7831 = vadd.f32 %v7756, %v7830
    %v7832 = vpop.f32.mrb[0].mxu0
    %7833 = vdwg.mxu0
    %v7834 = vadd.f32 %v7831, %v6206
    %v7835 = vxor.u32 %v7834, 2147483648
    %v7836 = vmul.f32 %v7835, 1.442695
    %v7837 = vpow.pop %v7836
    %v7838 = vadd.f32 %v7837, 1.0
    %v7839 = vrcp.pop %v7838
    %v7840 = vmul.f32 1.0, %v7839
    %v7841 = vtanh.pop %v7834
    %v7842 = vmul.f32 %v7840, %v7581
    %7844 = vrot.lane.b32.xlu0 %v7841, 32
    %v7845 = vpop.permute.xlu0 %7844
    %v7847 = vmul.f32 %v7840, %v7845
    %7849 = vrot.lane.b32.xlu0 %v7847, 32
    %v7850 = vpop.permute.xlu0 %7849
    %v7852 = vadd.f32 %v7842, %v7850
    %v7853 = vtanh.pop %v7852
    %7855 = vrot.lane.b32.xlu0 %v7853, 32
    %v7856 = vpop.permute.xlu0 %7855
    %v7858 = vmul.f32 %v7840, %v7856
    %v7859 = vld [vmem:[#allocation2 + $0xe] sm:$0x3]
    %7860 = vmatprep.subr.mxu0 0.0
    %7861 = vmatpush1.msra.mxu0 %v5841
    %7862 = vmatprep.subr.mxu0 0.0
    %7863 = vmatpush1.msra.mxu0 %v5842
    %7864 = vmatprep.subr.mxu0 0.0
    %7865 = vmatpush1.msra.mxu0 %v5843
    %7866 = vmatprep.subr.mxu0 0.0
    %7867 = vmatpush1.msra.mxu0 %v5844
    %7868 = vmatprep.subr.mxu0 0.0
    %7869 = vmatpush1.msra.mxu0 0.0
    %7870 = vmatprep.subr.mxu0 0.0
    %7871 = vmatpush1.msra.mxu0 0.0
    %7872 = vmatprep.subr.mxu0 0.0
    %7873 = vmatpush1.msra.mxu0 0.0
    %7874 = vmatprep.subr.mxu0 0.0
    %7875 = vmatpush1.msra.mxu0 0.0
    %7876 = vmatprep.subr.mxu0 0.0
    %7877 = vmatpush1.msra.mxu0 0.0
    %7878 = vmatprep.subr.mxu0 0.0
    %7879 = vmatpush1.msra.mxu0 0.0
    %7880 = vmatprep.subr.mxu0 0.0
    %7881 = vmatpush1.msra.mxu0 0.0
    %7882 = vmatprep.subr.mxu0 0.0
    %7883 = vmatpush1.msra.mxu0 0.0
    %7884 = vmatprep.subr.mxu0 0.0
    %7885 = vmatpush1.msra.mxu0 0.0
    %7886 = vmatprep.subr.mxu0 0.0
    %7887 = vmatpush1.msra.mxu0 0.0
    %7888 = vmatprep.subr.mxu0 0.0
    %7889 = vmatpush1.msra.mxu0 0.0
    %7890 = vmatprep.subr.mxu0 0.0
    %7891 = vmatpush1.msra.mxu0 0.0
    %7892 = vmatprep.subr.mxu0 0.0
    %7893 = vmatpush1.msra.mxu0 0.0
    %7894 = vmatprep.subr.mxu0 0.0
    %7895 = vmatpush1.msra.mxu0 0.0
    %7896 = vmatprep.subr.mxu0 0.0
    %7897 = vmatpush1.msra.mxu0 0.0
    %7898 = vmatprep.subr.mxu0 0.0
    %7899 = vmatpush1.msra.mxu0 0.0
    %7900 = vmatprep.subr.mxu0 0.0
    %7901 = vmatpush1.msra.mxu0 0.0
    %7902 = vmatprep.subr.mxu0 0.0
    %7903 = vmatpush1.msra.mxu0 0.0
    %7904 = vmatprep.subr.mxu0 0.0
    %7905 = vmatpush1.msra.mxu0 0.0
    %7906 = vmatprep.subr.mxu0 0.0
    %7907 = vmatpush1.msra.mxu0 0.0
    %7908 = vmatprep.subr.mxu0 0.0
    %7909 = vmatpush1.msra.mxu0 0.0
    %7910 = vmatprep.subr.mxu0 0.0
    %7911 = vmatpush1.msra.mxu0 0.0
    %7912 = vmatprep.subr.mxu0 0.0
    %7913 = vmatpush1.msra.mxu0 0.0
    %7914 = vmatprep.subr.mxu0 0.0
    %7915 = vmatpush1.msra.mxu0 0.0
    %7916 = vmatprep.subr.mxu0 0.0
    %7917 = vmatpush1.msra.mxu0 0.0
    %7918 = vmatprep.subr.mxu0 0.0
    %7919 = vmatpush1.msra.mxu0 0.0
    %7920 = vmatprep.subr.mxu0 0.0
    %7921 = vmatpush1.msra.mxu0 0.0
    %7922 = vmatprep.subr.mxu0 0.0
    %7923 = vmatpush1.msra.mxu0 0.0
    %7924 = vmatprep.mubr.f32.mxu0 0.0
    %7925 = vmatmul.mubr.f32.gmra.mrb[0].mxu0 %v7762
    %v7926 = vpop.f32.mrb[0].mxu0
    %v7927 = vadd.f32 0.0, %v7926
    %v7928 = vpop.f32.mrb[0].mxu0
    %7929 = vdwg.mxu0
    %v7930 = vadd.f32 %v7859, %v7927
    %v7931 = vxor.u32 %v7930, 2147483648
    %v7932 = vmul.f32 %v7931, 1.442695
    %v7933 = vpow.pop %v7932
    %v7934 = vadd.f32 %v7933, 1.0
    %v7935 = vrcp.pop %v7934
    %v7936 = vmul.f32 1.0, %v7935
    %v7937 = vtanh.pop %v7930
    %v7938 = vmul.f32 %v7936, %v7677
    %7940 = vrot.lane.b32.xlu0 %v7937, 32
    %v7941 = vpop.permute.xlu0 %7940
    %v7943 = vmul.f32 %v7936, %v7941
    %7945 = vrot.lane.b32.xlu0 %v7943, 32
    %v7946 = vpop.permute.xlu0 %7945
    %v7948 = vadd.f32 %v7938, %v7946
    %v7949 = vtanh.pop %v7948
    %7951 = vrot.lane.b32.xlu0 %v7949, 32
    %v7952 = vpop.permute.xlu0 %7951
    %v7954 = vmul.f32 %v7936, %v7952
    %7956 = vrot.lane.b32.xlu0 %v7858, 64
    %v7957 = vpop.permute.xlu0 %7956
    %v7958 = vsel %vm190, %v7957, 0
    %7960 = vmatprep.subr.mxu0 0.0
    %7961 = vmatpush1.msra.mxu0 %v5845
    %7962 = vmatprep.subr.mxu0 0.0
    %7963 = vmatpush1.msra.mxu0 %v5846
    %7964 = vmatprep.subr.mxu0 0.0
    %7965 = vmatpush1.msra.mxu0 %v5847
    %7966 = vmatprep.subr.mxu0 0.0
    %7967 = vmatpush1.msra.mxu0 %v5848
    %7968 = vmatprep.subr.mxu0 0.0
    %7969 = vmatpush1.msra.mxu0 0.0
    %7970 = vmatprep.subr.mxu0 0.0
    %7971 = vmatpush1.msra.mxu0 0.0
    %7972 = vmatprep.subr.mxu0 0.0
    %7973 = vmatpush1.msra.mxu0 0.0
    %7974 = vmatprep.subr.mxu0 0.0
    %7975 = vmatpush1.msra.mxu0 0.0
    %7976 = vmatprep.subr.mxu0 0.0
    %7977 = vmatpush1.msra.mxu0 0.0
    %7978 = vmatprep.subr.mxu0 0.0
    %7979 = vmatpush1.msra.mxu0 0.0
    %7980 = vmatprep.subr.mxu0 0.0
    %7981 = vmatpush1.msra.mxu0 0.0
    %7982 = vmatprep.subr.mxu0 0.0
    %7983 = vmatpush1.msra.mxu0 0.0
    %7984 = vmatprep.subr.mxu0 0.0
    %7985 = vmatpush1.msra.mxu0 0.0
    %7986 = vmatprep.subr.mxu0 0.0
    %7987 = vmatpush1.msra.mxu0 0.0
    %7988 = vmatprep.subr.mxu0 0.0
    %7989 = vmatpush1.msra.mxu0 0.0
    %7990 = vmatprep.subr.mxu0 0.0
    %7991 = vmatpush1.msra.mxu0 0.0
    %7992 = vmatprep.subr.mxu0 0.0
    %7993 = vmatpush1.msra.mxu0 0.0
    %7994 = vmatprep.subr.mxu0 0.0
    %7995 = vmatpush1.msra.mxu0 0.0
    %7996 = vmatprep.subr.mxu0 0.0
    %7997 = vmatpush1.msra.mxu0 0.0
    %7998 = vmatprep.subr.mxu0 0.0
    %7999 = vmatpush1.msra.mxu0 0.0
    %8000 = vmatprep.subr.mxu0 0.0
    %8001 = vmatpush1.msra.mxu0 0.0
    %8002 = vmatprep.subr.mxu0 0.0
    %8003 = vmatpush1.msra.mxu0 0.0
    %8004 = vmatprep.subr.mxu0 0.0
    %8005 = vmatpush1.msra.mxu0 0.0
    %8006 = vmatprep.subr.mxu0 0.0
    %8007 = vmatpush1.msra.mxu0 0.0
    %8008 = vmatprep.subr.mxu0 0.0
    %8009 = vmatpush1.msra.mxu0 0.0
    %8010 = vmatprep.subr.mxu0 0.0
    %8011 = vmatpush1.msra.mxu0 0.0
    %8012 = vmatprep.subr.mxu0 0.0
    %8013 = vmatpush1.msra.mxu0 0.0
    %8014 = vmatprep.subr.mxu0 0.0
    %8015 = vmatpush1.msra.mxu0 0.0
    %8016 = vmatprep.subr.mxu0 0.0
    %8017 = vmatpush1.msra.mxu0 0.0
    %8018 = vmatprep.subr.mxu0 0.0
    %8019 = vmatpush1.msra.mxu0 0.0
    %8020 = vmatprep.subr.mxu0 0.0
    %8021 = vmatpush1.msra.mxu0 0.0
    %8022 = vmatprep.subr.mxu0 0.0
    %8023 = vmatpush1.msra.mxu0 0.0
    %8024 = vmatprep.mubr.f32.mxu0 0.0
    %8025 = vmatmul.mubr.f32.gmra.mrb[0].mxu0 %v7958
    %v8026 = vpop.f32.mrb[0].mxu0
    %v8027 = vadd.f32 0.0, %v8026
    %v8028 = vpop.f32.mrb[0].mxu0
    %8029 = vdwg.mxu0
    %8031 = vrot.lane.b32.xlu0 %v7954, 64
    %v8032 = vpop.permute.xlu0 %8031
    %v8033 = vsel %vm190, %v8032, 0
    %8035 = vmatprep.subr.mxu0 0.0
    %8036 = vmatpush1.msra.mxu0 %v5837
    %8037 = vmatprep.subr.mxu0 0.0
    %8038 = vmatpush1.msra.mxu0 %v5838
    %8039 = vmatprep.subr.mxu0 0.0
    %8040 = vmatpush1.msra.mxu0 %v5839
    %8041 = vmatprep.subr.mxu0 0.0
    %8042 = vmatpush1.msra.mxu0 %v5840
    %8043 = vmatprep.subr.mxu0 0.0
    %8044 = vmatpush1.msra.mxu0 0.0
    %8045 = vmatprep.subr.mxu0 0.0
    %8046 = vmatpush1.msra.mxu0 0.0
    %8047 = vmatprep.subr.mxu0 0.0
    %8048 = vmatpush1.msra.mxu0 0.0
    %8049 = vmatprep.subr.mxu0 0.0
    %8050 = vmatpush1.msra.mxu0 0.0
    %8051 = vmatprep.subr.mxu0 0.0
    %8052 = vmatpush1.msra.mxu0 0.0
    %8053 = vmatprep.subr.mxu0 0.0
    %8054 = vmatpush1.msra.mxu0 0.0
    %8055 = vmatprep.subr.mxu0 0.0
    %8056 = vmatpush1.msra.mxu0 0.0
    %8057 = vmatprep.subr.mxu0 0.0
    %8058 = vmatpush1.msra.mxu0 0.0
    %8059 = vmatprep.subr.mxu0 0.0
    %8060 = vmatpush1.msra.mxu0 0.0
    %8061 = vmatprep.subr.mxu0 0.0
    %8062 = vmatpush1.msra.mxu0 0.0
    %8063 = vmatprep.subr.mxu0 0.0
    %8064 = vmatpush1.msra.mxu0 0.0
    %8065 = vmatprep.subr.mxu0 0.0
    %8066 = vmatpush1.msra.mxu0 0.0
    %8067 = vmatprep.subr.mxu0 0.0
    %8068 = vmatpush1.msra.mxu0 0.0
    %8069 = vmatprep.subr.mxu0 0.0
    %8070 = vmatpush1.msra.mxu0 0.0
    %8071 = vmatprep.subr.mxu0 0.0
    %8072 = vmatpush1.msra.mxu0 0.0
    %8073 = vmatprep.subr.mxu0 0.0
    %8074 = vmatpush1.msra.mxu0 0.0
    %8075 = vmatprep.subr.mxu0 0.0
    %8076 = vmatpush1.msra.mxu0 0.0
    %8077 = vmatprep.subr.mxu0 0.0
    %8078 = vmatpush1.msra.mxu0 0.0
    %8079 = vmatprep.subr.mxu0 0.0
    %8080 = vmatpush1.msra.mxu0 0.0
    %8081 = vmatprep.subr.mxu0 0.0
    %8082 = vmatpush1.msra.mxu0 0.0
    %8083 = vmatprep.subr.mxu0 0.0
    %8084 = vmatpush1.msra.mxu0 0.0
    %8085 = vmatprep.subr.mxu0 0.0
    %8086 = vmatpush1.msra.mxu0 0.0
    %8087 = vmatprep.subr.mxu0 0.0
    %8088 = vmatpush1.msra.mxu0 0.0
    %8089 = vmatprep.subr.mxu0 0.0
    %8090 = vmatpush1.msra.mxu0 0.0
    %8091 = vmatprep.subr.mxu0 0.0
    %8092 = vmatpush1.msra.mxu0 0.0
    %8093 = vmatprep.subr.mxu0 0.0
    %8094 = vmatpush1.msra.mxu0 0.0
    %8095 = vmatprep.subr.mxu0 0.0
    %8096 = vmatpush1.msra.mxu0 0.0
    %8097 = vmatprep.subr.mxu0 0.0
    %8098 = vmatpush1.msra.mxu0 0.0
    %8099 = vmatprep.mubr.f32.mxu0 0.0
    %8100 = vmatmul.mubr.f32.gmra.mrb[0].mxu0 %v8033
    %v8101 = vpop.f32.mrb[0].mxu0
    %v8102 = vadd.f32 %v8027, %v8101
    %v8103 = vpop.f32.mrb[0].mxu0
    %8104 = vdwg.mxu0
    %v8105 = vadd.f32 %v8102, %v6206
    %v8106 = vxor.u32 %v8105, 2147483648
    %v8107 = vmul.f32 %v8106, 1.442695
    %v8108 = vpow.pop %v8107
    %v8109 = vadd.f32 %v8108, 1.0
    %v8110 = vrcp.pop %v8109
    %v8111 = vmul.f32 1.0, %v8110
    %v8112 = vtanh.pop %v8105
    %v8113 = vmul.f32 %v8111, %v7852
    %8115 = vrot.lane.b32.xlu0 %v8112, 32
    %v8116 = vpop.permute.xlu0 %8115
    %v8118 = vmul.f32 %v8111, %v8116
    %8120 = vrot.lane.b32.xlu0 %v8118, 32
    %v8121 = vpop.permute.xlu0 %8120
    %v8123 = vadd.f32 %v8113, %v8121
    %v8124 = vtanh.pop %v8123
    %8126 = vrot.lane.b32.xlu0 %v8124, 32
    %v8127 = vpop.permute.xlu0 %8126
    %v8129 = vmul.f32 %v8111, %v8127
    %v8130 = vld [vmem:[#allocation2 + $0x10] sm:$0x3]
    %8131 = vmatprep.subr.mxu0 0.0
    %8132 = vmatpush1.msra.mxu0 %v5841
    %8133 = vmatprep.subr.mxu0 0.0
    %8134 = vmatpush1.msra.mxu0 %v5842
    %8135 = vmatprep.subr.mxu0 0.0
    %8136 = vmatpush1.msra.mxu0 %v5843
    %8137 = vmatprep.subr.mxu0 0.0
    %8138 = vmatpush1.msra.mxu0 %v5844
    %8139 = vmatprep.subr.mxu0 0.0
    %8140 = vmatpush1.msra.mxu0 0.0
    %8141 = vmatprep.subr.mxu0 0.0
    %8142 = vmatpush1.msra.mxu0 0.0
    %8143 = vmatprep.subr.mxu0 0.0
    %8144 = vmatpush1.msra.mxu0 0.0
    %8145 = vmatprep.subr.mxu0 0.0
    %8146 = vmatpush1.msra.mxu0 0.0
    %8147 = vmatprep.subr.mxu0 0.0
    %8148 = vmatpush1.msra.mxu0 0.0
    %8149 = vmatprep.subr.mxu0 0.0
    %8150 = vmatpush1.msra.mxu0 0.0
    %8151 = vmatprep.subr.mxu0 0.0
    %8152 = vmatpush1.msra.mxu0 0.0
    %8153 = vmatprep.subr.mxu0 0.0
    %8154 = vmatpush1.msra.mxu0 0.0
    %8155 = vmatprep.subr.mxu0 0.0
    %8156 = vmatpush1.msra.mxu0 0.0
    %8157 = vmatprep.subr.mxu0 0.0
    %8158 = vmatpush1.msra.mxu0 0.0
    %8159 = vmatprep.subr.mxu0 0.0
    %8160 = vmatpush1.msra.mxu0 0.0
    %8161 = vmatprep.subr.mxu0 0.0
    %8162 = vmatpush1.msra.mxu0 0.0
    %8163 = vmatprep.subr.mxu0 0.0
    %8164 = vmatpush1.msra.mxu0 0.0
    %8165 = vmatprep.subr.mxu0 0.0
    %8166 = vmatpush1.msra.mxu0 0.0
    %8167 = vmatprep.subr.mxu0 0.0
    %8168 = vmatpush1.msra.mxu0 0.0
    %8169 = vmatprep.subr.mxu0 0.0
    %8170 = vmatpush1.msra.mxu0 0.0
    %8171 = vmatprep.subr.mxu0 0.0
    %8172 = vmatpush1.msra.mxu0 0.0
    %8173 = vmatprep.subr.mxu0 0.0
    %8174 = vmatpush1.msra.mxu0 0.0
    %8175 = vmatprep.subr.mxu0 0.0
    %8176 = vmatpush1.msra.mxu0 0.0
    %8177 = vmatprep.subr.mxu0 0.0
    %8178 = vmatpush1.msra.mxu0 0.0
    %8179 = vmatprep.subr.mxu0 0.0
    %8180 = vmatpush1.msra.mxu0 0.0
    %8181 = vmatprep.subr.mxu0 0.0
    %8182 = vmatpush1.msra.mxu0 0.0
    %8183 = vmatprep.subr.mxu0 0.0
    %8184 = vmatpush1.msra.mxu0 0.0
    %8185 = vmatprep.subr.mxu0 0.0
    %8186 = vmatpush1.msra.mxu0 0.0
    %8187 = vmatprep.subr.mxu0 0.0
    %8188 = vmatpush1.msra.mxu0 0.0
    %8189 = vmatprep.subr.mxu0 0.0
    %8190 = vmatpush1.msra.mxu0 0.0
    %8191 = vmatprep.subr.mxu0 0.0
    %8192 = vmatpush1.msra.mxu0 0.0
    %8193 = vmatprep.subr.mxu0 0.0
    %8194 = vmatpush1.msra.mxu0 0.0
    %8195 = vmatprep.mubr.f32.mxu0 0.0
    %8196 = vmatmul.mubr.f32.gmra.mrb[0].mxu0 %v8033
    %v8197 = vpop.f32.mrb[0].mxu0
    %v8198 = vadd.f32 0.0, %v8197
    %v8199 = vpop.f32.mrb[0].mxu0
    %8200 = vdwg.mxu0
    %v8201 = vadd.f32 %v8130, %v8198
    %v8202 = vxor.u32 %v8201, 2147483648
    %v8203 = vmul.f32 %v8202, 1.442695
    %v8204 = vpow.pop %v8203
    %v8205 = vadd.f32 %v8204, 1.0
    %v8206 = vrcp.pop %v8205
    %v8207 = vmul.f32 1.0, %v8206
    %v8208 = vtanh.pop %v8201
    %v8209 = vmul.f32 %v8207, %v7948
    %8211 = vrot.lane.b32.xlu0 %v8208, 32
    %v8212 = vpop.permute.xlu0 %8211
    %v8214 = vmul.f32 %v8207, %v8212
    %8216 = vrot.lane.b32.xlu0 %v8214, 32
    %v8217 = vpop.permute.xlu0 %8216
    %v8219 = vadd.f32 %v8209, %v8217
    %v8220 = vtanh.pop %v8219
    %8222 = vrot.lane.b32.xlu0 %v8220, 32
    %v8223 = vpop.permute.xlu0 %8222
    %v8225 = vmul.f32 %v8207, %v8223
    %8227 = vrot.lane.b32.xlu0 %v8129, 64
    %v8228 = vpop.permute.xlu0 %8227
    %v8229 = vsel %vm190, %v8228, 0
    %8231 = vmatprep.subr.mxu0 0.0
    %8232 = vmatpush1.msra.mxu0 %v5845
    %8233 = vmatprep.subr.mxu0 0.0
    %8234 = vmatpush1.msra.mxu0 %v5846
    %8235 = vmatprep.subr.mxu0 0.0
    %8236 = vmatpush1.msra.mxu0 %v5847
    %8237 = vmatprep.subr.mxu0 0.0
    %8238 = vmatpush1.msra.mxu0 %v5848
    %8239 = vmatprep.subr.mxu0 0.0
    %8240 = vmatpush1.msra.mxu0 0.0
    %8241 = vmatprep.subr.mxu0 0.0
    %8242 = vmatpush1.msra.mxu0 0.0
    %8243 = vmatprep.subr.mxu0 0.0
    %8244 = vmatpush1.msra.mxu0 0.0
    %8245 = vmatprep.subr.mxu0 0.0
    %8246 = vmatpush1.msra.mxu0 0.0
    %8247 = vmatprep.subr.mxu0 0.0
    %8248 = vmatpush1.msra.mxu0 0.0
    %8249 = vmatprep.subr.mxu0 0.0
    %8250 = vmatpush1.msra.mxu0 0.0
    %8251 = vmatprep.subr.mxu0 0.0
    %8252 = vmatpush1.msra.mxu0 0.0
    %8253 = vmatprep.subr.mxu0 0.0
    %8254 = vmatpush1.msra.mxu0 0.0
    %8255 = vmatprep.subr.mxu0 0.0
    %8256 = vmatpush1.msra.mxu0 0.0
    %8257 = vmatprep.subr.mxu0 0.0
    %8258 = vmatpush1.msra.mxu0 0.0
    %8259 = vmatprep.subr.mxu0 0.0
    %8260 = vmatpush1.msra.mxu0 0.0
    %8261 = vmatprep.subr.mxu0 0.0
    %8262 = vmatpush1.msra.mxu0 0.0
    %8263 = vmatprep.subr.mxu0 0.0
    %8264 = vmatpush1.msra.mxu0 0.0
    %8265 = vmatprep.subr.mxu0 0.0
    %8266 = vmatpush1.msra.mxu0 0.0
    %8267 = vmatprep.subr.mxu0 0.0
    %8268 = vmatpush1.msra.mxu0 0.0
    %8269 = vmatprep.subr.mxu0 0.0
    %8270 = vmatpush1.msra.mxu0 0.0
    %8271 = vmatprep.subr.mxu0 0.0
    %8272 = vmatpush1.msra.mxu0 0.0
    %8273 = vmatprep.subr.mxu0 0.0
    %8274 = vmatpush1.msra.mxu0 0.0
    %8275 = vmatprep.subr.mxu0 0.0
    %8276 = vmatpush1.msra.mxu0 0.0
    %8277 = vmatprep.subr.mxu0 0.0
    %8278 = vmatpush1.msra.mxu0 0.0
    %8279 = vmatprep.subr.mxu0 0.0
    %8280 = vmatpush1.msra.mxu0 0.0
    %8281 = vmatprep.subr.mxu0 0.0
    %8282 = vmatpush1.msra.mxu0 0.0
    %8283 = vmatprep.subr.mxu0 0.0
    %8284 = vmatpush1.msra.mxu0 0.0
    %8285 = vmatprep.subr.mxu0 0.0
    %8286 = vmatpush1.msra.mxu0 0.0
    %8287 = vmatprep.subr.mxu0 0.0
    %8288 = vmatpush1.msra.mxu0 0.0
    %8289 = vmatprep.subr.mxu0 0.0
    %8290 = vmatpush1.msra.mxu0 0.0
    %8291 = vmatprep.subr.mxu0 0.0
    %8292 = vmatpush1.msra.mxu0 0.0
    %8293 = vmatprep.subr.mxu0 0.0
    %8294 = vmatpush1.msra.mxu0 0.0
    %8295 = vmatprep.mubr.f32.mxu0 0.0
    %8296 = vmatmul.mubr.f32.gmra.mrb[0].mxu0 %v8229
    %v8297 = vpop.f32.mrb[0].mxu0
    %v8298 = vadd.f32 0.0, %v8297
    %v8299 = vpop.f32.mrb[0].mxu0
    %8300 = vdwg.mxu0
    %8302 = vrot.lane.b32.xlu0 %v8225, 64
    %v8303 = vpop.permute.xlu0 %8302
    %v8304 = vsel %vm190, %v8303, 0
    %8306 = vmatprep.subr.mxu0 0.0
    %8307 = vmatpush1.msra.mxu0 %v5837
    %8308 = vmatprep.subr.mxu0 0.0
    %8309 = vmatpush1.msra.mxu0 %v5838
    %8310 = vmatprep.subr.mxu0 0.0
    %8311 = vmatpush1.msra.mxu0 %v5839
    %8312 = vmatprep.subr.mxu0 0.0
    %8313 = vmatpush1.msra.mxu0 %v5840
    %8314 = vmatprep.subr.mxu0 0.0
    %8315 = vmatpush1.msra.mxu0 0.0
    %8316 = vmatprep.subr.mxu0 0.0
    %8317 = vmatpush1.msra.mxu0 0.0
    %8318 = vmatprep.subr.mxu0 0.0
    %8319 = vmatpush1.msra.mxu0 0.0
    %8320 = vmatprep.subr.mxu0 0.0
    %8321 = vmatpush1.msra.mxu0 0.0
    %8322 = vmatprep.subr.mxu0 0.0
    %8323 = vmatpush1.msra.mxu0 0.0
    %8324 = vmatprep.subr.mxu0 0.0
    %8325 = vmatpush1.msra.mxu0 0.0
    %8326 = vmatprep.subr.mxu0 0.0
    %8327 = vmatpush1.msra.mxu0 0.0
    %8328 = vmatprep.subr.mxu0 0.0
    %8329 = vmatpush1.msra.mxu0 0.0
    %8330 = vmatprep.subr.mxu0 0.0
    %8331 = vmatpush1.msra.mxu0 0.0
    %8332 = vmatprep.subr.mxu0 0.0
    %8333 = vmatpush1.msra.mxu0 0.0
    %8334 = vmatprep.subr.mxu0 0.0
    %8335 = vmatpush1.msra.mxu0 0.0
    %8336 = vmatprep.subr.mxu0 0.0
    %8337 = vmatpush1.msra.mxu0 0.0
    %8338 = vmatprep.subr.mxu0 0.0
    %8339 = vmatpush1.msra.mxu0 0.0
    %8340 = vmatprep.subr.mxu0 0.0
    %8341 = vmatpush1.msra.mxu0 0.0
    %8342 = vmatprep.subr.mxu0 0.0
    %8343 = vmatpush1.msra.mxu0 0.0
    %8344 = vmatprep.subr.mxu0 0.0
    %8345 = vmatpush1.msra.mxu0 0.0
    %8346 = vmatprep.subr.mxu0 0.0
    %8347 = vmatpush1.msra.mxu0 0.0
    %8348 = vmatprep.subr.mxu0 0.0
    %8349 = vmatpush1.msra.mxu0 0.0
    %8350 = vmatprep.subr.mxu0 0.0
    %8351 = vmatpush1.msra.mxu0 0.0
    %8352 = vmatprep.subr.mxu0 0.0
    %8353 = vmatpush1.msra.mxu0 0.0
    %8354 = vmatprep.subr.mxu0 0.0
    %8355 = vmatpush1.msra.mxu0 0.0
    %8356 = vmatprep.subr.mxu0 0.0
    %8357 = vmatpush1.msra.mxu0 0.0
    %8358 = vmatprep.subr.mxu0 0.0
    %8359 = vmatpush1.msra.mxu0 0.0
    %8360 = vmatprep.subr.mxu0 0.0
    %8361 = vmatpush1.msra.mxu0 0.0
    %8362 = vmatprep.subr.mxu0 0.0
    %8363 = vmatpush1.msra.mxu0 0.0
    %8364 = vmatprep.subr.mxu0 0.0
    %8365 = vmatpush1.msra.mxu0 0.0
    %8366 = vmatprep.subr.mxu0 0.0
    %8367 = vmatpush1.msra.mxu0 0.0
    %8368 = vmatprep.subr.mxu0 0.0
    %8369 = vmatpush1.msra.mxu0 0.0
    %8370 = vmatprep.mubr.f32.mxu0 0.0
    %8371 = vmatmul.mubr.f32.gmra.mrb[0].mxu0 %v8304
    %v8372 = vpop.f32.mrb[0].mxu0
    %v8373 = vadd.f32 %v8298, %v8372
    %v8374 = vpop.f32.mrb[0].mxu0
    %8375 = vdwg.mxu0
    %v8376 = vadd.f32 %v8373, %v6206
    %v8377 = vxor.u32 %v8376, 2147483648
    %v8378 = vmul.f32 %v8377, 1.442695
    %v8379 = vpow.pop %v8378
    %v8380 = vadd.f32 %v8379, 1.0
    %v8381 = vrcp.pop %v8380
    %v8382 = vmul.f32 1.0, %v8381
    %v8383 = vtanh.pop %v8376
    %v8384 = vmul.f32 %v8382, %v8123
    %8386 = vrot.lane.b32.xlu0 %v8383, 32
    %v8387 = vpop.permute.xlu0 %8386
    %v8389 = vmul.f32 %v8382, %v8387
    %8391 = vrot.lane.b32.xlu0 %v8389, 32
    %v8392 = vpop.permute.xlu0 %8391
    %v8394 = vadd.f32 %v8384, %v8392
    %v8395 = vtanh.pop %v8394
    %8397 = vrot.lane.b32.xlu0 %v8395, 32
    %v8398 = vpop.permute.xlu0 %8397
    %v8400 = vmul.f32 %v8382, %v8398
    %v8401 = vld [vmem:[#allocation2 + $0x12] sm:$0x3]
    %8402 = vmatprep.subr.mxu0 0.0
    %8403 = vmatpush1.msra.mxu0 %v5841
    %8404 = vmatprep.subr.mxu0 0.0
    %8405 = vmatpush1.msra.mxu0 %v5842
    %8406 = vmatprep.subr.mxu0 0.0
    %8407 = vmatpush1.msra.mxu0 %v5843
    %8408 = vmatprep.subr.mxu0 0.0
    %8409 = vmatpush1.msra.mxu0 %v5844
    %8410 = vmatprep.subr.mxu0 0.0
    %8411 = vmatpush1.msra.mxu0 0.0
    %8412 = vmatprep.subr.mxu0 0.0
    %8413 = vmatpush1.msra.mxu0 0.0
    %8414 = vmatprep.subr.mxu0 0.0
    %8415 = vmatpush1.msra.mxu0 0.0
    %8416 = vmatprep.subr.mxu0 0.0
    %8417 = vmatpush1.msra.mxu0 0.0
    %8418 = vmatprep.subr.mxu0 0.0
    %8419 = vmatpush1.msra.mxu0 0.0
    %8420 = vmatprep.subr.mxu0 0.0
    %8421 = vmatpush1.msra.mxu0 0.0
    %8422 = vmatprep.subr.mxu0 0.0
    %8423 = vmatpush1.msra.mxu0 0.0
    %8424 = vmatprep.subr.mxu0 0.0
    %8425 = vmatpush1.msra.mxu0 0.0
    %8426 = vmatprep.subr.mxu0 0.0
    %8427 = vmatpush1.msra.mxu0 0.0
    %8428 = vmatprep.subr.mxu0 0.0
    %8429 = vmatpush1.msra.mxu0 0.0
    %8430 = vmatprep.subr.mxu0 0.0
    %8431 = vmatpush1.msra.mxu0 0.0
    %8432 = vmatprep.subr.mxu0 0.0
    %8433 = vmatpush1.msra.mxu0 0.0
    %8434 = vmatprep.subr.mxu0 0.0
    %8435 = vmatpush1.msra.mxu0 0.0
    %8436 = vmatprep.subr.mxu0 0.0
    %8437 = vmatpush1.msra.mxu0 0.0
    %8438 = vmatprep.subr.mxu0 0.0
    %8439 = vmatpush1.msra.mxu0 0.0
    %8440 = vmatprep.subr.mxu0 0.0
    %8441 = vmatpush1.msra.mxu0 0.0
    %8442 = vmatprep.subr.mxu0 0.0
    %8443 = vmatpush1.msra.mxu0 0.0
    %8444 = vmatprep.subr.mxu0 0.0
    %8445 = vmatpush1.msra.mxu0 0.0
    %8446 = vmatprep.subr.mxu0 0.0
    %8447 = vmatpush1.msra.mxu0 0.0
    %8448 = vmatprep.subr.mxu0 0.0
    %8449 = vmatpush1.msra.mxu0 0.0
    %8450 = vmatprep.subr.mxu0 0.0
    %8451 = vmatpush1.msra.mxu0 0.0
    %8452 = vmatprep.subr.mxu0 0.0
    %8453 = vmatpush1.msra.mxu0 0.0
    %8454 = vmatprep.subr.mxu0 0.0
    %8455 = vmatpush1.msra.mxu0 0.0
    %8456 = vmatprep.subr.mxu0 0.0
    %8457 = vmatpush1.msra.mxu0 0.0
    %8458 = vmatprep.subr.mxu0 0.0
    %8459 = vmatpush1.msra.mxu0 0.0
    %8460 = vmatprep.subr.mxu0 0.0
    %8461 = vmatpush1.msra.mxu0 0.0
    %8462 = vmatprep.subr.mxu0 0.0
    %8463 = vmatpush1.msra.mxu0 0.0
    %8464 = vmatprep.subr.mxu0 0.0
    %8465 = vmatpush1.msra.mxu0 0.0
    %8466 = vmatprep.mubr.f32.mxu0 0.0
    %8467 = vmatmul.mubr.f32.gmra.mrb[0].mxu0 %v8304
    %v8468 = vpop.f32.mrb[0].mxu0
    %v8469 = vadd.f32 0.0, %v8468
    %v8470 = vpop.f32.mrb[0].mxu0
    %8471 = vdwg.mxu0
    %v8472 = vadd.f32 %v8401, %v8469
    %v8473 = vxor.u32 %v8472, 2147483648
    %v8474 = vmul.f32 %v8473, 1.442695
    %v8475 = vpow.pop %v8474
    %v8476 = vadd.f32 %v8475, 1.0
    %v8477 = vrcp.pop %v8476
    %v8478 = vmul.f32 1.0, %v8477
    %v8479 = vtanh.pop %v8472
    %v8480 = vmul.f32 %v8478, %v8219
    %8482 = vrot.lane.b32.xlu0 %v8479, 32
    %v8483 = vpop.permute.xlu0 %8482
    %v8485 = vmul.f32 %v8478, %v8483
    %8487 = vrot.lane.b32.xlu0 %v8485, 32
    %v8488 = vpop.permute.xlu0 %8487
    %v8490 = vadd.f32 %v8480, %v8488
    %v8491 = vtanh.pop %v8490
    %8493 = vrot.lane.b32.xlu0 %v8491, 32
    %v8494 = vpop.permute.xlu0 %8493
    %v8496 = vmul.f32 %v8478, %v8494
    %8498 = vrot.lane.b32.xlu0 %v8400, 64
    %v8499 = vpop.permute.xlu0 %8498
    %v8500 = vsel %vm190, %v8499, 0
    %8502 = vmatprep.subr.mxu0 0.0
    %8503 = vmatpush1.msra.mxu0 %v5845
    %8504 = vmatprep.subr.mxu0 0.0
    %8505 = vmatpush1.msra.mxu0 %v5846
    %8506 = vmatprep.subr.mxu0 0.0
    %8507 = vmatpush1.msra.mxu0 %v5847
    %8508 = vmatprep.subr.mxu0 0.0
    %8509 = vmatpush1.msra.mxu0 %v5848
    %8510 = vmatprep.subr.mxu0 0.0
    %8511 = vmatpush1.msra.mxu0 0.0
    %8512 = vmatprep.subr.mxu0 0.0
    %8513 = vmatpush1.msra.mxu0 0.0
    %8514 = vmatprep.subr.mxu0 0.0
    %8515 = vmatpush1.msra.mxu0 0.0
    %8516 = vmatprep.subr.mxu0 0.0
    %8517 = vmatpush1.msra.mxu0 0.0
    %8518 = vmatprep.subr.mxu0 0.0
    %8519 = vmatpush1.msra.mxu0 0.0
    %8520 = vmatprep.subr.mxu0 0.0
    %8521 = vmatpush1.msra.mxu0 0.0
    %8522 = vmatprep.subr.mxu0 0.0
    %8523 = vmatpush1.msra.mxu0 0.0
    %8524 = vmatprep.subr.mxu0 0.0
    %8525 = vmatpush1.msra.mxu0 0.0
    %8526 = vmatprep.subr.mxu0 0.0
    %8527 = vmatpush1.msra.mxu0 0.0
    %8528 = vmatprep.subr.mxu0 0.0
    %8529 = vmatpush1.msra.mxu0 0.0
    %8530 = vmatprep.subr.mxu0 0.0
    %8531 = vmatpush1.msra.mxu0 0.0
    %8532 = vmatprep.subr.mxu0 0.0
    %8533 = vmatpush1.msra.mxu0 0.0
    %8534 = vmatprep.subr.mxu0 0.0
    %8535 = vmatpush1.msra.mxu0 0.0
    %8536 = vmatprep.subr.mxu0 0.0
    %8537 = vmatpush1.msra.mxu0 0.0
    %8538 = vmatprep.subr.mxu0 0.0
    %8539 = vmatpush1.msra.mxu0 0.0
    %8540 = vmatprep.subr.mxu0 0.0
    %8541 = vmatpush1.msra.mxu0 0.0
    %8542 = vmatprep.subr.mxu0 0.0
    %8543 = vmatpush1.msra.mxu0 0.0
    %8544 = vmatprep.subr.mxu0 0.0
    %8545 = vmatpush1.msra.mxu0 0.0
    %8546 = vmatprep.subr.mxu0 0.0
    %8547 = vmatpush1.msra.mxu0 0.0
    %8548 = vmatprep.subr.mxu0 0.0
    %8549 = vmatpush1.msra.mxu0 0.0
    %8550 = vmatprep.subr.mxu0 0.0
    %8551 = vmatpush1.msra.mxu0 0.0
    %8552 = vmatprep.subr.mxu0 0.0
    %8553 = vmatpush1.msra.mxu0 0.0
    %8554 = vmatprep.subr.mxu0 0.0
    %8555 = vmatpush1.msra.mxu0 0.0
    %8556 = vmatprep.subr.mxu0 0.0
    %8557 = vmatpush1.msra.mxu0 0.0
    %8558 = vmatprep.subr.mxu0 0.0
    %8559 = vmatpush1.msra.mxu0 0.0
    %8560 = vmatprep.subr.mxu0 0.0
    %8561 = vmatpush1.msra.mxu0 0.0
    %8562 = vmatprep.subr.mxu0 0.0
    %8563 = vmatpush1.msra.mxu0 0.0
    %8564 = vmatprep.subr.mxu0 0.0
    %8565 = vmatpush1.msra.mxu0 0.0
    %8566 = vmatprep.mubr.f32.mxu0 0.0
    %8567 = vmatmul.mubr.f32.gmra.mrb[0].mxu0 %v8500
    %v8568 = vpop.f32.mrb[0].mxu0
    %v8569 = vadd.f32 0.0, %v8568
    %v8570 = vpop.f32.mrb[0].mxu0
    %8571 = vdwg.mxu0
    %8573 = vrot.lane.b32.xlu0 %v8496, 64
    %v8574 = vpop.permute.xlu0 %8573
    %v8575 = vsel %vm190, %v8574, 0
    %8577 = vmatprep.subr.mxu0 0.0
    %8578 = vmatpush1.msra.mxu0 %v5837
    %8579 = vmatprep.subr.mxu0 0.0
    %8580 = vmatpush1.msra.mxu0 %v5838
    %8581 = vmatprep.subr.mxu0 0.0
    %8582 = vmatpush1.msra.mxu0 %v5839
    %8583 = vmatprep.subr.mxu0 0.0
    %8584 = vmatpush1.msra.mxu0 %v5840
    %8585 = vmatprep.subr.mxu0 0.0
    %8586 = vmatpush1.msra.mxu0 0.0
    %8587 = vmatprep.subr.mxu0 0.0
    %8588 = vmatpush1.msra.mxu0 0.0
    %8589 = vmatprep.subr.mxu0 0.0
    %8590 = vmatpush1.msra.mxu0 0.0
    %8591 = vmatprep.subr.mxu0 0.0
    %8592 = vmatpush1.msra.mxu0 0.0
    %8593 = vmatprep.subr.mxu0 0.0
    %8594 = vmatpush1.msra.mxu0 0.0
    %8595 = vmatprep.subr.mxu0 0.0
    %8596 = vmatpush1.msra.mxu0 0.0
    %8597 = vmatprep.subr.mxu0 0.0
    %8598 = vmatpush1.msra.mxu0 0.0
    %8599 = vmatprep.subr.mxu0 0.0
    %8600 = vmatpush1.msra.mxu0 0.0
    %8601 = vmatprep.subr.mxu0 0.0
    %8602 = vmatpush1.msra.mxu0 0.0
    %8603 = vmatprep.subr.mxu0 0.0
    %8604 = vmatpush1.msra.mxu0 0.0
    %8605 = vmatprep.subr.mxu0 0.0
    %8606 = vmatpush1.msra.mxu0 0.0
    %8607 = vmatprep.subr.mxu0 0.0
    %8608 = vmatpush1.msra.mxu0 0.0
    %8609 = vmatprep.subr.mxu0 0.0
    %8610 = vmatpush1.msra.mxu0 0.0
    %8611 = vmatprep.subr.mxu0 0.0
    %8612 = vmatpush1.msra.mxu0 0.0
    %8613 = vmatprep.subr.mxu0 0.0
    %8614 = vmatpush1.msra.mxu0 0.0
    %8615 = vmatprep.subr.mxu0 0.0
    %8616 = vmatpush1.msra.mxu0 0.0
    %8617 = vmatprep.subr.mxu0 0.0
    %8618 = vmatpush1.msra.mxu0 0.0
    %8619 = vmatprep.subr.mxu0 0.0
    %8620 = vmatpush1.msra.mxu0 0.0
    %8621 = vmatprep.subr.mxu0 0.0
    %8622 = vmatpush1.msra.mxu0 0.0
    %8623 = vmatprep.subr.mxu0 0.0
    %8624 = vmatpush1.msra.mxu0 0.0
    %8625 = vmatprep.subr.mxu0 0.0
    %8626 = vmatpush1.msra.mxu0 0.0
    %8627 = vmatprep.subr.mxu0 0.0
    %8628 = vmatpush1.msra.mxu0 0.0
    %8629 = vmatprep.subr.mxu0 0.0
    %8630 = vmatpush1.msra.mxu0 0.0
    %8631 = vmatprep.subr.mxu0 0.0
    %8632 = vmatpush1.msra.mxu0 0.0
    %8633 = vmatprep.subr.mxu0 0.0
    %8634 = vmatpush1.msra.mxu0 0.0
    %8635 = vmatprep.subr.mxu0 0.0
    %8636 = vmatpush1.msra.mxu0 0.0
    %8637 = vmatprep.subr.mxu0 0.0
    %8638 = vmatpush1.msra.mxu0 0.0
    %8639 = vmatprep.subr.mxu0 0.0
    %8640 = vmatpush1.msra.mxu0 0.0
    %8641 = vmatprep.mubr.f32.mxu0 0.0
    %8642 = vmatmul.mubr.f32.gmra.mrb[0].mxu0 %v8575
    %v8643 = vpop.f32.mrb[0].mxu0
    %v8644 = vadd.f32 %v8569, %v8643
    %v8645 = vpop.f32.mrb[0].mxu0
    %8646 = vdwg.mxu0
    %v8647 = vadd.f32 %v8644, %v6206
    %v8648 = vxor.u32 %v8647, 2147483648
    %v8649 = vmul.f32 %v8648, 1.442695
    %v8650 = vpow.pop %v8649
    %v8651 = vadd.f32 %v8650, 1.0
    %v8652 = vrcp.pop %v8651
    %v8653 = vmul.f32 1.0, %v8652
    %v8654 = vtanh.pop %v8647
    %v8655 = vmul.f32 %v8653, %v8394
    %8657 = vrot.lane.b32.xlu0 %v8654, 32
    %v8658 = vpop.permute.xlu0 %8657
    %v8660 = vmul.f32 %v8653, %v8658
    %8662 = vrot.lane.b32.xlu0 %v8660, 32
    %v8663 = vpop.permute.xlu0 %8662
    %v8665 = vadd.f32 %v8655, %v8663
    %v8666 = vtanh.pop %v8665
    %8668 = vrot.lane.b32.xlu0 %v8666, 32
    %v8669 = vpop.permute.xlu0 %8668
    %v8671 = vmul.f32 %v8653, %v8669
    %v8672 = vld [vmem:[#allocation2 + $0x14] sm:$0x3]
    %8673 = vmatprep.subr.mxu0 0.0
    %8674 = vmatpush1.msra.mxu0 %v5841
    %8675 = vmatprep.subr.mxu0 0.0
    %8676 = vmatpush1.msra.mxu0 %v5842
    %8677 = vmatprep.subr.mxu0 0.0
    %8678 = vmatpush1.msra.mxu0 %v5843
    %8679 = vmatprep.subr.mxu0 0.0
    %8680 = vmatpush1.msra.mxu0 %v5844
    %8681 = vmatprep.subr.mxu0 0.0
    %8682 = vmatpush1.msra.mxu0 0.0
    %8683 = vmatprep.subr.mxu0 0.0
    %8684 = vmatpush1.msra.mxu0 0.0
    %8685 = vmatprep.subr.mxu0 0.0
    %8686 = vmatpush1.msra.mxu0 0.0
    %8687 = vmatprep.subr.mxu0 0.0
    %8688 = vmatpush1.msra.mxu0 0.0
    %8689 = vmatprep.subr.mxu0 0.0
    %8690 = vmatpush1.msra.mxu0 0.0
    %8691 = vmatprep.subr.mxu0 0.0
    %8692 = vmatpush1.msra.mxu0 0.0
    %8693 = vmatprep.subr.mxu0 0.0
    %8694 = vmatpush1.msra.mxu0 0.0
    %8695 = vmatprep.subr.mxu0 0.0
    %8696 = vmatpush1.msra.mxu0 0.0
    %8697 = vmatprep.subr.mxu0 0.0
    %8698 = vmatpush1.msra.mxu0 0.0
    %8699 = vmatprep.subr.mxu0 0.0
    %8700 = vmatpush1.msra.mxu0 0.0
    %8701 = vmatprep.subr.mxu0 0.0
    %8702 = vmatpush1.msra.mxu0 0.0
    %8703 = vmatprep.subr.mxu0 0.0
    %8704 = vmatpush1.msra.mxu0 0.0
    %8705 = vmatprep.subr.mxu0 0.0
    %8706 = vmatpush1.msra.mxu0 0.0
    %8707 = vmatprep.subr.mxu0 0.0
    %8708 = vmatpush1.msra.mxu0 0.0
    %8709 = vmatprep.subr.mxu0 0.0
    %8710 = vmatpush1.msra.mxu0 0.0
    %8711 = vmatprep.subr.mxu0 0.0
    %8712 = vmatpush1.msra.mxu0 0.0
    %8713 = vmatprep.subr.mxu0 0.0
    %8714 = vmatpush1.msra.mxu0 0.0
    %8715 = vmatprep.subr.mxu0 0.0
    %8716 = vmatpush1.msra.mxu0 0.0
    %8717 = vmatprep.subr.mxu0 0.0
    %8718 = vmatpush1.msra.mxu0 0.0
    %8719 = vmatprep.subr.mxu0 0.0
    %8720 = vmatpush1.msra.mxu0 0.0
    %8721 = vmatprep.subr.mxu0 0.0
    %8722 = vmatpush1.msra.mxu0 0.0
    %8723 = vmatprep.subr.mxu0 0.0
    %8724 = vmatpush1.msra.mxu0 0.0
    %8725 = vmatprep.subr.mxu0 0.0
    %8726 = vmatpush1.msra.mxu0 0.0
    %8727 = vmatprep.subr.mxu0 0.0
    %8728 = vmatpush1.msra.mxu0 0.0
    %8729 = vmatprep.subr.mxu0 0.0
    %8730 = vmatpush1.msra.mxu0 0.0
    %8731 = vmatprep.subr.mxu0 0.0
    %8732 = vmatpush1.msra.mxu0 0.0
    %8733 = vmatprep.subr.mxu0 0.0
    %8734 = vmatpush1.msra.mxu0 0.0
    %8735 = vmatprep.subr.mxu0 0.0
    %8736 = vmatpush1.msra.mxu0 0.0
    %8737 = vmatprep.mubr.f32.mxu0 0.0
    %8738 = vmatmul.mubr.f32.gmra.mrb[0].mxu0 %v8575
    %v8739 = vpop.f32.mrb[0].mxu0
    %v8740 = vadd.f32 0.0, %v8739
    %v8741 = vpop.f32.mrb[0].mxu0
    %8742 = vdwg.mxu0
    %v8743 = vadd.f32 %v8672, %v8740
    %v8744 = vxor.u32 %v8743, 2147483648
    %v8745 = vmul.f32 %v8744, 1.442695
    %v8746 = vpow.pop %v8745
    %v8747 = vadd.f32 %v8746, 1.0
    %v8748 = vrcp.pop %v8747
    %v8749 = vmul.f32 1.0, %v8748
    %v8750 = vtanh.pop %v8743
    %v8751 = vmul.f32 %v8749, %v8490
    %8753 = vrot.lane.b32.xlu0 %v8750, 32
    %v8754 = vpop.permute.xlu0 %8753
    %v8756 = vmul.f32 %v8749, %v8754
    %8758 = vrot.lane.b32.xlu0 %v8756, 32
    %v8759 = vpop.permute.xlu0 %8758
    %v8761 = vadd.f32 %v8751, %v8759
    %v8762 = vtanh.pop %v8761
    %8764 = vrot.lane.b32.xlu0 %v8762, 32
    %v8765 = vpop.permute.xlu0 %8764
    %v8767 = vmul.f32 %v8749, %v8765
    %8769 = vrot.lane.b32.xlu0 %v8671, 64
    %v8770 = vpop.permute.xlu0 %8769
    %v8771 = vsel %vm190, %v8770, 0
    %8773 = vmatprep.subr.mxu0 0.0
    %8774 = vmatpush1.msra.mxu0 %v5845
    %8775 = vmatprep.subr.mxu0 0.0
    %8776 = vmatpush1.msra.mxu0 %v5846
    %8777 = vmatprep.subr.mxu0 0.0
    %8778 = vmatpush1.msra.mxu0 %v5847
    %8779 = vmatprep.subr.mxu0 0.0
    %8780 = vmatpush1.msra.mxu0 %v5848
    %8781 = vmatprep.subr.mxu0 0.0
    %8782 = vmatpush1.msra.mxu0 0.0
    %8783 = vmatprep.subr.mxu0 0.0
    %8784 = vmatpush1.msra.mxu0 0.0
    %8785 = vmatprep.subr.mxu0 0.0
    %8786 = vmatpush1.msra.mxu0 0.0
    %8787 = vmatprep.subr.mxu0 0.0
    %8788 = vmatpush1.msra.mxu0 0.0
    %8789 = vmatprep.subr.mxu0 0.0
    %8790 = vmatpush1.msra.mxu0 0.0
    %8791 = vmatprep.subr.mxu0 0.0
    %8792 = vmatpush1.msra.mxu0 0.0
    %8793 = vmatprep.subr.mxu0 0.0
    %8794 = vmatpush1.msra.mxu0 0.0
    %8795 = vmatprep.subr.mxu0 0.0
    %8796 = vmatpush1.msra.mxu0 0.0
    %8797 = vmatprep.subr.mxu0 0.0
    %8798 = vmatpush1.msra.mxu0 0.0
    %8799 = vmatprep.subr.mxu0 0.0
    %8800 = vmatpush1.msra.mxu0 0.0
    %8801 = vmatprep.subr.mxu0 0.0
    %8802 = vmatpush1.msra.mxu0 0.0
    %8803 = vmatprep.subr.mxu0 0.0
    %8804 = vmatpush1.msra.mxu0 0.0
    %8805 = vmatprep.subr.mxu0 0.0
    %8806 = vmatpush1.msra.mxu0 0.0
    %8807 = vmatprep.subr.mxu0 0.0
    %8808 = vmatpush1.msra.mxu0 0.0
    %8809 = vmatprep.subr.mxu0 0.0
    %8810 = vmatpush1.msra.mxu0 0.0
    %8811 = vmatprep.subr.mxu0 0.0
    %8812 = vmatpush1.msra.mxu0 0.0
    %8813 = vmatprep.subr.mxu0 0.0
    %8814 = vmatpush1.msra.mxu0 0.0
    %8815 = vmatprep.subr.mxu0 0.0
    %8816 = vmatpush1.msra.mxu0 0.0
    %8817 = vmatprep.subr.mxu0 0.0
    %8818 = vmatpush1.msra.mxu0 0.0
    %8819 = vmatprep.subr.mxu0 0.0
    %8820 = vmatpush1.msra.mxu0 0.0
    %8821 = vmatprep.subr.mxu0 0.0
    %8822 = vmatpush1.msra.mxu0 0.0
    %8823 = vmatprep.subr.mxu0 0.0
    %8824 = vmatpush1.msra.mxu0 0.0
    %8825 = vmatprep.subr.mxu0 0.0
    %8826 = vmatpush1.msra.mxu0 0.0
    %8827 = vmatprep.subr.mxu0 0.0
    %8828 = vmatpush1.msra.mxu0 0.0
    %8829 = vmatprep.subr.mxu0 0.0
    %8830 = vmatpush1.msra.mxu0 0.0
    %8831 = vmatprep.subr.mxu0 0.0
    %8832 = vmatpush1.msra.mxu0 0.0
    %8833 = vmatprep.subr.mxu0 0.0
    %8834 = vmatpush1.msra.mxu0 0.0
    %8835 = vmatprep.subr.mxu0 0.0
    %8836 = vmatpush1.msra.mxu0 0.0
    %8837 = vmatprep.mubr.f32.mxu0 0.0
    %8838 = vmatmul.mubr.f32.gmra.mrb[0].mxu0 %v8771
    %v8839 = vpop.f32.mrb[0].mxu0
    %v8840 = vadd.f32 0.0, %v8839
    %v8841 = vpop.f32.mrb[0].mxu0
    %8842 = vdwg.mxu0
    %8844 = vrot.lane.b32.xlu0 %v8767, 64
    %v8845 = vpop.permute.xlu0 %8844
    %v8846 = vsel %vm190, %v8845, 0
    %8848 = vmatprep.subr.mxu0 0.0
    %8849 = vmatpush1.msra.mxu0 %v5837
    %8850 = vmatprep.subr.mxu0 0.0
    %8851 = vmatpush1.msra.mxu0 %v5838
    %8852 = vmatprep.subr.mxu0 0.0
    %8853 = vmatpush1.msra.mxu0 %v5839
    %8854 = vmatprep.subr.mxu0 0.0
    %8855 = vmatpush1.msra.mxu0 %v5840
    %8856 = vmatprep.subr.mxu0 0.0
    %8857 = vmatpush1.msra.mxu0 0.0
    %8858 = vmatprep.subr.mxu0 0.0
    %8859 = vmatpush1.msra.mxu0 0.0
    %8860 = vmatprep.subr.mxu0 0.0
    %8861 = vmatpush1.msra.mxu0 0.0
    %8862 = vmatprep.subr.mxu0 0.0
    %8863 = vmatpush1.msra.mxu0 0.0
    %8864 = vmatprep.subr.mxu0 0.0
    %8865 = vmatpush1.msra.mxu0 0.0
    %8866 = vmatprep.subr.mxu0 0.0
    %8867 = vmatpush1.msra.mxu0 0.0
    %8868 = vmatprep.subr.mxu0 0.0
    %8869 = vmatpush1.msra.mxu0 0.0
    %8870 = vmatprep.subr.mxu0 0.0
    %8871 = vmatpush1.msra.mxu0 0.0
    %8872 = vmatprep.subr.mxu0 0.0
    %8873 = vmatpush1.msra.mxu0 0.0
    %8874 = vmatprep.subr.mxu0 0.0
    %8875 = vmatpush1.msra.mxu0 0.0
    %8876 = vmatprep.subr.mxu0 0.0
    %8877 = vmatpush1.msra.mxu0 0.0
    %8878 = vmatprep.subr.mxu0 0.0
    %8879 = vmatpush1.msra.mxu0 0.0
    %8880 = vmatprep.subr.mxu0 0.0
    %8881 = vmatpush1.msra.mxu0 0.0
    %8882 = vmatprep.subr.mxu0 0.0
    %8883 = vmatpush1.msra.mxu0 0.0
    %8884 = vmatprep.subr.mxu0 0.0
    %8885 = vmatpush1.msra.mxu0 0.0
    %8886 = vmatprep.subr.mxu0 0.0
    %8887 = vmatpush1.msra.mxu0 0.0
    %8888 = vmatprep.subr.mxu0 0.0
    %8889 = vmatpush1.msra.mxu0 0.0
    %8890 = vmatprep.subr.mxu0 0.0
    %8891 = vmatpush1.msra.mxu0 0.0
    %8892 = vmatprep.subr.mxu0 0.0
    %8893 = vmatpush1.msra.mxu0 0.0
    %8894 = vmatprep.subr.mxu0 0.0
    %8895 = vmatpush1.msra.mxu0 0.0
    %8896 = vmatprep.subr.mxu0 0.0
    %8897 = vmatpush1.msra.mxu0 0.0
    %8898 = vmatprep.subr.mxu0 0.0
    %8899 = vmatpush1.msra.mxu0 0.0
    %8900 = vmatprep.subr.mxu0 0.0
    %8901 = vmatpush1.msra.mxu0 0.0
    %8902 = vmatprep.subr.mxu0 0.0
    %8903 = vmatpush1.msra.mxu0 0.0
    %8904 = vmatprep.subr.mxu0 0.0
    %8905 = vmatpush1.msra.mxu0 0.0
    %8906 = vmatprep.subr.mxu0 0.0
    %8907 = vmatpush1.msra.mxu0 0.0
    %8908 = vmatprep.subr.mxu0 0.0
    %8909 = vmatpush1.msra.mxu0 0.0
    %8910 = vmatprep.subr.mxu0 0.0
    %8911 = vmatpush1.msra.mxu0 0.0
    %8912 = vmatprep.mubr.f32.mxu0 0.0
    %8913 = vmatmul.mubr.f32.gmra.mrb[0].mxu0 %v8846
    %v8914 = vpop.f32.mrb[0].mxu0
    %v8915 = vadd.f32 %v8840, %v8914
    %v8916 = vpop.f32.mrb[0].mxu0
    %8917 = vdwg.mxu0
    %v8918 = vadd.f32 %v8915, %v6206
    %v8919 = vxor.u32 %v8918, 2147483648
    %v8920 = vmul.f32 %v8919, 1.442695
    %v8921 = vpow.pop %v8920
    %v8922 = vadd.f32 %v8921, 1.0
    %v8923 = vrcp.pop %v8922
    %v8924 = vmul.f32 1.0, %v8923
    %v8925 = vtanh.pop %v8918
    %v8926 = vmul.f32 %v8924, %v8665
    %8928 = vrot.lane.b32.xlu0 %v8925, 32
    %v8929 = vpop.permute.xlu0 %8928
    %v8931 = vmul.f32 %v8924, %v8929
    %8933 = vrot.lane.b32.xlu0 %v8931, 32
    %v8934 = vpop.permute.xlu0 %8933
    %v8936 = vadd.f32 %v8926, %v8934
    %v8937 = vtanh.pop %v8936
    %8939 = vrot.lane.b32.xlu0 %v8937, 32
    %v8940 = vpop.permute.xlu0 %8939
    %v8942 = vmul.f32 %v8924, %v8940
    %v8943 = vld [vmem:[#allocation2 + $0x16] sm:$0x3]
    %8944 = vmatprep.subr.mxu0 0.0
    %8945 = vmatpush1.msra.mxu0 %v5841
    %8946 = vmatprep.subr.mxu0 0.0
    %8947 = vmatpush1.msra.mxu0 %v5842
    %8948 = vmatprep.subr.mxu0 0.0
    %8949 = vmatpush1.msra.mxu0 %v5843
    %8950 = vmatprep.subr.mxu0 0.0
    %8951 = vmatpush1.msra.mxu0 %v5844
    %8952 = vmatprep.subr.mxu0 0.0
    %8953 = vmatpush1.msra.mxu0 0.0
    %8954 = vmatprep.subr.mxu0 0.0
    %8955 = vmatpush1.msra.mxu0 0.0
    %8956 = vmatprep.subr.mxu0 0.0
    %8957 = vmatpush1.msra.mxu0 0.0
    %8958 = vmatprep.subr.mxu0 0.0
    %8959 = vmatpush1.msra.mxu0 0.0
    %8960 = vmatprep.subr.mxu0 0.0
    %8961 = vmatpush1.msra.mxu0 0.0
    %8962 = vmatprep.subr.mxu0 0.0
    %8963 = vmatpush1.msra.mxu0 0.0
    %8964 = vmatprep.subr.mxu0 0.0
    %8965 = vmatpush1.msra.mxu0 0.0
    %8966 = vmatprep.subr.mxu0 0.0
    %8967 = vmatpush1.msra.mxu0 0.0
    %8968 = vmatprep.subr.mxu0 0.0
    %8969 = vmatpush1.msra.mxu0 0.0
    %8970 = vmatprep.subr.mxu0 0.0
    %8971 = vmatpush1.msra.mxu0 0.0
    %8972 = vmatprep.subr.mxu0 0.0
    %8973 = vmatpush1.msra.mxu0 0.0
    %8974 = vmatprep.subr.mxu0 0.0
    %8975 = vmatpush1.msra.mxu0 0.0
    %8976 = vmatprep.subr.mxu0 0.0
    %8977 = vmatpush1.msra.mxu0 0.0
    %8978 = vmatprep.subr.mxu0 0.0
    %8979 = vmatpush1.msra.mxu0 0.0
    %8980 = vmatprep.subr.mxu0 0.0
    %8981 = vmatpush1.msra.mxu0 0.0
    %8982 = vmatprep.subr.mxu0 0.0
    %8983 = vmatpush1.msra.mxu0 0.0
    %8984 = vmatprep.subr.mxu0 0.0
    %8985 = vmatpush1.msra.mxu0 0.0
    %8986 = vmatprep.subr.mxu0 0.0
    %8987 = vmatpush1.msra.mxu0 0.0
    %8988 = vmatprep.subr.mxu0 0.0
    %8989 = vmatpush1.msra.mxu0 0.0
    %8990 = vmatprep.subr.mxu0 0.0
    %8991 = vmatpush1.msra.mxu0 0.0
    %8992 = vmatprep.subr.mxu0 0.0
    %8993 = vmatpush1.msra.mxu0 0.0
    %8994 = vmatprep.subr.mxu0 0.0
    %8995 = vmatpush1.msra.mxu0 0.0
    %8996 = vmatprep.subr.mxu0 0.0
    %8997 = vmatpush1.msra.mxu0 0.0
    %8998 = vmatprep.subr.mxu0 0.0
    %8999 = vmatpush1.msra.mxu0 0.0
    %9000 = vmatprep.subr.mxu0 0.0
    %9001 = vmatpush1.msra.mxu0 0.0
    %9002 = vmatprep.subr.mxu0 0.0
    %9003 = vmatpush1.msra.mxu0 0.0
    %9004 = vmatprep.subr.mxu0 0.0
    %9005 = vmatpush1.msra.mxu0 0.0
    %9006 = vmatprep.subr.mxu0 0.0
    %9007 = vmatpush1.msra.mxu0 0.0
    %9008 = vmatprep.mubr.f32.mxu0 0.0
    %9009 = vmatmul.mubr.f32.gmra.mrb[0].mxu0 %v8846
    %v9010 = vpop.f32.mrb[0].mxu0
    %v9011 = vadd.f32 0.0, %v9010
    %v9012 = vpop.f32.mrb[0].mxu0
    %9013 = vdwg.mxu0
    %v9014 = vadd.f32 %v8943, %v9011
    %v9015 = vxor.u32 %v9014, 2147483648
    %v9016 = vmul.f32 %v9015, 1.442695
    %v9017 = vpow.pop %v9016
    %v9018 = vadd.f32 %v9017, 1.0
    %v9019 = vrcp.pop %v9018
    %v9020 = vmul.f32 1.0, %v9019
    %v9021 = vtanh.pop %v9014
    %v9022 = vmul.f32 %v9020, %v8761
    %9024 = vrot.lane.b32.xlu0 %v9021, 32
    %v9025 = vpop.permute.xlu0 %9024
    %v9027 = vmul.f32 %v9020, %v9025
    %9029 = vrot.lane.b32.xlu0 %v9027, 32
    %v9030 = vpop.permute.xlu0 %9029
    %v9032 = vadd.f32 %v9022, %v9030
    %v9033 = vtanh.pop %v9032
    %9035 = vrot.lane.b32.xlu0 %v9033, 32
    %v9036 = vpop.permute.xlu0 %9035
    %v9038 = vmul.f32 %v9020, %v9036
    %9040 = vrot.lane.b32.xlu0 %v8942, 64
    %v9041 = vpop.permute.xlu0 %9040
    %v9042 = vsel %vm190, %v9041, 0
    %9044 = vmatprep.subr.mxu0 0.0
    %9045 = vmatpush1.msra.mxu0 %v5845
    %9046 = vmatprep.subr.mxu0 0.0
    %9047 = vmatpush1.msra.mxu0 %v5846
    %9048 = vmatprep.subr.mxu0 0.0
    %9049 = vmatpush1.msra.mxu0 %v5847
    %9050 = vmatprep.subr.mxu0 0.0
    %9051 = vmatpush1.msra.mxu0 %v5848
    %9052 = vmatprep.subr.mxu0 0.0
    %9053 = vmatpush1.msra.mxu0 0.0
    %9054 = vmatprep.subr.mxu0 0.0
    %9055 = vmatpush1.msra.mxu0 0.0
    %9056 = vmatprep.subr.mxu0 0.0
    %9057 = vmatpush1.msra.mxu0 0.0
    %9058 = vmatprep.subr.mxu0 0.0
    %9059 = vmatpush1.msra.mxu0 0.0
    %9060 = vmatprep.subr.mxu0 0.0
    %9061 = vmatpush1.msra.mxu0 0.0
    %9062 = vmatprep.subr.mxu0 0.0
    %9063 = vmatpush1.msra.mxu0 0.0
    %9064 = vmatprep.subr.mxu0 0.0
    %9065 = vmatpush1.msra.mxu0 0.0
    %9066 = vmatprep.subr.mxu0 0.0
    %9067 = vmatpush1.msra.mxu0 0.0
    %9068 = vmatprep.subr.mxu0 0.0
    %9069 = vmatpush1.msra.mxu0 0.0
    %9070 = vmatprep.subr.mxu0 0.0
    %9071 = vmatpush1.msra.mxu0 0.0
    %9072 = vmatprep.subr.mxu0 0.0
    %9073 = vmatpush1.msra.mxu0 0.0
    %9074 = vmatprep.subr.mxu0 0.0
    %9075 = vmatpush1.msra.mxu0 0.0
    %9076 = vmatprep.subr.mxu0 0.0
    %9077 = vmatpush1.msra.mxu0 0.0
    %9078 = vmatprep.subr.mxu0 0.0
    %9079 = vmatpush1.msra.mxu0 0.0
    %9080 = vmatprep.subr.mxu0 0.0
    %9081 = vmatpush1.msra.mxu0 0.0
    %9082 = vmatprep.subr.mxu0 0.0
    %9083 = vmatpush1.msra.mxu0 0.0
    %9084 = vmatprep.subr.mxu0 0.0
    %9085 = vmatpush1.msra.mxu0 0.0
    %9086 = vmatprep.subr.mxu0 0.0
    %9087 = vmatpush1.msra.mxu0 0.0
    %9088 = vmatprep.subr.mxu0 0.0
    %9089 = vmatpush1.msra.mxu0 0.0
    %9090 = vmatprep.subr.mxu0 0.0
    %9091 = vmatpush1.msra.mxu0 0.0
    %9092 = vmatprep.subr.mxu0 0.0
    %9093 = vmatpush1.msra.mxu0 0.0
    %9094 = vmatprep.subr.mxu0 0.0
    %9095 = vmatpush1.msra.mxu0 0.0
    %9096 = vmatprep.subr.mxu0 0.0
    %9097 = vmatpush1.msra.mxu0 0.0
    %9098 = vmatprep.subr.mxu0 0.0
    %9099 = vmatpush1.msra.mxu0 0.0
    %9100 = vmatprep.subr.mxu0 0.0
    %9101 = vmatpush1.msra.mxu0 0.0
    %9102 = vmatprep.subr.mxu0 0.0
    %9103 = vmatpush1.msra.mxu0 0.0
    %9104 = vmatprep.subr.mxu0 0.0
    %9105 = vmatpush1.msra.mxu0 0.0
    %9106 = vmatprep.subr.mxu0 0.0
    %9107 = vmatpush1.msra.mxu0 0.0
    %9108 = vmatprep.mubr.f32.mxu0 0.0
    %9109 = vmatmul.mubr.f32.gmra.mrb[0].mxu0 %v9042
    %v9110 = vpop.f32.mrb[0].mxu0
    %v9111 = vadd.f32 0.0, %v9110
    %v9112 = vpop.f32.mrb[0].mxu0
    %9113 = vdwg.mxu0
    %9115 = vrot.lane.b32.xlu0 %v9038, 64
    %v9116 = vpop.permute.xlu0 %9115
    %v9117 = vsel %vm190, %v9116, 0
    %9119 = vmatprep.subr.mxu0 0.0
    %9120 = vmatpush1.msra.mxu0 %v5837
    %9121 = vmatprep.subr.mxu0 0.0
    %9122 = vmatpush1.msra.mxu0 %v5838
    %9123 = vmatprep.subr.mxu0 0.0
    %9124 = vmatpush1.msra.mxu0 %v5839
    %9125 = vmatprep.subr.mxu0 0.0
    %9126 = vmatpush1.msra.mxu0 %v5840
    %9127 = vmatprep.subr.mxu0 0.0
    %9128 = vmatpush1.msra.mxu0 0.0
    %9129 = vmatprep.subr.mxu0 0.0
    %9130 = vmatpush1.msra.mxu0 0.0
    %9131 = vmatprep.subr.mxu0 0.0
    %9132 = vmatpush1.msra.mxu0 0.0
    %9133 = vmatprep.subr.mxu0 0.0
    %9134 = vmatpush1.msra.mxu0 0.0
    %9135 = vmatprep.subr.mxu0 0.0
    %9136 = vmatpush1.msra.mxu0 0.0
    %9137 = vmatprep.subr.mxu0 0.0
    %9138 = vmatpush1.msra.mxu0 0.0
    %9139 = vmatprep.subr.mxu0 0.0
    %9140 = vmatpush1.msra.mxu0 0.0
    %9141 = vmatprep.subr.mxu0 0.0
    %9142 = vmatpush1.msra.mxu0 0.0
    %9143 = vmatprep.subr.mxu0 0.0
    %9144 = vmatpush1.msra.mxu0 0.0
    %9145 = vmatprep.subr.mxu0 0.0
    %9146 = vmatpush1.msra.mxu0 0.0
    %9147 = vmatprep.subr.mxu0 0.0
    %9148 = vmatpush1.msra.mxu0 0.0
    %9149 = vmatprep.subr.mxu0 0.0
    %9150 = vmatpush1.msra.mxu0 0.0
    %9151 = vmatprep.subr.mxu0 0.0
    %9152 = vmatpush1.msra.mxu0 0.0
    %9153 = vmatprep.subr.mxu0 0.0
    %9154 = vmatpush1.msra.mxu0 0.0
    %9155 = vmatprep.subr.mxu0 0.0
    %9156 = vmatpush1.msra.mxu0 0.0
    %9157 = vmatprep.subr.mxu0 0.0
    %9158 = vmatpush1.msra.mxu0 0.0
    %9159 = vmatprep.subr.mxu0 0.0
    %9160 = vmatpush1.msra.mxu0 0.0
    %9161 = vmatprep.subr.mxu0 0.0
    %9162 = vmatpush1.msra.mxu0 0.0
    %9163 = vmatprep.subr.mxu0 0.0
    %9164 = vmatpush1.msra.mxu0 0.0
    %9165 = vmatprep.subr.mxu0 0.0
    %9166 = vmatpush1.msra.mxu0 0.0
    %9167 = vmatprep.subr.mxu0 0.0
    %9168 = vmatpush1.msra.mxu0 0.0
    %9169 = vmatprep.subr.mxu0 0.0
    %9170 = vmatpush1.msra.mxu0 0.0
    %9171 = vmatprep.subr.mxu0 0.0
    %9172 = vmatpush1.msra.mxu0 0.0
    %9173 = vmatprep.subr.mxu0 0.0
    %9174 = vmatpush1.msra.mxu0 0.0
    %9175 = vmatprep.subr.mxu0 0.0
    %9176 = vmatpush1.msra.mxu0 0.0
    %9177 = vmatprep.subr.mxu0 0.0
    %9178 = vmatpush1.msra.mxu0 0.0
    %9179 = vmatprep.subr.mxu0 0.0
    %9180 = vmatpush1.msra.mxu0 0.0
    %9181 = vmatprep.subr.mxu0 0.0
    %9182 = vmatpush1.msra.mxu0 0.0
    %9183 = vmatprep.mubr.f32.mxu0 0.0
    %9184 = vmatmul.mubr.f32.gmra.mrb[0].mxu0 %v9117
    %v9185 = vpop.f32.mrb[0].mxu0
    %v9186 = vadd.f32 %v9111, %v9185
    %v9187 = vpop.f32.mrb[0].mxu0
    %9188 = vdwg.mxu0
    %v9189 = vadd.f32 %v9186, %v6206
    %v9190 = vxor.u32 %v9189, 2147483648
    %v9191 = vmul.f32 %v9190, 1.442695
    %v9192 = vpow.pop %v9191
    %v9193 = vadd.f32 %v9192, 1.0
    %v9194 = vrcp.pop %v9193
    %v9195 = vmul.f32 1.0, %v9194
    %v9196 = vtanh.pop %v9189
    %v9197 = vmul.f32 %v9195, %v8936
    %9199 = vrot.lane.b32.xlu0 %v9196, 32
    %v9200 = vpop.permute.xlu0 %9199
    %v9202 = vmul.f32 %v9195, %v9200
    %9204 = vrot.lane.b32.xlu0 %v9202, 32
    %v9205 = vpop.permute.xlu0 %9204
    %v9207 = vadd.f32 %v9197, %v9205
    %v9208 = vtanh.pop %v9207
    %9210 = vrot.lane.b32.xlu0 %v9208, 32
    %v9211 = vpop.permute.xlu0 %9210
    %v9213 = vmul.f32 %v9195, %v9211
    %v9214 = vld [vmem:[#allocation2 + $0x18] sm:$0x3]
    %9215 = vmatprep.subr.mxu0 0.0
    %9216 = vmatpush1.msra.mxu0 %v5841
    %9217 = vmatprep.subr.mxu0 0.0
    %9218 = vmatpush1.msra.mxu0 %v5842
    %9219 = vmatprep.subr.mxu0 0.0
    %9220 = vmatpush1.msra.mxu0 %v5843
    %9221 = vmatprep.subr.mxu0 0.0
    %9222 = vmatpush1.msra.mxu0 %v5844
    %9223 = vmatprep.subr.mxu0 0.0
    %9224 = vmatpush1.msra.mxu0 0.0
    %9225 = vmatprep.subr.mxu0 0.0
    %9226 = vmatpush1.msra.mxu0 0.0
    %9227 = vmatprep.subr.mxu0 0.0
    %9228 = vmatpush1.msra.mxu0 0.0
    %9229 = vmatprep.subr.mxu0 0.0
    %9230 = vmatpush1.msra.mxu0 0.0
    %9231 = vmatprep.subr.mxu0 0.0
    %9232 = vmatpush1.msra.mxu0 0.0
    %9233 = vmatprep.subr.mxu0 0.0
    %9234 = vmatpush1.msra.mxu0 0.0
    %9235 = vmatprep.subr.mxu0 0.0
    %9236 = vmatpush1.msra.mxu0 0.0
    %9237 = vmatprep.subr.mxu0 0.0
    %9238 = vmatpush1.msra.mxu0 0.0
    %9239 = vmatprep.subr.mxu0 0.0
    %9240 = vmatpush1.msra.mxu0 0.0
    %9241 = vmatprep.subr.mxu0 0.0
    %9242 = vmatpush1.msra.mxu0 0.0
    %9243 = vmatprep.subr.mxu0 0.0
    %9244 = vmatpush1.msra.mxu0 0.0
    %9245 = vmatprep.subr.mxu0 0.0
    %9246 = vmatpush1.msra.mxu0 0.0
    %9247 = vmatprep.subr.mxu0 0.0
    %9248 = vmatpush1.msra.mxu0 0.0
    %9249 = vmatprep.subr.mxu0 0.0
    %9250 = vmatpush1.msra.mxu0 0.0
    %9251 = vmatprep.subr.mxu0 0.0
    %9252 = vmatpush1.msra.mxu0 0.0
    %9253 = vmatprep.subr.mxu0 0.0
    %9254 = vmatpush1.msra.mxu0 0.0
    %9255 = vmatprep.subr.mxu0 0.0
    %9256 = vmatpush1.msra.mxu0 0.0
    %9257 = vmatprep.subr.mxu0 0.0
    %9258 = vmatpush1.msra.mxu0 0.0
    %9259 = vmatprep.subr.mxu0 0.0
    %9260 = vmatpush1.msra.mxu0 0.0
    %9261 = vmatprep.subr.mxu0 0.0
    %9262 = vmatpush1.msra.mxu0 0.0
    %9263 = vmatprep.subr.mxu0 0.0
    %9264 = vmatpush1.msra.mxu0 0.0
    %9265 = vmatprep.subr.mxu0 0.0
    %9266 = vmatpush1.msra.mxu0 0.0
    %9267 = vmatprep.subr.mxu0 0.0
    %9268 = vmatpush1.msra.mxu0 0.0
    %9269 = vmatprep.subr.mxu0 0.0
    %9270 = vmatpush1.msra.mxu0 0.0
    %9271 = vmatprep.subr.mxu0 0.0
    %9272 = vmatpush1.msra.mxu0 0.0
    %9273 = vmatprep.subr.mxu0 0.0
    %9274 = vmatpush1.msra.mxu0 0.0
    %9275 = vmatprep.subr.mxu0 0.0
    %9276 = vmatpush1.msra.mxu0 0.0
    %9277 = vmatprep.subr.mxu0 0.0
    %9278 = vmatpush1.msra.mxu0 0.0
    %9279 = vmatprep.mubr.f32.mxu0 0.0
    %9280 = vmatmul.mubr.f32.gmra.mrb[0].mxu0 %v9117
    %v9281 = vpop.f32.mrb[0].mxu0
    %v9282 = vadd.f32 0.0, %v9281
    %v9283 = vpop.f32.mrb[0].mxu0
    %9284 = vdwg.mxu0
    %v9285 = vadd.f32 %v9214, %v9282
    %v9286 = vxor.u32 %v9285, 2147483648
    %v9287 = vmul.f32 %v9286, 1.442695
    %v9288 = vpow.pop %v9287
    %v9289 = vadd.f32 %v9288, 1.0
    %v9290 = vrcp.pop %v9289
    %v9291 = vmul.f32 1.0, %v9290
    %v9292 = vtanh.pop %v9285
    %v9293 = vmul.f32 %v9291, %v9032
    %9295 = vrot.lane.b32.xlu0 %v9292, 32
    %v9296 = vpop.permute.xlu0 %9295
    %v9298 = vmul.f32 %v9291, %v9296
    %9300 = vrot.lane.b32.xlu0 %v9298, 32
    %v9301 = vpop.permute.xlu0 %9300
    %v9303 = vadd.f32 %v9293, %v9301
    %v9304 = vtanh.pop %v9303
    %9306 = vrot.lane.b32.xlu0 %v9304, 32
    %v9307 = vpop.permute.xlu0 %9306
    %v9309 = vmul.f32 %v9291, %v9307
    %9311 = vrot.lane.b32.xlu0 %v9213, 64
    %v9312 = vpop.permute.xlu0 %9311
    %v9313 = vsel %vm190, %v9312, 0
    %9315 = vmatprep.subr.mxu0 0.0
    %9316 = vmatpush1.msra.mxu0 %v5845
    %9317 = vmatprep.subr.mxu0 0.0
    %9318 = vmatpush1.msra.mxu0 %v5846
    %9319 = vmatprep.subr.mxu0 0.0
    %9320 = vmatpush1.msra.mxu0 %v5847
    %9321 = vmatprep.subr.mxu0 0.0
    %9322 = vmatpush1.msra.mxu0 %v5848
    %9323 = vmatprep.subr.mxu0 0.0
    %9324 = vmatpush1.msra.mxu0 0.0
    %9325 = vmatprep.subr.mxu0 0.0
    %9326 = vmatpush1.msra.mxu0 0.0
    %9327 = vmatprep.subr.mxu0 0.0
    %9328 = vmatpush1.msra.mxu0 0.0
    %9329 = vmatprep.subr.mxu0 0.0
    %9330 = vmatpush1.msra.mxu0 0.0
    %9331 = vmatprep.subr.mxu0 0.0
    %9332 = vmatpush1.msra.mxu0 0.0
    %9333 = vmatprep.subr.mxu0 0.0
    %9334 = vmatpush1.msra.mxu0 0.0
    %9335 = vmatprep.subr.mxu0 0.0
    %9336 = vmatpush1.msra.mxu0 0.0
    %9337 = vmatprep.subr.mxu0 0.0
    %9338 = vmatpush1.msra.mxu0 0.0
    %9339 = vmatprep.subr.mxu0 0.0
    %9340 = vmatpush1.msra.mxu0 0.0
    %9341 = vmatprep.subr.mxu0 0.0
    %9342 = vmatpush1.msra.mxu0 0.0
    %9343 = vmatprep.subr.mxu0 0.0
    %9344 = vmatpush1.msra.mxu0 0.0
    %9345 = vmatprep.subr.mxu0 0.0
    %9346 = vmatpush1.msra.mxu0 0.0
    %9347 = vmatprep.subr.mxu0 0.0
    %9348 = vmatpush1.msra.mxu0 0.0
    %9349 = vmatprep.subr.mxu0 0.0
    %9350 = vmatpush1.msra.mxu0 0.0
    %9351 = vmatprep.subr.mxu0 0.0
    %9352 = vmatpush1.msra.mxu0 0.0
    %9353 = vmatprep.subr.mxu0 0.0
    %9354 = vmatpush1.msra.mxu0 0.0
    %9355 = vmatprep.subr.mxu0 0.0
    %9356 = vmatpush1.msra.mxu0 0.0
    %9357 = vmatprep.subr.mxu0 0.0
    %9358 = vmatpush1.msra.mxu0 0.0
    %9359 = vmatprep.subr.mxu0 0.0
    %9360 = vmatpush1.msra.mxu0 0.0
    %9361 = vmatprep.subr.mxu0 0.0
    %9362 = vmatpush1.msra.mxu0 0.0
    %9363 = vmatprep.subr.mxu0 0.0
    %9364 = vmatpush1.msra.mxu0 0.0
    %9365 = vmatprep.subr.mxu0 0.0
    %9366 = vmatpush1.msra.mxu0 0.0
    %9367 = vmatprep.subr.mxu0 0.0
    %9368 = vmatpush1.msra.mxu0 0.0
    %9369 = vmatprep.subr.mxu0 0.0
    %9370 = vmatpush1.msra.mxu0 0.0
    %9371 = vmatprep.subr.mxu0 0.0
    %9372 = vmatpush1.msra.mxu0 0.0
    %9373 = vmatprep.subr.mxu0 0.0
    %9374 = vmatpush1.msra.mxu0 0.0
    %9375 = vmatprep.subr.mxu0 0.0
    %9376 = vmatpush1.msra.mxu0 0.0
    %9377 = vmatprep.subr.mxu0 0.0
    %9378 = vmatpush1.msra.mxu0 0.0
    %9379 = vmatprep.mubr.f32.mxu0 0.0
    %9380 = vmatmul.mubr.f32.gmra.mrb[0].mxu0 %v9313
    %v9381 = vpop.f32.mrb[0].mxu0
    %v9382 = vadd.f32 0.0, %v9381
    %v9383 = vpop.f32.mrb[0].mxu0
    %9384 = vdwg.mxu0
    %9386 = vrot.lane.b32.xlu0 %v9309, 64
    %v9387 = vpop.permute.xlu0 %9386
    %v9388 = vsel %vm190, %v9387, 0
    %9390 = vmatprep.subr.mxu0 0.0
    %9391 = vmatpush1.msra.mxu0 %v5837
    %9392 = vmatprep.subr.mxu0 0.0
    %9393 = vmatpush1.msra.mxu0 %v5838
    %9394 = vmatprep.subr.mxu0 0.0
    %9395 = vmatpush1.msra.mxu0 %v5839
    %9396 = vmatprep.subr.mxu0 0.0
    %9397 = vmatpush1.msra.mxu0 %v5840
    %9398 = vmatprep.subr.mxu0 0.0
    %9399 = vmatpush1.msra.mxu0 0.0
    %9400 = vmatprep.subr.mxu0 0.0
    %9401 = vmatpush1.msra.mxu0 0.0
    %9402 = vmatprep.subr.mxu0 0.0
    %9403 = vmatpush1.msra.mxu0 0.0
    %9404 = vmatprep.subr.mxu0 0.0
    %9405 = vmatpush1.msra.mxu0 0.0
    %9406 = vmatprep.subr.mxu0 0.0
    %9407 = vmatpush1.msra.mxu0 0.0
    %9408 = vmatprep.subr.mxu0 0.0
    %9409 = vmatpush1.msra.mxu0 0.0
    %9410 = vmatprep.subr.mxu0 0.0
    %9411 = vmatpush1.msra.mxu0 0.0
    %9412 = vmatprep.subr.mxu0 0.0
    %9413 = vmatpush1.msra.mxu0 0.0
    %9414 = vmatprep.subr.mxu0 0.0
    %9415 = vmatpush1.msra.mxu0 0.0
    %9416 = vmatprep.subr.mxu0 0.0
    %9417 = vmatpush1.msra.mxu0 0.0
    %9418 = vmatprep.subr.mxu0 0.0
    %9419 = vmatpush1.msra.mxu0 0.0
    %9420 = vmatprep.subr.mxu0 0.0
    %9421 = vmatpush1.msra.mxu0 0.0
    %9422 = vmatprep.subr.mxu0 0.0
    %9423 = vmatpush1.msra.mxu0 0.0
    %9424 = vmatprep.subr.mxu0 0.0
    %9425 = vmatpush1.msra.mxu0 0.0
    %9426 = vmatprep.subr.mxu0 0.0
    %9427 = vmatpush1.msra.mxu0 0.0
    %9428 = vmatprep.subr.mxu0 0.0
    %9429 = vmatpush1.msra.mxu0 0.0
    %9430 = vmatprep.subr.mxu0 0.0
    %9431 = vmatpush1.msra.mxu0 0.0
    %9432 = vmatprep.subr.mxu0 0.0
    %9433 = vmatpush1.msra.mxu0 0.0
    %9434 = vmatprep.subr.mxu0 0.0
    %9435 = vmatpush1.msra.mxu0 0.0
    %9436 = vmatprep.subr.mxu0 0.0
    %9437 = vmatpush1.msra.mxu0 0.0
    %9438 = vmatprep.subr.mxu0 0.0
    %9439 = vmatpush1.msra.mxu0 0.0
    %9440 = vmatprep.subr.mxu0 0.0
    %9441 = vmatpush1.msra.mxu0 0.0
    %9442 = vmatprep.subr.mxu0 0.0
    %9443 = vmatpush1.msra.mxu0 0.0
    %9444 = vmatprep.subr.mxu0 0.0
    %9445 = vmatpush1.msra.mxu0 0.0
    %9446 = vmatprep.subr.mxu0 0.0
    %9447 = vmatpush1.msra.mxu0 0.0
    %9448 = vmatprep.subr.mxu0 0.0
    %9449 = vmatpush1.msra.mxu0 0.0
    %9450 = vmatprep.subr.mxu0 0.0
    %9451 = vmatpush1.msra.mxu0 0.0
    %9452 = vmatprep.subr.mxu0 0.0
    %9453 = vmatpush1.msra.mxu0 0.0
    %9454 = vmatprep.mubr.f32.mxu0 0.0
    %9455 = vmatmul.mubr.f32.gmra.mrb[0].mxu0 %v9388
    %v9456 = vpop.f32.mrb[0].mxu0
    %v9457 = vadd.f32 %v9382, %v9456
    %v9458 = vpop.f32.mrb[0].mxu0
    %9459 = vdwg.mxu0
    %v9460 = vadd.f32 %v9457, %v6206
    %v9461 = vxor.u32 %v9460, 2147483648
    %v9462 = vmul.f32 %v9461, 1.442695
    %v9463 = vpow.pop %v9462
    %v9464 = vadd.f32 %v9463, 1.0
    %v9465 = vrcp.pop %v9464
    %v9466 = vmul.f32 1.0, %v9465
    %v9467 = vtanh.pop %v9460
    %v9468 = vmul.f32 %v9466, %v9207
    %9470 = vrot.lane.b32.xlu0 %v9467, 32
    %v9471 = vpop.permute.xlu0 %9470
    %v9473 = vmul.f32 %v9466, %v9471
    %9475 = vrot.lane.b32.xlu0 %v9473, 32
    %v9476 = vpop.permute.xlu0 %9475
    %v9478 = vadd.f32 %v9468, %v9476
    %v9479 = vtanh.pop %v9478
    %9481 = vrot.lane.b32.xlu0 %v9479, 32
    %v9482 = vpop.permute.xlu0 %9481
    %v9484 = vmul.f32 %v9466, %v9482
    %v9485 = vld [vmem:[#allocation2 + $0x1a] sm:$0x3]
    %9486 = vmatprep.subr.mxu0 0.0
    %9487 = vmatpush1.msra.mxu0 %v5841
    %9488 = vmatprep.subr.mxu0 0.0
    %9489 = vmatpush1.msra.mxu0 %v5842
    %9490 = vmatprep.subr.mxu0 0.0
    %9491 = vmatpush1.msra.mxu0 %v5843
    %9492 = vmatprep.subr.mxu0 0.0
    %9493 = vmatpush1.msra.mxu0 %v5844
    %9494 = vmatprep.subr.mxu0 0.0
    %9495 = vmatpush1.msra.mxu0 0.0
    %9496 = vmatprep.subr.mxu0 0.0
    %9497 = vmatpush1.msra.mxu0 0.0
    %9498 = vmatprep.subr.mxu0 0.0
    %9499 = vmatpush1.msra.mxu0 0.0
    %9500 = vmatprep.subr.mxu0 0.0
    %9501 = vmatpush1.msra.mxu0 0.0
    %9502 = vmatprep.subr.mxu0 0.0
    %9503 = vmatpush1.msra.mxu0 0.0
    %9504 = vmatprep.subr.mxu0 0.0
    %9505 = vmatpush1.msra.mxu0 0.0
    %9506 = vmatprep.subr.mxu0 0.0
    %9507 = vmatpush1.msra.mxu0 0.0
    %9508 = vmatprep.subr.mxu0 0.0
    %9509 = vmatpush1.msra.mxu0 0.0
    %9510 = vmatprep.subr.mxu0 0.0
    %9511 = vmatpush1.msra.mxu0 0.0
    %9512 = vmatprep.subr.mxu0 0.0
    %9513 = vmatpush1.msra.mxu0 0.0
    %9514 = vmatprep.subr.mxu0 0.0
    %9515 = vmatpush1.msra.mxu0 0.0
    %9516 = vmatprep.subr.mxu0 0.0
    %9517 = vmatpush1.msra.mxu0 0.0
    %9518 = vmatprep.subr.mxu0 0.0
    %9519 = vmatpush1.msra.mxu0 0.0
    %9520 = vmatprep.subr.mxu0 0.0
    %9521 = vmatpush1.msra.mxu0 0.0
    %9522 = vmatprep.subr.mxu0 0.0
    %9523 = vmatpush1.msra.mxu0 0.0
    %9524 = vmatprep.subr.mxu0 0.0
    %9525 = vmatpush1.msra.mxu0 0.0
    %9526 = vmatprep.subr.mxu0 0.0
    %9527 = vmatpush1.msra.mxu0 0.0
    %9528 = vmatprep.subr.mxu0 0.0
    %9529 = vmatpush1.msra.mxu0 0.0
    %9530 = vmatprep.subr.mxu0 0.0
    %9531 = vmatpush1.msra.mxu0 0.0
    %9532 = vmatprep.subr.mxu0 0.0
    %9533 = vmatpush1.msra.mxu0 0.0
    %9534 = vmatprep.subr.mxu0 0.0
    %9535 = vmatpush1.msra.mxu0 0.0
    %9536 = vmatprep.subr.mxu0 0.0
    %9537 = vmatpush1.msra.mxu0 0.0
    %9538 = vmatprep.subr.mxu0 0.0
    %9539 = vmatpush1.msra.mxu0 0.0
    %9540 = vmatprep.subr.mxu0 0.0
    %9541 = vmatpush1.msra.mxu0 0.0
    %9542 = vmatprep.subr.mxu0 0.0
    %9543 = vmatpush1.msra.mxu0 0.0
    %9544 = vmatprep.subr.mxu0 0.0
    %9545 = vmatpush1.msra.mxu0 0.0
    %9546 = vmatprep.subr.mxu0 0.0
    %9547 = vmatpush1.msra.mxu0 0.0
    %9548 = vmatprep.subr.mxu0 0.0
    %9549 = vmatpush1.msra.mxu0 0.0
    %9550 = vmatprep.mubr.f32.mxu0 0.0
    %9551 = vmatmul.mubr.f32.gmra.mrb[0].mxu0 %v9388
    %v9552 = vpop.f32.mrb[0].mxu0
    %v9553 = vadd.f32 0.0, %v9552
    %v9554 = vpop.f32.mrb[0].mxu0
    %9555 = vdwg.mxu0
    %v9556 = vadd.f32 %v9485, %v9553
    %v9557 = vxor.u32 %v9556, 2147483648
    %v9558 = vmul.f32 %v9557, 1.442695
    %v9559 = vpow.pop %v9558
    %v9560 = vadd.f32 %v9559, 1.0
    %v9561 = vrcp.pop %v9560
    %v9562 = vmul.f32 1.0, %v9561
    %v9563 = vtanh.pop %v9556
    %v9564 = vmul.f32 %v9562, %v9303
    %9566 = vrot.lane.b32.xlu0 %v9563, 32
    %v9567 = vpop.permute.xlu0 %9566
    %v9569 = vmul.f32 %v9562, %v9567
    %9571 = vrot.lane.b32.xlu0 %v9569, 32
    %v9572 = vpop.permute.xlu0 %9571
    %v9574 = vadd.f32 %v9564, %v9572
    %v9575 = vtanh.pop %v9574
    %9577 = vrot.lane.b32.xlu0 %v9575, 32
    %v9578 = vpop.permute.xlu0 %9577
    %v9580 = vmul.f32 %v9562, %v9578
    %9582 = vrot.lane.b32.xlu0 %v9484, 64
    %v9583 = vpop.permute.xlu0 %9582
    %v9584 = vsel %vm190, %v9583, 0
    %9586 = vmatprep.subr.mxu0 0.0
    %9587 = vmatpush1.msra.mxu0 %v5845
    %9588 = vmatprep.subr.mxu0 0.0
    %9589 = vmatpush1.msra.mxu0 %v5846
    %9590 = vmatprep.subr.mxu0 0.0
    %9591 = vmatpush1.msra.mxu0 %v5847
    %9592 = vmatprep.subr.mxu0 0.0
    %9593 = vmatpush1.msra.mxu0 %v5848
    %9594 = vmatprep.subr.mxu0 0.0
    %9595 = vmatpush1.msra.mxu0 0.0
    %9596 = vmatprep.subr.mxu0 0.0
    %9597 = vmatpush1.msra.mxu0 0.0
    %9598 = vmatprep.subr.mxu0 0.0
    %9599 = vmatpush1.msra.mxu0 0.0
    %9600 = vmatprep.subr.mxu0 0.0
    %9601 = vmatpush1.msra.mxu0 0.0
    %9602 = vmatprep.subr.mxu0 0.0
    %9603 = vmatpush1.msra.mxu0 0.0
    %9604 = vmatprep.subr.mxu0 0.0
    %9605 = vmatpush1.msra.mxu0 0.0
    %9606 = vmatprep.subr.mxu0 0.0
    %9607 = vmatpush1.msra.mxu0 0.0
    %9608 = vmatprep.subr.mxu0 0.0
    %9609 = vmatpush1.msra.mxu0 0.0
    %9610 = vmatprep.subr.mxu0 0.0
    %9611 = vmatpush1.msra.mxu0 0.0
    %9612 = vmatprep.subr.mxu0 0.0
    %9613 = vmatpush1.msra.mxu0 0.0
    %9614 = vmatprep.subr.mxu0 0.0
    %9615 = vmatpush1.msra.mxu0 0.0
    %9616 = vmatprep.subr.mxu0 0.0
    %9617 = vmatpush1.msra.mxu0 0.0
    %9618 = vmatprep.subr.mxu0 0.0
    %9619 = vmatpush1.msra.mxu0 0.0
    %9620 = vmatprep.subr.mxu0 0.0
    %9621 = vmatpush1.msra.mxu0 0.0
    %9622 = vmatprep.subr.mxu0 0.0
    %9623 = vmatpush1.msra.mxu0 0.0
    %9624 = vmatprep.subr.mxu0 0.0
    %9625 = vmatpush1.msra.mxu0 0.0
    %9626 = vmatprep.subr.mxu0 0.0
    %9627 = vmatpush1.msra.mxu0 0.0
    %9628 = vmatprep.subr.mxu0 0.0
    %9629 = vmatpush1.msra.mxu0 0.0
    %9630 = vmatprep.subr.mxu0 0.0
    %9631 = vmatpush1.msra.mxu0 0.0
    %9632 = vmatprep.subr.mxu0 0.0
    %9633 = vmatpush1.msra.mxu0 0.0
    %9634 = vmatprep.subr.mxu0 0.0
    %9635 = vmatpush1.msra.mxu0 0.0
    %9636 = vmatprep.subr.mxu0 0.0
    %9637 = vmatpush1.msra.mxu0 0.0
    %9638 = vmatprep.subr.mxu0 0.0
    %9639 = vmatpush1.msra.mxu0 0.0
    %9640 = vmatprep.subr.mxu0 0.0
    %9641 = vmatpush1.msra.mxu0 0.0
    %9642 = vmatprep.subr.mxu0 0.0
    %9643 = vmatpush1.msra.mxu0 0.0
    %9644 = vmatprep.subr.mxu0 0.0
    %9645 = vmatpush1.msra.mxu0 0.0
    %9646 = vmatprep.subr.mxu0 0.0
    %9647 = vmatpush1.msra.mxu0 0.0
    %9648 = vmatprep.subr.mxu0 0.0
    %9649 = vmatpush1.msra.mxu0 0.0
    %9650 = vmatprep.mubr.f32.mxu0 0.0
    %9651 = vmatmul.mubr.f32.gmra.mrb[0].mxu0 %v9584
    %v9652 = vpop.f32.mrb[0].mxu0
    %v9653 = vadd.f32 0.0, %v9652
    %v9654 = vpop.f32.mrb[0].mxu0
    %9655 = vdwg.mxu0
    %9657 = vrot.lane.b32.xlu0 %v9580, 64
    %v9658 = vpop.permute.xlu0 %9657
    %v9659 = vsel %vm190, %v9658, 0
    %9661 = vmatprep.subr.mxu0 0.0
    %9662 = vmatpush1.msra.mxu0 %v5837
    %9663 = vmatprep.subr.mxu0 0.0
    %9664 = vmatpush1.msra.mxu0 %v5838
    %9665 = vmatprep.subr.mxu0 0.0
    %9666 = vmatpush1.msra.mxu0 %v5839
    %9667 = vmatprep.subr.mxu0 0.0
    %9668 = vmatpush1.msra.mxu0 %v5840
    %9669 = vmatprep.subr.mxu0 0.0
    %9670 = vmatpush1.msra.mxu0 0.0
    %9671 = vmatprep.subr.mxu0 0.0
    %9672 = vmatpush1.msra.mxu0 0.0
    %9673 = vmatprep.subr.mxu0 0.0
    %9674 = vmatpush1.msra.mxu0 0.0
    %9675 = vmatprep.subr.mxu0 0.0
    %9676 = vmatpush1.msra.mxu0 0.0
    %9677 = vmatprep.subr.mxu0 0.0
    %9678 = vmatpush1.msra.mxu0 0.0
    %9679 = vmatprep.subr.mxu0 0.0
    %9680 = vmatpush1.msra.mxu0 0.0
    %9681 = vmatprep.subr.mxu0 0.0
    %9682 = vmatpush1.msra.mxu0 0.0
    %9683 = vmatprep.subr.mxu0 0.0
    %9684 = vmatpush1.msra.mxu0 0.0
    %9685 = vmatprep.subr.mxu0 0.0
    %9686 = vmatpush1.msra.mxu0 0.0
    %9687 = vmatprep.subr.mxu0 0.0
    %9688 = vmatpush1.msra.mxu0 0.0
    %9689 = vmatprep.subr.mxu0 0.0
    %9690 = vmatpush1.msra.mxu0 0.0
    %9691 = vmatprep.subr.mxu0 0.0
    %9692 = vmatpush1.msra.mxu0 0.0
    %9693 = vmatprep.subr.mxu0 0.0
    %9694 = vmatpush1.msra.mxu0 0.0
    %9695 = vmatprep.subr.mxu0 0.0
    %9696 = vmatpush1.msra.mxu0 0.0
    %9697 = vmatprep.subr.mxu0 0.0
    %9698 = vmatpush1.msra.mxu0 0.0
    %9699 = vmatprep.subr.mxu0 0.0
    %9700 = vmatpush1.msra.mxu0 0.0
    %9701 = vmatprep.subr.mxu0 0.0
    %9702 = vmatpush1.msra.mxu0 0.0
    %9703 = vmatprep.subr.mxu0 0.0
    %9704 = vmatpush1.msra.mxu0 0.0
    %9705 = vmatprep.subr.mxu0 0.0
    %9706 = vmatpush1.msra.mxu0 0.0
    %9707 = vmatprep.subr.mxu0 0.0
    %9708 = vmatpush1.msra.mxu0 0.0
    %9709 = vmatprep.subr.mxu0 0.0
    %9710 = vmatpush1.msra.mxu0 0.0
    %9711 = vmatprep.subr.mxu0 0.0
    %9712 = vmatpush1.msra.mxu0 0.0
    %9713 = vmatprep.subr.mxu0 0.0
    %9714 = vmatpush1.msra.mxu0 0.0
    %9715 = vmatprep.subr.mxu0 0.0
    %9716 = vmatpush1.msra.mxu0 0.0
    %9717 = vmatprep.subr.mxu0 0.0
    %9718 = vmatpush1.msra.mxu0 0.0
    %9719 = vmatprep.subr.mxu0 0.0
    %9720 = vmatpush1.msra.mxu0 0.0
    %9721 = vmatprep.subr.mxu0 0.0
    %9722 = vmatpush1.msra.mxu0 0.0
    %9723 = vmatprep.subr.mxu0 0.0
    %9724 = vmatpush1.msra.mxu0 0.0
    %9725 = vmatprep.mubr.f32.mxu0 0.0
    %9726 = vmatmul.mubr.f32.gmra.mrb[0].mxu0 %v9659
    %v9727 = vpop.f32.mrb[0].mxu0
    %v9728 = vadd.f32 %v9653, %v9727
    %v9729 = vpop.f32.mrb[0].mxu0
    %9730 = vdwg.mxu0
    %v9731 = vadd.f32 %v9728, %v6206
    %v9732 = vxor.u32 %v9731, 2147483648
    %v9733 = vmul.f32 %v9732, 1.442695
    %v9734 = vpow.pop %v9733
    %v9735 = vadd.f32 %v9734, 1.0
    %v9736 = vrcp.pop %v9735
    %v9737 = vmul.f32 1.0, %v9736
    %v9738 = vtanh.pop %v9731
    %v9739 = vmul.f32 %v9737, %v9478
    %9741 = vrot.lane.b32.xlu0 %v9738, 32
    %v9742 = vpop.permute.xlu0 %9741
    %v9744 = vmul.f32 %v9737, %v9742
    %9746 = vrot.lane.b32.xlu0 %v9744, 32
    %v9747 = vpop.permute.xlu0 %9746
    %v9749 = vadd.f32 %v9739, %v9747
    %v9750 = vtanh.pop %v9749
    %9752 = vrot.lane.b32.xlu0 %v9750, 32
    %v9753 = vpop.permute.xlu0 %9752
    %v9755 = vmul.f32 %v9737, %v9753
    %v9756 = vld [vmem:[#allocation2 + $0x1c] sm:$0x3]
    %9757 = vmatprep.subr.mxu0 0.0
    %9758 = vmatpush1.msra.mxu0 %v5841
    %9759 = vmatprep.subr.mxu0 0.0
    %9760 = vmatpush1.msra.mxu0 %v5842
    %9761 = vmatprep.subr.mxu0 0.0
    %9762 = vmatpush1.msra.mxu0 %v5843
    %9763 = vmatprep.subr.mxu0 0.0
    %9764 = vmatpush1.msra.mxu0 %v5844
    %9765 = vmatprep.subr.mxu0 0.0
    %9766 = vmatpush1.msra.mxu0 0.0
    %9767 = vmatprep.subr.mxu0 0.0
    %9768 = vmatpush1.msra.mxu0 0.0
    %9769 = vmatprep.subr.mxu0 0.0
    %9770 = vmatpush1.msra.mxu0 0.0
    %9771 = vmatprep.subr.mxu0 0.0
    %9772 = vmatpush1.msra.mxu0 0.0
    %9773 = vmatprep.subr.mxu0 0.0
    %9774 = vmatpush1.msra.mxu0 0.0
    %9775 = vmatprep.subr.mxu0 0.0
    %9776 = vmatpush1.msra.mxu0 0.0
    %9777 = vmatprep.subr.mxu0 0.0
    %9778 = vmatpush1.msra.mxu0 0.0
    %9779 = vmatprep.subr.mxu0 0.0
    %9780 = vmatpush1.msra.mxu0 0.0
    %9781 = vmatprep.subr.mxu0 0.0
    %9782 = vmatpush1.msra.mxu0 0.0
    %9783 = vmatprep.subr.mxu0 0.0
    %9784 = vmatpush1.msra.mxu0 0.0
    %9785 = vmatprep.subr.mxu0 0.0
    %9786 = vmatpush1.msra.mxu0 0.0
    %9787 = vmatprep.subr.mxu0 0.0
    %9788 = vmatpush1.msra.mxu0 0.0
    %9789 = vmatprep.subr.mxu0 0.0
    %9790 = vmatpush1.msra.mxu0 0.0
    %9791 = vmatprep.subr.mxu0 0.0
    %9792 = vmatpush1.msra.mxu0 0.0
    %9793 = vmatprep.subr.mxu0 0.0
    %9794 = vmatpush1.msra.mxu0 0.0
    %9795 = vmatprep.subr.mxu0 0.0
    %9796 = vmatpush1.msra.mxu0 0.0
    %9797 = vmatprep.subr.mxu0 0.0
    %9798 = vmatpush1.msra.mxu0 0.0
    %9799 = vmatprep.subr.mxu0 0.0
    %9800 = vmatpush1.msra.mxu0 0.0
    %9801 = vmatprep.subr.mxu0 0.0
    %9802 = vmatpush1.msra.mxu0 0.0
    %9803 = vmatprep.subr.mxu0 0.0
    %9804 = vmatpush1.msra.mxu0 0.0
    %9805 = vmatprep.subr.mxu0 0.0
    %9806 = vmatpush1.msra.mxu0 0.0
    %9807 = vmatprep.subr.mxu0 0.0
    %9808 = vmatpush1.msra.mxu0 0.0
    %9809 = vmatprep.subr.mxu0 0.0
    %9810 = vmatpush1.msra.mxu0 0.0
    %9811 = vmatprep.subr.mxu0 0.0
    %9812 = vmatpush1.msra.mxu0 0.0
    %9813 = vmatprep.subr.mxu0 0.0
    %9814 = vmatpush1.msra.mxu0 0.0
    %9815 = vmatprep.subr.mxu0 0.0
    %9816 = vmatpush1.msra.mxu0 0.0
    %9817 = vmatprep.subr.mxu0 0.0
    %9818 = vmatpush1.msra.mxu0 0.0
    %9819 = vmatprep.subr.mxu0 0.0
    %9820 = vmatpush1.msra.mxu0 0.0
    %9821 = vmatprep.mubr.f32.mxu0 0.0
    %9822 = vmatmul.mubr.f32.gmra.mrb[0].mxu0 %v9659
    %v9823 = vpop.f32.mrb[0].mxu0
    %v9824 = vadd.f32 0.0, %v9823
    %v9825 = vpop.f32.mrb[0].mxu0
    %9826 = vdwg.mxu0
    %v9827 = vadd.f32 %v9756, %v9824
    %v9828 = vxor.u32 %v9827, 2147483648
    %v9829 = vmul.f32 %v9828, 1.442695
    %v9830 = vpow.pop %v9829
    %v9831 = vadd.f32 %v9830, 1.0
    %v9832 = vrcp.pop %v9831
    %v9833 = vmul.f32 1.0, %v9832
    %v9834 = vtanh.pop %v9827
    %v9835 = vmul.f32 %v9833, %v9574
    %9837 = vrot.lane.b32.xlu0 %v9834, 32
    %v9838 = vpop.permute.xlu0 %9837
    %v9840 = vmul.f32 %v9833, %v9838
    %9842 = vrot.lane.b32.xlu0 %v9840, 32
    %v9843 = vpop.permute.xlu0 %9842
    %v9845 = vadd.f32 %v9835, %v9843
    %v9846 = vtanh.pop %v9845
    %9848 = vrot.lane.b32.xlu0 %v9846, 32
    %v9849 = vpop.permute.xlu0 %9848
    %v9851 = vmul.f32 %v9833, %v9849
    %9853 = vrot.lane.b32.xlu0 %v9755, 64
    %v9854 = vpop.permute.xlu0 %9853
    %v9855 = vsel %vm190, %v9854, 0
    %9857 = vmatprep.subr.mxu0 0.0
    %9858 = vmatpush1.msra.mxu0 %v5845
    %9859 = vmatprep.subr.mxu0 0.0
    %9860 = vmatpush1.msra.mxu0 %v5846
    %9861 = vmatprep.subr.mxu0 0.0
    %9862 = vmatpush1.msra.mxu0 %v5847
    %9863 = vmatprep.subr.mxu0 0.0
    %9864 = vmatpush1.msra.mxu0 %v5848
    %9865 = vmatprep.subr.mxu0 0.0
    %9866 = vmatpush1.msra.mxu0 0.0
    %9867 = vmatprep.subr.mxu0 0.0
    %9868 = vmatpush1.msra.mxu0 0.0
    %9869 = vmatprep.subr.mxu0 0.0
    %9870 = vmatpush1.msra.mxu0 0.0
    %9871 = vmatprep.subr.mxu0 0.0
    %9872 = vmatpush1.msra.mxu0 0.0
    %9873 = vmatprep.subr.mxu0 0.0
    %9874 = vmatpush1.msra.mxu0 0.0
    %9875 = vmatprep.subr.mxu0 0.0
    %9876 = vmatpush1.msra.mxu0 0.0
    %9877 = vmatprep.subr.mxu0 0.0
    %9878 = vmatpush1.msra.mxu0 0.0
    %9879 = vmatprep.subr.mxu0 0.0
    %9880 = vmatpush1.msra.mxu0 0.0
    %9881 = vmatprep.subr.mxu0 0.0
    %9882 = vmatpush1.msra.mxu0 0.0
    %9883 = vmatprep.subr.mxu0 0.0
    %9884 = vmatpush1.msra.mxu0 0.0
    %9885 = vmatprep.subr.mxu0 0.0
    %9886 = vmatpush1.msra.mxu0 0.0
    %9887 = vmatprep.subr.mxu0 0.0
    %9888 = vmatpush1.msra.mxu0 0.0
    %9889 = vmatprep.subr.mxu0 0.0
    %9890 = vmatpush1.msra.mxu0 0.0
    %9891 = vmatprep.subr.mxu0 0.0
    %9892 = vmatpush1.msra.mxu0 0.0
    %9893 = vmatprep.subr.mxu0 0.0
    %9894 = vmatpush1.msra.mxu0 0.0
    %9895 = vmatprep.subr.mxu0 0.0
    %9896 = vmatpush1.msra.mxu0 0.0
    %9897 = vmatprep.subr.mxu0 0.0
    %9898 = vmatpush1.msra.mxu0 0.0
    %9899 = vmatprep.subr.mxu0 0.0
    %9900 = vmatpush1.msra.mxu0 0.0
    %9901 = vmatprep.subr.mxu0 0.0
    %9902 = vmatpush1.msra.mxu0 0.0
    %9903 = vmatprep.subr.mxu0 0.0
    %9904 = vmatpush1.msra.mxu0 0.0
    %9905 = vmatprep.subr.mxu0 0.0
    %9906 = vmatpush1.msra.mxu0 0.0
    %9907 = vmatprep.subr.mxu0 0.0
    %9908 = vmatpush1.msra.mxu0 0.0
    %9909 = vmatprep.subr.mxu0 0.0
    %9910 = vmatpush1.msra.mxu0 0.0
    %9911 = vmatprep.subr.mxu0 0.0
    %9912 = vmatpush1.msra.mxu0 0.0
    %9913 = vmatprep.subr.mxu0 0.0
    %9914 = vmatpush1.msra.mxu0 0.0
    %9915 = vmatprep.subr.mxu0 0.0
    %9916 = vmatpush1.msra.mxu0 0.0
    %9917 = vmatprep.subr.mxu0 0.0
    %9918 = vmatpush1.msra.mxu0 0.0
    %9919 = vmatprep.subr.mxu0 0.0
    %9920 = vmatpush1.msra.mxu0 0.0
    %9921 = vmatprep.mubr.f32.mxu0 0.0
    %9922 = vmatmul.mubr.f32.gmra.mrb[0].mxu0 %v9855
    %v9923 = vpop.f32.mrb[0].mxu0
    %v9924 = vadd.f32 0.0, %v9923
    %v9925 = vpop.f32.mrb[0].mxu0
    %9926 = vdwg.mxu0
    %9928 = vrot.lane.b32.xlu0 %v9851, 64
    %v9929 = vpop.permute.xlu0 %9928
    %v9930 = vsel %vm190, %v9929, 0
    %9932 = vmatprep.subr.mxu0 0.0
    %9933 = vmatpush1.msra.mxu0 %v5837
    %9934 = vmatprep.subr.mxu0 0.0
    %9935 = vmatpush1.msra.mxu0 %v5838
    %9936 = vmatprep.subr.mxu0 0.0
    %9937 = vmatpush1.msra.mxu0 %v5839
    %9938 = vmatprep.subr.mxu0 0.0
    %9939 = vmatpush1.msra.mxu0 %v5840
    %9940 = vmatprep.subr.mxu0 0.0
    %9941 = vmatpush1.msra.mxu0 0.0
    %9942 = vmatprep.subr.mxu0 0.0
    %9943 = vmatpush1.msra.mxu0 0.0
    %9944 = vmatprep.subr.mxu0 0.0
    %9945 = vmatpush1.msra.mxu0 0.0
    %9946 = vmatprep.subr.mxu0 0.0
    %9947 = vmatpush1.msra.mxu0 0.0
    %9948 = vmatprep.subr.mxu0 0.0
    %9949 = vmatpush1.msra.mxu0 0.0
    %9950 = vmatprep.subr.mxu0 0.0
    %9951 = vmatpush1.msra.mxu0 0.0
    %9952 = vmatprep.subr.mxu0 0.0
    %9953 = vmatpush1.msra.mxu0 0.0
    %9954 = vmatprep.subr.mxu0 0.0
    %9955 = vmatpush1.msra.mxu0 0.0
    %9956 = vmatprep.subr.mxu0 0.0
    %9957 = vmatpush1.msra.mxu0 0.0
    %9958 = vmatprep.subr.mxu0 0.0
    %9959 = vmatpush1.msra.mxu0 0.0
    %9960 = vmatprep.subr.mxu0 0.0
    %9961 = vmatpush1.msra.mxu0 0.0
    %9962 = vmatprep.subr.mxu0 0.0
    %9963 = vmatpush1.msra.mxu0 0.0
    %9964 = vmatprep.subr.mxu0 0.0
    %9965 = vmatpush1.msra.mxu0 0.0
    %9966 = vmatprep.subr.mxu0 0.0
    %9967 = vmatpush1.msra.mxu0 0.0
    %9968 = vmatprep.subr.mxu0 0.0
    %9969 = vmatpush1.msra.mxu0 0.0
    %9970 = vmatprep.subr.mxu0 0.0
    %9971 = vmatpush1.msra.mxu0 0.0
    %9972 = vmatprep.subr.mxu0 0.0
    %9973 = vmatpush1.msra.mxu0 0.0
    %9974 = vmatprep.subr.mxu0 0.0
    %9975 = vmatpush1.msra.mxu0 0.0
    %9976 = vmatprep.subr.mxu0 0.0
    %9977 = vmatpush1.msra.mxu0 0.0
    %9978 = vmatprep.subr.mxu0 0.0
    %9979 = vmatpush1.msra.mxu0 0.0
    %9980 = vmatprep.subr.mxu0 0.0
    %9981 = vmatpush1.msra.mxu0 0.0
    %9982 = vmatprep.subr.mxu0 0.0
    %9983 = vmatpush1.msra.mxu0 0.0
    %9984 = vmatprep.subr.mxu0 0.0
    %9985 = vmatpush1.msra.mxu0 0.0
    %9986 = vmatprep.subr.mxu0 0.0
    %9987 = vmatpush1.msra.mxu0 0.0
    %9988 = vmatprep.subr.mxu0 0.0
    %9989 = vmatpush1.msra.mxu0 0.0
    %9990 = vmatprep.subr.mxu0 0.0
    %9991 = vmatpush1.msra.mxu0 0.0
    %9992 = vmatprep.subr.mxu0 0.0
    %9993 = vmatpush1.msra.mxu0 0.0
    %9994 = vmatprep.subr.mxu0 0.0
    %9995 = vmatpush1.msra.mxu0 0.0
    %9996 = vmatprep.mubr.f32.mxu0 0.0
    %9997 = vmatmul.mubr.f32.gmra.mrb[0].mxu0 %v9930
    %v9998 = vpop.f32.mrb[0].mxu0
    %v9999 = vadd.f32 %v9924, %v9998
    %v10000 = vpop.f32.mrb[0].mxu0
    %10001 = vdwg.mxu0
    %v10002 = vadd.f32 %v9999, %v6206
    %v10003 = vxor.u32 %v10002, 2147483648
    %v10004 = vmul.f32 %v10003, 1.442695
    %v10005 = vpow.pop %v10004
    %v10006 = vadd.f32 %v10005, 1.0
    %v10007 = vrcp.pop %v10006
    %v10008 = vmul.f32 1.0, %v10007
    %v10009 = vtanh.pop %v10002
    %v10010 = vmul.f32 %v10008, %v9749
    %10012 = vrot.lane.b32.xlu0 %v10009, 32
    %v10013 = vpop.permute.xlu0 %10012
    %v10015 = vmul.f32 %v10008, %v10013
    %10017 = vrot.lane.b32.xlu0 %v10015, 32
    %v10018 = vpop.permute.xlu0 %10017
    %v10020 = vadd.f32 %v10010, %v10018
    %v10021 = vtanh.pop %v10020
    %10023 = vrot.lane.b32.xlu0 %v10021, 32
    %v10024 = vpop.permute.xlu0 %10023
    %v10026 = vmul.f32 %v10008, %v10024
    %v10027 = vld [vmem:[#allocation2 + $0x1e] sm:$0x3]
    %10028 = vmatprep.subr.mxu0 0.0
    %10029 = vmatpush1.msra.mxu0 %v5841
    %10030 = vmatprep.subr.mxu0 0.0
    %10031 = vmatpush1.msra.mxu0 %v5842
    %10032 = vmatprep.subr.mxu0 0.0
    %10033 = vmatpush1.msra.mxu0 %v5843
    %10034 = vmatprep.subr.mxu0 0.0
    %10035 = vmatpush1.msra.mxu0 %v5844
    %10036 = vmatprep.subr.mxu0 0.0
    %10037 = vmatpush1.msra.mxu0 0.0
    %10038 = vmatprep.subr.mxu0 0.0
    %10039 = vmatpush1.msra.mxu0 0.0
    %10040 = vmatprep.subr.mxu0 0.0
    %10041 = vmatpush1.msra.mxu0 0.0
    %10042 = vmatprep.subr.mxu0 0.0
    %10043 = vmatpush1.msra.mxu0 0.0
    %10044 = vmatprep.subr.mxu0 0.0
    %10045 = vmatpush1.msra.mxu0 0.0
    %10046 = vmatprep.subr.mxu0 0.0
    %10047 = vmatpush1.msra.mxu0 0.0
    %10048 = vmatprep.subr.mxu0 0.0
    %10049 = vmatpush1.msra.mxu0 0.0
    %10050 = vmatprep.subr.mxu0 0.0
    %10051 = vmatpush1.msra.mxu0 0.0
    %10052 = vmatprep.subr.mxu0 0.0
    %10053 = vmatpush1.msra.mxu0 0.0
    %10054 = vmatprep.subr.mxu0 0.0
    %10055 = vmatpush1.msra.mxu0 0.0
    %10056 = vmatprep.subr.mxu0 0.0
    %10057 = vmatpush1.msra.mxu0 0.0
    %10058 = vmatprep.subr.mxu0 0.0
    %10059 = vmatpush1.msra.mxu0 0.0
    %10060 = vmatprep.subr.mxu0 0.0
    %10061 = vmatpush1.msra.mxu0 0.0
    %10062 = vmatprep.subr.mxu0 0.0
    %10063 = vmatpush1.msra.mxu0 0.0
    %10064 = vmatprep.subr.mxu0 0.0
    %10065 = vmatpush1.msra.mxu0 0.0
    %10066 = vmatprep.subr.mxu0 0.0
    %10067 = vmatpush1.msra.mxu0 0.0
    %10068 = vmatprep.subr.mxu0 0.0
    %10069 = vmatpush1.msra.mxu0 0.0
    %10070 = vmatprep.subr.mxu0 0.0
    %10071 = vmatpush1.msra.mxu0 0.0
    %10072 = vmatprep.subr.mxu0 0.0
    %10073 = vmatpush1.msra.mxu0 0.0
    %10074 = vmatprep.subr.mxu0 0.0
    %10075 = vmatpush1.msra.mxu0 0.0
    %10076 = vmatprep.subr.mxu0 0.0
    %10077 = vmatpush1.msra.mxu0 0.0
    %10078 = vmatprep.subr.mxu0 0.0
    %10079 = vmatpush1.msra.mxu0 0.0
    %10080 = vmatprep.subr.mxu0 0.0
    %10081 = vmatpush1.msra.mxu0 0.0
    %10082 = vmatprep.subr.mxu0 0.0
    %10083 = vmatpush1.msra.mxu0 0.0
    %10084 = vmatprep.subr.mxu0 0.0
    %10085 = vmatpush1.msra.mxu0 0.0
    %10086 = vmatprep.subr.mxu0 0.0
    %10087 = vmatpush1.msra.mxu0 0.0
    %10088 = vmatprep.subr.mxu0 0.0
    %10089 = vmatpush1.msra.mxu0 0.0
    %10090 = vmatprep.subr.mxu0 0.0
    %10091 = vmatpush1.msra.mxu0 0.0
    %10092 = vmatprep.mubr.f32.mxu0 0.0
    %10093 = vmatmul.mubr.f32.gmra.mrb[0].mxu0 %v9930
    %v10094 = vpop.f32.mrb[0].mxu0
    %v10095 = vadd.f32 0.0, %v10094
    %v10096 = vpop.f32.mrb[0].mxu0
    %10097 = vdwg.mxu0
    %v10098 = vadd.f32 %v10027, %v10095
    %v10099 = vxor.u32 %v10098, 2147483648
    %v10100 = vmul.f32 %v10099, 1.442695
    %v10101 = vpow.pop %v10100
    %v10102 = vadd.f32 %v10101, 1.0
    %v10103 = vrcp.pop %v10102
    %v10104 = vmul.f32 1.0, %v10103
    %v10105 = vtanh.pop %v10098
    %v10106 = vmul.f32 %v10104, %v9845
    %10108 = vrot.lane.b32.xlu0 %v10105, 32
    %v10109 = vpop.permute.xlu0 %10108
    %v10111 = vmul.f32 %v10104, %v10109
    %10113 = vrot.lane.b32.xlu0 %v10111, 32
    %v10114 = vpop.permute.xlu0 %10113
    %v10116 = vadd.f32 %v10106, %v10114
    %v10117 = vtanh.pop %v10116
    %10119 = vrot.lane.b32.xlu0 %v10117, 32
    %v10120 = vpop.permute.xlu0 %10119
    %v10122 = vmul.f32 %v10104, %v10120
    %10124 = vrot.lane.b32.xlu0 %v10026, 64
    %v10125 = vpop.permute.xlu0 %10124
    %v10126 = vsel %vm190, %v10125, 0
    %10128 = vmatprep.subr.mxu0 0.0
    %10129 = vmatpush1.msra.mxu0 %v5845
    %10130 = vmatprep.subr.mxu0 0.0
    %10131 = vmatpush1.msra.mxu0 %v5846
    %10132 = vmatprep.subr.mxu0 0.0
    %10133 = vmatpush1.msra.mxu0 %v5847
    %10134 = vmatprep.subr.mxu0 0.0
    %10135 = vmatpush1.msra.mxu0 %v5848
    %10136 = vmatprep.subr.mxu0 0.0
    %10137 = vmatpush1.msra.mxu0 0.0
    %10138 = vmatprep.subr.mxu0 0.0
    %10139 = vmatpush1.msra.mxu0 0.0
    %10140 = vmatprep.subr.mxu0 0.0
    %10141 = vmatpush1.msra.mxu0 0.0
    %10142 = vmatprep.subr.mxu0 0.0
    %10143 = vmatpush1.msra.mxu0 0.0
    %10144 = vmatprep.subr.mxu0 0.0
    %10145 = vmatpush1.msra.mxu0 0.0
    %10146 = vmatprep.subr.mxu0 0.0
    %10147 = vmatpush1.msra.mxu0 0.0
    %10148 = vmatprep.subr.mxu0 0.0
    %10149 = vmatpush1.msra.mxu0 0.0
    %10150 = vmatprep.subr.mxu0 0.0
    %10151 = vmatpush1.msra.mxu0 0.0
    %10152 = vmatprep.subr.mxu0 0.0
    %10153 = vmatpush1.msra.mxu0 0.0
    %10154 = vmatprep.subr.mxu0 0.0
    %10155 = vmatpush1.msra.mxu0 0.0
    %10156 = vmatprep.subr.mxu0 0.0
    %10157 = vmatpush1.msra.mxu0 0.0
    %10158 = vmatprep.subr.mxu0 0.0
    %10159 = vmatpush1.msra.mxu0 0.0
    %10160 = vmatprep.subr.mxu0 0.0
    %10161 = vmatpush1.msra.mxu0 0.0
    %10162 = vmatprep.subr.mxu0 0.0
    %10163 = vmatpush1.msra.mxu0 0.0
    %10164 = vmatprep.subr.mxu0 0.0
    %10165 = vmatpush1.msra.mxu0 0.0
    %10166 = vmatprep.subr.mxu0 0.0
    %10167 = vmatpush1.msra.mxu0 0.0
    %10168 = vmatprep.subr.mxu0 0.0
    %10169 = vmatpush1.msra.mxu0 0.0
    %10170 = vmatprep.subr.mxu0 0.0
    %10171 = vmatpush1.msra.mxu0 0.0
    %10172 = vmatprep.subr.mxu0 0.0
    %10173 = vmatpush1.msra.mxu0 0.0
    %10174 = vmatprep.subr.mxu0 0.0
    %10175 = vmatpush1.msra.mxu0 0.0
    %10176 = vmatprep.subr.mxu0 0.0
    %10177 = vmatpush1.msra.mxu0 0.0
    %10178 = vmatprep.subr.mxu0 0.0
    %10179 = vmatpush1.msra.mxu0 0.0
    %10180 = vmatprep.subr.mxu0 0.0
    %10181 = vmatpush1.msra.mxu0 0.0
    %10182 = vmatprep.subr.mxu0 0.0
    %10183 = vmatpush1.msra.mxu0 0.0
    %10184 = vmatprep.subr.mxu0 0.0
    %10185 = vmatpush1.msra.mxu0 0.0
    %10186 = vmatprep.subr.mxu0 0.0
    %10187 = vmatpush1.msra.mxu0 0.0
    %10188 = vmatprep.subr.mxu0 0.0
    %10189 = vmatpush1.msra.mxu0 0.0
    %10190 = vmatprep.subr.mxu0 0.0
    %10191 = vmatpush1.msra.mxu0 0.0
    %10192 = vmatprep.mubr.f32.mxu0 0.0
    %10193 = vmatmul.mubr.f32.gmra.mrb[0].mxu0 %v10126
    %v10194 = vpop.f32.mrb[0].mxu0
    %v10195 = vadd.f32 0.0, %v10194
    %v10196 = vpop.f32.mrb[0].mxu0
    %10197 = vdwg.mxu0
    %10199 = vrot.lane.b32.xlu0 %v10122, 64
    %v10200 = vpop.permute.xlu0 %10199
    %v10201 = vsel %vm190, %v10200, 0
    %10203 = vmatprep.subr.mxu0 0.0
    %10204 = vmatpush1.msra.mxu0 %v5837
    %10205 = vmatprep.subr.mxu0 0.0
    %10206 = vmatpush1.msra.mxu0 %v5838
    %10207 = vmatprep.subr.mxu0 0.0
    %10208 = vmatpush1.msra.mxu0 %v5839
    %10209 = vmatprep.subr.mxu0 0.0
    %10210 = vmatpush1.msra.mxu0 %v5840
    %10211 = vmatprep.subr.mxu0 0.0
    %10212 = vmatpush1.msra.mxu0 0.0
    %10213 = vmatprep.subr.mxu0 0.0
    %10214 = vmatpush1.msra.mxu0 0.0
    %10215 = vmatprep.subr.mxu0 0.0
    %10216 = vmatpush1.msra.mxu0 0.0
    %10217 = vmatprep.subr.mxu0 0.0
    %10218 = vmatpush1.msra.mxu0 0.0
    %10219 = vmatprep.subr.mxu0 0.0
    %10220 = vmatpush1.msra.mxu0 0.0
    %10221 = vmatprep.subr.mxu0 0.0
    %10222 = vmatpush1.msra.mxu0 0.0
    %10223 = vmatprep.subr.mxu0 0.0
    %10224 = vmatpush1.msra.mxu0 0.0
    %10225 = vmatprep.subr.mxu0 0.0
    %10226 = vmatpush1.msra.mxu0 0.0
    %10227 = vmatprep.subr.mxu0 0.0
    %10228 = vmatpush1.msra.mxu0 0.0
    %10229 = vmatprep.subr.mxu0 0.0
    %10230 = vmatpush1.msra.mxu0 0.0
    %10231 = vmatprep.subr.mxu0 0.0
    %10232 = vmatpush1.msra.mxu0 0.0
    %10233 = vmatprep.subr.mxu0 0.0
    %10234 = vmatpush1.msra.mxu0 0.0
    %10235 = vmatprep.subr.mxu0 0.0
    %10236 = vmatpush1.msra.mxu0 0.0
    %10237 = vmatprep.subr.mxu0 0.0
    %10238 = vmatpush1.msra.mxu0 0.0
    %10239 = vmatprep.subr.mxu0 0.0
    %10240 = vmatpush1.msra.mxu0 0.0
    %10241 = vmatprep.subr.mxu0 0.0
    %10242 = vmatpush1.msra.mxu0 0.0
    %10243 = vmatprep.subr.mxu0 0.0
    %10244 = vmatpush1.msra.mxu0 0.0
    %10245 = vmatprep.subr.mxu0 0.0
    %10246 = vmatpush1.msra.mxu0 0.0
    %10247 = vmatprep.subr.mxu0 0.0
    %10248 = vmatpush1.msra.mxu0 0.0
    %10249 = vmatprep.subr.mxu0 0.0
    %10250 = vmatpush1.msra.mxu0 0.0
    %10251 = vmatprep.subr.mxu0 0.0
    %10252 = vmatpush1.msra.mxu0 0.0
    %10253 = vmatprep.subr.mxu0 0.0
    %10254 = vmatpush1.msra.mxu0 0.0
    %10255 = vmatprep.subr.mxu0 0.0
    %10256 = vmatpush1.msra.mxu0 0.0
    %10257 = vmatprep.subr.mxu0 0.0
    %10258 = vmatpush1.msra.mxu0 0.0
    %10259 = vmatprep.subr.mxu0 0.0
    %10260 = vmatpush1.msra.mxu0 0.0
    %10261 = vmatprep.subr.mxu0 0.0
    %10262 = vmatpush1.msra.mxu0 0.0
    %10263 = vmatprep.subr.mxu0 0.0
    %10264 = vmatpush1.msra.mxu0 0.0
    %10265 = vmatprep.subr.mxu0 0.0
    %10266 = vmatpush1.msra.mxu0 0.0
    %10267 = vmatprep.mubr.f32.mxu0 0.0
    %10268 = vmatmul.mubr.f32.gmra.mrb[0].mxu0 %v10201
    %v10269 = vpop.f32.mrb[0].mxu0
    %v10270 = vadd.f32 %v10195, %v10269
    %v10271 = vpop.f32.mrb[0].mxu0
    %10272 = vdwg.mxu0
    %v10273 = vadd.f32 %v10270, %v6206
    %v10274 = vxor.u32 %v10273, 2147483648
    %v10275 = vmul.f32 %v10274, 1.442695
    %v10276 = vpow.pop %v10275
    %v10277 = vadd.f32 %v10276, 1.0
    %v10278 = vrcp.pop %v10277
    %v10279 = vmul.f32 1.0, %v10278
    %v10280 = vtanh.pop %v10273
    %v10281 = vmul.f32 %v10279, %v10020
    %10283 = vrot.lane.b32.xlu0 %v10280, 32
    %v10284 = vpop.permute.xlu0 %10283
    %v10286 = vmul.f32 %v10279, %v10284
    %10288 = vrot.lane.b32.xlu0 %v10286, 32
    %v10289 = vpop.permute.xlu0 %10288
    %v10291 = vadd.f32 %v10281, %v10289
    %v10292 = vtanh.pop %v10291
    %10294 = vrot.lane.b32.xlu0 %v10292, 32
    %v10295 = vpop.permute.xlu0 %10294
    %v10297 = vmul.f32 %v10279, %v10295
    %v10298 = vld [vmem:[%s17] sm:$0xff]
    %v10299 = vld [vmem:[%s17 + $0x8] sm:$0xff]
    %v10300 = vld [vmem:[%s17 + $0x10] sm:$0xff]
    %v10301 = vld [vmem:[%s17 + $0x18] sm:$0xff]
    %v10302 = vld [vmem:[%s18] sm:$0x1]
    %v10304 = vlaneseq
    %v10305 = vshrl.u32 %v10304, 7
    %v10306 = vsub.s32 0, %v10305
    %v10307 = vrot.slane %v10302, %v10306
    %10310 = vrot.lane.b32.xlu0 %v10297, 64
    %v10311 = vpop.permute.xlu0 %10310
    %v10312 = vsel %vm190, %v10311, 0
    %10314 = vmatprep.subr.mxu0 0.0
    %10315 = vmatpush1.msra.mxu0 %v10298
    %10316 = vmatprep.subr.mxu0 0.0
    %10317 = vmatpush1.msra.mxu0 %v10299
    %10318 = vmatprep.subr.mxu0 0.0
    %10319 = vmatpush1.msra.mxu0 %v10300
    %10320 = vmatprep.subr.mxu0 0.0
    %10321 = vmatpush1.msra.mxu0 %v10301
    %10322 = vmatprep.subr.mxu0 0.0
    %10323 = vmatpush1.msra.mxu0 0.0
    %10324 = vmatprep.subr.mxu0 0.0
    %10325 = vmatpush1.msra.mxu0 0.0
    %10326 = vmatprep.subr.mxu0 0.0
    %10327 = vmatpush1.msra.mxu0 0.0
    %10328 = vmatprep.subr.mxu0 0.0
    %10329 = vmatpush1.msra.mxu0 0.0
    %10330 = vmatprep.subr.mxu0 0.0
    %10331 = vmatpush1.msra.mxu0 0.0
    %10332 = vmatprep.subr.mxu0 0.0
    %10333 = vmatpush1.msra.mxu0 0.0
    %10334 = vmatprep.subr.mxu0 0.0
    %10335 = vmatpush1.msra.mxu0 0.0
    %10336 = vmatprep.subr.mxu0 0.0
    %10337 = vmatpush1.msra.mxu0 0.0
    %10338 = vmatprep.subr.mxu0 0.0
    %10339 = vmatpush1.msra.mxu0 0.0
    %10340 = vmatprep.subr.mxu0 0.0
    %10341 = vmatpush1.msra.mxu0 0.0
    %10342 = vmatprep.subr.mxu0 0.0
    %10343 = vmatpush1.msra.mxu0 0.0
    %10344 = vmatprep.subr.mxu0 0.0
    %10345 = vmatpush1.msra.mxu0 0.0
    %10346 = vmatprep.subr.mxu0 0.0
    %10347 = vmatpush1.msra.mxu0 0.0
    %10348 = vmatprep.subr.mxu0 0.0
    %10349 = vmatpush1.msra.mxu0 0.0
    %10350 = vmatprep.subr.mxu0 0.0
    %10351 = vmatpush1.msra.mxu0 0.0
    %10352 = vmatprep.subr.mxu0 0.0
    %10353 = vmatpush1.msra.mxu0 0.0
    %10354 = vmatprep.subr.mxu0 0.0
    %10355 = vmatpush1.msra.mxu0 0.0
    %10356 = vmatprep.subr.mxu0 0.0
    %10357 = vmatpush1.msra.mxu0 0.0
    %10358 = vmatprep.subr.mxu0 0.0
    %10359 = vmatpush1.msra.mxu0 0.0
    %10360 = vmatprep.subr.mxu0 0.0
    %10361 = vmatpush1.msra.mxu0 0.0
    %10362 = vmatprep.subr.mxu0 0.0
    %10363 = vmatpush1.msra.mxu0 0.0
    %10364 = vmatprep.subr.mxu0 0.0
    %10365 = vmatpush1.msra.mxu0 0.0
    %10366 = vmatprep.subr.mxu0 0.0
    %10367 = vmatpush1.msra.mxu0 0.0
    %10368 = vmatprep.subr.mxu0 0.0
    %10369 = vmatpush1.msra.mxu0 0.0
    %10370 = vmatprep.subr.mxu0 0.0
    %10371 = vmatpush1.msra.mxu0 0.0
    %10372 = vmatprep.subr.mxu0 0.0
    %10373 = vmatpush1.msra.mxu0 0.0
    %10374 = vmatprep.subr.mxu0 0.0
    %10375 = vmatpush1.msra.mxu0 0.0
    %10376 = vmatprep.subr.mxu0 0.0
    %10377 = vmatpush1.msra.mxu0 0.0
    %10378 = vmatprep.mubr.f32.mxu0 0.0
    %10379 = vmatmul.mubr.f32.gmra.mrb[0].mxu0 %v10312
    %v10380 = vpop.f32.mrb[0].mxu0
    %v10381 = vadd.f32 %v10307, %v10380
    %v10382 = vpop.f32.mrb[0].mxu0
    %10383 = vdwg.mxu0
    %vm10384 = vcmask 33792
    %10385 = vst.msk [vmem:[#allocation3] sm:$0x3] %vm10384, %v10381
    // Predicated region
    $region78: #{andi_model_forward.1} parent=1 // pred_check
      _
    $region79: #{andi_model_forward.1} parent=1 // pred_check_branch
      %10387 = sbr.rel (0) target = $region81
    $region80: #{andi_model_forward.1} parent=1 // pred_region
      %s10389 = ssub.s32 32, 32
      %10390 = vsyncadd [#allocation4], %s10389
      %s10392 = sshll.u32 [#allocation3], 4
      %s10393 = int_to_ptr.vmem [resolvable:$true] %s10392
      %10395 = dma.vmem_to_hbm [thread:$0]  %s10393, 32, %s19, [#allocation4]
    $region81: #{andi_model_forward.1} parent=1 // pred_fallthru
      _
    // Predicated region
    $region82: #{andi_model_forward.1} parent=1 // pred_check
      _
    $region83: #{andi_model_forward.1} parent=1 // pred_check_branch
      %10397 = sbr.rel (0) target = $region85
    $region84: #{andi_model_forward.1} parent=1 // pred_region
      %10398 = dma.done [#allocation4], 32
    $region85: #{andi_model_forward.1} parent=1 // pred_fallthru
      _
    %10399 = vsyncpa [#allocation4], 1

</llo_original>
